<compile_context>
chip_gen: v7x
topology: tpu7x:2x2x1
jax: 0.10.0
libtpu: 0.0.40
codegen_flags: <defaults>
</compile_context>

<pallas_src>
import jax
import jax.numpy as jnp
from jax import lax
from jax.experimental import pallas as pl
from jax.experimental.pallas import tpu as pltpu

PAD_IDX = 0  # Vocabulary.reversed_basic_tokens['<PAD>'] assumed to be 0


# ----------------------------------------------------------------------------
# Fused multi-layer LSTM: one pallas_call, single grid step, everything in VMEM
# PyTorch gate order (i, f, g, o), combined b_ih + b_hh bias.
# ----------------------------------------------------------------------------
def stacked_lstm(x, layer_params, h0, c0):
    """x: (T, B, In) time-major. layer_params: list of (w_ih, w_hh, b_ih, b_hh)
    with w_ih (4H, In_l), w_hh (4H, H). h0/c0: (L, B, H).
    Returns (y (T,B,H), hT (L,B,H), cT (L,B,H))."""
    T, B, In = x.shape
    L, _, H = h0.shape
    assert L == len(layer_params)

    # Pre-pack weights: transpose for (row-major x) @ W, cast matmul operands
    # to bf16 (f32 accumulation inside the kernel). In production these would
    # be packed once at init time.
    flat_w = []
    for (w_ih, w_hh, b_ih, b_hh) in layer_params:
        flat_w.append(jnp.transpose(w_ih).astype(jnp.bfloat16))        # (In_l, 4H)
        flat_w.append(jnp.transpose(w_hh).astype(jnp.bfloat16))        # (H, 4H)
        flat_w.append((b_ih + b_hh).reshape(1, 4 * H).astype(jnp.float32))

    def kernel(*refs):
        x_ref, h0_ref, c0_ref = refs[0:3]
        wrefs = refs[3:3 + 3 * L]
        y_ref, hT_ref, cT_ref = refs[3 + 3 * L:6 + 3 * L]
        gx_ref, h_ref, c_ref = refs[6 + 3 * L:]

        for l in range(L):
            wih_ref = wrefs[3 * l]
            whh_ref = wrefs[3 * l + 1]
            b_ref = wrefs[3 * l + 2]

            # --- hoisted input projection for the whole sequence (big matmul)
            if l == 0:
                xin = x_ref[...].reshape(T * B, In)
            else:
                # previous layer's output sequence lives in y_ref (VMEM)
                xin = y_ref[...].reshape(T * B, H)
            gx = jnp.dot(xin.astype(jnp.bfloat16), wih_ref[...],
                         preferred_element_type=jnp.float32) + b_ref[...]
            gx_ref[...] = gx.reshape(T, B, 4 * H)

            # --- recurrence: only h @ W_hh + gate math on the serial path
            h_ref[...] = h0_ref[l]
            c_ref[...] = c0_ref[l]
            whh = whh_ref[...]

            def step(t, carry):
                h = h_ref[...]
                c = c_ref[...]
                gates = gx_ref[t] + jnp.dot(h.astype(jnp.bfloat16), whh,
                                            preferred_element_type=jnp.float32)
                i_g = jax.nn.sigmoid(gates[:, 0 * H:1 * H])
                f_g = jax.nn.sigmoid(gates[:, 1 * H:2 * H])
                g_g = jnp.tanh(gates[:, 2 * H:3 * H])
                o_g = jax.nn.sigmoid(gates[:, 3 * H:4 * H])
                c_new = f_g * c + i_g * g_g
                h_new = o_g * jnp.tanh(c_new)
                h_ref[...] = h_new
                c_ref[...] = c_new
                y_ref[t] = h_new
                return carry

            lax.fori_loop(0, T, step, 0, unroll=True)

            hT_ref[l] = h_ref[...]
            cT_ref[l] = c_ref[...]

    in_specs = [
        pl.BlockSpec((T, B, In), lambda i: (0, 0, 0)),
        pl.BlockSpec((L, B, H), lambda i: (0, 0, 0)),
        pl.BlockSpec((L, B, H), lambda i: (0, 0, 0)),
    ]
    for (w_ih, w_hh, _, _) in layer_params:
        in_dim = w_ih.shape[1]
        in_specs.append(pl.BlockSpec((in_dim, 4 * H), lambda i: (0, 0)))
        in_specs.append(pl.BlockSpec((H, 4 * H), lambda i: (0, 0)))
        in_specs.append(pl.BlockSpec((1, 4 * H), lambda i: (0, 0)))

    grid_spec = pltpu.PrefetchScalarGridSpec(
        num_scalar_prefetch=0,
        grid=(1,),
        in_specs=in_specs,
        out_specs=(
            pl.BlockSpec((T, B, H), lambda i: (0, 0, 0)),
            pl.BlockSpec((L, B, H), lambda i: (0, 0, 0)),
            pl.BlockSpec((L, B, H), lambda i: (0, 0, 0)),
        ),
        scratch_shapes=[
            pltpu.VMEM((T, B, 4 * H), jnp.float32),   # hoisted input-proj gates
            pltpu.VMEM((B, H), jnp.float32),          # h carry
            pltpu.VMEM((B, H), jnp.float32),          # c carry
        ],
    )
    out_shapes = (
        jax.ShapeDtypeStruct((T, B, H), jnp.float32),
        jax.ShapeDtypeStruct((L, B, H), jnp.float32),
        jax.ShapeDtypeStruct((L, B, H), jnp.float32),
    )
    return pl.pallas_call(
        kernel,
        out_shape=out_shapes,
        grid_spec=grid_spec,
        compiler_params=pltpu.CompilerParams(
            dimension_semantics=("arbitrary",)),
    )(x, h0, c0, *flat_w)


# ----------------------------------------------------------------------------
# Final linear projection: (N, H) @ (H, V) + b, tiled over the vocab dim.
# ----------------------------------------------------------------------------
def _linear_kernel(x_ref, w_ref, b_ref, o_ref):
    o_ref[...] = (jnp.dot(x_ref[...].astype(jnp.bfloat16), w_ref[...],
                          preferred_element_type=jnp.float32)
                  + b_ref[...])


def linear(x, w, b):
    """x: (N, H); w: (V, H); b: (V,). Returns (N, V) f32."""
    N, H = x.shape
    V = w.shape[0]
    w_t = jnp.transpose(w).astype(jnp.bfloat16)          # (H, V)
    b2 = b.reshape(1, V).astype(jnp.float32)

    if V % 512 == 0:
        tv = 512
    elif V % 256 == 0:
        tv = 256
    elif V % 128 == 0:
        tv = 128
    else:
        tv = V

    return pl.pallas_call(
        _linear_kernel,
        out_shape=jax.ShapeDtypeStruct((N, V), jnp.float32),
        grid=(V // tv,),
        in_specs=[
            pl.BlockSpec((N, H), lambda j: (0, 0)),
            pl.BlockSpec((H, tv), lambda j: (0, j)),
            pl.BlockSpec((1, tv), lambda j: (0, j)),
        ],
        out_specs=pl.BlockSpec((N, tv), lambda j: (0, j)),
        compiler_params=pltpu.CompilerParams(
            dimension_semantics=("parallel",)),
    )(x, w_t, b2)


# ----------------------------------------------------------------------------
# Parameter construction (mirrors the PyTorch module init)
# ----------------------------------------------------------------------------
def init_params(key, src_vocab, trg_vocab, input_size, num_layers, hidden):
    keys = iter(jax.random.split(key, 64))

    def embed_table(vocab):
        t = jax.random.normal(next(keys), (vocab, input_size), jnp.float32)
        return t.at[PAD_IDX].set(0.0)  # padding_idx row is zero

    def lstm_stack():
        params = []
        bscale = 1.0 / float(jnp.sqrt(hidden))
        for l in range(num_layers):
            in_dim = input_size if l == 0 else hidden
            w_ih = jax.random.uniform(next(keys), (4 * hidden, in_dim),
                                      jnp.float32, -0.08, 0.08)
            w_hh = jax.random.uniform(next(keys), (4 * hidden, hidden),
                                      jnp.float32, -0.08, 0.08)
            b_ih = jax.random.uniform(next(keys), (4 * hidden,),
                                      jnp.float32, -bscale, bscale)
            b_hh = jax.random.uniform(next(keys), (4 * hidden,),
                                      jnp.float32, -bscale, bscale)
            params.append((w_ih, w_hh, b_ih, b_hh))
        return params

    lscale = 1.0 / float(jnp.sqrt(hidden))
    lin_w = jax.random.uniform(next(keys), (trg_vocab, hidden),
                               jnp.float32, -lscale, lscale)
    lin_b = jax.random.uniform(next(keys), (trg_vocab,),
                               jnp.float32, -lscale, lscale)
    return {
        "src_embed": embed_table(src_vocab),
        "trg_embed": embed_table(trg_vocab),
        "encoder": lstm_stack(),
        "decoder": lstm_stack(),
        "linear_w": lin_w,
        "linear_b": lin_b,
    }


# ----------------------------------------------------------------------------
# S2S forward (matches the PyTorch module forward semantics)
# ----------------------------------------------------------------------------
def s2s_forward(params, src, src_len, trg, trg_len, states):
    # TODO(synk): src_len/trg_len unused (matches plain nn.LSTM forward; no packing).
    del src_len, trg_len
    h0, c0 = states  # (L, B, H) each

    # Embedding gather kept in plain JAX glue (no clean Pallas win at this size).
    src_embed = jnp.take(params["src_embed"], src, axis=0)   # (B, Ts, In)
    trg_embed = jnp.take(params["trg_embed"], trg, axis=0)   # (B, Tt, In)
    src_embed = jnp.transpose(src_embed, (1, 0, 2))          # (Ts, B, In)
    trg_embed = jnp.transpose(trg_embed, (1, 0, 2))          # (Tt, B, In)

    _, h_t, c_t = stacked_lstm(src_embed, params["encoder"], h0, c0)
    # dec_out[:-1] only depends on trg_embed[:-1] (causal), so skip the last
    # (discarded) decoder step entirely.
    dec_out, _, _ = stacked_lstm(trg_embed[:-1], params["decoder"], h_t, c_t)

    dec_out = jnp.transpose(dec_out, (1, 0, 2))              # (B, Tt-1, H)
    H = dec_out.shape[-1]
    flat = dec_out.reshape(-1, H)                            # (B*(Tt-1), H)
    return linear(flat, params["linear_w"], params["linear_b"])


# ----------------------------------------------------------------------------
# Pure-JAX f32 reference (for a correctness cross-check)
# ----------------------------------------------------------------------------
def _ref_lstm_stack(x, layer_params, h0, c0):
    inp = x
    hs, cs = [], []
    for l, (w_ih, w_hh, b_ih, b_hh) in enumerate(layer_params):
        H = w_hh.shape[1]

        def step(carry, x_t):
            h, c = carry
            gates = x_t @ w_ih.T + h @ w_hh.T + b_ih + b_hh
            i = jax.nn.sigmoid(gates[:, 0 * H:1 * H])
            f = jax.nn.sigmoid(gates[:, 1 * H:2 * H])
            g = jnp.tanh(gates[:, 2 * H:3 * H])
            o = jax.nn.sigmoid(gates[:, 3 * H:4 * H])
            c = f * c + i * g
            h = o * jnp.tanh(c)
            return (h, c), h

        (hT, cT), y = lax.scan(step, (h0[l], c0[l]), inp)
        inp = y
        hs.append(hT)
        cs.append(cT)
    return inp, jnp.stack(hs), jnp.stack(cs)


def ref_forward(params, src, trg, states):
    h0, c0 = states
    se = jnp.transpose(jnp.take(params["src_embed"], src, axis=0), (1, 0, 2))
    te = jnp.transpose(jnp.take(params["trg_embed"], trg, axis=0), (1, 0, 2))
    _, h_t, c_t = _ref_lstm_stack(se, params["encoder"], h0, c0)
    dec, _, _ = _ref_lstm_stack(te, params["decoder"], h_t, c_t)
    dec = jnp.transpose(dec[:-1], (1, 0, 2))
    flat = dec.reshape(-1, dec.shape[-1])
    return flat @ params["linear_w"].T + params["linear_b"]


if __name__ == "__main__":
    SRC_VOCAB = 256
    TRG_VOCAB = 256
    INPUT_SIZE = 128
    HIDDEN = 128
    NUM_LAYERS = 2
    BATCH = 8
    T_SRC = 8
    T_TRG = 8

    root = jax.random.PRNGKey(0)
    k_params, k_src, k_trg = jax.random.split(root, 3)

    params = init_params(k_params, SRC_VOCAB, TRG_VOCAB, INPUT_SIZE,
                         NUM_LAYERS, HIDDEN)

    src = jax.random.randint(k_src, (BATCH, T_SRC), 0, SRC_VOCAB, jnp.int32)
    trg = jax.random.randint(k_trg, (BATCH, T_TRG), 0, TRG_VOCAB, jnp.int32)
    src_len = jnp.full((BATCH,), T_SRC, jnp.int32)
    trg_len = jnp.full((BATCH,), T_TRG, jnp.int32)
    states = (jnp.zeros((NUM_LAYERS, BATCH, HIDDEN), jnp.float32),
              jnp.zeros((NUM_LAYERS, BATCH, HIDDEN), jnp.float32))

    fwd = jax.jit(s2s_forward)
    out = fwd(params, src, src_len, trg, trg_len, states)
    out = jax.block_until_ready(out)

    expected_shape = (BATCH * (T_TRG - 1), TRG_VOCAB)
    assert out.shape == expected_shape, (out.shape, expected_shape)
    assert bool(jnp.all(jnp.isfinite(out)))

    # Numerical cross-check against the pure-JAX f32 reference (bf16 MXU
    # operands => loose tolerance).
    ref = jax.block_until_ready(ref_forward(params, src, trg, states))
    max_err = float(jnp.max(jnp.abs(out - ref)))
    assert max_err < 0.1, max_err

    print("KERNEL_OK")
</pallas_src>

<mosaic_0001>
module attributes {stable_mosaic.version = 11 : i64} {
  func.func @_linear_kernel(%arg0: i32, %arg1: memref<56x128xf32, #tpu.memory_space<vmem>>, %arg2: memref<128x256xbf16, #tpu.memory_space<vmem>>, %arg3: memref<1x256xf32, #tpu.memory_space<vmem>>, %arg4: memref<56x256xf32, #tpu.memory_space<vmem>>) attributes {dimension_semantics = [#tpu.dimension_semantics<parallel>], iteration_bounds = array<i64: 1>, scalar_prefetch = 0 : i64, scratch_operands = 0 : i64, tpu.core_type = #tpu.core_type<tc>, window_params = [{pipeline_mode = #tpu.pipeline_mode<synchronous>, transform_indices = @transform_0, window_bounds = array<i64: 56, 128>}, {transform_indices = @transform_1, window_bounds = array<i64: 128, 256>}, {transform_indices = @transform_2, window_bounds = array<i64: 1, 256>}, {transform_indices = @transform_3, window_bounds = array<i64: 56, 256>}]} {
    %c0 = arith.constant 0 : index
    %c0_0 = arith.constant 0 : index
    %0 = vector.load %arg1[%c0, %c0_0] : memref<56x128xf32, #tpu.memory_space<vmem>>, vector<56x128xf32>
    %1 = arith.truncf %0 : vector<56x128xf32> to vector<56x128xbf16>
    %c0_1 = arith.constant 0 : index
    %c0_2 = arith.constant 0 : index
    %2 = vector.load %arg2[%c0_1, %c0_2] : memref<128x256xbf16, #tpu.memory_space<vmem>>, vector<128x256xbf16>
    %cst = arith.constant dense<0.000000e+00> : vector<56x256xf32>
    %3 = tpu.matmul %1, %2, %cst {dimension_numbers = #tpu.dot_dimension_numbers<[1], [0], [0], [1], [0, 0, 1, 1], [], []>} : vector<56x128xbf16>, vector<128x256xbf16>, vector<56x256xf32> -> vector<56x256xf32>
    %c0_3 = arith.constant 0 : index
    %c0_4 = arith.constant 0 : index
    %4 = vector.load %arg3[%c0_3, %c0_4] : memref<1x256xf32, #tpu.memory_space<vmem>>, vector<1x256xf32>
    %5 = vector.broadcast %4 : vector<1x256xf32> to vector<56x256xf32>
    %6 = arith.addf %3, %5 : vector<56x256xf32>
    %c0_5 = arith.constant 0 : index
    %c0_6 = arith.constant 0 : index
    %7 = vector.load %arg4[%c0_5, %c0_6] : memref<56x256xf32, #tpu.memory_space<vmem>>, vector<56x256xf32>
    tpu.vector_store %arg4[%c0_5, %c0_6], %6 {strides = array<i32>} : memref<56x256xf32, #tpu.memory_space<vmem>>, vector<56x256xf32>,
    return
  }
  func.func @transform_0(%arg0: i32) -> (i32, i32) {
    %c0_i32 = arith.constant 0 : i32
    %c0_i32_0 = arith.constant 0 : i32
    %c0_i32_1 = arith.constant 0 : i32
    return %c0_i32, %c0_i32_0 : i32, i32
  }
  func.func @transform_1(%arg0: i32) -> (i32, i32) {
    %c0_i32 = arith.constant 0 : i32
    %c0_i32_0 = arith.constant 0 : i32
    return %c0_i32, %arg0 : i32, i32
  }
  func.func @transform_2(%arg0: i32) -> (i32, i32) {
    %c0_i32 = arith.constant 0 : i32
    %c0_i32_0 = arith.constant 0 : i32
    return %c0_i32, %arg0 : i32, i32
  }
  func.func @transform_3(%arg0: i32) -> (i32, i32) {
    %c0_i32 = arith.constant 0 : i32
    %c0_i32_0 = arith.constant 0 : i32
    return %c0_i32, %arg0 : i32, i32
  }
}

module attributes {stable_mosaic.version = 11 : i64} {
  func.func @kernel(%arg0: i32, %arg1: memref<7x8x128xf32, #tpu.memory_space<vmem>>, %arg2: memref<2x8x128xf32, #tpu.memory_space<vmem>>, %arg3: memref<2x8x128xf32, #tpu.memory_space<vmem>>, %arg4: memref<128x512xbf16, #tpu.memory_space<vmem>>, %arg5: memref<128x512xbf16, #tpu.memory_space<vmem>>, %arg6: memref<1x512xf32, #tpu.memory_space<vmem>>, %arg7: memref<128x512xbf16, #tpu.memory_space<vmem>>, %arg8: memref<128x512xbf16, #tpu.memory_space<vmem>>, %arg9: memref<1x512xf32, #tpu.memory_space<vmem>>, %arg10: memref<7x8x128xf32, #tpu.memory_space<vmem>>, %arg11: memref<2x8x128xf32, #tpu.memory_space<vmem>>, %arg12: memref<2x8x128xf32, #tpu.memory_space<vmem>>, %arg13: memref<7x8x512xf32, #tpu.memory_space<vmem>>, %arg14: memref<8x128xf32, #tpu.memory_space<vmem>>, %arg15: memref<8x128xf32, #tpu.memory_space<vmem>>) attributes {dimension_semantics = [#tpu.dimension_semantics<arbitrary>], iteration_bounds = array<i64: 1>, scalar_prefetch = 0 : i64, scratch_operands = 3 : i64, tpu.core_type = #tpu.core_type<tc>, window_params = [{pipeline_mode = #tpu.pipeline_mode<synchronous>, transform_indices = @transform_0, window_bounds = array<i64: 7, 8, 128>}, {pipeline_mode = #tpu.pipeline_mode<synchronous>, transform_indices = @transform_1, window_bounds = array<i64: 2, 8, 128>}, {pipeline_mode = #tpu.pipeline_mode<synchronous>, transform_indices = @transform_2, window_bounds = array<i64: 2, 8, 128>}, {pipeline_mode = #tpu.pipeline_mode<synchronous>, transform_indices = @transform_3, window_bounds = array<i64: 128, 512>}, {pipeline_mode = #tpu.pipeline_mode<synchronous>, transform_indices = @transform_4, window_bounds = array<i64: 128, 512>}, {pipeline_mode = #tpu.pipeline_mode<synchronous>, transform_indices = @transform_5, window_bounds = array<i64: 1, 512>}, {pipeline_mode = #tpu.pipeline_mode<synchronous>, transform_indices = @transform_6, window_bounds = array<i64: 128, 512>}, {pipeline_mode = #tpu.pipeline_mode<synchronous>, transform_indices = @transform_7, window_bounds = array<i64: 128, 512>}, {pipeline_mode = #tpu.pipeline_mode<synchronous>, transform_indices = @transform_8, window_bounds = array<i64: 1, 512>}, {pipeline_mode = #tpu.pipeline_mode<synchronous>, transform_indices = @transform_9, window_bounds = array<i64: 7, 8, 128>}, {pipeline_mode = #tpu.pipeline_mode<synchronous>, transform_indices = @transform_10, window_bounds = array<i64: 2, 8, 128>}, {pipeline_mode = #tpu.pipeline_mode<synchronous>, transform_indices = @transform_11, window_bounds = array<i64: 2, 8, 128>}]} {
    %c0 = arith.constant 0 : index
    %c0_0 = arith.constant 0 : index
    %c0_1 = arith.constant 0 : index
    %0 = vector.load %arg1[%c0, %c0_0, %c0_1] : memref<7x8x128xf32, #tpu.memory_space<vmem>>, vector<7x8x128xf32>
    %1 = vector.shape_cast %0 : vector<7x8x128xf32> to vector<56x128xf32>
    %2 = arith.truncf %1 : vector<56x128xf32> to vector<56x128xbf16>
    %c0_2 = arith.constant 0 : index
    %c0_3 = arith.constant 0 : index
    %3 = vector.load %arg4[%c0_2, %c0_3] : memref<128x512xbf16, #tpu.memory_space<vmem>>, vector<128x512xbf16>
    %cst = arith.constant dense<0.000000e+00> : vector<56x512xf32>
    %4 = tpu.matmul %2, %3, %cst {dimension_numbers = #tpu.dot_dimension_numbers<[1], [0], [0], [1], [0, 0, 1, 1], [], []>} : vector<56x128xbf16>, vector<128x512xbf16>, vector<56x512xf32> -> vector<56x512xf32>
    %c0_4 = arith.constant 0 : index
    %c0_5 = arith.constant 0 : index
    %5 = vector.load %arg6[%c0_4, %c0_5] : memref<1x512xf32, #tpu.memory_space<vmem>>, vector<1x512xf32>
    %6 = vector.broadcast %5 : vector<1x512xf32> to vector<56x512xf32>
    %7 = arith.addf %4, %6 : vector<56x512xf32>
    %8 = vector.shape_cast %7 : vector<56x512xf32> to vector<7x8x512xf32>
    %c0_6 = arith.constant 0 : index
    %c0_7 = arith.constant 0 : index
    %c0_8 = arith.constant 0 : index
    %9 = vector.load %arg13[%c0_6, %c0_7, %c0_8] : memref<7x8x512xf32, #tpu.memory_space<vmem>>, vector<7x8x512xf32>
    tpu.vector_store %arg13[%c0_6, %c0_7, %c0_8], %8 {strides = array<i32>} : memref<7x8x512xf32, #tpu.memory_space<vmem>>, vector<7x8x512xf32>,
    %c0_9 = arith.constant 0 : index
    %c0_10 = arith.constant 0 : index
    %c0_11 = arith.constant 0 : index
    %10 = vector.load %arg2[%c0_9, %c0_10, %c0_11] : memref<2x8x128xf32, #tpu.memory_space<vmem>>, vector<1x8x128xf32>
    %11 = vector.shape_cast %10 : vector<1x8x128xf32> to vector<8x128xf32>
    %c0_12 = arith.constant 0 : index
    %c0_13 = arith.constant 0 : index
    %12 = vector.load %arg14[%c0_12, %c0_13] : memref<8x128xf32, #tpu.memory_space<vmem>>, vector<8x128xf32>
    tpu.vector_store %arg14[%c0_12, %c0_13], %11 {strides = array<i32>} : memref<8x128xf32, #tpu.memory_space<vmem>>, vector<8x128xf32>,
    %c0_14 = arith.constant 0 : index
    %c0_15 = arith.constant 0 : index
    %c0_16 = arith.constant 0 : index
    %13 = vector.load %arg3[%c0_14, %c0_15, %c0_16] : memref<2x8x128xf32, #tpu.memory_space<vmem>>, vector<1x8x128xf32>
    %14 = vector.shape_cast %13 : vector<1x8x128xf32> to vector<8x128xf32>
    %c0_17 = arith.constant 0 : index
    %c0_18 = arith.constant 0 : index
    %15 = vector.load %arg15[%c0_17, %c0_18] : memref<8x128xf32, #tpu.memory_space<vmem>>, vector<8x128xf32>
    tpu.vector_store %arg15[%c0_17, %c0_18], %14 {strides = array<i32>} : memref<8x128xf32, #tpu.memory_space<vmem>>, vector<8x128xf32>,
    %c0_19 = arith.constant 0 : index
    %c0_20 = arith.constant 0 : index
    %16 = vector.load %arg5[%c0_19, %c0_20] : memref<128x512xbf16, #tpu.memory_space<vmem>>, vector<128x512xbf16>
    %c0_i32 = arith.constant 0 : i32
    %c0_21 = arith.constant 0 : index
    %c0_22 = arith.constant 0 : index
    %17 = vector.load %arg14[%c0_21, %c0_22] : memref<8x128xf32, #tpu.memory_space<vmem>>, vector<8x128xf32>
    %c0_23 = arith.constant 0 : index
    %c0_24 = arith.constant 0 : index
    %18 = vector.load %arg15[%c0_23, %c0_24] : memref<8x128xf32, #tpu.memory_space<vmem>>, vector<8x128xf32>
    %19 = arith.index_cast %c0_i32 : i32 to index
    %c0_25 = arith.constant 0 : index
    %c0_26 = arith.constant 0 : index
    %20 = vector.load %arg13[%19, %c0_25, %c0_26] : memref<7x8x512xf32, #tpu.memory_space<vmem>>, vector<1x8x512xf32>
    %21 = vector.shape_cast %20 : vector<1x8x512xf32> to vector<8x512xf32>
    %22 = arith.truncf %17 : vector<8x128xf32> to vector<8x128xbf16>
    %cst_27 = arith.constant dense<0.000000e+00> : vector<8x512xf32>
    %23 = tpu.matmul %22, %16, %cst_27 {dimension_numbers = #tpu.dot_dimension_numbers<[1], [0], [0], [1], [0, 0, 1, 1], [], []>} : vector<8x128xbf16>, vector<128x512xbf16>, vector<8x512xf32> -> vector<8x512xf32>
    %24 = arith.addf %21, %23 : vector<8x512xf32>
    %25 = vector.extract_strided_slice %24 {offsets = [0, 0], sizes = [8, 128], strides = [1, 1]} : vector<8x512xf32> to vector<8x128xf32>
    %26 = arith.negf %25 : vector<8x128xf32>
    %27 = math.exp %26 : vector<8x128xf32>
    %cst_28 = arith.constant 1.000000e+00 : f32
    %28 = vector.broadcast %cst_28 : f32 to vector<8x128xf32>
    %29 = arith.addf %28, %27 : vector<8x128xf32>
    %30 = arith.divf %28, %29 : vector<8x128xf32>
    %31 = vector.extract_strided_slice %24 {offsets = [0, 128], sizes = [8, 128], strides = [1, 1]} : vector<8x512xf32> to vector<8x128xf32>
    %32 = arith.negf %31 : vector<8x128xf32>
    %33 = math.exp %32 : vector<8x128xf32>
    %cst_29 = arith.constant 1.000000e+00 : f32
    %34 = vector.broadcast %cst_29 : f32 to vector<8x128xf32>
    %35 = arith.addf %34, %33 : vector<8x128xf32>
    %36 = arith.divf %34, %35 : vector<8x128xf32>
    %37 = vector.extract_strided_slice %24 {offsets = [0, 256], sizes = [8, 128], strides = [1, 1]} : vector<8x512xf32> to vector<8x128xf32>
    %38 = math.tanh %37 : vector<8x128xf32>
    %39 = vector.extract_strided_slice %24 {offsets = [0, 384], sizes = [8, 128], strides = [1, 1]} : vector<8x512xf32> to vector<8x128xf32>
    %40 = arith.negf %39 : vector<8x128xf32>
    %41 = math.exp %40 : vector<8x128xf32>
    %cst_30 = arith.constant 1.000000e+00 : f32
    %42 = vector.broadcast %cst_30 : f32 to vector<8x128xf32>
    %43 = arith.addf %42, %41 : vector<8x128xf32>
    %44 = arith.divf %42, %43 : vector<8x128xf32>
    %45 = arith.mulf %36, %18 : vector<8x128xf32>
    %46 = arith.mulf %30, %38 : vector<8x128xf32>
    %47 = arith.addf %45, %46 : vector<8x128xf32>
    %48 = math.tanh %47 : vector<8x128xf32>
    %49 = arith.mulf %44, %48 : vector<8x128xf32>
    %c0_31 = arith.constant 0 : index
    %c0_32 = arith.constant 0 : index
    %50 = vector.load %arg14[%c0_31, %c0_32] : memref<8x128xf32, #tpu.memory_space<vmem>>, vector<8x128xf32>
    tpu.vector_store %arg14[%c0_31, %c0_32], %49 {strides = array<i32>} : memref<8x128xf32, #tpu.memory_space<vmem>>, vector<8x128xf32>,
    %c0_33 = arith.constant 0 : index
    %c0_34 = arith.constant 0 : index
    %51 = vector.load %arg15[%c0_33, %c0_34] : memref<8x128xf32, #tpu.memory_space<vmem>>, vector<8x128xf32>
    tpu.vector_store %arg15[%c0_33, %c0_34], %47 {strides = array<i32>} : memref<8x128xf32, #tpu.memory_space<vmem>>, vector<8x128xf32>,
    %52 = arith.index_cast %c0_i32 : i32 to index
    %c0_35 = arith.constant 0 : index
    %c0_36 = arith.constant 0 : index
    %53 = vector.load %arg10[%52, %c0_35, %c0_36] : memref<7x8x128xf32, #tpu.memory_space<vmem>>, vector<1x8x128xf32>
    %54 = vector.shape_cast %53 : vector<1x8x128xf32> to vector<8x128xf32>
    %55 = vector.shape_cast %49 : vector<8x128xf32> to vector<1x8x128xf32>
    tpu.vector_store %arg10[%52, %c0_35, %c0_36], %55 {strides = array<i32>} : memref<7x8x128xf32, #tpu.memory_space<vmem>>, vector<1x8x128xf32>,
    %c1_i32 = arith.constant 1 : i32
    %c0_37 = arith.constant 0 : index
    %c0_38 = arith.constant 0 : index
    %56 = vector.load %arg14[%c0_37, %c0_38] : memref<8x128xf32, #tpu.memory_space<vmem>>, vector<8x128xf32>
    %c0_39 = arith.constant 0 : index
    %c0_40 = arith.constant 0 : index
    %57 = vector.load %arg15[%c0_39, %c0_40] : memref<8x128xf32, #tpu.memory_space<vmem>>, vector<8x128xf32>
    %58 = arith.index_cast %c1_i32 : i32 to index
    %c0_41 = arith.constant 0 : index
    %c0_42 = arith.constant 0 : index
    %59 = vector.load %arg13[%58, %c0_41, %c0_42] : memref<7x8x512xf32, #tpu.memory_space<vmem>>, vector<1x8x512xf32>
    %60 = vector.shape_cast %59 : vector<1x8x512xf32> to vector<8x512xf32>
    %61 = arith.truncf %56 : vector<8x128xf32> to vector<8x128xbf16>
    %cst_43 = arith.constant dense<0.000000e+00> : vector<8x512xf32>
    %62 = tpu.matmul %61, %16, %cst_43 {dimension_numbers = #tpu.dot_dimension_numbers<[1], [0], [0], [1], [0, 0, 1, 1], [], []>} : vector<8x128xbf16>, vector<128x512xbf16>, vector<8x512xf32> -> vector<8x512xf32>
    %63 = arith.addf %60, %62 : vector<8x512xf32>
    %64 = vector.extract_strided_slice %63 {offsets = [0, 0], sizes = [8, 128], strides = [1, 1]} : vector<8x512xf32> to vector<8x128xf32>
    %65 = arith.negf %64 : vector<8x128xf32>
    %66 = math.exp %65 : vector<8x128xf32>
    %cst_44 = arith.constant 1.000000e+00 : f32
    %67 = vector.broadcast %cst_44 : f32 to vector<8x128xf32>
    %68 = arith.addf %67, %66 : vector<8x128xf32>
    %69 = arith.divf %67, %68 : vector<8x128xf32>
    %70 = vector.extract_strided_slice %63 {offsets = [0, 128], sizes = [8, 128], strides = [1, 1]} : vector<8x512xf32> to vector<8x128xf32>
    %71 = arith.negf %70 : vector<8x128xf32>
    %72 = math.exp %71 : vector<8x128xf32>
    %cst_45 = arith.constant 1.000000e+00 : f32
    %73 = vector.broadcast %cst_45 : f32 to vector<8x128xf32>
    %74 = arith.addf %73, %72 : vector<8x128xf32>
    %75 = arith.divf %73, %74 : vector<8x128xf32>
    %76 = vector.extract_strided_slice %63 {offsets = [0, 256], sizes = [8, 128], strides = [1, 1]} : vector<8x512xf32> to vector<8x128xf32>
    %77 = math.tanh %76 : vector<8x128xf32>
    %78 = vector.extract_strided_slice %63 {offsets = [0, 384], sizes = [8, 128], strides = [1, 1]} : vector<8x512xf32> to vector<8x128xf32>
    %79 = arith.negf %78 : vector<8x128xf32>
    %80 = math.exp %79 : vector<8x128xf32>
    %cst_46 = arith.constant 1.000000e+00 : f32
    %81 = vector.broadcast %cst_46 : f32 to vector<8x128xf32>
    %82 = arith.addf %81, %80 : vector<8x128xf32>
    %83 = arith.divf %81, %82 : vector<8x128xf32>
    %84 = arith.mulf %75, %57 : vector<8x128xf32>
    %85 = arith.mulf %69, %77 : vector<8x128xf32>
    %86 = arith.addf %84, %85 : vector<8x128xf32>
    %87 = math.tanh %86 : vector<8x128xf32>
    %88 = arith.mulf %83, %87 : vector<8x128xf32>
    %c0_47 = arith.constant 0 : index
    %c0_48 = arith.constant 0 : index
    %89 = vector.load %arg14[%c0_47, %c0_48] : memref<8x128xf32, #tpu.memory_space<vmem>>, vector<8x128xf32>
    tpu.vector_store %arg14[%c0_47, %c0_48], %88 {strides = array<i32>} : memref<8x128xf32, #tpu.memory_space<vmem>>, vector<8x128xf32>,
    %c0_49 = arith.constant 0 : index
    %c0_50 = arith.constant 0 : index
    %90 = vector.load %arg15[%c0_49, %c0_50] : memref<8x128xf32, #tpu.memory_space<vmem>>, vector<8x128xf32>
    tpu.vector_store %arg15[%c0_49, %c0_50], %86 {strides = array<i32>} : memref<8x128xf32, #tpu.memory_space<vmem>>, vector<8x128xf32>,
    %91 = arith.index_cast %c1_i32 : i32 to index
    %c0_51 = arith.constant 0 : index
    %c0_52 = arith.constant 0 : index
    %92 = vector.load %arg10[%91, %c0_51, %c0_52] : memref<7x8x128xf32, #tpu.memory_space<vmem>>, vector<1x8x128xf32>
    %93 = vector.shape_cast %92 : vector<1x8x128xf32> to vector<8x128xf32>
    %94 = vector.shape_cast %88 : vector<8x128xf32> to vector<1x8x128xf32>
    tpu.vector_store %arg10[%91, %c0_51, %c0_52], %94 {strides = array<i32>} : memref<7x8x128xf32, #tpu.memory_space<vmem>>, vector<1x8x128xf32>,
    %c2_i32 = arith.constant 2 : i32
    %c0_53 = arith.constant 0 : index
    %c0_54 = arith.constant 0 : index
    %95 = vector.load %arg14[%c0_53, %c0_54] : memref<8x128xf32, #tpu.memory_space<vmem>>, vector<8x128xf32>
    %c0_55 = arith.constant 0 : index
    %c0_56 = arith.constant 0 : index
    %96 = vector.load %arg15[%c0_55, %c0_56] : memref<8x128xf32, #tpu.memory_space<vmem>>, vector<8x128xf32>
    %97 = arith.index_cast %c2_i32 : i32 to index
    %c0_57 = arith.constant 0 : index
    %c0_58 = arith.constant 0 : index
    %98 = vector.load %arg13[%97, %c0_57, %c0_58] : memref<7x8x512xf32, #tpu.memory_space<vmem>>, vector<1x8x512xf32>
    %99 = vector.shape_cast %98 : vector<1x8x512xf32> to vector<8x512xf32>
    %100 = arith.truncf %95 : vector<8x128xf32> to vector<8x128xbf16>
    %cst_59 = arith.constant dense<0.000000e+00> : vector<8x512xf32>
    %101 = tpu.matmul %100, %16, %cst_59 {dimension_numbers = #tpu.dot_dimension_numbers<[1], [0], [0], [1], [0, 0, 1, 1], [], []>} : vector<8x128xbf16>, vector<128x512xbf16>, vector<8x512xf32> -> vector<8x512xf32>
    %102 = arith.addf %99, %101 : vector<8x512xf32>
    %103 = vector.extract_strided_slice %102 {offsets = [0, 0], sizes = [8, 128], strides = [1, 1]} : vector<8x512xf32> to vector<8x128xf32>
    %104 = arith.negf %103 : vector<8x128xf32>
    %105 = math.exp %104 : vector<8x128xf32>
    %cst_60 = arith.constant 1.000000e+00 : f32
    %106 = vector.broadcast %cst_60 : f32 to vector<8x128xf32>
    %107 = arith.addf %106, %105 : vector<8x128xf32>
    %108 = arith.divf %106, %107 : vector<8x128xf32>
    %109 = vector.extract_strided_slice %102 {offsets = [0, 128], sizes = [8, 128], strides = [1, 1]} : vector<8x512xf32> to vector<8x128xf32>
    %110 = arith.negf %109 : vector<8x128xf32>
    %111 = math.exp %110 : vector<8x128xf32>
    %cst_61 = arith.constant 1.000000e+00 : f32
    %112 = vector.broadcast %cst_61 : f32 to vector<8x128xf32>
    %113 = arith.addf %112, %111 : vector<8x128xf32>
    %114 = arith.divf %112, %113 : vector<8x128xf32>
    %115 = vector.extract_strided_slice %102 {offsets = [0, 256], sizes = [8, 128], strides = [1, 1]} : vector<8x512xf32> to vector<8x128xf32>
    %116 = math.tanh %115 : vector<8x128xf32>
    %117 = vector.extract_strided_slice %102 {offsets = [0, 384], sizes = [8, 128], strides = [1, 1]} : vector<8x512xf32> to vector<8x128xf32>
    %118 = arith.negf %117 : vector<8x128xf32>
    %119 = math.exp %118 : vector<8x128xf32>
    %cst_62 = arith.constant 1.000000e+00 : f32
    %120 = vector.broadcast %cst_62 : f32 to vector<8x128xf32>
    %121 = arith.addf %120, %119 : vector<8x128xf32>
    %122 = arith.divf %120, %121 : vector<8x128xf32>
    %123 = arith.mulf %114, %96 : vector<8x128xf32>
    %124 = arith.mulf %108, %116 : vector<8x128xf32>
    %125 = arith.addf %123, %124 : vector<8x128xf32>
    %126 = math.tanh %125 : vector<8x128xf32>
    %127 = arith.mulf %122, %126 : vector<8x128xf32>
    %c0_63 = arith.constant 0 : index
    %c0_64 = arith.constant 0 : index
    %128 = vector.load %arg14[%c0_63, %c0_64] : memref<8x128xf32, #tpu.memory_space<vmem>>, vector<8x128xf32>
    tpu.vector_store %arg14[%c0_63, %c0_64], %127 {strides = array<i32>} : memref<8x128xf32, #tpu.memory_space<vmem>>, vector<8x128xf32>,
    %c0_65 = arith.constant 0 : index
    %c0_66 = arith.constant 0 : index
    %129 = vector.load %arg15[%c0_65, %c0_66] : memref<8x128xf32, #tpu.memory_space<vmem>>, vector<8x128xf32>
    tpu.vector_store %arg15[%c0_65, %c0_66], %125 {strides = array<i32>} : memref<8x128xf32, #tpu.memory_space<vmem>>, vector<8x128xf32>,
    %130 = arith.index_cast %c2_i32 : i32 to index
    %c0_67 = arith.constant 0 : index
    %c0_68 = arith.constant 0 : index
    %131 = vector.load %arg10[%130, %c0_67, %c0_68] : memref<7x8x128xf32, #tpu.memory_space<vmem>>, vector<1x8x128xf32>
    %132 = vector.shape_cast %131 : vector<1x8x128xf32> to vector<8x128xf32>
    %133 = vector.shape_cast %127 : vector<8x128xf32> to vector<1x8x128xf32>
    tpu.vector_store %arg10[%130, %c0_67, %c0_68], %133 {strides = array<i32>} : memref<7x8x128xf32, #tpu.memory_space<vmem>>, vector<1x8x128xf32>,
    %c3_i32 = arith.constant 3 : i32
    %c0_69 = arith.constant 0 : index
    %c0_70 = arith.constant 0 : index
    %134 = vector.load %arg14[%c0_69, %c0_70] : memref<8x128xf32, #tpu.memory_space<vmem>>, vector<8x128xf32>
    %c0_71 = arith.constant 0 : index
    %c0_72 = arith.constant 0 : index
    %135 = vector.load %arg15[%c0_71, %c0_72] : memref<8x128xf32, #tpu.memory_space<vmem>>, vector<8x128xf32>
    %136 = arith.index_cast %c3_i32 : i32 to index
    %c0_73 = arith.constant 0 : index
    %c0_74 = arith.constant 0 : index
    %137 = vector.load %arg13[%136, %c0_73, %c0_74] : memref<7x8x512xf32, #tpu.memory_space<vmem>>, vector<1x8x512xf32>
    %138 = vector.shape_cast %137 : vector<1x8x512xf32> to vector<8x512xf32>
    %139 = arith.truncf %134 : vector<8x128xf32> to vector<8x128xbf16>
    %cst_75 = arith.constant dense<0.000000e+00> : vector<8x512xf32>
    %140 = tpu.matmul %139, %16, %cst_75 {dimension_numbers = #tpu.dot_dimension_numbers<[1], [0], [0], [1], [0, 0, 1, 1], [], []>} : vector<8x128xbf16>, vector<128x512xbf16>, vector<8x512xf32> -> vector<8x512xf32>
    %141 = arith.addf %138, %140 : vector<8x512xf32>
    %142 = vector.extract_strided_slice %141 {offsets = [0, 0], sizes = [8, 128], strides = [1, 1]} : vector<8x512xf32> to vector<8x128xf32>
    %143 = arith.negf %142 : vector<8x128xf32>
    %144 = math.exp %143 : vector<8x128xf32>
    %cst_76 = arith.constant 1.000000e+00 : f32
    %145 = vector.broadcast %cst_76 : f32 to vector<8x128xf32>
    %146 = arith.addf %145, %144 : vector<8x128xf32>
    %147 = arith.divf %145, %146 : vector<8x128xf32>
    %148 = vector.extract_strided_slice %141 {offsets = [0, 128], sizes = [8, 128], strides = [1, 1]} : vector<8x512xf32> to vector<8x128xf32>
    %149 = arith.negf %148 : vector<8x128xf32>
    %150 = math.exp %149 : vector<8x128xf32>
    %cst_77 = arith.constant 1.000000e+00 : f32
    %151 = vector.broadcast %cst_77 : f32 to vector<8x128xf32>
    %152 = arith.addf %151, %150 : vector<8x128xf32>
    %153 = arith.divf %151, %152 : vector<8x128xf32>
    %154 = vector.extract_strided_slice %141 {offsets = [0, 256], sizes = [8, 128], strides = [1, 1]} : vector<8x512xf32> to vector<8x128xf32>
    %155 = math.tanh %154 : vector<8x128xf32>
    %156 = vector.extract_strided_slice %141 {offsets = [0, 384], sizes = [8, 128], strides = [1, 1]} : vector<8x512xf32> to vector<8x128xf32>
    %157 = arith.negf %156 : vector<8x128xf32>
    %158 = math.exp %157 : vector<8x128xf32>
    %cst_78 = arith.constant 1.000000e+00 : f32
    %159 = vector.broadcast %cst_78 : f32 to vector<8x128xf32>
    %160 = arith.addf %159, %158 : vector<8x128xf32>
    %161 = arith.divf %159, %160 : vector<8x128xf32>
    %162 = arith.mulf %153, %135 : vector<8x128xf32>
    %163 = arith.mulf %147, %155 : vector<8x128xf32>
    %164 = arith.addf %162, %163 : vector<8x128xf32>
    %165 = math.tanh %164 : vector<8x128xf32>
    %166 = arith.mulf %161, %165 : vector<8x128xf32>
    %c0_79 = arith.constant 0 : index
    %c0_80 = arith.constant 0 : index
    %167 = vector.load %arg14[%c0_79, %c0_80] : memref<8x128xf32, #tpu.memory_space<vmem>>, vector<8x128xf32>
    tpu.vector_store %arg14[%c0_79, %c0_80], %166 {strides = array<i32>} : memref<8x128xf32, #tpu.memory_space<vmem>>, vector<8x128xf32>,
    %c0_81 = arith.constant 0 : index
    %c0_82 = arith.constant 0 : index
    %168 = vector.load %arg15[%c0_81, %c0_82] : memref<8x128xf32, #tpu.memory_space<vmem>>, vector<8x128xf32>
    tpu.vector_store %arg15[%c0_81, %c0_82], %164 {strides = array<i32>} : memref<8x128xf32, #tpu.memory_space<vmem>>, vector<8x128xf32>,
    %169 = arith.index_cast %c3_i32 : i32 to index
    %c0_83 = arith.constant 0 : index
    %c0_84 = arith.constant 0 : index
    %170 = vector.load %arg10[%169, %c0_83, %c0_84] : memref<7x8x128xf32, #tpu.memory_space<vmem>>, vector<1x8x128xf32>
    %171 = vector.shape_cast %170 : vector<1x8x128xf32> to vector<8x128xf32>
    %172 = vector.shape_cast %166 : vector<8x128xf32> to vector<1x8x128xf32>
    tpu.vector_store %arg10[%169, %c0_83, %c0_84], %172 {strides = array<i32>} : memref<7x8x128xf32, #tpu.memory_space<vmem>>, vector<1x8x128xf32>,
    %c4_i32 = arith.constant 4 : i32
    %c0_85 = arith.constant 0 : index
    %c0_86 = arith.constant 0 : index
    %173 = vector.load %arg14[%c0_85, %c0_86] : memref<8x128xf32, #tpu.memory_space<vmem>>, vector<8x128xf32>
    %c0_87 = arith.constant 0 : index
    %c0_88 = arith.constant 0 : index
    %174 = vector.load %arg15[%c0_87, %c0_88] : memref<8x128xf32, #tpu.memory_space<vmem>>, vector<8x128xf32>
    %175 = arith.index_cast %c4_i32 : i32 to index
    %c0_89 = arith.constant 0 : index
    %c0_90 = arith.constant 0 : index
    %176 = vector.load %arg13[%175, %c0_89, %c0_90] : memref<7x8x512xf32, #tpu.memory_space<vmem>>, vector<1x8x512xf32>
    %177 = vector.shape_cast %176 : vector<1x8x512xf32> to vector<8x512xf32>
    %178 = arith.truncf %173 : vector<8x128xf32> to vector<8x128xbf16>
    %cst_91 = arith.constant dense<0.000000e+00> : vector<8x512xf32>
    %179 = tpu.matmul %178, %16, %cst_91 {dimension_numbers = #tpu.dot_dimension_numbers<[1], [0], [0], [1], [0, 0, 1, 1], [], []>} : vector<8x128xbf16>, vector<128x512xbf16>, vector<8x512xf32> -> vector<8x512xf32>
    %180 = arith.addf %177, %179 : vector<8x512xf32>
    %181 = vector.extract_strided_slice %180 {offsets = [0, 0], sizes = [8, 128], strides = [1, 1]} : vector<8x512xf32> to vector<8x128xf32>
    %182 = arith.negf %181 : vector<8x128xf32>
    %183 = math.exp %182 : vector<8x128xf32>
    %cst_92 = arith.constant 1.000000e+00 : f32
    %184 = vector.broadcast %cst_92 : f32 to vector<8x128xf32>
    %185 = arith.addf %184, %183 : vector<8x128xf32>
    %186 = arith.divf %184, %185 : vector<8x128xf32>
    %187 = vector.extract_strided_slice %180 {offsets = [0, 128], sizes = [8, 128], strides = [1, 1]} : vector<8x512xf32> to vector<8x128xf32>
    %188 = arith.negf %187 : vector<8x128xf32>
    %189 = math.exp %188 : vector<8x128xf32>
    %cst_93 = arith.constant 1.000000e+00 : f32
    %190 = vector.broadcast %cst_93 : f32 to vector<8x128xf32>
    %191 = arith.addf %190, %189 : vector<8x128xf32>
    %192 = arith.divf %190, %191 : vector<8x128xf32>
    %193 = vector.extract_strided_slice %180 {offsets = [0, 256], sizes = [8, 128], strides = [1, 1]} : vector<8x512xf32> to vector<8x128xf32>
    %194 = math.tanh %193 : vector<8x128xf32>
    %195 = vector.extract_strided_slice %180 {offsets = [0, 384], sizes = [8, 128], strides = [1, 1]} : vector<8x512xf32> to vector<8x128xf32>
    %196 = arith.negf %195 : vector<8x128xf32>
    %197 = math.exp %196 : vector<8x128xf32>
    %cst_94 = arith.constant 1.000000e+00 : f32
    %198 = vector.broadcast %cst_94 : f32 to vector<8x128xf32>
    %199 = arith.addf %198, %197 : vector<8x128xf32>
    %200 = arith.divf %198, %199 : vector<8x128xf32>
    %201 = arith.mulf %192, %174 : vector<8x128xf32>
    %202 = arith.mulf %186, %194 : vector<8x128xf32>
    %203 = arith.addf %201, %202 : vector<8x128xf32>
    %204 = math.tanh %203 : vector<8x128xf32>
    %205 = arith.mulf %200, %204 : vector<8x128xf32>
    %c0_95 = arith.constant 0 : index
    %c0_96 = arith.constant 0 : index
    %206 = vector.load %arg14[%c0_95, %c0_96] : memref<8x128xf32, #tpu.memory_space<vmem>>, vector<8x128xf32>
    tpu.vector_store %arg14[%c0_95, %c0_96], %205 {strides = array<i32>} : memref<8x128xf32, #tpu.memory_space<vmem>>, vector<8x128xf32>,
    %c0_97 = arith.constant 0 : index
    %c0_98 = arith.constant 0 : index
    %207 = vector.load %arg15[%c0_97, %c0_98] : memref<8x128xf32, #tpu.memory_space<vmem>>, vector<8x128xf32>
    tpu.vector_store %arg15[%c0_97, %c0_98], %203 {strides = array<i32>} : memref<8x128xf32, #tpu.memory_space<vmem>>, vector<8x128xf32>,
    %208 = arith.index_cast %c4_i32 : i32 to index
    %c0_99 = arith.constant 0 : index
    %c0_100 = arith.constant 0 : index
    %209 = vector.load %arg10[%208, %c0_99, %c0_100] : memref<7x8x128xf32, #tpu.memory_space<vmem>>, vector<1x8x128xf32>
    %210 = vector.shape_cast %209 : vector<1x8x128xf32> to vector<8x128xf32>
    %211 = vector.shape_cast %205 : vector<8x128xf32> to vector<1x8x128xf32>
    tpu.vector_store %arg10[%208, %c0_99, %c0_100], %211 {strides = array<i32>} : memref<7x8x128xf32, #tpu.memory_space<vmem>>, vector<1x8x128xf32>,
    %c5_i32 = arith.constant 5 : i32
    %c0_101 = arith.constant 0 : index
    %c0_102 = arith.constant 0 : index
    %212 = vector.load %arg14[%c0_101, %c0_102] : memref<8x128xf32, #tpu.memory_space<vmem>>, vector<8x128xf32>
    %c0_103 = arith.constant 0 : index
    %c0_104 = arith.constant 0 : index
    %213 = vector.load %arg15[%c0_103, %c0_104] : memref<8x128xf32, #tpu.memory_space<vmem>>, vector<8x128xf32>
    %214 = arith.index_cast %c5_i32 : i32 to index
    %c0_105 = arith.constant 0 : index
    %c0_106 = arith.constant 0 : index
    %215 = vector.load %arg13[%214, %c0_105, %c0_106] : memref<7x8x512xf32, #tpu.memory_space<vmem>>, vector<1x8x512xf32>
    %216 = vector.shape_cast %215 : vector<1x8x512xf32> to vector<8x512xf32>
    %217 = arith.truncf %212 : vector<8x128xf32> to vector<8x128xbf16>
    %cst_107 = arith.constant dense<0.000000e+00> : vector<8x512xf32>
    %218 = tpu.matmul %217, %16, %cst_107 {dimension_numbers = #tpu.dot_dimension_numbers<[1], [0], [0], [1], [0, 0, 1, 1], [], []>} : vector<8x128xbf16>, vector<128x512xbf16>, vector<8x512xf32> -> vector<8x512xf32>
    %219 = arith.addf %216, %218 : vector<8x512xf32>
    %220 = vector.extract_strided_slice %219 {offsets = [0, 0], sizes = [8, 128], strides = [1, 1]} : vector<8x512xf32> to vector<8x128xf32>
    %221 = arith.negf %220 : vector<8x128xf32>
    %222 = math.exp %221 : vector<8x128xf32>
    %cst_108 = arith.constant 1.000000e+00 : f32
    %223 = vector.broadcast %cst_108 : f32 to vector<8x128xf32>
    %224 = arith.addf %223, %222 : vector<8x128xf32>
    %225 = arith.divf %223, %224 : vector<8x128xf32>
    %226 = vector.extract_strided_slice %219 {offsets = [0, 128], sizes = [8, 128], strides = [1, 1]} : vector<8x512xf32> to vector<8x128xf32>
    %227 = arith.negf %226 : vector<8x128xf32>
    %228 = math.exp %227 : vector<8x128xf32>
    %cst_109 = arith.constant 1.000000e+00 : f32
    %229 = vector.broadcast %cst_109 : f32 to vector<8x128xf32>
    %230 = arith.addf %229, %228 : vector<8x128xf32>
    %231 = arith.divf %229, %230 : vector<8x128xf32>
    %232 = vector.extract_strided_slice %219 {offsets = [0, 256], sizes = [8, 128], strides = [1, 1]} : vector<8x512xf32> to vector<8x128xf32>
    %233 = math.tanh %232 : vector<8x128xf32>
    %234 = vector.extract_strided_slice %219 {offsets = [0, 384], sizes = [8, 128], strides = [1, 1]} : vector<8x512xf32> to vector<8x128xf32>
    %235 = arith.negf %234 : vector<8x128xf32>
    %236 = math.exp %235 : vector<8x128xf32>
    %cst_110 = arith.constant 1.000000e+00 : f32
    %237 = vector.broadcast %cst_110 : f32 to vector<8x128xf32>
    %238 = arith.addf %237, %236 : vector<8x128xf32>
    %239 = arith.divf %237, %238 : vector<8x128xf32>
    %240 = arith.mulf %231, %213 : vector<8x128xf32>
    %241 = arith.mulf %225, %233 : vector<8x128xf32>
    %242 = arith.addf %240, %241 : vector<8x128xf32>
    %243 = math.tanh %242 : vector<8x128xf32>
    %244 = arith.mulf %239, %243 : vector<8x128xf32>
    %c0_111 = arith.constant 0 : index
    %c0_112 = arith.constant 0 : index
    %245 = vector.load %arg14[%c0_111, %c0_112] : memref<8x128xf32, #tpu.memory_space<vmem>>, vector<8x128xf32>
    tpu.vector_store %arg14[%c0_111, %c0_112], %244 {strides = array<i32>} : memref<8x128xf32, #tpu.memory_space<vmem>>, vector<8x128xf32>,
    %c0_113 = arith.constant 0 : index
    %c0_114 = arith.constant 0 : index
    %246 = vector.load %arg15[%c0_113, %c0_114] : memref<8x128xf32, #tpu.memory_space<vmem>>, vector<8x128xf32>
    tpu.vector_store %arg15[%c0_113, %c0_114], %242 {strides = array<i32>} : memref<8x128xf32, #tpu.memory_space<vmem>>, vector<8x128xf32>,
    %247 = arith.index_cast %c5_i32 : i32 to index
    %c0_115 = arith.constant 0 : index
    %c0_116 = arith.constant 0 : index
    %248 = vector.load %arg10[%247, %c0_115, %c0_116] : memref<7x8x128xf32, #tpu.memory_space<vmem>>, vector<1x8x128xf32>
    %249 = vector.shape_cast %248 : vector<1x8x128xf32> to vector<8x128xf32>
    %250 = vector.shape_cast %244 : vector<8x128xf32> to vector<1x8x128xf32>
    tpu.vector_store %arg10[%247, %c0_115, %c0_116], %250 {strides = array<i32>} : memref<7x8x128xf32, #tpu.memory_space<vmem>>, vector<1x8x128xf32>,
    %c6_i32 = arith.constant 6 : i32
    %c0_117 = arith.constant 0 : index
    %c0_118 = arith.constant 0 : index
    %251 = vector.load %arg14[%c0_117, %c0_118] : memref<8x128xf32, #tpu.memory_space<vmem>>, vector<8x128xf32>
    %c0_119 = arith.constant 0 : index
    %c0_120 = arith.constant 0 : index
    %252 = vector.load %arg15[%c0_119, %c0_120] : memref<8x128xf32, #tpu.memory_space<vmem>>, vector<8x128xf32>
    %253 = arith.index_cast %c6_i32 : i32 to index
    %c0_121 = arith.constant 0 : index
    %c0_122 = arith.constant 0 : index
    %254 = vector.load %arg13[%253, %c0_121, %c0_122] : memref<7x8x512xf32, #tpu.memory_space<vmem>>, vector<1x8x512xf32>
    %255 = vector.shape_cast %254 : vector<1x8x512xf32> to vector<8x512xf32>
    %256 = arith.truncf %251 : vector<8x128xf32> to vector<8x128xbf16>
    %cst_123 = arith.constant dense<0.000000e+00> : vector<8x512xf32>
    %257 = tpu.matmul %256, %16, %cst_123 {dimension_numbers = #tpu.dot_dimension_numbers<[1], [0], [0], [1], [0, 0, 1, 1], [], []>} : vector<8x128xbf16>, vector<128x512xbf16>, vector<8x512xf32> -> vector<8x512xf32>
    %258 = arith.addf %255, %257 : vector<8x512xf32>
    %259 = vector.extract_strided_slice %258 {offsets = [0, 0], sizes = [8, 128], strides = [1, 1]} : vector<8x512xf32> to vector<8x128xf32>
    %260 = arith.negf %259 : vector<8x128xf32>
    %261 = math.exp %260 : vector<8x128xf32>
    %cst_124 = arith.constant 1.000000e+00 : f32
    %262 = vector.broadcast %cst_124 : f32 to vector<8x128xf32>
    %263 = arith.addf %262, %261 : vector<8x128xf32>
    %264 = arith.divf %262, %263 : vector<8x128xf32>
    %265 = vector.extract_strided_slice %258 {offsets = [0, 128], sizes = [8, 128], strides = [1, 1]} : vector<8x512xf32> to vector<8x128xf32>
    %266 = arith.negf %265 : vector<8x128xf32>
    %267 = math.exp %266 : vector<8x128xf32>
    %cst_125 = arith.constant 1.000000e+00 : f32
    %268 = vector.broadcast %cst_125 : f32 to vector<8x128xf32>
    %269 = arith.addf %268, %267 : vector<8x128xf32>
    %270 = arith.divf %268, %269 : vector<8x128xf32>
    %271 = vector.extract_strided_slice %258 {offsets = [0, 256], sizes = [8, 128], strides = [1, 1]} : vector<8x512xf32> to vector<8x128xf32>
    %272 = math.tanh %271 : vector<8x128xf32>
    %273 = vector.extract_strided_slice %258 {offsets = [0, 384], sizes = [8, 128], strides = [1, 1]} : vector<8x512xf32> to vector<8x128xf32>
    %274 = arith.negf %273 : vector<8x128xf32>
    %275 = math.exp %274 : vector<8x128xf32>
    %cst_126 = arith.constant 1.000000e+00 : f32
    %276 = vector.broadcast %cst_126 : f32 to vector<8x128xf32>
    %277 = arith.addf %276, %275 : vector<8x128xf32>
    %278 = arith.divf %276, %277 : vector<8x128xf32>
    %279 = arith.mulf %270, %252 : vector<8x128xf32>
    %280 = arith.mulf %264, %272 : vector<8x128xf32>
    %281 = arith.addf %279, %280 : vector<8x128xf32>
    %282 = math.tanh %281 : vector<8x128xf32>
    %283 = arith.mulf %278, %282 : vector<8x128xf32>
    %c0_127 = arith.constant 0 : index
    %c0_128 = arith.constant 0 : index
    %284 = vector.load %arg14[%c0_127, %c0_128] : memref<8x128xf32, #tpu.memory_space<vmem>>, vector<8x128xf32>
    tpu.vector_store %arg14[%c0_127, %c0_128], %283 {strides = array<i32>} : memref<8x128xf32, #tpu.memory_space<vmem>>, vector<8x128xf32>,
    %c0_129 = arith.constant 0 : index
    %c0_130 = arith.constant 0 : index
    %285 = vector.load %arg15[%c0_129, %c0_130] : memref<8x128xf32, #tpu.memory_space<vmem>>, vector<8x128xf32>
    tpu.vector_store %arg15[%c0_129, %c0_130], %281 {strides = array<i32>} : memref<8x128xf32, #tpu.memory_space<vmem>>, vector<8x128xf32>,
    %286 = arith.index_cast %c6_i32 : i32 to index
    %c0_131 = arith.constant 0 : index
    %c0_132 = arith.constant 0 : index
    %287 = vector.load %arg10[%286, %c0_131, %c0_132] : memref<7x8x128xf32, #tpu.memory_space<vmem>>, vector<1x8x128xf32>
    %288 = vector.shape_cast %287 : vector<1x8x128xf32> to vector<8x128xf32>
    %289 = vector.shape_cast %283 : vector<8x128xf32> to vector<1x8x128xf32>
    tpu.vector_store %arg10[%286, %c0_131, %c0_132], %289 {strides = array<i32>} : memref<7x8x128xf32, #tpu.memory_space<vmem>>, vector<1x8x128xf32>,
    %c7_i32 = arith.constant 7 : i32
    %c0_133 = arith.constant 0 : index
    %c0_134 = arith.constant 0 : index
    %290 = vector.load %arg14[%c0_133, %c0_134] : memref<8x128xf32, #tpu.memory_space<vmem>>, vector<8x128xf32>
    %c0_135 = arith.constant 0 : index
    %c0_136 = arith.constant 0 : index
    %c0_137 = arith.constant 0 : index
    %291 = vector.load %arg11[%c0_135, %c0_136, %c0_137] : memref<2x8x128xf32, #tpu.memory_space<vmem>>, vector<1x8x128xf32>
    %292 = vector.shape_cast %291 : vector<1x8x128xf32> to vector<8x128xf32>
    %293 = vector.shape_cast %290 : vector<8x128xf32> to vector<1x8x128xf32>
    tpu.vector_store %arg11[%c0_135, %c0_136, %c0_137], %293 {strides = array<i32>} : memref<2x8x128xf32, #tpu.memory_space<vmem>>, vector<1x8x128xf32>,
    %c0_138 = arith.constant 0 : index
    %c0_139 = arith.constant 0 : index
    %294 = vector.load %arg15[%c0_138, %c0_139] : memref<8x128xf32, #tpu.memory_space<vmem>>, vector<8x128xf32>
    %c0_140 = arith.constant 0 : index
    %c0_141 = arith.constant 0 : index
    %c0_142 = arith.constant 0 : index
    %295 = vector.load %arg12[%c0_140, %c0_141, %c0_142] : memref<2x8x128xf32, #tpu.memory_space<vmem>>, vector<1x8x128xf32>
    %296 = vector.shape_cast %295 : vector<1x8x128xf32> to vector<8x128xf32>
    %297 = vector.shape_cast %294 : vector<8x128xf32> to vector<1x8x128xf32>
    tpu.vector_store %arg12[%c0_140, %c0_141, %c0_142], %297 {strides = array<i32>} : memref<2x8x128xf32, #tpu.memory_space<vmem>>, vector<1x8x128xf32>,
    %c0_143 = arith.constant 0 : index
    %c0_144 = arith.constant 0 : index
    %c0_145 = arith.constant 0 : index
    %298 = vector.load %arg10[%c0_143, %c0_144, %c0_145] : memref<7x8x128xf32, #tpu.memory_space<vmem>>, vector<7x8x128xf32>
    %299 = vector.shape_cast %298 : vector<7x8x128xf32> to vector<56x128xf32>
    %300 = arith.truncf %299 : vector<56x128xf32> to vector<56x128xbf16>
    %c0_146 = arith.constant 0 : index
    %c0_147 = arith.constant 0 : index
    %301 = vector.load %arg7[%c0_146, %c0_147] : memref<128x512xbf16, #tpu.memory_space<vmem>>, vector<128x512xbf16>
    %cst_148 = arith.constant dense<0.000000e+00> : vector<56x512xf32>
    %302 = tpu.matmul %300, %301, %cst_148 {dimension_numbers = #tpu.dot_dimension_numbers<[1], [0], [0], [1], [0, 0, 1, 1], [], []>} : vector<56x128xbf16>, vector<128x512xbf16>, vector<56x512xf32> -> vector<56x512xf32>
    %c0_149 = arith.constant 0 : index
    %c0_150 = arith.constant 0 : index
    %303 = vector.load %arg9[%c0_149, %c0_150] : memref<1x512xf32, #tpu.memory_space<vmem>>, vector<1x512xf32>
    %304 = vector.broadcast %303 : vector<1x512xf32> to vector<56x512xf32>
    %305 = arith.addf %302, %304 : vector<56x512xf32>
    %306 = vector.shape_cast %305 : vector<56x512xf32> to vector<7x8x512xf32>
    %c0_151 = arith.constant 0 : index
    %c0_152 = arith.constant 0 : index
    %c0_153 = arith.constant 0 : index
    %307 = vector.load %arg13[%c0_151, %c0_152, %c0_153] : memref<7x8x512xf32, #tpu.memory_space<vmem>>, vector<7x8x512xf32>
    tpu.vector_store %arg13[%c0_151, %c0_152, %c0_153], %306 {strides = array<i32>} : memref<7x8x512xf32, #tpu.memory_space<vmem>>, vector<7x8x512xf32>,
    %c1 = arith.constant 1 : index
    %c0_154 = arith.constant 0 : index
    %c0_155 = arith.constant 0 : index
    %308 = vector.load %arg2[%c1, %c0_154, %c0_155] : memref<2x8x128xf32, #tpu.memory_space<vmem>>, vector<1x8x128xf32>
    %309 = vector.shape_cast %308 : vector<1x8x128xf32> to vector<8x128xf32>
    %c0_156 = arith.constant 0 : index
    %c0_157 = arith.constant 0 : index
    %310 = vector.load %arg14[%c0_156, %c0_157] : memref<8x128xf32, #tpu.memory_space<vmem>>, vector<8x128xf32>
    tpu.vector_store %arg14[%c0_156, %c0_157], %309 {strides = array<i32>} : memref<8x128xf32, #tpu.memory_space<vmem>>, vector<8x128xf32>,
    %c1_158 = arith.constant 1 : index
    %c0_159 = arith.constant 0 : index
    %c0_160 = arith.constant 0 : index
    %311 = vector.load %arg3[%c1_158, %c0_159, %c0_160] : memref<2x8x128xf32, #tpu.memory_space<vmem>>, vector<1x8x128xf32>
    %312 = vector.shape_cast %311 : vector<1x8x128xf32> to vector<8x128xf32>
    %c0_161 = arith.constant 0 : index
    %c0_162 = arith.constant 0 : index
    %313 = vector.load %arg15[%c0_161, %c0_162] : memref<8x128xf32, #tpu.memory_space<vmem>>, vector<8x128xf32>
    tpu.vector_store %arg15[%c0_161, %c0_162], %312 {strides = array<i32>} : memref<8x128xf32, #tpu.memory_space<vmem>>, vector<8x128xf32>,
    %c0_163 = arith.constant 0 : index
    %c0_164 = arith.constant 0 : index
    %314 = vector.load %arg8[%c0_163, %c0_164] : memref<128x512xbf16, #tpu.memory_space<vmem>>, vector<128x512xbf16>
    %c0_i32_165 = arith.constant 0 : i32
    %c0_166 = arith.constant 0 : index
    %c0_167 = arith.constant 0 : index
    %315 = vector.load %arg14[%c0_166, %c0_167] : memref<8x128xf32, #tpu.memory_space<vmem>>, vector<8x128xf32>
    %c0_168 = arith.constant 0 : index
    %c0_169 = arith.constant 0 : index
    %316 = vector.load %arg15[%c0_168, %c0_169] : memref<8x128xf32, #tpu.memory_space<vmem>>, vector<8x128xf32>
    %317 = arith.index_cast %c0_i32_165 : i32 to index
    %c0_170 = arith.constant 0 : index
    %c0_171 = arith.constant 0 : index
    %318 = vector.load %arg13[%317, %c0_170, %c0_171] : memref<7x8x512xf32, #tpu.memory_space<vmem>>, vector<1x8x512xf32>
    %319 = vector.shape_cast %318 : vector<1x8x512xf32> to vector<8x512xf32>
    %320 = arith.truncf %315 : vector<8x128xf32> to vector<8x128xbf16>
    %cst_172 = arith.constant dense<0.000000e+00> : vector<8x512xf32>
    %321 = tpu.matmul %320, %314, %cst_172 {dimension_numbers = #tpu.dot_dimension_numbers<[1], [0], [0], [1], [0, 0, 1, 1], [], []>} : vector<8x128xbf16>, vector<128x512xbf16>, vector<8x512xf32> -> vector<8x512xf32>
    %322 = arith.addf %319, %321 : vector<8x512xf32>
    %323 = vector.extract_strided_slice %322 {offsets = [0, 0], sizes = [8, 128], strides = [1, 1]} : vector<8x512xf32> to vector<8x128xf32>
    %324 = arith.negf %323 : vector<8x128xf32>
    %325 = math.exp %324 : vector<8x128xf32>
    %cst_173 = arith.constant 1.000000e+00 : f32
    %326 = vector.broadcast %cst_173 : f32 to vector<8x128xf32>
    %327 = arith.addf %326, %325 : vector<8x128xf32>
    %328 = arith.divf %326, %327 : vector<8x128xf32>
    %329 = vector.extract_strided_slice %322 {offsets = [0, 128], sizes = [8, 128], strides = [1, 1]} : vector<8x512xf32> to vector<8x128xf32>
    %330 = arith.negf %329 : vector<8x128xf32>
    %331 = math.exp %330 : vector<8x128xf32>
    %cst_174 = arith.constant 1.000000e+00 : f32
    %332 = vector.broadcast %cst_174 : f32 to vector<8x128xf32>
    %333 = arith.addf %332, %331 : vector<8x128xf32>
    %334 = arith.divf %332, %333 : vector<8x128xf32>
    %335 = vector.extract_strided_slice %322 {offsets = [0, 256], sizes = [8, 128], strides = [1, 1]} : vector<8x512xf32> to vector<8x128xf32>
    %336 = math.tanh %335 : vector<8x128xf32>
    %337 = vector.extract_strided_slice %322 {offsets = [0, 384], sizes = [8, 128], strides = [1, 1]} : vector<8x512xf32> to vector<8x128xf32>
    %338 = arith.negf %337 : vector<8x128xf32>
    %339 = math.exp %338 : vector<8x128xf32>
    %cst_175 = arith.constant 1.000000e+00 : f32
    %340 = vector.broadcast %cst_175 : f32 to vector<8x128xf32>
    %341 = arith.addf %340, %339 : vector<8x128xf32>
    %342 = arith.divf %340, %341 : vector<8x128xf32>
    %343 = arith.mulf %334, %316 : vector<8x128xf32>
    %344 = arith.mulf %328, %336 : vector<8x128xf32>
    %345 = arith.addf %343, %344 : vector<8x128xf32>
    %346 = math.tanh %345 : vector<8x128xf32>
    %347 = arith.mulf %342, %346 : vector<8x128xf32>
    %c0_176 = arith.constant 0 : index
    %c0_177 = arith.constant 0 : index
    %348 = vector.load %arg14[%c0_176, %c0_177] : memref<8x128xf32, #tpu.memory_space<vmem>>, vector<8x128xf32>
    tpu.vector_store %arg14[%c0_176, %c0_177], %347 {strides = array<i32>} : memref<8x128xf32, #tpu.memory_space<vmem>>, vector<8x128xf32>,
    %c0_178 = arith.constant 0 : index
    %c0_179 = arith.constant 0 : index
    %349 = vector.load %arg15[%c0_178, %c0_179] : memref<8x128xf32, #tpu.memory_space<vmem>>, vector<8x128xf32>
    tpu.vector_store %arg15[%c0_178, %c0_179], %345 {strides = array<i32>} : memref<8x128xf32, #tpu.memory_space<vmem>>, vector<8x128xf32>,
    %350 = arith.index_cast %c0_i32_165 : i32 to index
    %c0_180 = arith.constant 0 : index
    %c0_181 = arith.constant 0 : index
    %351 = vector.load %arg10[%350, %c0_180, %c0_181] : memref<7x8x128xf32, #tpu.memory_space<vmem>>, vector<1x8x128xf32>
    %352 = vector.shape_cast %351 : vector<1x8x128xf32> to vector<8x128xf32>
    %353 = vector.shape_cast %347 : vector<8x128xf32> to vector<1x8x128xf32>
    tpu.vector_store %arg10[%350, %c0_180, %c0_181], %353 {strides = array<i32>} : memref<7x8x128xf32, #tpu.memory_space<vmem>>, vector<1x8x128xf32>,
    %c1_i32_182 = arith.constant 1 : i32
    %c0_183 = arith.constant 0 : index
    %c0_184 = arith.constant 0 : index
    %354 = vector.load %arg14[%c0_183, %c0_184] : memref<8x128xf32, #tpu.memory_space<vmem>>, vector<8x128xf32>
    %c0_185 = arith.constant 0 : index
    %c0_186 = arith.constant 0 : index
    %355 = vector.load %arg15[%c0_185, %c0_186] : memref<8x128xf32, #tpu.memory_space<vmem>>, vector<8x128xf32>
    %356 = arith.index_cast %c1_i32_182 : i32 to index
    %c0_187 = arith.constant 0 : index
    %c0_188 = arith.constant 0 : index
    %357 = vector.load %arg13[%356, %c0_187, %c0_188] : memref<7x8x512xf32, #tpu.memory_space<vmem>>, vector<1x8x512xf32>
    %358 = vector.shape_cast %357 : vector<1x8x512xf32> to vector<8x512xf32>
    %359 = arith.truncf %354 : vector<8x128xf32> to vector<8x128xbf16>
    %cst_189 = arith.constant dense<0.000000e+00> : vector<8x512xf32>
    %360 = tpu.matmul %359, %314, %cst_189 {dimension_numbers = #tpu.dot_dimension_numbers<[1], [0], [0], [1], [0, 0, 1, 1], [], []>} : vector<8x128xbf16>, vector<128x512xbf16>, vector<8x512xf32> -> vector<8x512xf32>
    %361 = arith.addf %358, %360 : vector<8x512xf32>
    %362 = vector.extract_strided_slice %361 {offsets = [0, 0], sizes = [8, 128], strides = [1, 1]} : vector<8x512xf32> to vector<8x128xf32>
    %363 = arith.negf %362 : vector<8x128xf32>
    %364 = math.exp %363 : vector<8x128xf32>
    %cst_190 = arith.constant 1.000000e+00 : f32
    %365 = vector.broadcast %cst_190 : f32 to vector<8x128xf32>
    %366 = arith.addf %365, %364 : vector<8x128xf32>
    %367 = arith.divf %365, %366 : vector<8x128xf32>
    %368 = vector.extract_strided_slice %361 {offsets = [0, 128], sizes = [8, 128], strides = [1, 1]} : vector<8x512xf32> to vector<8x128xf32>
    %369 = arith.negf %368 : vector<8x128xf32>
    %370 = math.exp %369 : vector<8x128xf32>
    %cst_191 = arith.constant 1.000000e+00 : f32
    %371 = vector.broadcast %cst_191 : f32 to vector<8x128xf32>
    %372 = arith.addf %371, %370 : vector<8x128xf32>
    %373 = arith.divf %371, %372 : vector<8x128xf32>
    %374 = vector.extract_strided_slice %361 {offsets = [0, 256], sizes = [8, 128], strides = [1, 1]} : vector<8x512xf32> to vector<8x128xf32>
    %375 = math.tanh %374 : vector<8x128xf32>
    %376 = vector.extract_strided_slice %361 {offsets = [0, 384], sizes = [8, 128], strides = [1, 1]} : vector<8x512xf32> to vector<8x128xf32>
    %377 = arith.negf %376 : vector<8x128xf32>
    %378 = math.exp %377 : vector<8x128xf32>
    %cst_192 = arith.constant 1.000000e+00 : f32
    %379 = vector.broadcast %cst_192 : f32 to vector<8x128xf32>
    %380 = arith.addf %379, %378 : vector<8x128xf32>
    %381 = arith.divf %379, %380 : vector<8x128xf32>
    %382 = arith.mulf %373, %355 : vector<8x128xf32>
    %383 = arith.mulf %367, %375 : vector<8x128xf32>
    %384 = arith.addf %382, %383 : vector<8x128xf32>
    %385 = math.tanh %384 : vector<8x128xf32>
    %386 = arith.mulf %381, %385 : vector<8x128xf32>
    %c0_193 = arith.constant 0 : index
    %c0_194 = arith.constant 0 : index
    %387 = vector.load %arg14[%c0_193, %c0_194] : memref<8x128xf32, #tpu.memory_space<vmem>>, vector<8x128xf32>
    tpu.vector_store %arg14[%c0_193, %c0_194], %386 {strides = array<i32>} : memref<8x128xf32, #tpu.memory_space<vmem>>, vector<8x128xf32>,
    %c0_195 = arith.constant 0 : index
    %c0_196 = arith.constant 0 : index
    %388 = vector.load %arg15[%c0_195, %c0_196] : memref<8x128xf32, #tpu.memory_space<vmem>>, vector<8x128xf32>
    tpu.vector_store %arg15[%c0_195, %c0_196], %384 {strides = array<i32>} : memref<8x128xf32, #tpu.memory_space<vmem>>, vector<8x128xf32>,
    %389 = arith.index_cast %c1_i32_182 : i32 to index
    %c0_197 = arith.constant 0 : index
    %c0_198 = arith.constant 0 : index
    %390 = vector.load %arg10[%389, %c0_197, %c0_198] : memref<7x8x128xf32, #tpu.memory_space<vmem>>, vector<1x8x128xf32>
    %391 = vector.shape_cast %390 : vector<1x8x128xf32> to vector<8x128xf32>
    %392 = vector.shape_cast %386 : vector<8x128xf32> to vector<1x8x128xf32>
    tpu.vector_store %arg10[%389, %c0_197, %c0_198], %392 {strides = array<i32>} : memref<7x8x128xf32, #tpu.memory_space<vmem>>, vector<1x8x128xf32>,
    %c2_i32_199 = arith.constant 2 : i32
    %c0_200 = arith.constant 0 : index
    %c0_201 = arith.constant 0 : index
    %393 = vector.load %arg14[%c0_200, %c0_201] : memref<8x128xf32, #tpu.memory_space<vmem>>, vector<8x128xf32>
    %c0_202 = arith.constant 0 : index
    %c0_203 = arith.constant 0 : index
    %394 = vector.load %arg15[%c0_202, %c0_203] : memref<8x128xf32, #tpu.memory_space<vmem>>, vector<8x128xf32>
    %395 = arith.index_cast %c2_i32_199 : i32 to index
    %c0_204 = arith.constant 0 : index
    %c0_205 = arith.constant 0 : index
    %396 = vector.load %arg13[%395, %c0_204, %c0_205] : memref<7x8x512xf32, #tpu.memory_space<vmem>>, vector<1x8x512xf32>
    %397 = vector.shape_cast %396 : vector<1x8x512xf32> to vector<8x512xf32>
    %398 = arith.truncf %393 : vector<8x128xf32> to vector<8x128xbf16>
    %cst_206 = arith.constant dense<0.000000e+00> : vector<8x512xf32>
    %399 = tpu.matmul %398, %314, %cst_206 {dimension_numbers = #tpu.dot_dimension_numbers<[1], [0], [0], [1], [0, 0, 1, 1], [], []>} : vector<8x128xbf16>, vector<128x512xbf16>, vector<8x512xf32> -> vector<8x512xf32>
    %400 = arith.addf %397, %399 : vector<8x512xf32>
    %401 = vector.extract_strided_slice %400 {offsets = [0, 0], sizes = [8, 128], strides = [1, 1]} : vector<8x512xf32> to vector<8x128xf32>
    %402 = arith.negf %401 : vector<8x128xf32>
    %403 = math.exp %402 : vector<8x128xf32>
    %cst_207 = arith.constant 1.000000e+00 : f32
    %404 = vector.broadcast %cst_207 : f32 to vector<8x128xf32>
    %405 = arith.addf %404, %403 : vector<8x128xf32>
    %406 = arith.divf %404, %405 : vector<8x128xf32>
    %407 = vector.extract_strided_slice %400 {offsets = [0, 128], sizes = [8, 128], strides = [1, 1]} : vector<8x512xf32> to vector<8x128xf32>
    %408 = arith.negf %407 : vector<8x128xf32>
    %409 = math.exp %408 : vector<8x128xf32>
    %cst_208 = arith.constant 1.000000e+00 : f32
    %410 = vector.broadcast %cst_208 : f32 to vector<8x128xf32>
    %411 = arith.addf %410, %409 : vector<8x128xf32>
    %412 = arith.divf %410, %411 : vector<8x128xf32>
    %413 = vector.extract_strided_slice %400 {offsets = [0, 256], sizes = [8, 128], strides = [1, 1]} : vector<8x512xf32> to vector<8x128xf32>
    %414 = math.tanh %413 : vector<8x128xf32>
    %415 = vector.extract_strided_slice %400 {offsets = [0, 384], sizes = [8, 128], strides = [1, 1]} : vector<8x512xf32> to vector<8x128xf32>
    %416 = arith.negf %415 : vector<8x128xf32>
    %417 = math.exp %416 : vector<8x128xf32>
    %cst_209 = arith.constant 1.000000e+00 : f32
    %418 = vector.broadcast %cst_209 : f32 to vector<8x128xf32>
    %419 = arith.addf %418, %417 : vector<8x128xf32>
    %420 = arith.divf %418, %419 : vector<8x128xf32>
    %421 = arith.mulf %412, %394 : vector<8x128xf32>
    %422 = arith.mulf %406, %414 : vector<8x128xf32>
    %423 = arith.addf %421, %422 : vector<8x128xf32>
    %424 = math.tanh %423 : vector<8x128xf32>
    %425 = arith.mulf %420, %424 : vector<8x128xf32>
    %c0_210 = arith.constant 0 : index
    %c0_211 = arith.constant 0 : index
    %426 = vector.load %arg14[%c0_210, %c0_211] : memref<8x128xf32, #tpu.memory_space<vmem>>, vector<8x128xf32>
    tpu.vector_store %arg14[%c0_210, %c0_211], %425 {strides = array<i32>} : memref<8x128xf32, #tpu.memory_space<vmem>>, vector<8x128xf32>,
    %c0_212 = arith.constant 0 : index
    %c0_213 = arith.constant 0 : index
    %427 = vector.load %arg15[%c0_212, %c0_213] : memref<8x128xf32, #tpu.memory_space<vmem>>, vector<8x128xf32>
    tpu.vector_store %arg15[%c0_212, %c0_213], %423 {strides = array<i32>} : memref<8x128xf32, #tpu.memory_space<vmem>>, vector<8x128xf32>,
    %428 = arith.index_cast %c2_i32_199 : i32 to index
    %c0_214 = arith.constant 0 : index
    %c0_215 = arith.constant 0 : index
    %429 = vector.load %arg10[%428, %c0_214, %c0_215] : memref<7x8x128xf32, #tpu.memory_space<vmem>>, vector<1x8x128xf32>
    %430 = vector.shape_cast %429 : vector<1x8x128xf32> to vector<8x128xf32>
    %431 = vector.shape_cast %425 : vector<8x128xf32> to vector<1x8x128xf32>
    tpu.vector_store %arg10[%428, %c0_214, %c0_215], %431 {strides = array<i32>} : memref<7x8x128xf32, #tpu.memory_space<vmem>>, vector<1x8x128xf32>,
    %c3_i32_216 = arith.constant 3 : i32
    %c0_217 = arith.constant 0 : index
    %c0_218 = arith.constant 0 : index
    %432 = vector.load %arg14[%c0_217, %c0_218] : memref<8x128xf32, #tpu.memory_space<vmem>>, vector<8x128xf32>
    %c0_219 = arith.constant 0 : index
    %c0_220 = arith.constant 0 : index
    %433 = vector.load %arg15[%c0_219, %c0_220] : memref<8x128xf32, #tpu.memory_space<vmem>>, vector<8x128xf32>
    %434 = arith.index_cast %c3_i32_216 : i32 to index
    %c0_221 = arith.constant 0 : index
    %c0_222 = arith.constant 0 : index
    %435 = vector.load %arg13[%434, %c0_221, %c0_222] : memref<7x8x512xf32, #tpu.memory_space<vmem>>, vector<1x8x512xf32>
    %436 = vector.shape_cast %435 : vector<1x8x512xf32> to vector<8x512xf32>
    %437 = arith.truncf %432 : vector<8x128xf32> to vector<8x128xbf16>
    %cst_223 = arith.constant dense<0.000000e+00> : vector<8x512xf32>
    %438 = tpu.matmul %437, %314, %cst_223 {dimension_numbers = #tpu.dot_dimension_numbers<[1], [0], [0], [1], [0, 0, 1, 1], [], []>} : vector<8x128xbf16>, vector<128x512xbf16>, vector<8x512xf32> -> vector<8x512xf32>
    %439 = arith.addf %436, %438 : vector<8x512xf32>
    %440 = vector.extract_strided_slice %439 {offsets = [0, 0], sizes = [8, 128], strides = [1, 1]} : vector<8x512xf32> to vector<8x128xf32>
    %441 = arith.negf %440 : vector<8x128xf32>
    %442 = math.exp %441 : vector<8x128xf32>
    %cst_224 = arith.constant 1.000000e+00 : f32
    %443 = vector.broadcast %cst_224 : f32 to vector<8x128xf32>
    %444 = arith.addf %443, %442 : vector<8x128xf32>
    %445 = arith.divf %443, %444 : vector<8x128xf32>
    %446 = vector.extract_strided_slice %439 {offsets = [0, 128], sizes = [8, 128], strides = [1, 1]} : vector<8x512xf32> to vector<8x128xf32>
    %447 = arith.negf %446 : vector<8x128xf32>
    %448 = math.exp %447 : vector<8x128xf32>
    %cst_225 = arith.constant 1.000000e+00 : f32
    %449 = vector.broadcast %cst_225 : f32 to vector<8x128xf32>
    %450 = arith.addf %449, %448 : vector<8x128xf32>
    %451 = arith.divf %449, %450 : vector<8x128xf32>
    %452 = vector.extract_strided_slice %439 {offsets = [0, 256], sizes = [8, 128], strides = [1, 1]} : vector<8x512xf32> to vector<8x128xf32>
    %453 = math.tanh %452 : vector<8x128xf32>
    %454 = vector.extract_strided_slice %439 {offsets = [0, 384], sizes = [8, 128], strides = [1, 1]} : vector<8x512xf32> to vector<8x128xf32>
    %455 = arith.negf %454 : vector<8x128xf32>
    %456 = math.exp %455 : vector<8x128xf32>
    %cst_226 = arith.constant 1.000000e+00 : f32
    %457 = vector.broadcast %cst_226 : f32 to vector<8x128xf32>
    %458 = arith.addf %457, %456 : vector<8x128xf32>
    %459 = arith.divf %457, %458 : vector<8x128xf32>
    %460 = arith.mulf %451, %433 : vector<8x128xf32>
    %461 = arith.mulf %445, %453 : vector<8x128xf32>
    %462 = arith.addf %460, %461 : vector<8x128xf32>
    %463 = math.tanh %462 : vector<8x128xf32>
    %464 = arith.mulf %459, %463 : vector<8x128xf32>
    %c0_227 = arith.constant 0 : index
    %c0_228 = arith.constant 0 : index
    %465 = vector.load %arg14[%c0_227, %c0_228] : memref<8x128xf32, #tpu.memory_space<vmem>>, vector<8x128xf32>
    tpu.vector_store %arg14[%c0_227, %c0_228], %464 {strides = array<i32>} : memref<8x128xf32, #tpu.memory_space<vmem>>, vector<8x128xf32>,
    %c0_229 = arith.constant 0 : index
    %c0_230 = arith.constant 0 : index
    %466 = vector.load %arg15[%c0_229, %c0_230] : memref<8x128xf32, #tpu.memory_space<vmem>>, vector<8x128xf32>
    tpu.vector_store %arg15[%c0_229, %c0_230], %462 {strides = array<i32>} : memref<8x128xf32, #tpu.memory_space<vmem>>, vector<8x128xf32>,
    %467 = arith.index_cast %c3_i32_216 : i32 to index
    %c0_231 = arith.constant 0 : index
    %c0_232 = arith.constant 0 : index
    %468 = vector.load %arg10[%467, %c0_231, %c0_232] : memref<7x8x128xf32, #tpu.memory_space<vmem>>, vector<1x8x128xf32>
    %469 = vector.shape_cast %468 : vector<1x8x128xf32> to vector<8x128xf32>
    %470 = vector.shape_cast %464 : vector<8x128xf32> to vector<1x8x128xf32>
    tpu.vector_store %arg10[%467, %c0_231, %c0_232], %470 {strides = array<i32>} : memref<7x8x128xf32, #tpu.memory_space<vmem>>, vector<1x8x128xf32>,
    %c4_i32_233 = arith.constant 4 : i32
    %c0_234 = arith.constant 0 : index
    %c0_235 = arith.constant 0 : index
    %471 = vector.load %arg14[%c0_234, %c0_235] : memref<8x128xf32, #tpu.memory_space<vmem>>, vector<8x128xf32>
    %c0_236 = arith.constant 0 : index
    %c0_237 = arith.constant 0 : index
    %472 = vector.load %arg15[%c0_236, %c0_237] : memref<8x128xf32, #tpu.memory_space<vmem>>, vector<8x128xf32>
    %473 = arith.index_cast %c4_i32_233 : i32 to index
    %c0_238 = arith.constant 0 : index
    %c0_239 = arith.constant 0 : index
    %474 = vector.load %arg13[%473, %c0_238, %c0_239] : memref<7x8x512xf32, #tpu.memory_space<vmem>>, vector<1x8x512xf32>
    %475 = vector.shape_cast %474 : vector<1x8x512xf32> to vector<8x512xf32>
    %476 = arith.truncf %471 : vector<8x128xf32> to vector<8x128xbf16>
    %cst_240 = arith.constant dense<0.000000e+00> : vector<8x512xf32>
    %477 = tpu.matmul %476, %314, %cst_240 {dimension_numbers = #tpu.dot_dimension_numbers<[1], [0], [0], [1], [0, 0, 1, 1], [], []>} : vector<8x128xbf16>, vector<128x512xbf16>, vector<8x512xf32> -> vector<8x512xf32>
    %478 = arith.addf %475, %477 : vector<8x512xf32>
    %479 = vector.extract_strided_slice %478 {offsets = [0, 0], sizes = [8, 128], strides = [1, 1]} : vector<8x512xf32> to vector<8x128xf32>
    %480 = arith.negf %479 : vector<8x128xf32>
    %481 = math.exp %480 : vector<8x128xf32>
    %cst_241 = arith.constant 1.000000e+00 : f32
    %482 = vector.broadcast %cst_241 : f32 to vector<8x128xf32>
    %483 = arith.addf %482, %481 : vector<8x128xf32>
    %484 = arith.divf %482, %483 : vector<8x128xf32>
    %485 = vector.extract_strided_slice %478 {offsets = [0, 128], sizes = [8, 128], strides = [1, 1]} : vector<8x512xf32> to vector<8x128xf32>
    %486 = arith.negf %485 : vector<8x128xf32>
    %487 = math.exp %486 : vector<8x128xf32>
    %cst_242 = arith.constant 1.000000e+00 : f32
    %488 = vector.broadcast %cst_242 : f32 to vector<8x128xf32>
    %489 = arith.addf %488, %487 : vector<8x128xf32>
    %490 = arith.divf %488, %489 : vector<8x128xf32>
    %491 = vector.extract_strided_slice %478 {offsets = [0, 256], sizes = [8, 128], strides = [1, 1]} : vector<8x512xf32> to vector<8x128xf32>
    %492 = math.tanh %491 : vector<8x128xf32>
    %493 = vector.extract_strided_slice %478 {offsets = [0, 384], sizes = [8, 128], strides = [1, 1]} : vector<8x512xf32> to vector<8x128xf32>
    %494 = arith.negf %493 : vector<8x128xf32>
    %495 = math.exp %494 : vector<8x128xf32>
    %cst_243 = arith.constant 1.000000e+00 : f32
    %496 = vector.broadcast %cst_243 : f32 to vector<8x128xf32>
    %497 = arith.addf %496, %495 : vector<8x128xf32>
    %498 = arith.divf %496, %497 : vector<8x128xf32>
    %499 = arith.mulf %490, %472 : vector<8x128xf32>
    %500 = arith.mulf %484, %492 : vector<8x128xf32>
    %501 = arith.addf %499, %500 : vector<8x128xf32>
    %502 = math.tanh %501 : vector<8x128xf32>
    %503 = arith.mulf %498, %502 : vector<8x128xf32>
    %c0_244 = arith.constant 0 : index
    %c0_245 = arith.constant 0 : index
    %504 = vector.load %arg14[%c0_244, %c0_245] : memref<8x128xf32, #tpu.memory_space<vmem>>, vector<8x128xf32>
    tpu.vector_store %arg14[%c0_244, %c0_245], %503 {strides = array<i32>} : memref<8x128xf32, #tpu.memory_space<vmem>>, vector<8x128xf32>,
    %c0_246 = arith.constant 0 : index
    %c0_247 = arith.constant 0 : index
    %505 = vector.load %arg15[%c0_246, %c0_247] : memref<8x128xf32, #tpu.memory_space<vmem>>, vector<8x128xf32>
    tpu.vector_store %arg15[%c0_246, %c0_247], %501 {strides = array<i32>} : memref<8x128xf32, #tpu.memory_space<vmem>>, vector<8x128xf32>,
    %506 = arith.index_cast %c4_i32_233 : i32 to index
    %c0_248 = arith.constant 0 : index
    %c0_249 = arith.constant 0 : index
    %507 = vector.load %arg10[%506, %c0_248, %c0_249] : memref<7x8x128xf32, #tpu.memory_space<vmem>>, vector<1x8x128xf32>
    %508 = vector.shape_cast %507 : vector<1x8x128xf32> to vector<8x128xf32>
    %509 = vector.shape_cast %503 : vector<8x128xf32> to vector<1x8x128xf32>
    tpu.vector_store %arg10[%506, %c0_248, %c0_249], %509 {strides = array<i32>} : memref<7x8x128xf32, #tpu.memory_space<vmem>>, vector<1x8x128xf32>,
    %c5_i32_250 = arith.constant 5 : i32
    %c0_251 = arith.constant 0 : index
    %c0_252 = arith.constant 0 : index
    %510 = vector.load %arg14[%c0_251, %c0_252] : memref<8x128xf32, #tpu.memory_space<vmem>>, vector<8x128xf32>
    %c0_253 = arith.constant 0 : index
    %c0_254 = arith.constant 0 : index
    %511 = vector.load %arg15[%c0_253, %c0_254] : memref<8x128xf32, #tpu.memory_space<vmem>>, vector<8x128xf32>
    %512 = arith.index_cast %c5_i32_250 : i32 to index
    %c0_255 = arith.constant 0 : index
    %c0_256 = arith.constant 0 : index
    %513 = vector.load %arg13[%512, %c0_255, %c0_256] : memref<7x8x512xf32, #tpu.memory_space<vmem>>, vector<1x8x512xf32>
    %514 = vector.shape_cast %513 : vector<1x8x512xf32> to vector<8x512xf32>
    %515 = arith.truncf %510 : vector<8x128xf32> to vector<8x128xbf16>
    %cst_257 = arith.constant dense<0.000000e+00> : vector<8x512xf32>
    %516 = tpu.matmul %515, %314, %cst_257 {dimension_numbers = #tpu.dot_dimension_numbers<[1], [0], [0], [1], [0, 0, 1, 1], [], []>} : vector<8x128xbf16>, vector<128x512xbf16>, vector<8x512xf32> -> vector<8x512xf32>
    %517 = arith.addf %514, %516 : vector<8x512xf32>
    %518 = vector.extract_strided_slice %517 {offsets = [0, 0], sizes = [8, 128], strides = [1, 1]} : vector<8x512xf32> to vector<8x128xf32>
    %519 = arith.negf %518 : vector<8x128xf32>
    %520 = math.exp %519 : vector<8x128xf32>
    %cst_258 = arith.constant 1.000000e+00 : f32
    %521 = vector.broadcast %cst_258 : f32 to vector<8x128xf32>
    %522 = arith.addf %521, %520 : vector<8x128xf32>
    %523 = arith.divf %521, %522 : vector<8x128xf32>
    %524 = vector.extract_strided_slice %517 {offsets = [0, 128], sizes = [8, 128], strides = [1, 1]} : vector<8x512xf32> to vector<8x128xf32>
    %525 = arith.negf %524 : vector<8x128xf32>
    %526 = math.exp %525 : vector<8x128xf32>
    %cst_259 = arith.constant 1.000000e+00 : f32
    %527 = vector.broadcast %cst_259 : f32 to vector<8x128xf32>
    %528 = arith.addf %527, %526 : vector<8x128xf32>
    %529 = arith.divf %527, %528 : vector<8x128xf32>
    %530 = vector.extract_strided_slice %517 {offsets = [0, 256], sizes = [8, 128], strides = [1, 1]} : vector<8x512xf32> to vector<8x128xf32>
    %531 = math.tanh %530 : vector<8x128xf32>
    %532 = vector.extract_strided_slice %517 {offsets = [0, 384], sizes = [8, 128], strides = [1, 1]} : vector<8x512xf32> to vector<8x128xf32>
    %533 = arith.negf %532 : vector<8x128xf32>
    %534 = math.exp %533 : vector<8x128xf32>
    %cst_260 = arith.constant 1.000000e+00 : f32
    %535 = vector.broadcast %cst_260 : f32 to vector<8x128xf32>
    %536 = arith.addf %535, %534 : vector<8x128xf32>
    %537 = arith.divf %535, %536 : vector<8x128xf32>
    %538 = arith.mulf %529, %511 : vector<8x128xf32>
    %539 = arith.mulf %523, %531 : vector<8x128xf32>
    %540 = arith.addf %538, %539 : vector<8x128xf32>
    %541 = math.tanh %540 : vector<8x128xf32>
    %542 = arith.mulf %537, %541 : vector<8x128xf32>
    %c0_261 = arith.constant 0 : index
    %c0_262 = arith.constant 0 : index
    %543 = vector.load %arg14[%c0_261, %c0_262] : memref<8x128xf32, #tpu.memory_space<vmem>>, vector<8x128xf32>
    tpu.vector_store %arg14[%c0_261, %c0_262], %542 {strides = array<i32>} : memref<8x128xf32, #tpu.memory_space<vmem>>, vector<8x128xf32>,
    %c0_263 = arith.constant 0 : index
    %c0_264 = arith.constant 0 : index
    %544 = vector.load %arg15[%c0_263, %c0_264] : memref<8x128xf32, #tpu.memory_space<vmem>>, vector<8x128xf32>
    tpu.vector_store %arg15[%c0_263, %c0_264], %540 {strides = array<i32>} : memref<8x128xf32, #tpu.memory_space<vmem>>, vector<8x128xf32>,
    %545 = arith.index_cast %c5_i32_250 : i32 to index
    %c0_265 = arith.constant 0 : index
    %c0_266 = arith.constant 0 : index
    %546 = vector.load %arg10[%545, %c0_265, %c0_266] : memref<7x8x128xf32, #tpu.memory_space<vmem>>, vector<1x8x128xf32>
    %547 = vector.shape_cast %546 : vector<1x8x128xf32> to vector<8x128xf32>
    %548 = vector.shape_cast %542 : vector<8x128xf32> to vector<1x8x128xf32>
    tpu.vector_store %arg10[%545, %c0_265, %c0_266], %548 {strides = array<i32>} : memref<7x8x128xf32, #tpu.memory_space<vmem>>, vector<1x8x128xf32>,
    %c6_i32_267 = arith.constant 6 : i32
    %c0_268 = arith.constant 0 : index
    %c0_269 = arith.constant 0 : index
    %549 = vector.load %arg14[%c0_268, %c0_269] : memref<8x128xf32, #tpu.memory_space<vmem>>, vector<8x128xf32>
    %c0_270 = arith.constant 0 : index
    %c0_271 = arith.constant 0 : index
    %550 = vector.load %arg15[%c0_270, %c0_271] : memref<8x128xf32, #tpu.memory_space<vmem>>, vector<8x128xf32>
    %551 = arith.index_cast %c6_i32_267 : i32 to index
    %c0_272 = arith.constant 0 : index
    %c0_273 = arith.constant 0 : index
    %552 = vector.load %arg13[%551, %c0_272, %c0_273] : memref<7x8x512xf32, #tpu.memory_space<vmem>>, vector<1x8x512xf32>
    %553 = vector.shape_cast %552 : vector<1x8x512xf32> to vector<8x512xf32>
    %554 = arith.truncf %549 : vector<8x128xf32> to vector<8x128xbf16>
    %cst_274 = arith.constant dense<0.000000e+00> : vector<8x512xf32>
    %555 = tpu.matmul %554, %314, %cst_274 {dimension_numbers = #tpu.dot_dimension_numbers<[1], [0], [0], [1], [0, 0, 1, 1], [], []>} : vector<8x128xbf16>, vector<128x512xbf16>, vector<8x512xf32> -> vector<8x512xf32>
    %556 = arith.addf %553, %555 : vector<8x512xf32>
    %557 = vector.extract_strided_slice %556 {offsets = [0, 0], sizes = [8, 128], strides = [1, 1]} : vector<8x512xf32> to vector<8x128xf32>
    %558 = arith.negf %557 : vector<8x128xf32>
    %559 = math.exp %558 : vector<8x128xf32>
    %cst_275 = arith.constant 1.000000e+00 : f32
    %560 = vector.broadcast %cst_275 : f32 to vector<8x128xf32>
    %561 = arith.addf %560, %559 : vector<8x128xf32>
    %562 = arith.divf %560, %561 : vector<8x128xf32>
    %563 = vector.extract_strided_slice %556 {offsets = [0, 128], sizes = [8, 128], strides = [1, 1]} : vector<8x512xf32> to vector<8x128xf32>
    %564 = arith.negf %563 : vector<8x128xf32>
    %565 = math.exp %564 : vector<8x128xf32>
    %cst_276 = arith.constant 1.000000e+00 : f32
    %566 = vector.broadcast %cst_276 : f32 to vector<8x128xf32>
    %567 = arith.addf %566, %565 : vector<8x128xf32>
    %568 = arith.divf %566, %567 : vector<8x128xf32>
    %569 = vector.extract_strided_slice %556 {offsets = [0, 256], sizes = [8, 128], strides = [1, 1]} : vector<8x512xf32> to vector<8x128xf32>
    %570 = math.tanh %569 : vector<8x128xf32>
    %571 = vector.extract_strided_slice %556 {offsets = [0, 384], sizes = [8, 128], strides = [1, 1]} : vector<8x512xf32> to vector<8x128xf32>
    %572 = arith.negf %571 : vector<8x128xf32>
    %573 = math.exp %572 : vector<8x128xf32>
    %cst_277 = arith.constant 1.000000e+00 : f32
    %574 = vector.broadcast %cst_277 : f32 to vector<8x128xf32>
    %575 = arith.addf %574, %573 : vector<8x128xf32>
    %576 = arith.divf %574, %575 : vector<8x128xf32>
    %577 = arith.mulf %568, %550 : vector<8x128xf32>
    %578 = arith.mulf %562, %570 : vector<8x128xf32>
    %579 = arith.addf %577, %578 : vector<8x128xf32>
    %580 = math.tanh %579 : vector<8x128xf32>
    %581 = arith.mulf %576, %580 : vector<8x128xf32>
    %c0_278 = arith.constant 0 : index
    %c0_279 = arith.constant 0 : index
    %582 = vector.load %arg14[%c0_278, %c0_279] : memref<8x128xf32, #tpu.memory_space<vmem>>, vector<8x128xf32>
    tpu.vector_store %arg14[%c0_278, %c0_279], %581 {strides = array<i32>} : memref<8x128xf32, #tpu.memory_space<vmem>>, vector<8x128xf32>,
    %c0_280 = arith.constant 0 : index
    %c0_281 = arith.constant 0 : index
    %583 = vector.load %arg15[%c0_280, %c0_281] : memref<8x128xf32, #tpu.memory_space<vmem>>, vector<8x128xf32>
    tpu.vector_store %arg15[%c0_280, %c0_281], %579 {strides = array<i32>} : memref<8x128xf32, #tpu.memory_space<vmem>>, vector<8x128xf32>,
    %584 = arith.index_cast %c6_i32_267 : i32 to index
    %c0_282 = arith.constant 0 : index
    %c0_283 = arith.constant 0 : index
    %585 = vector.load %arg10[%584, %c0_282, %c0_283] : memref<7x8x128xf32, #tpu.memory_space<vmem>>, vector<1x8x128xf32>
    %586 = vector.shape_cast %585 : vector<1x8x128xf32> to vector<8x128xf32>
    %587 = vector.shape_cast %581 : vector<8x128xf32> to vector<1x8x128xf32>
    tpu.vector_store %arg10[%584, %c0_282, %c0_283], %587 {strides = array<i32>} : memref<7x8x128xf32, #tpu.memory_space<vmem>>, vector<1x8x128xf32>,
    %c7_i32_284 = arith.constant 7 : i32
    %c0_285 = arith.constant 0 : index
    %c0_286 = arith.constant 0 : index
    %588 = vector.load %arg14[%c0_285, %c0_286] : memref<8x128xf32, #tpu.memory_space<vmem>>, vector<8x128xf32>
    %c1_287 = arith.constant 1 : index
    %c0_288 = arith.constant 0 : index
    %c0_289 = arith.constant 0 : index
    %589 = vector.load %arg11[%c1_287, %c0_288, %c0_289] : memref<2x8x128xf32, #tpu.memory_space<vmem>>, vector<1x8x128xf32>
    %590 = vector.shape_cast %589 : vector<1x8x128xf32> to vector<8x128xf32>
    %591 = vector.shape_cast %588 : vector<8x128xf32> to vector<1x8x128xf32>
    tpu.vector_store %arg11[%c1_287, %c0_288, %c0_289], %591 {strides = array<i32>} : memref<2x8x128xf32, #tpu.memory_space<vmem>>, vector<1x8x128xf32>,
    %c0_290 = arith.constant 0 : index
    %c0_291 = arith.constant 0 : index
    %592 = vector.load %arg15[%c0_290, %c0_291] : memref<8x128xf32, #tpu.memory_space<vmem>>, vector<8x128xf32>
    %c1_292 = arith.constant 1 : index
    %c0_293 = arith.constant 0 : index
    %c0_294 = arith.constant 0 : index
    %593 = vector.load %arg12[%c1_292, %c0_293, %c0_294] : memref<2x8x128xf32, #tpu.memory_space<vmem>>, vector<1x8x128xf32>
    %594 = vector.shape_cast %593 : vector<1x8x128xf32> to vector<8x128xf32>
    %595 = vector.shape_cast %592 : vector<8x128xf32> to vector<1x8x128xf32>
    tpu.vector_store %arg12[%c1_292, %c0_293, %c0_294], %595 {strides = array<i32>} : memref<2x8x128xf32, #tpu.memory_space<vmem>>, vector<1x8x128xf32>,
    return
  }
  func.func @transform_0(%arg0: i32) -> (i32, i32, i32) {
    %c0_i32 = arith.constant 0 : i32
    %c0_i32_0 = arith.constant 0 : i32
    %c0_i32_1 = arith.constant 0 : i32
    %c0_i32_2 = arith.constant 0 : i32
    return %c0_i32, %c0_i32_0, %c0_i32_1 : i32, i32, i32
  }
  func.func @transform_1(%arg0: i32) -> (i32, i32, i32) {
    %c0_i32 = arith.constant 0 : i32
    %c0_i32_0 = arith.constant 0 : i32
    %c0_i32_1 = arith.constant 0 : i32
    %c0_i32_2 = arith.constant 0 : i32
    return %c0_i32, %c0_i32_0, %c0_i32_1 : i32, i32, i32
  }
  func.func @transform_2(%arg0: i32) -> (i32, i32, i32) {
    %c0_i32 = arith.constant 0 : i32
    %c0_i32_0 = arith.constant 0 : i32
    %c0_i32_1 = arith.constant 0 : i32
    %c0_i32_2 = arith.constant 0 : i32
    return %c0_i32, %c0_i32_0, %c0_i32_1 : i32, i32, i32
  }
  func.func @transform_3(%arg0: i32) -> (i32, i32) {
    %c0_i32 = arith.constant 0 : i32
    %c0_i32_0 = arith.constant 0 : i32
    %c0_i32_1 = arith.constant 0 : i32
    return %c0_i32, %c0_i32_0 : i32, i32
  }
  func.func @transform_4(%arg0: i32) -> (i32, i32) {
    %c0_i32 = arith.constant 0 : i32
    %c0_i32_0 = arith.constant 0 : i32
    %c0_i32_1 = arith.constant 0 : i32
    return %c0_i32, %c0_i32_0 : i32, i32
  }
  func.func @transform_5(%arg0: i32) -> (i32, i32) {
    %c0_i32 = arith.constant 0 : i32
    %c0_i32_0 = arith.constant 0 : i32
    %c0_i32_1 = arith.constant 0 : i32
    return %c0_i32, %c0_i32_0 : i32, i32
  }
  func.func @transform_6(%arg0: i32) -> (i32, i32) {
    %c0_i32 = arith.constant 0 : i32
    %c0_i32_0 = arith.constant 0 : i32
    %c0_i32_1 = arith.constant 0 : i32
    return %c0_i32, %c0_i32_0 : i32, i32
  }
  func.func @transform_7(%arg0: i32) -> (i32, i32) {
    %c0_i32 = arith.constant 0 : i32
    %c0_i32_0 = arith.constant 0 : i32
    %c0_i32_1 = arith.constant 0 : i32
    return %c0_i32, %c0_i32_0 : i32, i32
  }
  func.func @transform_8(%arg0: i32) -> (i32, i32) {
    %c0_i32 = arith.constant 0 : i32
    %c0_i32_0 = arith.constant 0 : i32
    %c0_i32_1 = arith.constant 0 : i32
    return %c0_i32, %c0_i32_0 : i32, i32
  }
  func.func @transform_9(%arg0: i32) -> (i32, i32, i32) {
    %c0_i32 = arith.constant 0 : i32
    %c0_i32_0 = arith.constant 0 : i32
    %c0_i32_1 = arith.constant 0 : i32
    %c0_i32_2 = arith.constant 0 : i32
    return %c0_i32, %c0_i32_0, %c0_i32_1 : i32, i32, i32
  }
  func.func @transform_10(%arg0: i32) -> (i32, i32, i32) {
    %c0_i32 = arith.constant 0 : i32
    %c0_i32_0 = arith.constant 0 : i32
    %c0_i32_1 = arith.constant 0 : i32
    %c0_i32_2 = arith.constant 0 : i32
    return %c0_i32, %c0_i32_0, %c0_i32_1 : i32, i32, i32
  }
  func.func @transform_11(%arg0: i32) -> (i32, i32, i32) {
    %c0_i32 = arith.constant 0 : i32
    %c0_i32_0 = arith.constant 0 : i32
    %c0_i32_1 = arith.constant 0 : i32
    %c0_i32_2 = arith.constant 0 : i32
    return %c0_i32, %c0_i32_0, %c0_i32_1 : i32, i32, i32
  }
}

module attributes {stable_mosaic.version = 11 : i64} {
  func.func @kernel(%arg0: i32, %arg1: memref<8x8x128xf32, #tpu.memory_space<vmem>>, %arg2: memref<2x8x128xf32, #tpu.memory_space<vmem>>, %arg3: memref<2x8x128xf32, #tpu.memory_space<vmem>>, %arg4: memref<128x512xbf16, #tpu.memory_space<vmem>>, %arg5: memref<128x512xbf16, #tpu.memory_space<vmem>>, %arg6: memref<1x512xf32, #tpu.memory_space<vmem>>, %arg7: memref<128x512xbf16, #tpu.memory_space<vmem>>, %arg8: memref<128x512xbf16, #tpu.memory_space<vmem>>, %arg9: memref<1x512xf32, #tpu.memory_space<vmem>>, %arg10: memref<8x8x128xf32, #tpu.memory_space<vmem>>, %arg11: memref<2x8x128xf32, #tpu.memory_space<vmem>>, %arg12: memref<2x8x128xf32, #tpu.memory_space<vmem>>, %arg13: memref<8x8x512xf32, #tpu.memory_space<vmem>>, %arg14: memref<8x128xf32, #tpu.memory_space<vmem>>, %arg15: memref<8x128xf32, #tpu.memory_space<vmem>>) attributes {dimension_semantics = [#tpu.dimension_semantics<arbitrary>], iteration_bounds = array<i64: 1>, scalar_prefetch = 0 : i64, scratch_operands = 3 : i64, tpu.core_type = #tpu.core_type<tc>, window_params = [{pipeline_mode = #tpu.pipeline_mode<synchronous>, transform_indices = @transform_0, window_bounds = array<i64: 8, 8, 128>}, {pipeline_mode = #tpu.pipeline_mode<synchronous>, transform_indices = @transform_1, window_bounds = array<i64: 2, 8, 128>}, {pipeline_mode = #tpu.pipeline_mode<synchronous>, transform_indices = @transform_2, window_bounds = array<i64: 2, 8, 128>}, {pipeline_mode = #tpu.pipeline_mode<synchronous>, transform_indices = @transform_3, window_bounds = array<i64: 128, 512>}, {pipeline_mode = #tpu.pipeline_mode<synchronous>, transform_indices = @transform_4, window_bounds = array<i64: 128, 512>}, {pipeline_mode = #tpu.pipeline_mode<synchronous>, transform_indices = @transform_5, window_bounds = array<i64: 1, 512>}, {pipeline_mode = #tpu.pipeline_mode<synchronous>, transform_indices = @transform_6, window_bounds = array<i64: 128, 512>}, {pipeline_mode = #tpu.pipeline_mode<synchronous>, transform_indices = @transform_7, window_bounds = array<i64: 128, 512>}, {pipeline_mode = #tpu.pipeline_mode<synchronous>, transform_indices = @transform_8, window_bounds = array<i64: 1, 512>}, {pipeline_mode = #tpu.pipeline_mode<synchronous>, transform_indices = @transform_9, window_bounds = array<i64: 8, 8, 128>}, {pipeline_mode = #tpu.pipeline_mode<synchronous>, transform_indices = @transform_10, window_bounds = array<i64: 2, 8, 128>}, {pipeline_mode = #tpu.pipeline_mode<synchronous>, transform_indices = @transform_11, window_bounds = array<i64: 2, 8, 128>}]} {
    %c0 = arith.constant 0 : index
    %c0_0 = arith.constant 0 : index
    %c0_1 = arith.constant 0 : index
    %0 = vector.load %arg1[%c0, %c0_0, %c0_1] : memref<8x8x128xf32, #tpu.memory_space<vmem>>, vector<8x8x128xf32>
    %1 = vector.shape_cast %0 : vector<8x8x128xf32> to vector<64x128xf32>
    %2 = arith.truncf %1 : vector<64x128xf32> to vector<64x128xbf16>
    %c0_2 = arith.constant 0 : index
    %c0_3 = arith.constant 0 : index
    %3 = vector.load %arg4[%c0_2, %c0_3] : memref<128x512xbf16, #tpu.memory_space<vmem>>, vector<128x512xbf16>
    %cst = arith.constant dense<0.000000e+00> : vector<64x512xf32>
    %4 = tpu.matmul %2, %3, %cst {dimension_numbers = #tpu.dot_dimension_numbers<[1], [0], [0], [1], [0, 0, 1, 1], [], []>} : vector<64x128xbf16>, vector<128x512xbf16>, vector<64x512xf32> -> vector<64x512xf32>
    %c0_4 = arith.constant 0 : index
    %c0_5 = arith.constant 0 : index
    %5 = vector.load %arg6[%c0_4, %c0_5] : memref<1x512xf32, #tpu.memory_space<vmem>>, vector<1x512xf32>
    %6 = vector.broadcast %5 : vector<1x512xf32> to vector<64x512xf32>
    %7 = arith.addf %4, %6 : vector<64x512xf32>
    %8 = vector.shape_cast %7 : vector<64x512xf32> to vector<8x8x512xf32>
    %c0_6 = arith.constant 0 : index
    %c0_7 = arith.constant 0 : index
    %c0_8 = arith.constant 0 : index
    %9 = vector.load %arg13[%c0_6, %c0_7, %c0_8] : memref<8x8x512xf32, #tpu.memory_space<vmem>>, vector<8x8x512xf32>
    tpu.vector_store %arg13[%c0_6, %c0_7, %c0_8], %8 {strides = array<i32>} : memref<8x8x512xf32, #tpu.memory_space<vmem>>, vector<8x8x512xf32>,
    %c0_9 = arith.constant 0 : index
    %c0_10 = arith.constant 0 : index
    %c0_11 = arith.constant 0 : index
    %10 = vector.load %arg2[%c0_9, %c0_10, %c0_11] : memref<2x8x128xf32, #tpu.memory_space<vmem>>, vector<1x8x128xf32>
    %11 = vector.shape_cast %10 : vector<1x8x128xf32> to vector<8x128xf32>
    %c0_12 = arith.constant 0 : index
    %c0_13 = arith.constant 0 : index
    %12 = vector.load %arg14[%c0_12, %c0_13] : memref<8x128xf32, #tpu.memory_space<vmem>>, vector<8x128xf32>
    tpu.vector_store %arg14[%c0_12, %c0_13], %11 {strides = array<i32>} : memref<8x128xf32, #tpu.memory_space<vmem>>, vector<8x128xf32>,
    %c0_14 = arith.constant 0 : index
    %c0_15 = arith.constant 0 : index
    %c0_16 = arith.constant 0 : index
    %13 = vector.load %arg3[%c0_14, %c0_15, %c0_16] : memref<2x8x128xf32, #tpu.memory_space<vmem>>, vector<1x8x128xf32>
    %14 = vector.shape_cast %13 : vector<1x8x128xf32> to vector<8x128xf32>
    %c0_17 = arith.constant 0 : index
    %c0_18 = arith.constant 0 : index
    %15 = vector.load %arg15[%c0_17, %c0_18] : memref<8x128xf32, #tpu.memory_space<vmem>>, vector<8x128xf32>
    tpu.vector_store %arg15[%c0_17, %c0_18], %14 {strides = array<i32>} : memref<8x128xf32, #tpu.memory_space<vmem>>, vector<8x128xf32>,
    %c0_19 = arith.constant 0 : index
    %c0_20 = arith.constant 0 : index
    %16 = vector.load %arg5[%c0_19, %c0_20] : memref<128x512xbf16, #tpu.memory_space<vmem>>, vector<128x512xbf16>
    %c0_i32 = arith.constant 0 : i32
    %c0_21 = arith.constant 0 : index
    %c0_22 = arith.constant 0 : index
    %17 = vector.load %arg14[%c0_21, %c0_22] : memref<8x128xf32, #tpu.memory_space<vmem>>, vector<8x128xf32>
    %c0_23 = arith.constant 0 : index
    %c0_24 = arith.constant 0 : index
    %18 = vector.load %arg15[%c0_23, %c0_24] : memref<8x128xf32, #tpu.memory_space<vmem>>, vector<8x128xf32>
    %19 = arith.index_cast %c0_i32 : i32 to index
    %c0_25 = arith.constant 0 : index
    %c0_26 = arith.constant 0 : index
    %20 = vector.load %arg13[%19, %c0_25, %c0_26] : memref<8x8x512xf32, #tpu.memory_space<vmem>>, vector<1x8x512xf32>
    %21 = vector.shape_cast %20 : vector<1x8x512xf32> to vector<8x512xf32>
    %22 = arith.truncf %17 : vector<8x128xf32> to vector<8x128xbf16>
    %cst_27 = arith.constant dense<0.000000e+00> : vector<8x512xf32>
    %23 = tpu.matmul %22, %16, %cst_27 {dimension_numbers = #tpu.dot_dimension_numbers<[1], [0], [0], [1], [0, 0, 1, 1], [], []>} : vector<8x128xbf16>, vector<128x512xbf16>, vector<8x512xf32> -> vector<8x512xf32>
    %24 = arith.addf %21, %23 : vector<8x512xf32>
    %25 = vector.extract_strided_slice %24 {offsets = [0, 0], sizes = [8, 128], strides = [1, 1]} : vector<8x512xf32> to vector<8x128xf32>
    %26 = arith.negf %25 : vector<8x128xf32>
    %27 = math.exp %26 : vector<8x128xf32>
    %cst_28 = arith.constant 1.000000e+00 : f32
    %28 = vector.broadcast %cst_28 : f32 to vector<8x128xf32>
    %29 = arith.addf %28, %27 : vector<8x128xf32>
    %30 = arith.divf %28, %29 : vector<8x128xf32>
    %31 = vector.extract_strided_slice %24 {offsets = [0, 128], sizes = [8, 128], strides = [1, 1]} : vector<8x512xf32> to vector<8x128xf32>
    %32 = arith.negf %31 : vector<8x128xf32>
    %33 = math.exp %32 : vector<8x128xf32>
    %cst_29 = arith.constant 1.000000e+00 : f32
    %34 = vector.broadcast %cst_29 : f32 to vector<8x128xf32>
    %35 = arith.addf %34, %33 : vector<8x128xf32>
    %36 = arith.divf %34, %35 : vector<8x128xf32>
    %37 = vector.extract_strided_slice %24 {offsets = [0, 256], sizes = [8, 128], strides = [1, 1]} : vector<8x512xf32> to vector<8x128xf32>
    %38 = math.tanh %37 : vector<8x128xf32>
    %39 = vector.extract_strided_slice %24 {offsets = [0, 384], sizes = [8, 128], strides = [1, 1]} : vector<8x512xf32> to vector<8x128xf32>
    %40 = arith.negf %39 : vector<8x128xf32>
    %41 = math.exp %40 : vector<8x128xf32>
    %cst_30 = arith.constant 1.000000e+00 : f32
    %42 = vector.broadcast %cst_30 : f32 to vector<8x128xf32>
    %43 = arith.addf %42, %41 : vector<8x128xf32>
    %44 = arith.divf %42, %43 : vector<8x128xf32>
    %45 = arith.mulf %36, %18 : vector<8x128xf32>
    %46 = arith.mulf %30, %38 : vector<8x128xf32>
    %47 = arith.addf %45, %46 : vector<8x128xf32>
    %48 = math.tanh %47 : vector<8x128xf32>
    %49 = arith.mulf %44, %48 : vector<8x128xf32>
    %c0_31 = arith.constant 0 : index
    %c0_32 = arith.constant 0 : index
    %50 = vector.load %arg14[%c0_31, %c0_32] : memref<8x128xf32, #tpu.memory_space<vmem>>, vector<8x128xf32>
    tpu.vector_store %arg14[%c0_31, %c0_32], %49 {strides = array<i32>} : memref<8x128xf32, #tpu.memory_space<vmem>>, vector<8x128xf32>,
    %c0_33 = arith.constant 0 : index
    %c0_34 = arith.constant 0 : index
    %51 = vector.load %arg15[%c0_33, %c0_34] : memref<8x128xf32, #tpu.memory_space<vmem>>, vector<8x128xf32>
    tpu.vector_store %arg15[%c0_33, %c0_34], %47 {strides = array<i32>} : memref<8x128xf32, #tpu.memory_space<vmem>>, vector<8x128xf32>,
    %52 = arith.index_cast %c0_i32 : i32 to index
    %c0_35 = arith.constant 0 : index
    %c0_36 = arith.constant 0 : index
    %53 = vector.load %arg10[%52, %c0_35, %c0_36] : memref<8x8x128xf32, #tpu.memory_space<vmem>>, vector<1x8x128xf32>
    %54 = vector.shape_cast %53 : vector<1x8x128xf32> to vector<8x128xf32>
    %55 = vector.shape_cast %49 : vector<8x128xf32> to vector<1x8x128xf32>
    tpu.vector_store %arg10[%52, %c0_35, %c0_36], %55 {strides = array<i32>} : memref<8x8x128xf32, #tpu.memory_space<vmem>>, vector<1x8x128xf32>,
    %c1_i32 = arith.constant 1 : i32
    %c0_37 = arith.constant 0 : index
    %c0_38 = arith.constant 0 : index
    %56 = vector.load %arg14[%c0_37, %c0_38] : memref<8x128xf32, #tpu.memory_space<vmem>>, vector<8x128xf32>
    %c0_39 = arith.constant 0 : index
    %c0_40 = arith.constant 0 : index
    %57 = vector.load %arg15[%c0_39, %c0_40] : memref<8x128xf32, #tpu.memory_space<vmem>>, vector<8x128xf32>
    %58 = arith.index_cast %c1_i32 : i32 to index
    %c0_41 = arith.constant 0 : index
    %c0_42 = arith.constant 0 : index
    %59 = vector.load %arg13[%58, %c0_41, %c0_42] : memref<8x8x512xf32, #tpu.memory_space<vmem>>, vector<1x8x512xf32>
    %60 = vector.shape_cast %59 : vector<1x8x512xf32> to vector<8x512xf32>
    %61 = arith.truncf %56 : vector<8x128xf32> to vector<8x128xbf16>
    %cst_43 = arith.constant dense<0.000000e+00> : vector<8x512xf32>
    %62 = tpu.matmul %61, %16, %cst_43 {dimension_numbers = #tpu.dot_dimension_numbers<[1], [0], [0], [1], [0, 0, 1, 1], [], []>} : vector<8x128xbf16>, vector<128x512xbf16>, vector<8x512xf32> -> vector<8x512xf32>
    %63 = arith.addf %60, %62 : vector<8x512xf32>
    %64 = vector.extract_strided_slice %63 {offsets = [0, 0], sizes = [8, 128], strides = [1, 1]} : vector<8x512xf32> to vector<8x128xf32>
    %65 = arith.negf %64 : vector<8x128xf32>
    %66 = math.exp %65 : vector<8x128xf32>
    %cst_44 = arith.constant 1.000000e+00 : f32
    %67 = vector.broadcast %cst_44 : f32 to vector<8x128xf32>
    %68 = arith.addf %67, %66 : vector<8x128xf32>
    %69 = arith.divf %67, %68 : vector<8x128xf32>
    %70 = vector.extract_strided_slice %63 {offsets = [0, 128], sizes = [8, 128], strides = [1, 1]} : vector<8x512xf32> to vector<8x128xf32>
    %71 = arith.negf %70 : vector<8x128xf32>
    %72 = math.exp %71 : vector<8x128xf32>
    %cst_45 = arith.constant 1.000000e+00 : f32
    %73 = vector.broadcast %cst_45 : f32 to vector<8x128xf32>
    %74 = arith.addf %73, %72 : vector<8x128xf32>
    %75 = arith.divf %73, %74 : vector<8x128xf32>
    %76 = vector.extract_strided_slice %63 {offsets = [0, 256], sizes = [8, 128], strides = [1, 1]} : vector<8x512xf32> to vector<8x128xf32>
    %77 = math.tanh %76 : vector<8x128xf32>
    %78 = vector.extract_strided_slice %63 {offsets = [0, 384], sizes = [8, 128], strides = [1, 1]} : vector<8x512xf32> to vector<8x128xf32>
    %79 = arith.negf %78 : vector<8x128xf32>
    %80 = math.exp %79 : vector<8x128xf32>
    %cst_46 = arith.constant 1.000000e+00 : f32
    %81 = vector.broadcast %cst_46 : f32 to vector<8x128xf32>
    %82 = arith.addf %81, %80 : vector<8x128xf32>
    %83 = arith.divf %81, %82 : vector<8x128xf32>
    %84 = arith.mulf %75, %57 : vector<8x128xf32>
    %85 = arith.mulf %69, %77 : vector<8x128xf32>
    %86 = arith.addf %84, %85 : vector<8x128xf32>
    %87 = math.tanh %86 : vector<8x128xf32>
    %88 = arith.mulf %83, %87 : vector<8x128xf32>
    %c0_47 = arith.constant 0 : index
    %c0_48 = arith.constant 0 : index
    %89 = vector.load %arg14[%c0_47, %c0_48] : memref<8x128xf32, #tpu.memory_space<vmem>>, vector<8x128xf32>
    tpu.vector_store %arg14[%c0_47, %c0_48], %88 {strides = array<i32>} : memref<8x128xf32, #tpu.memory_space<vmem>>, vector<8x128xf32>,
    %c0_49 = arith.constant 0 : index
    %c0_50 = arith.constant 0 : index
    %90 = vector.load %arg15[%c0_49, %c0_50] : memref<8x128xf32, #tpu.memory_space<vmem>>, vector<8x128xf32>
    tpu.vector_store %arg15[%c0_49, %c0_50], %86 {strides = array<i32>} : memref<8x128xf32, #tpu.memory_space<vmem>>, vector<8x128xf32>,
    %91 = arith.index_cast %c1_i32 : i32 to index
    %c0_51 = arith.constant 0 : index
    %c0_52 = arith.constant 0 : index
    %92 = vector.load %arg10[%91, %c0_51, %c0_52] : memref<8x8x128xf32, #tpu.memory_space<vmem>>, vector<1x8x128xf32>
    %93 = vector.shape_cast %92 : vector<1x8x128xf32> to vector<8x128xf32>
    %94 = vector.shape_cast %88 : vector<8x128xf32> to vector<1x8x128xf32>
    tpu.vector_store %arg10[%91, %c0_51, %c0_52], %94 {strides = array<i32>} : memref<8x8x128xf32, #tpu.memory_space<vmem>>, vector<1x8x128xf32>,
    %c2_i32 = arith.constant 2 : i32
    %c0_53 = arith.constant 0 : index
    %c0_54 = arith.constant 0 : index
    %95 = vector.load %arg14[%c0_53, %c0_54] : memref<8x128xf32, #tpu.memory_space<vmem>>, vector<8x128xf32>
    %c0_55 = arith.constant 0 : index
    %c0_56 = arith.constant 0 : index
    %96 = vector.load %arg15[%c0_55, %c0_56] : memref<8x128xf32, #tpu.memory_space<vmem>>, vector<8x128xf32>
    %97 = arith.index_cast %c2_i32 : i32 to index
    %c0_57 = arith.constant 0 : index
    %c0_58 = arith.constant 0 : index
    %98 = vector.load %arg13[%97, %c0_57, %c0_58] : memref<8x8x512xf32, #tpu.memory_space<vmem>>, vector<1x8x512xf32>
    %99 = vector.shape_cast %98 : vector<1x8x512xf32> to vector<8x512xf32>
    %100 = arith.truncf %95 : vector<8x128xf32> to vector<8x128xbf16>
    %cst_59 = arith.constant dense<0.000000e+00> : vector<8x512xf32>
    %101 = tpu.matmul %100, %16, %cst_59 {dimension_numbers = #tpu.dot_dimension_numbers<[1], [0], [0], [1], [0, 0, 1, 1], [], []>} : vector<8x128xbf16>, vector<128x512xbf16>, vector<8x512xf32> -> vector<8x512xf32>
    %102 = arith.addf %99, %101 : vector<8x512xf32>
    %103 = vector.extract_strided_slice %102 {offsets = [0, 0], sizes = [8, 128], strides = [1, 1]} : vector<8x512xf32> to vector<8x128xf32>
    %104 = arith.negf %103 : vector<8x128xf32>
    %105 = math.exp %104 : vector<8x128xf32>
    %cst_60 = arith.constant 1.000000e+00 : f32
    %106 = vector.broadcast %cst_60 : f32 to vector<8x128xf32>
    %107 = arith.addf %106, %105 : vector<8x128xf32>
    %108 = arith.divf %106, %107 : vector<8x128xf32>
    %109 = vector.extract_strided_slice %102 {offsets = [0, 128], sizes = [8, 128], strides = [1, 1]} : vector<8x512xf32> to vector<8x128xf32>
    %110 = arith.negf %109 : vector<8x128xf32>
    %111 = math.exp %110 : vector<8x128xf32>
    %cst_61 = arith.constant 1.000000e+00 : f32
    %112 = vector.broadcast %cst_61 : f32 to vector<8x128xf32>
    %113 = arith.addf %112, %111 : vector<8x128xf32>
    %114 = arith.divf %112, %113 : vector<8x128xf32>
    %115 = vector.extract_strided_slice %102 {offsets = [0, 256], sizes = [8, 128], strides = [1, 1]} : vector<8x512xf32> to vector<8x128xf32>
    %116 = math.tanh %115 : vector<8x128xf32>
    %117 = vector.extract_strided_slice %102 {offsets = [0, 384], sizes = [8, 128], strides = [1, 1]} : vector<8x512xf32> to vector<8x128xf32>
    %118 = arith.negf %117 : vector<8x128xf32>
    %119 = math.exp %118 : vector<8x128xf32>
    %cst_62 = arith.constant 1.000000e+00 : f32
    %120 = vector.broadcast %cst_62 : f32 to vector<8x128xf32>
    %121 = arith.addf %120, %119 : vector<8x128xf32>
    %122 = arith.divf %120, %121 : vector<8x128xf32>
    %123 = arith.mulf %114, %96 : vector<8x128xf32>
    %124 = arith.mulf %108, %116 : vector<8x128xf32>
    %125 = arith.addf %123, %124 : vector<8x128xf32>
    %126 = math.tanh %125 : vector<8x128xf32>
    %127 = arith.mulf %122, %126 : vector<8x128xf32>
    %c0_63 = arith.constant 0 : index
    %c0_64 = arith.constant 0 : index
    %128 = vector.load %arg14[%c0_63, %c0_64] : memref<8x128xf32, #tpu.memory_space<vmem>>, vector<8x128xf32>
    tpu.vector_store %arg14[%c0_63, %c0_64], %127 {strides = array<i32>} : memref<8x128xf32, #tpu.memory_space<vmem>>, vector<8x128xf32>,
    %c0_65 = arith.constant 0 : index
    %c0_66 = arith.constant 0 : index
    %129 = vector.load %arg15[%c0_65, %c0_66] : memref<8x128xf32, #tpu.memory_space<vmem>>, vector<8x128xf32>
    tpu.vector_store %arg15[%c0_65, %c0_66], %125 {strides = array<i32>} : memref<8x128xf32, #tpu.memory_space<vmem>>, vector<8x128xf32>,
    %130 = arith.index_cast %c2_i32 : i32 to index
    %c0_67 = arith.constant 0 : index
    %c0_68 = arith.constant 0 : index
    %131 = vector.load %arg10[%130, %c0_67, %c0_68] : memref<8x8x128xf32, #tpu.memory_space<vmem>>, vector<1x8x128xf32>
    %132 = vector.shape_cast %131 : vector<1x8x128xf32> to vector<8x128xf32>
    %133 = vector.shape_cast %127 : vector<8x128xf32> to vector<1x8x128xf32>
    tpu.vector_store %arg10[%130, %c0_67, %c0_68], %133 {strides = array<i32>} : memref<8x8x128xf32, #tpu.memory_space<vmem>>, vector<1x8x128xf32>,
    %c3_i32 = arith.constant 3 : i32
    %c0_69 = arith.constant 0 : index
    %c0_70 = arith.constant 0 : index
    %134 = vector.load %arg14[%c0_69, %c0_70] : memref<8x128xf32, #tpu.memory_space<vmem>>, vector<8x128xf32>
    %c0_71 = arith.constant 0 : index
    %c0_72 = arith.constant 0 : index
    %135 = vector.load %arg15[%c0_71, %c0_72] : memref<8x128xf32, #tpu.memory_space<vmem>>, vector<8x128xf32>
    %136 = arith.index_cast %c3_i32 : i32 to index
    %c0_73 = arith.constant 0 : index
    %c0_74 = arith.constant 0 : index
    %137 = vector.load %arg13[%136, %c0_73, %c0_74] : memref<8x8x512xf32, #tpu.memory_space<vmem>>, vector<1x8x512xf32>
    %138 = vector.shape_cast %137 : vector<1x8x512xf32> to vector<8x512xf32>
    %139 = arith.truncf %134 : vector<8x128xf32> to vector<8x128xbf16>
    %cst_75 = arith.constant dense<0.000000e+00> : vector<8x512xf32>
    %140 = tpu.matmul %139, %16, %cst_75 {dimension_numbers = #tpu.dot_dimension_numbers<[1], [0], [0], [1], [0, 0, 1, 1], [], []>} : vector<8x128xbf16>, vector<128x512xbf16>, vector<8x512xf32> -> vector<8x512xf32>
    %141 = arith.addf %138, %140 : vector<8x512xf32>
    %142 = vector.extract_strided_slice %141 {offsets = [0, 0], sizes = [8, 128], strides = [1, 1]} : vector<8x512xf32> to vector<8x128xf32>
    %143 = arith.negf %142 : vector<8x128xf32>
    %144 = math.exp %143 : vector<8x128xf32>
    %cst_76 = arith.constant 1.000000e+00 : f32
    %145 = vector.broadcast %cst_76 : f32 to vector<8x128xf32>
    %146 = arith.addf %145, %144 : vector<8x128xf32>
    %147 = arith.divf %145, %146 : vector<8x128xf32>
    %148 = vector.extract_strided_slice %141 {offsets = [0, 128], sizes = [8, 128], strides = [1, 1]} : vector<8x512xf32> to vector<8x128xf32>
    %149 = arith.negf %148 : vector<8x128xf32>
    %150 = math.exp %149 : vector<8x128xf32>
    %cst_77 = arith.constant 1.000000e+00 : f32
    %151 = vector.broadcast %cst_77 : f32 to vector<8x128xf32>
    %152 = arith.addf %151, %150 : vector<8x128xf32>
    %153 = arith.divf %151, %152 : vector<8x128xf32>
    %154 = vector.extract_strided_slice %141 {offsets = [0, 256], sizes = [8, 128], strides = [1, 1]} : vector<8x512xf32> to vector<8x128xf32>
    %155 = math.tanh %154 : vector<8x128xf32>
    %156 = vector.extract_strided_slice %141 {offsets = [0, 384], sizes = [8, 128], strides = [1, 1]} : vector<8x512xf32> to vector<8x128xf32>
    %157 = arith.negf %156 : vector<8x128xf32>
    %158 = math.exp %157 : vector<8x128xf32>
    %cst_78 = arith.constant 1.000000e+00 : f32
    %159 = vector.broadcast %cst_78 : f32 to vector<8x128xf32>
    %160 = arith.addf %159, %158 : vector<8x128xf32>
    %161 = arith.divf %159, %160 : vector<8x128xf32>
    %162 = arith.mulf %153, %135 : vector<8x128xf32>
    %163 = arith.mulf %147, %155 : vector<8x128xf32>
    %164 = arith.addf %162, %163 : vector<8x128xf32>
    %165 = math.tanh %164 : vector<8x128xf32>
    %166 = arith.mulf %161, %165 : vector<8x128xf32>
    %c0_79 = arith.constant 0 : index
    %c0_80 = arith.constant 0 : index
    %167 = vector.load %arg14[%c0_79, %c0_80] : memref<8x128xf32, #tpu.memory_space<vmem>>, vector<8x128xf32>
    tpu.vector_store %arg14[%c0_79, %c0_80], %166 {strides = array<i32>} : memref<8x128xf32, #tpu.memory_space<vmem>>, vector<8x128xf32>,
    %c0_81 = arith.constant 0 : index
    %c0_82 = arith.constant 0 : index
    %168 = vector.load %arg15[%c0_81, %c0_82] : memref<8x128xf32, #tpu.memory_space<vmem>>, vector<8x128xf32>
    tpu.vector_store %arg15[%c0_81, %c0_82], %164 {strides = array<i32>} : memref<8x128xf32, #tpu.memory_space<vmem>>, vector<8x128xf32>,
    %169 = arith.index_cast %c3_i32 : i32 to index
    %c0_83 = arith.constant 0 : index
    %c0_84 = arith.constant 0 : index
    %170 = vector.load %arg10[%169, %c0_83, %c0_84] : memref<8x8x128xf32, #tpu.memory_space<vmem>>, vector<1x8x128xf32>
    %171 = vector.shape_cast %170 : vector<1x8x128xf32> to vector<8x128xf32>
    %172 = vector.shape_cast %166 : vector<8x128xf32> to vector<1x8x128xf32>
    tpu.vector_store %arg10[%169, %c0_83, %c0_84], %172 {strides = array<i32>} : memref<8x8x128xf32, #tpu.memory_space<vmem>>, vector<1x8x128xf32>,
    %c4_i32 = arith.constant 4 : i32
    %c0_85 = arith.constant 0 : index
    %c0_86 = arith.constant 0 : index
    %173 = vector.load %arg14[%c0_85, %c0_86] : memref<8x128xf32, #tpu.memory_space<vmem>>, vector<8x128xf32>
    %c0_87 = arith.constant 0 : index
    %c0_88 = arith.constant 0 : index
    %174 = vector.load %arg15[%c0_87, %c0_88] : memref<8x128xf32, #tpu.memory_space<vmem>>, vector<8x128xf32>
    %175 = arith.index_cast %c4_i32 : i32 to index
    %c0_89 = arith.constant 0 : index
    %c0_90 = arith.constant 0 : index
    %176 = vector.load %arg13[%175, %c0_89, %c0_90] : memref<8x8x512xf32, #tpu.memory_space<vmem>>, vector<1x8x512xf32>
    %177 = vector.shape_cast %176 : vector<1x8x512xf32> to vector<8x512xf32>
    %178 = arith.truncf %173 : vector<8x128xf32> to vector<8x128xbf16>
    %cst_91 = arith.constant dense<0.000000e+00> : vector<8x512xf32>
    %179 = tpu.matmul %178, %16, %cst_91 {dimension_numbers = #tpu.dot_dimension_numbers<[1], [0], [0], [1], [0, 0, 1, 1], [], []>} : vector<8x128xbf16>, vector<128x512xbf16>, vector<8x512xf32> -> vector<8x512xf32>
    %180 = arith.addf %177, %179 : vector<8x512xf32>
    %181 = vector.extract_strided_slice %180 {offsets = [0, 0], sizes = [8, 128], strides = [1, 1]} : vector<8x512xf32> to vector<8x128xf32>
    %182 = arith.negf %181 : vector<8x128xf32>
    %183 = math.exp %182 : vector<8x128xf32>
    %cst_92 = arith.constant 1.000000e+00 : f32
    %184 = vector.broadcast %cst_92 : f32 to vector<8x128xf32>
    %185 = arith.addf %184, %183 : vector<8x128xf32>
    %186 = arith.divf %184, %185 : vector<8x128xf32>
    %187 = vector.extract_strided_slice %180 {offsets = [0, 128], sizes = [8, 128], strides = [1, 1]} : vector<8x512xf32> to vector<8x128xf32>
    %188 = arith.negf %187 : vector<8x128xf32>
    %189 = math.exp %188 : vector<8x128xf32>
    %cst_93 = arith.constant 1.000000e+00 : f32
    %190 = vector.broadcast %cst_93 : f32 to vector<8x128xf32>
    %191 = arith.addf %190, %189 : vector<8x128xf32>
    %192 = arith.divf %190, %191 : vector<8x128xf32>
    %193 = vector.extract_strided_slice %180 {offsets = [0, 256], sizes = [8, 128], strides = [1, 1]} : vector<8x512xf32> to vector<8x128xf32>
    %194 = math.tanh %193 : vector<8x128xf32>
    %195 = vector.extract_strided_slice %180 {offsets = [0, 384], sizes = [8, 128], strides = [1, 1]} : vector<8x512xf32> to vector<8x128xf32>
    %196 = arith.negf %195 : vector<8x128xf32>
    %197 = math.exp %196 : vector<8x128xf32>
    %cst_94 = arith.constant 1.000000e+00 : f32
    %198 = vector.broadcast %cst_94 : f32 to vector<8x128xf32>
    %199 = arith.addf %198, %197 : vector<8x128xf32>
    %200 = arith.divf %198, %199 : vector<8x128xf32>
    %201 = arith.mulf %192, %174 : vector<8x128xf32>
    %202 = arith.mulf %186, %194 : vector<8x128xf32>
    %203 = arith.addf %201, %202 : vector<8x128xf32>
    %204 = math.tanh %203 : vector<8x128xf32>
    %205 = arith.mulf %200, %204 : vector<8x128xf32>
    %c0_95 = arith.constant 0 : index
    %c0_96 = arith.constant 0 : index
    %206 = vector.load %arg14[%c0_95, %c0_96] : memref<8x128xf32, #tpu.memory_space<vmem>>, vector<8x128xf32>
    tpu.vector_store %arg14[%c0_95, %c0_96], %205 {strides = array<i32>} : memref<8x128xf32, #tpu.memory_space<vmem>>, vector<8x128xf32>,
    %c0_97 = arith.constant 0 : index
    %c0_98 = arith.constant 0 : index
    %207 = vector.load %arg15[%c0_97, %c0_98] : memref<8x128xf32, #tpu.memory_space<vmem>>, vector<8x128xf32>
    tpu.vector_store %arg15[%c0_97, %c0_98], %203 {strides = array<i32>} : memref<8x128xf32, #tpu.memory_space<vmem>>, vector<8x128xf32>,
    %208 = arith.index_cast %c4_i32 : i32 to index
    %c0_99 = arith.constant 0 : index
    %c0_100 = arith.constant 0 : index
    %209 = vector.load %arg10[%208, %c0_99, %c0_100] : memref<8x8x128xf32, #tpu.memory_space<vmem>>, vector<1x8x128xf32>
    %210 = vector.shape_cast %209 : vector<1x8x128xf32> to vector<8x128xf32>
    %211 = vector.shape_cast %205 : vector<8x128xf32> to vector<1x8x128xf32>
    tpu.vector_store %arg10[%208, %c0_99, %c0_100], %211 {strides = array<i32>} : memref<8x8x128xf32, #tpu.memory_space<vmem>>, vector<1x8x128xf32>,
    %c5_i32 = arith.constant 5 : i32
    %c0_101 = arith.constant 0 : index
    %c0_102 = arith.constant 0 : index
    %212 = vector.load %arg14[%c0_101, %c0_102] : memref<8x128xf32, #tpu.memory_space<vmem>>, vector<8x128xf32>
    %c0_103 = arith.constant 0 : index
    %c0_104 = arith.constant 0 : index
    %213 = vector.load %arg15[%c0_103, %c0_104] : memref<8x128xf32, #tpu.memory_space<vmem>>, vector<8x128xf32>
    %214 = arith.index_cast %c5_i32 : i32 to index
    %c0_105 = arith.constant 0 : index
    %c0_106 = arith.constant 0 : index
    %215 = vector.load %arg13[%214, %c0_105, %c0_106] : memref<8x8x512xf32, #tpu.memory_space<vmem>>, vector<1x8x512xf32>
    %216 = vector.shape_cast %215 : vector<1x8x512xf32> to vector<8x512xf32>
    %217 = arith.truncf %212 : vector<8x128xf32> to vector<8x128xbf16>
    %cst_107 = arith.constant dense<0.000000e+00> : vector<8x512xf32>
    %218 = tpu.matmul %217, %16, %cst_107 {dimension_numbers = #tpu.dot_dimension_numbers<[1], [0], [0], [1], [0, 0, 1, 1], [], []>} : vector<8x128xbf16>, vector<128x512xbf16>, vector<8x512xf32> -> vector<8x512xf32>
    %219 = arith.addf %216, %218 : vector<8x512xf32>
    %220 = vector.extract_strided_slice %219 {offsets = [0, 0], sizes = [8, 128], strides = [1, 1]} : vector<8x512xf32> to vector<8x128xf32>
    %221 = arith.negf %220 : vector<8x128xf32>
    %222 = math.exp %221 : vector<8x128xf32>
    %cst_108 = arith.constant 1.000000e+00 : f32
    %223 = vector.broadcast %cst_108 : f32 to vector<8x128xf32>
    %224 = arith.addf %223, %222 : vector<8x128xf32>
    %225 = arith.divf %223, %224 : vector<8x128xf32>
    %226 = vector.extract_strided_slice %219 {offsets = [0, 128], sizes = [8, 128], strides = [1, 1]} : vector<8x512xf32> to vector<8x128xf32>
    %227 = arith.negf %226 : vector<8x128xf32>
    %228 = math.exp %227 : vector<8x128xf32>
    %cst_109 = arith.constant 1.000000e+00 : f32
    %229 = vector.broadcast %cst_109 : f32 to vector<8x128xf32>
    %230 = arith.addf %229, %228 : vector<8x128xf32>
    %231 = arith.divf %229, %230 : vector<8x128xf32>
    %232 = vector.extract_strided_slice %219 {offsets = [0, 256], sizes = [8, 128], strides = [1, 1]} : vector<8x512xf32> to vector<8x128xf32>
    %233 = math.tanh %232 : vector<8x128xf32>
    %234 = vector.extract_strided_slice %219 {offsets = [0, 384], sizes = [8, 128], strides = [1, 1]} : vector<8x512xf32> to vector<8x128xf32>
    %235 = arith.negf %234 : vector<8x128xf32>
    %236 = math.exp %235 : vector<8x128xf32>
    %cst_110 = arith.constant 1.000000e+00 : f32
    %237 = vector.broadcast %cst_110 : f32 to vector<8x128xf32>
    %238 = arith.addf %237, %236 : vector<8x128xf32>
    %239 = arith.divf %237, %238 : vector<8x128xf32>
    %240 = arith.mulf %231, %213 : vector<8x128xf32>
    %241 = arith.mulf %225, %233 : vector<8x128xf32>
    %242 = arith.addf %240, %241 : vector<8x128xf32>
    %243 = math.tanh %242 : vector<8x128xf32>
    %244 = arith.mulf %239, %243 : vector<8x128xf32>
    %c0_111 = arith.constant 0 : index
    %c0_112 = arith.constant 0 : index
    %245 = vector.load %arg14[%c0_111, %c0_112] : memref<8x128xf32, #tpu.memory_space<vmem>>, vector<8x128xf32>
    tpu.vector_store %arg14[%c0_111, %c0_112], %244 {strides = array<i32>} : memref<8x128xf32, #tpu.memory_space<vmem>>, vector<8x128xf32>,
    %c0_113 = arith.constant 0 : index
    %c0_114 = arith.constant 0 : index
    %246 = vector.load %arg15[%c0_113, %c0_114] : memref<8x128xf32, #tpu.memory_space<vmem>>, vector<8x128xf32>
    tpu.vector_store %arg15[%c0_113, %c0_114], %242 {strides = array<i32>} : memref<8x128xf32, #tpu.memory_space<vmem>>, vector<8x128xf32>,
    %247 = arith.index_cast %c5_i32 : i32 to index
    %c0_115 = arith.constant 0 : index
    %c0_116 = arith.constant 0 : index
    %248 = vector.load %arg10[%247, %c0_115, %c0_116] : memref<8x8x128xf32, #tpu.memory_space<vmem>>, vector<1x8x128xf32>
    %249 = vector.shape_cast %248 : vector<1x8x128xf32> to vector<8x128xf32>
    %250 = vector.shape_cast %244 : vector<8x128xf32> to vector<1x8x128xf32>
    tpu.vector_store %arg10[%247, %c0_115, %c0_116], %250 {strides = array<i32>} : memref<8x8x128xf32, #tpu.memory_space<vmem>>, vector<1x8x128xf32>,
    %c6_i32 = arith.constant 6 : i32
    %c0_117 = arith.constant 0 : index
    %c0_118 = arith.constant 0 : index
    %251 = vector.load %arg14[%c0_117, %c0_118] : memref<8x128xf32, #tpu.memory_space<vmem>>, vector<8x128xf32>
    %c0_119 = arith.constant 0 : index
    %c0_120 = arith.constant 0 : index
    %252 = vector.load %arg15[%c0_119, %c0_120] : memref<8x128xf32, #tpu.memory_space<vmem>>, vector<8x128xf32>
    %253 = arith.index_cast %c6_i32 : i32 to index
    %c0_121 = arith.constant 0 : index
    %c0_122 = arith.constant 0 : index
    %254 = vector.load %arg13[%253, %c0_121, %c0_122] : memref<8x8x512xf32, #tpu.memory_space<vmem>>, vector<1x8x512xf32>
    %255 = vector.shape_cast %254 : vector<1x8x512xf32> to vector<8x512xf32>
    %256 = arith.truncf %251 : vector<8x128xf32> to vector<8x128xbf16>
    %cst_123 = arith.constant dense<0.000000e+00> : vector<8x512xf32>
    %257 = tpu.matmul %256, %16, %cst_123 {dimension_numbers = #tpu.dot_dimension_numbers<[1], [0], [0], [1], [0, 0, 1, 1], [], []>} : vector<8x128xbf16>, vector<128x512xbf16>, vector<8x512xf32> -> vector<8x512xf32>
    %258 = arith.addf %255, %257 : vector<8x512xf32>
    %259 = vector.extract_strided_slice %258 {offsets = [0, 0], sizes = [8, 128], strides = [1, 1]} : vector<8x512xf32> to vector<8x128xf32>
    %260 = arith.negf %259 : vector<8x128xf32>
    %261 = math.exp %260 : vector<8x128xf32>
    %cst_124 = arith.constant 1.000000e+00 : f32
    %262 = vector.broadcast %cst_124 : f32 to vector<8x128xf32>
    %263 = arith.addf %262, %261 : vector<8x128xf32>
    %264 = arith.divf %262, %263 : vector<8x128xf32>
    %265 = vector.extract_strided_slice %258 {offsets = [0, 128], sizes = [8, 128], strides = [1, 1]} : vector<8x512xf32> to vector<8x128xf32>
    %266 = arith.negf %265 : vector<8x128xf32>
    %267 = math.exp %266 : vector<8x128xf32>
    %cst_125 = arith.constant 1.000000e+00 : f32
    %268 = vector.broadcast %cst_125 : f32 to vector<8x128xf32>
    %269 = arith.addf %268, %267 : vector<8x128xf32>
    %270 = arith.divf %268, %269 : vector<8x128xf32>
    %271 = vector.extract_strided_slice %258 {offsets = [0, 256], sizes = [8, 128], strides = [1, 1]} : vector<8x512xf32> to vector<8x128xf32>
    %272 = math.tanh %271 : vector<8x128xf32>
    %273 = vector.extract_strided_slice %258 {offsets = [0, 384], sizes = [8, 128], strides = [1, 1]} : vector<8x512xf32> to vector<8x128xf32>
    %274 = arith.negf %273 : vector<8x128xf32>
    %275 = math.exp %274 : vector<8x128xf32>
    %cst_126 = arith.constant 1.000000e+00 : f32
    %276 = vector.broadcast %cst_126 : f32 to vector<8x128xf32>
    %277 = arith.addf %276, %275 : vector<8x128xf32>
    %278 = arith.divf %276, %277 : vector<8x128xf32>
    %279 = arith.mulf %270, %252 : vector<8x128xf32>
    %280 = arith.mulf %264, %272 : vector<8x128xf32>
    %281 = arith.addf %279, %280 : vector<8x128xf32>
    %282 = math.tanh %281 : vector<8x128xf32>
    %283 = arith.mulf %278, %282 : vector<8x128xf32>
    %c0_127 = arith.constant 0 : index
    %c0_128 = arith.constant 0 : index
    %284 = vector.load %arg14[%c0_127, %c0_128] : memref<8x128xf32, #tpu.memory_space<vmem>>, vector<8x128xf32>
    tpu.vector_store %arg14[%c0_127, %c0_128], %283 {strides = array<i32>} : memref<8x128xf32, #tpu.memory_space<vmem>>, vector<8x128xf32>,
    %c0_129 = arith.constant 0 : index
    %c0_130 = arith.constant 0 : index
    %285 = vector.load %arg15[%c0_129, %c0_130] : memref<8x128xf32, #tpu.memory_space<vmem>>, vector<8x128xf32>
    tpu.vector_store %arg15[%c0_129, %c0_130], %281 {strides = array<i32>} : memref<8x128xf32, #tpu.memory_space<vmem>>, vector<8x128xf32>,
    %286 = arith.index_cast %c6_i32 : i32 to index
    %c0_131 = arith.constant 0 : index
    %c0_132 = arith.constant 0 : index
    %287 = vector.load %arg10[%286, %c0_131, %c0_132] : memref<8x8x128xf32, #tpu.memory_space<vmem>>, vector<1x8x128xf32>
    %288 = vector.shape_cast %287 : vector<1x8x128xf32> to vector<8x128xf32>
    %289 = vector.shape_cast %283 : vector<8x128xf32> to vector<1x8x128xf32>
    tpu.vector_store %arg10[%286, %c0_131, %c0_132], %289 {strides = array<i32>} : memref<8x8x128xf32, #tpu.memory_space<vmem>>, vector<1x8x128xf32>,
    %c7_i32 = arith.constant 7 : i32
    %c0_133 = arith.constant 0 : index
    %c0_134 = arith.constant 0 : index
    %290 = vector.load %arg14[%c0_133, %c0_134] : memref<8x128xf32, #tpu.memory_space<vmem>>, vector<8x128xf32>
    %c0_135 = arith.constant 0 : index
    %c0_136 = arith.constant 0 : index
    %291 = vector.load %arg15[%c0_135, %c0_136] : memref<8x128xf32, #tpu.memory_space<vmem>>, vector<8x128xf32>
    %292 = arith.index_cast %c7_i32 : i32 to index
    %c0_137 = arith.constant 0 : index
    %c0_138 = arith.constant 0 : index
    %293 = vector.load %arg13[%292, %c0_137, %c0_138] : memref<8x8x512xf32, #tpu.memory_space<vmem>>, vector<1x8x512xf32>
    %294 = vector.shape_cast %293 : vector<1x8x512xf32> to vector<8x512xf32>
    %295 = arith.truncf %290 : vector<8x128xf32> to vector<8x128xbf16>
    %cst_139 = arith.constant dense<0.000000e+00> : vector<8x512xf32>
    %296 = tpu.matmul %295, %16, %cst_139 {dimension_numbers = #tpu.dot_dimension_numbers<[1], [0], [0], [1], [0, 0, 1, 1], [], []>} : vector<8x128xbf16>, vector<128x512xbf16>, vector<8x512xf32> -> vector<8x512xf32>
    %297 = arith.addf %294, %296 : vector<8x512xf32>
    %298 = vector.extract_strided_slice %297 {offsets = [0, 0], sizes = [8, 128], strides = [1, 1]} : vector<8x512xf32> to vector<8x128xf32>
    %299 = arith.negf %298 : vector<8x128xf32>
    %300 = math.exp %299 : vector<8x128xf32>
    %cst_140 = arith.constant 1.000000e+00 : f32
    %301 = vector.broadcast %cst_140 : f32 to vector<8x128xf32>
    %302 = arith.addf %301, %300 : vector<8x128xf32>
    %303 = arith.divf %301, %302 : vector<8x128xf32>
    %304 = vector.extract_strided_slice %297 {offsets = [0, 128], sizes = [8, 128], strides = [1, 1]} : vector<8x512xf32> to vector<8x128xf32>
    %305 = arith.negf %304 : vector<8x128xf32>
    %306 = math.exp %305 : vector<8x128xf32>
    %cst_141 = arith.constant 1.000000e+00 : f32
    %307 = vector.broadcast %cst_141 : f32 to vector<8x128xf32>
    %308 = arith.addf %307, %306 : vector<8x128xf32>
    %309 = arith.divf %307, %308 : vector<8x128xf32>
    %310 = vector.extract_strided_slice %297 {offsets = [0, 256], sizes = [8, 128], strides = [1, 1]} : vector<8x512xf32> to vector<8x128xf32>
    %311 = math.tanh %310 : vector<8x128xf32>
    %312 = vector.extract_strided_slice %297 {offsets = [0, 384], sizes = [8, 128], strides = [1, 1]} : vector<8x512xf32> to vector<8x128xf32>
    %313 = arith.negf %312 : vector<8x128xf32>
    %314 = math.exp %313 : vector<8x128xf32>
    %cst_142 = arith.constant 1.000000e+00 : f32
    %315 = vector.broadcast %cst_142 : f32 to vector<8x128xf32>
    %316 = arith.addf %315, %314 : vector<8x128xf32>
    %317 = arith.divf %315, %316 : vector<8x128xf32>
    %318 = arith.mulf %309, %291 : vector<8x128xf32>
    %319 = arith.mulf %303, %311 : vector<8x128xf32>
    %320 = arith.addf %318, %319 : vector<8x128xf32>
    %321 = math.tanh %320 : vector<8x128xf32>
    %322 = arith.mulf %317, %321 : vector<8x128xf32>
    %c0_143 = arith.constant 0 : index
    %c0_144 = arith.constant 0 : index
    %323 = vector.load %arg14[%c0_143, %c0_144] : memref<8x128xf32, #tpu.memory_space<vmem>>, vector<8x128xf32>
    tpu.vector_store %arg14[%c0_143, %c0_144], %322 {strides = array<i32>} : memref<8x128xf32, #tpu.memory_space<vmem>>, vector<8x128xf32>,
    %c0_145 = arith.constant 0 : index
    %c0_146 = arith.constant 0 : index
    %324 = vector.load %arg15[%c0_145, %c0_146] : memref<8x128xf32, #tpu.memory_space<vmem>>, vector<8x128xf32>
    tpu.vector_store %arg15[%c0_145, %c0_146], %320 {strides = array<i32>} : memref<8x128xf32, #tpu.memory_space<vmem>>, vector<8x128xf32>,
    %325 = arith.index_cast %c7_i32 : i32 to index
    %c0_147 = arith.constant 0 : index
    %c0_148 = arith.constant 0 : index
    %326 = vector.load %arg10[%325, %c0_147, %c0_148] : memref<8x8x128xf32, #tpu.memory_space<vmem>>, vector<1x8x128xf32>
    %327 = vector.shape_cast %326 : vector<1x8x128xf32> to vector<8x128xf32>
    %328 = vector.shape_cast %322 : vector<8x128xf32> to vector<1x8x128xf32>
    tpu.vector_store %arg10[%325, %c0_147, %c0_148], %328 {strides = array<i32>} : memref<8x8x128xf32, #tpu.memory_space<vmem>>, vector<1x8x128xf32>,
    %c8_i32 = arith.constant 8 : i32
    %c0_149 = arith.constant 0 : index
    %c0_150 = arith.constant 0 : index
    %329 = vector.load %arg14[%c0_149, %c0_150] : memref<8x128xf32, #tpu.memory_space<vmem>>, vector<8x128xf32>
    %c0_151 = arith.constant 0 : index
    %c0_152 = arith.constant 0 : index
    %c0_153 = arith.constant 0 : index
    %330 = vector.load %arg11[%c0_151, %c0_152, %c0_153] : memref<2x8x128xf32, #tpu.memory_space<vmem>>, vector<1x8x128xf32>
    %331 = vector.shape_cast %330 : vector<1x8x128xf32> to vector<8x128xf32>
    %332 = vector.shape_cast %329 : vector<8x128xf32> to vector<1x8x128xf32>
    tpu.vector_store %arg11[%c0_151, %c0_152, %c0_153], %332 {strides = array<i32>} : memref<2x8x128xf32, #tpu.memory_space<vmem>>, vector<1x8x128xf32>,
    %c0_154 = arith.constant 0 : index
    %c0_155 = arith.constant 0 : index
    %333 = vector.load %arg15[%c0_154, %c0_155] : memref<8x128xf32, #tpu.memory_space<vmem>>, vector<8x128xf32>
    %c0_156 = arith.constant 0 : index
    %c0_157 = arith.constant 0 : index
    %c0_158 = arith.constant 0 : index
    %334 = vector.load %arg12[%c0_156, %c0_157, %c0_158] : memref<2x8x128xf32, #tpu.memory_space<vmem>>, vector<1x8x128xf32>
    %335 = vector.shape_cast %334 : vector<1x8x128xf32> to vector<8x128xf32>
    %336 = vector.shape_cast %333 : vector<8x128xf32> to vector<1x8x128xf32>
    tpu.vector_store %arg12[%c0_156, %c0_157, %c0_158], %336 {strides = array<i32>} : memref<2x8x128xf32, #tpu.memory_space<vmem>>, vector<1x8x128xf32>,
    %c0_159 = arith.constant 0 : index
    %c0_160 = arith.constant 0 : index
    %c0_161 = arith.constant 0 : index
    %337 = vector.load %arg10[%c0_159, %c0_160, %c0_161] : memref<8x8x128xf32, #tpu.memory_space<vmem>>, vector<8x8x128xf32>
    %338 = vector.shape_cast %337 : vector<8x8x128xf32> to vector<64x128xf32>
    %339 = arith.truncf %338 : vector<64x128xf32> to vector<64x128xbf16>
    %c0_162 = arith.constant 0 : index
    %c0_163 = arith.constant 0 : index
    %340 = vector.load %arg7[%c0_162, %c0_163] : memref<128x512xbf16, #tpu.memory_space<vmem>>, vector<128x512xbf16>
    %cst_164 = arith.constant dense<0.000000e+00> : vector<64x512xf32>
    %341 = tpu.matmul %339, %340, %cst_164 {dimension_numbers = #tpu.dot_dimension_numbers<[1], [0], [0], [1], [0, 0, 1, 1], [], []>} : vector<64x128xbf16>, vector<128x512xbf16>, vector<64x512xf32> -> vector<64x512xf32>
    %c0_165 = arith.constant 0 : index
    %c0_166 = arith.constant 0 : index
    %342 = vector.load %arg9[%c0_165, %c0_166] : memref<1x512xf32, #tpu.memory_space<vmem>>, vector<1x512xf32>
    %343 = vector.broadcast %342 : vector<1x512xf32> to vector<64x512xf32>
    %344 = arith.addf %341, %343 : vector<64x512xf32>
    %345 = vector.shape_cast %344 : vector<64x512xf32> to vector<8x8x512xf32>
    %c0_167 = arith.constant 0 : index
    %c0_168 = arith.constant 0 : index
    %c0_169 = arith.constant 0 : index
    %346 = vector.load %arg13[%c0_167, %c0_168, %c0_169] : memref<8x8x512xf32, #tpu.memory_space<vmem>>, vector<8x8x512xf32>
    tpu.vector_store %arg13[%c0_167, %c0_168, %c0_169], %345 {strides = array<i32>} : memref<8x8x512xf32, #tpu.memory_space<vmem>>, vector<8x8x512xf32>,
    %c1 = arith.constant 1 : index
    %c0_170 = arith.constant 0 : index
    %c0_171 = arith.constant 0 : index
    %347 = vector.load %arg2[%c1, %c0_170, %c0_171] : memref<2x8x128xf32, #tpu.memory_space<vmem>>, vector<1x8x128xf32>
    %348 = vector.shape_cast %347 : vector<1x8x128xf32> to vector<8x128xf32>
    %c0_172 = arith.constant 0 : index
    %c0_173 = arith.constant 0 : index
    %349 = vector.load %arg14[%c0_172, %c0_173] : memref<8x128xf32, #tpu.memory_space<vmem>>, vector<8x128xf32>
    tpu.vector_store %arg14[%c0_172, %c0_173], %348 {strides = array<i32>} : memref<8x128xf32, #tpu.memory_space<vmem>>, vector<8x128xf32>,
    %c1_174 = arith.constant 1 : index
    %c0_175 = arith.constant 0 : index
    %c0_176 = arith.constant 0 : index
    %350 = vector.load %arg3[%c1_174, %c0_175, %c0_176] : memref<2x8x128xf32, #tpu.memory_space<vmem>>, vector<1x8x128xf32>
    %351 = vector.shape_cast %350 : vector<1x8x128xf32> to vector<8x128xf32>
    %c0_177 = arith.constant 0 : index
    %c0_178 = arith.constant 0 : index
    %352 = vector.load %arg15[%c0_177, %c0_178] : memref<8x128xf32, #tpu.memory_space<vmem>>, vector<8x128xf32>
    tpu.vector_store %arg15[%c0_177, %c0_178], %351 {strides = array<i32>} : memref<8x128xf32, #tpu.memory_space<vmem>>, vector<8x128xf32>,
    %c0_179 = arith.constant 0 : index
    %c0_180 = arith.constant 0 : index
    %353 = vector.load %arg8[%c0_179, %c0_180] : memref<128x512xbf16, #tpu.memory_space<vmem>>, vector<128x512xbf16>
    %c0_i32_181 = arith.constant 0 : i32
    %c0_182 = arith.constant 0 : index
    %c0_183 = arith.constant 0 : index
    %354 = vector.load %arg14[%c0_182, %c0_183] : memref<8x128xf32, #tpu.memory_space<vmem>>, vector<8x128xf32>
    %c0_184 = arith.constant 0 : index
    %c0_185 = arith.constant 0 : index
    %355 = vector.load %arg15[%c0_184, %c0_185] : memref<8x128xf32, #tpu.memory_space<vmem>>, vector<8x128xf32>
    %356 = arith.index_cast %c0_i32_181 : i32 to index
    %c0_186 = arith.constant 0 : index
    %c0_187 = arith.constant 0 : index
    %357 = vector.load %arg13[%356, %c0_186, %c0_187] : memref<8x8x512xf32, #tpu.memory_space<vmem>>, vector<1x8x512xf32>
    %358 = vector.shape_cast %357 : vector<1x8x512xf32> to vector<8x512xf32>
    %359 = arith.truncf %354 : vector<8x128xf32> to vector<8x128xbf16>
    %cst_188 = arith.constant dense<0.000000e+00> : vector<8x512xf32>
    %360 = tpu.matmul %359, %353, %cst_188 {dimension_numbers = #tpu.dot_dimension_numbers<[1], [0], [0], [1], [0, 0, 1, 1], [], []>} : vector<8x128xbf16>, vector<128x512xbf16>, vector<8x512xf32> -> vector<8x512xf32>
    %361 = arith.addf %358, %360 : vector<8x512xf32>
    %362 = vector.extract_strided_slice %361 {offsets = [0, 0], sizes = [8, 128], strides = [1, 1]} : vector<8x512xf32> to vector<8x128xf32>
    %363 = arith.negf %362 : vector<8x128xf32>
    %364 = math.exp %363 : vector<8x128xf32>
    %cst_189 = arith.constant 1.000000e+00 : f32
    %365 = vector.broadcast %cst_189 : f32 to vector<8x128xf32>
    %366 = arith.addf %365, %364 : vector<8x128xf32>
    %367 = arith.divf %365, %366 : vector<8x128xf32>
    %368 = vector.extract_strided_slice %361 {offsets = [0, 128], sizes = [8, 128], strides = [1, 1]} : vector<8x512xf32> to vector<8x128xf32>
    %369 = arith.negf %368 : vector<8x128xf32>
    %370 = math.exp %369 : vector<8x128xf32>
    %cst_190 = arith.constant 1.000000e+00 : f32
    %371 = vector.broadcast %cst_190 : f32 to vector<8x128xf32>
    %372 = arith.addf %371, %370 : vector<8x128xf32>
    %373 = arith.divf %371, %372 : vector<8x128xf32>
    %374 = vector.extract_strided_slice %361 {offsets = [0, 256], sizes = [8, 128], strides = [1, 1]} : vector<8x512xf32> to vector<8x128xf32>
    %375 = math.tanh %374 : vector<8x128xf32>
    %376 = vector.extract_strided_slice %361 {offsets = [0, 384], sizes = [8, 128], strides = [1, 1]} : vector<8x512xf32> to vector<8x128xf32>
    %377 = arith.negf %376 : vector<8x128xf32>
    %378 = math.exp %377 : vector<8x128xf32>
    %cst_191 = arith.constant 1.000000e+00 : f32
    %379 = vector.broadcast %cst_191 : f32 to vector<8x128xf32>
    %380 = arith.addf %379, %378 : vector<8x128xf32>
    %381 = arith.divf %379, %380 : vector<8x128xf32>
    %382 = arith.mulf %373, %355 : vector<8x128xf32>
    %383 = arith.mulf %367, %375 : vector<8x128xf32>
    %384 = arith.addf %382, %383 : vector<8x128xf32>
    %385 = math.tanh %384 : vector<8x128xf32>
    %386 = arith.mulf %381, %385 : vector<8x128xf32>
    %c0_192 = arith.constant 0 : index
    %c0_193 = arith.constant 0 : index
    %387 = vector.load %arg14[%c0_192, %c0_193] : memref<8x128xf32, #tpu.memory_space<vmem>>, vector<8x128xf32>
    tpu.vector_store %arg14[%c0_192, %c0_193], %386 {strides = array<i32>} : memref<8x128xf32, #tpu.memory_space<vmem>>, vector<8x128xf32>,
    %c0_194 = arith.constant 0 : index
    %c0_195 = arith.constant 0 : index
    %388 = vector.load %arg15[%c0_194, %c0_195] : memref<8x128xf32, #tpu.memory_space<vmem>>, vector<8x128xf32>
    tpu.vector_store %arg15[%c0_194, %c0_195], %384 {strides = array<i32>} : memref<8x128xf32, #tpu.memory_space<vmem>>, vector<8x128xf32>,
    %389 = arith.index_cast %c0_i32_181 : i32 to index
    %c0_196 = arith.constant 0 : index
    %c0_197 = arith.constant 0 : index
    %390 = vector.load %arg10[%389, %c0_196, %c0_197] : memref<8x8x128xf32, #tpu.memory_space<vmem>>, vector<1x8x128xf32>
    %391 = vector.shape_cast %390 : vector<1x8x128xf32> to vector<8x128xf32>
    %392 = vector.shape_cast %386 : vector<8x128xf32> to vector<1x8x128xf32>
    tpu.vector_store %arg10[%389, %c0_196, %c0_197], %392 {strides = array<i32>} : memref<8x8x128xf32, #tpu.memory_space<vmem>>, vector<1x8x128xf32>,
    %c1_i32_198 = arith.constant 1 : i32
    %c0_199 = arith.constant 0 : index
    %c0_200 = arith.constant 0 : index
    %393 = vector.load %arg14[%c0_199, %c0_200] : memref<8x128xf32, #tpu.memory_space<vmem>>, vector<8x128xf32>
    %c0_201 = arith.constant 0 : index
    %c0_202 = arith.constant 0 : index
    %394 = vector.load %arg15[%c0_201, %c0_202] : memref<8x128xf32, #tpu.memory_space<vmem>>, vector<8x128xf32>
    %395 = arith.index_cast %c1_i32_198 : i32 to index
    %c0_203 = arith.constant 0 : index
    %c0_204 = arith.constant 0 : index
    %396 = vector.load %arg13[%395, %c0_203, %c0_204] : memref<8x8x512xf32, #tpu.memory_space<vmem>>, vector<1x8x512xf32>
    %397 = vector.shape_cast %396 : vector<1x8x512xf32> to vector<8x512xf32>
    %398 = arith.truncf %393 : vector<8x128xf32> to vector<8x128xbf16>
    %cst_205 = arith.constant dense<0.000000e+00> : vector<8x512xf32>
    %399 = tpu.matmul %398, %353, %cst_205 {dimension_numbers = #tpu.dot_dimension_numbers<[1], [0], [0], [1], [0, 0, 1, 1], [], []>} : vector<8x128xbf16>, vector<128x512xbf16>, vector<8x512xf32> -> vector<8x512xf32>
    %400 = arith.addf %397, %399 : vector<8x512xf32>
    %401 = vector.extract_strided_slice %400 {offsets = [0, 0], sizes = [8, 128], strides = [1, 1]} : vector<8x512xf32> to vector<8x128xf32>
    %402 = arith.negf %401 : vector<8x128xf32>
    %403 = math.exp %402 : vector<8x128xf32>
    %cst_206 = arith.constant 1.000000e+00 : f32
    %404 = vector.broadcast %cst_206 : f32 to vector<8x128xf32>
    %405 = arith.addf %404, %403 : vector<8x128xf32>
    %406 = arith.divf %404, %405 : vector<8x128xf32>
    %407 = vector.extract_strided_slice %400 {offsets = [0, 128], sizes = [8, 128], strides = [1, 1]} : vector<8x512xf32> to vector<8x128xf32>
    %408 = arith.negf %407 : vector<8x128xf32>
    %409 = math.exp %408 : vector<8x128xf32>
    %cst_207 = arith.constant 1.000000e+00 : f32
    %410 = vector.broadcast %cst_207 : f32 to vector<8x128xf32>
    %411 = arith.addf %410, %409 : vector<8x128xf32>
    %412 = arith.divf %410, %411 : vector<8x128xf32>
    %413 = vector.extract_strided_slice %400 {offsets = [0, 256], sizes = [8, 128], strides = [1, 1]} : vector<8x512xf32> to vector<8x128xf32>
    %414 = math.tanh %413 : vector<8x128xf32>
    %415 = vector.extract_strided_slice %400 {offsets = [0, 384], sizes = [8, 128], strides = [1, 1]} : vector<8x512xf32> to vector<8x128xf32>
    %416 = arith.negf %415 : vector<8x128xf32>
    %417 = math.exp %416 : vector<8x128xf32>
    %cst_208 = arith.constant 1.000000e+00 : f32
    %418 = vector.broadcast %cst_208 : f32 to vector<8x128xf32>
    %419 = arith.addf %418, %417 : vector<8x128xf32>
    %420 = arith.divf %418, %419 : vector<8x128xf32>
    %421 = arith.mulf %412, %394 : vector<8x128xf32>
    %422 = arith.mulf %406, %414 : vector<8x128xf32>
    %423 = arith.addf %421, %422 : vector<8x128xf32>
    %424 = math.tanh %423 : vector<8x128xf32>
    %425 = arith.mulf %420, %424 : vector<8x128xf32>
    %c0_209 = arith.constant 0 : index
    %c0_210 = arith.constant 0 : index
    %426 = vector.load %arg14[%c0_209, %c0_210] : memref<8x128xf32, #tpu.memory_space<vmem>>, vector<8x128xf32>
    tpu.vector_store %arg14[%c0_209, %c0_210], %425 {strides = array<i32>} : memref<8x128xf32, #tpu.memory_space<vmem>>, vector<8x128xf32>,
    %c0_211 = arith.constant 0 : index
    %c0_212 = arith.constant 0 : index
    %427 = vector.load %arg15[%c0_211, %c0_212] : memref<8x128xf32, #tpu.memory_space<vmem>>, vector<8x128xf32>
    tpu.vector_store %arg15[%c0_211, %c0_212], %423 {strides = array<i32>} : memref<8x128xf32, #tpu.memory_space<vmem>>, vector<8x128xf32>,
    %428 = arith.index_cast %c1_i32_198 : i32 to index
    %c0_213 = arith.constant 0 : index
    %c0_214 = arith.constant 0 : index
    %429 = vector.load %arg10[%428, %c0_213, %c0_214] : memref<8x8x128xf32, #tpu.memory_space<vmem>>, vector<1x8x128xf32>
    %430 = vector.shape_cast %429 : vector<1x8x128xf32> to vector<8x128xf32>
    %431 = vector.shape_cast %425 : vector<8x128xf32> to vector<1x8x128xf32>
    tpu.vector_store %arg10[%428, %c0_213, %c0_214], %431 {strides = array<i32>} : memref<8x8x128xf32, #tpu.memory_space<vmem>>, vector<1x8x128xf32>,
    %c2_i32_215 = arith.constant 2 : i32
    %c0_216 = arith.constant 0 : index
    %c0_217 = arith.constant 0 : index
    %432 = vector.load %arg14[%c0_216, %c0_217] : memref<8x128xf32, #tpu.memory_space<vmem>>, vector<8x128xf32>
    %c0_218 = arith.constant 0 : index
    %c0_219 = arith.constant 0 : index
    %433 = vector.load %arg15[%c0_218, %c0_219] : memref<8x128xf32, #tpu.memory_space<vmem>>, vector<8x128xf32>
    %434 = arith.index_cast %c2_i32_215 : i32 to index
    %c0_220 = arith.constant 0 : index
    %c0_221 = arith.constant 0 : index
    %435 = vector.load %arg13[%434, %c0_220, %c0_221] : memref<8x8x512xf32, #tpu.memory_space<vmem>>, vector<1x8x512xf32>
    %436 = vector.shape_cast %435 : vector<1x8x512xf32> to vector<8x512xf32>
    %437 = arith.truncf %432 : vector<8x128xf32> to vector<8x128xbf16>
    %cst_222 = arith.constant dense<0.000000e+00> : vector<8x512xf32>
    %438 = tpu.matmul %437, %353, %cst_222 {dimension_numbers = #tpu.dot_dimension_numbers<[1], [0], [0], [1], [0, 0, 1, 1], [], []>} : vector<8x128xbf16>, vector<128x512xbf16>, vector<8x512xf32> -> vector<8x512xf32>
    %439 = arith.addf %436, %438 : vector<8x512xf32>
    %440 = vector.extract_strided_slice %439 {offsets = [0, 0], sizes = [8, 128], strides = [1, 1]} : vector<8x512xf32> to vector<8x128xf32>
    %441 = arith.negf %440 : vector<8x128xf32>
    %442 = math.exp %441 : vector<8x128xf32>
    %cst_223 = arith.constant 1.000000e+00 : f32
    %443 = vector.broadcast %cst_223 : f32 to vector<8x128xf32>
    %444 = arith.addf %443, %442 : vector<8x128xf32>
    %445 = arith.divf %443, %444 : vector<8x128xf32>
    %446 = vector.extract_strided_slice %439 {offsets = [0, 128], sizes = [8, 128], strides = [1, 1]} : vector<8x512xf32> to vector<8x128xf32>
    %447 = arith.negf %446 : vector<8x128xf32>
    %448 = math.exp %447 : vector<8x128xf32>
    %cst_224 = arith.constant 1.000000e+00 : f32
    %449 = vector.broadcast %cst_224 : f32 to vector<8x128xf32>
    %450 = arith.addf %449, %448 : vector<8x128xf32>
    %451 = arith.divf %449, %450 : vector<8x128xf32>
    %452 = vector.extract_strided_slice %439 {offsets = [0, 256], sizes = [8, 128], strides = [1, 1]} : vector<8x512xf32> to vector<8x128xf32>
    %453 = math.tanh %452 : vector<8x128xf32>
    %454 = vector.extract_strided_slice %439 {offsets = [0, 384], sizes = [8, 128], strides = [1, 1]} : vector<8x512xf32> to vector<8x128xf32>
    %455 = arith.negf %454 : vector<8x128xf32>
    %456 = math.exp %455 : vector<8x128xf32>
    %cst_225 = arith.constant 1.000000e+00 : f32
    %457 = vector.broadcast %cst_225 : f32 to vector<8x128xf32>
    %458 = arith.addf %457, %456 : vector<8x128xf32>
    %459 = arith.divf %457, %458 : vector<8x128xf32>
    %460 = arith.mulf %451, %433 : vector<8x128xf32>
    %461 = arith.mulf %445, %453 : vector<8x128xf32>
    %462 = arith.addf %460, %461 : vector<8x128xf32>
    %463 = math.tanh %462 : vector<8x128xf32>
    %464 = arith.mulf %459, %463 : vector<8x128xf32>
    %c0_226 = arith.constant 0 : index
    %c0_227 = arith.constant 0 : index
    %465 = vector.load %arg14[%c0_226, %c0_227] : memref<8x128xf32, #tpu.memory_space<vmem>>, vector<8x128xf32>
    tpu.vector_store %arg14[%c0_226, %c0_227], %464 {strides = array<i32>} : memref<8x128xf32, #tpu.memory_space<vmem>>, vector<8x128xf32>,
    %c0_228 = arith.constant 0 : index
    %c0_229 = arith.constant 0 : index
    %466 = vector.load %arg15[%c0_228, %c0_229] : memref<8x128xf32, #tpu.memory_space<vmem>>, vector<8x128xf32>
    tpu.vector_store %arg15[%c0_228, %c0_229], %462 {strides = array<i32>} : memref<8x128xf32, #tpu.memory_space<vmem>>, vector<8x128xf32>,
    %467 = arith.index_cast %c2_i32_215 : i32 to index
    %c0_230 = arith.constant 0 : index
    %c0_231 = arith.constant 0 : index
    %468 = vector.load %arg10[%467, %c0_230, %c0_231] : memref<8x8x128xf32, #tpu.memory_space<vmem>>, vector<1x8x128xf32>
    %469 = vector.shape_cast %468 : vector<1x8x128xf32> to vector<8x128xf32>
    %470 = vector.shape_cast %464 : vector<8x128xf32> to vector<1x8x128xf32>
    tpu.vector_store %arg10[%467, %c0_230, %c0_231], %470 {strides = array<i32>} : memref<8x8x128xf32, #tpu.memory_space<vmem>>, vector<1x8x128xf32>,
    %c3_i32_232 = arith.constant 3 : i32
    %c0_233 = arith.constant 0 : index
    %c0_234 = arith.constant 0 : index
    %471 = vector.load %arg14[%c0_233, %c0_234] : memref<8x128xf32, #tpu.memory_space<vmem>>, vector<8x128xf32>
    %c0_235 = arith.constant 0 : index
    %c0_236 = arith.constant 0 : index
    %472 = vector.load %arg15[%c0_235, %c0_236] : memref<8x128xf32, #tpu.memory_space<vmem>>, vector<8x128xf32>
    %473 = arith.index_cast %c3_i32_232 : i32 to index
    %c0_237 = arith.constant 0 : index
    %c0_238 = arith.constant 0 : index
    %474 = vector.load %arg13[%473, %c0_237, %c0_238] : memref<8x8x512xf32, #tpu.memory_space<vmem>>, vector<1x8x512xf32>
    %475 = vector.shape_cast %474 : vector<1x8x512xf32> to vector<8x512xf32>
    %476 = arith.truncf %471 : vector<8x128xf32> to vector<8x128xbf16>
    %cst_239 = arith.constant dense<0.000000e+00> : vector<8x512xf32>
    %477 = tpu.matmul %476, %353, %cst_239 {dimension_numbers = #tpu.dot_dimension_numbers<[1], [0], [0], [1], [0, 0, 1, 1], [], []>} : vector<8x128xbf16>, vector<128x512xbf16>, vector<8x512xf32> -> vector<8x512xf32>
    %478 = arith.addf %475, %477 : vector<8x512xf32>
    %479 = vector.extract_strided_slice %478 {offsets = [0, 0], sizes = [8, 128], strides = [1, 1]} : vector<8x512xf32> to vector<8x128xf32>
    %480 = arith.negf %479 : vector<8x128xf32>
    %481 = math.exp %480 : vector<8x128xf32>
    %cst_240 = arith.constant 1.000000e+00 : f32
    %482 = vector.broadcast %cst_240 : f32 to vector<8x128xf32>
    %483 = arith.addf %482, %481 : vector<8x128xf32>
    %484 = arith.divf %482, %483 : vector<8x128xf32>
    %485 = vector.extract_strided_slice %478 {offsets = [0, 128], sizes = [8, 128], strides = [1, 1]} : vector<8x512xf32> to vector<8x128xf32>
    %486 = arith.negf %485 : vector<8x128xf32>
    %487 = math.exp %486 : vector<8x128xf32>
    %cst_241 = arith.constant 1.000000e+00 : f32
    %488 = vector.broadcast %cst_241 : f32 to vector<8x128xf32>
    %489 = arith.addf %488, %487 : vector<8x128xf32>
    %490 = arith.divf %488, %489 : vector<8x128xf32>
    %491 = vector.extract_strided_slice %478 {offsets = [0, 256], sizes = [8, 128], strides = [1, 1]} : vector<8x512xf32> to vector<8x128xf32>
    %492 = math.tanh %491 : vector<8x128xf32>
    %493 = vector.extract_strided_slice %478 {offsets = [0, 384], sizes = [8, 128], strides = [1, 1]} : vector<8x512xf32> to vector<8x128xf32>
    %494 = arith.negf %493 : vector<8x128xf32>
    %495 = math.exp %494 : vector<8x128xf32>
    %cst_242 = arith.constant 1.000000e+00 : f32
    %496 = vector.broadcast %cst_242 : f32 to vector<8x128xf32>
    %497 = arith.addf %496, %495 : vector<8x128xf32>
    %498 = arith.divf %496, %497 : vector<8x128xf32>
    %499 = arith.mulf %490, %472 : vector<8x128xf32>
    %500 = arith.mulf %484, %492 : vector<8x128xf32>
    %501 = arith.addf %499, %500 : vector<8x128xf32>
    %502 = math.tanh %501 : vector<8x128xf32>
    %503 = arith.mulf %498, %502 : vector<8x128xf32>
    %c0_243 = arith.constant 0 : index
    %c0_244 = arith.constant 0 : index
    %504 = vector.load %arg14[%c0_243, %c0_244] : memref<8x128xf32, #tpu.memory_space<vmem>>, vector<8x128xf32>
    tpu.vector_store %arg14[%c0_243, %c0_244], %503 {strides = array<i32>} : memref<8x128xf32, #tpu.memory_space<vmem>>, vector<8x128xf32>,
    %c0_245 = arith.constant 0 : index
    %c0_246 = arith.constant 0 : index
    %505 = vector.load %arg15[%c0_245, %c0_246] : memref<8x128xf32, #tpu.memory_space<vmem>>, vector<8x128xf32>
    tpu.vector_store %arg15[%c0_245, %c0_246], %501 {strides = array<i32>} : memref<8x128xf32, #tpu.memory_space<vmem>>, vector<8x128xf32>,
    %506 = arith.index_cast %c3_i32_232 : i32 to index
    %c0_247 = arith.constant 0 : index
    %c0_248 = arith.constant 0 : index
    %507 = vector.load %arg10[%506, %c0_247, %c0_248] : memref<8x8x128xf32, #tpu.memory_space<vmem>>, vector<1x8x128xf32>
    %508 = vector.shape_cast %507 : vector<1x8x128xf32> to vector<8x128xf32>
    %509 = vector.shape_cast %503 : vector<8x128xf32> to vector<1x8x128xf32>
    tpu.vector_store %arg10[%506, %c0_247, %c0_248], %509 {strides = array<i32>} : memref<8x8x128xf32, #tpu.memory_space<vmem>>, vector<1x8x128xf32>,
    %c4_i32_249 = arith.constant 4 : i32
    %c0_250 = arith.constant 0 : index
    %c0_251 = arith.constant 0 : index
    %510 = vector.load %arg14[%c0_250, %c0_251] : memref<8x128xf32, #tpu.memory_space<vmem>>, vector<8x128xf32>
    %c0_252 = arith.constant 0 : index
    %c0_253 = arith.constant 0 : index
    %511 = vector.load %arg15[%c0_252, %c0_253] : memref<8x128xf32, #tpu.memory_space<vmem>>, vector<8x128xf32>
    %512 = arith.index_cast %c4_i32_249 : i32 to index
    %c0_254 = arith.constant 0 : index
    %c0_255 = arith.constant 0 : index
    %513 = vector.load %arg13[%512, %c0_254, %c0_255] : memref<8x8x512xf32, #tpu.memory_space<vmem>>, vector<1x8x512xf32>
    %514 = vector.shape_cast %513 : vector<1x8x512xf32> to vector<8x512xf32>
    %515 = arith.truncf %510 : vector<8x128xf32> to vector<8x128xbf16>
    %cst_256 = arith.constant dense<0.000000e+00> : vector<8x512xf32>
    %516 = tpu.matmul %515, %353, %cst_256 {dimension_numbers = #tpu.dot_dimension_numbers<[1], [0], [0], [1], [0, 0, 1, 1], [], []>} : vector<8x128xbf16>, vector<128x512xbf16>, vector<8x512xf32> -> vector<8x512xf32>
    %517 = arith.addf %514, %516 : vector<8x512xf32>
    %518 = vector.extract_strided_slice %517 {offsets = [0, 0], sizes = [8, 128], strides = [1, 1]} : vector<8x512xf32> to vector<8x128xf32>
    %519 = arith.negf %518 : vector<8x128xf32>
    %520 = math.exp %519 : vector<8x128xf32>
    %cst_257 = arith.constant 1.000000e+00 : f32
    %521 = vector.broadcast %cst_257 : f32 to vector<8x128xf32>
    %522 = arith.addf %521, %520 : vector<8x128xf32>
    %523 = arith.divf %521, %522 : vector<8x128xf32>
    %524 = vector.extract_strided_slice %517 {offsets = [0, 128], sizes = [8, 128], strides = [1, 1]} : vector<8x512xf32> to vector<8x128xf32>
    %525 = arith.negf %524 : vector<8x128xf32>
    %526 = math.exp %525 : vector<8x128xf32>
    %cst_258 = arith.constant 1.000000e+00 : f32
    %527 = vector.broadcast %cst_258 : f32 to vector<8x128xf32>
    %528 = arith.addf %527, %526 : vector<8x128xf32>
    %529 = arith.divf %527, %528 : vector<8x128xf32>
    %530 = vector.extract_strided_slice %517 {offsets = [0, 256], sizes = [8, 128], strides = [1, 1]} : vector<8x512xf32> to vector<8x128xf32>
    %531 = math.tanh %530 : vector<8x128xf32>
    %532 = vector.extract_strided_slice %517 {offsets = [0, 384], sizes = [8, 128], strides = [1, 1]} : vector<8x512xf32> to vector<8x128xf32>
    %533 = arith.negf %532 : vector<8x128xf32>
    %534 = math.exp %533 : vector<8x128xf32>
    %cst_259 = arith.constant 1.000000e+00 : f32
    %535 = vector.broadcast %cst_259 : f32 to vector<8x128xf32>
    %536 = arith.addf %535, %534 : vector<8x128xf32>
    %537 = arith.divf %535, %536 : vector<8x128xf32>
    %538 = arith.mulf %529, %511 : vector<8x128xf32>
    %539 = arith.mulf %523, %531 : vector<8x128xf32>
    %540 = arith.addf %538, %539 : vector<8x128xf32>
    %541 = math.tanh %540 : vector<8x128xf32>
    %542 = arith.mulf %537, %541 : vector<8x128xf32>
    %c0_260 = arith.constant 0 : index
    %c0_261 = arith.constant 0 : index
    %543 = vector.load %arg14[%c0_260, %c0_261] : memref<8x128xf32, #tpu.memory_space<vmem>>, vector<8x128xf32>
    tpu.vector_store %arg14[%c0_260, %c0_261], %542 {strides = array<i32>} : memref<8x128xf32, #tpu.memory_space<vmem>>, vector<8x128xf32>,
    %c0_262 = arith.constant 0 : index
    %c0_263 = arith.constant 0 : index
    %544 = vector.load %arg15[%c0_262, %c0_263] : memref<8x128xf32, #tpu.memory_space<vmem>>, vector<8x128xf32>
    tpu.vector_store %arg15[%c0_262, %c0_263], %540 {strides = array<i32>} : memref<8x128xf32, #tpu.memory_space<vmem>>, vector<8x128xf32>,
    %545 = arith.index_cast %c4_i32_249 : i32 to index
    %c0_264 = arith.constant 0 : index
    %c0_265 = arith.constant 0 : index
    %546 = vector.load %arg10[%545, %c0_264, %c0_265] : memref<8x8x128xf32, #tpu.memory_space<vmem>>, vector<1x8x128xf32>
    %547 = vector.shape_cast %546 : vector<1x8x128xf32> to vector<8x128xf32>
    %548 = vector.shape_cast %542 : vector<8x128xf32> to vector<1x8x128xf32>
    tpu.vector_store %arg10[%545, %c0_264, %c0_265], %548 {strides = array<i32>} : memref<8x8x128xf32, #tpu.memory_space<vmem>>, vector<1x8x128xf32>,
    %c5_i32_266 = arith.constant 5 : i32
    %c0_267 = arith.constant 0 : index
    %c0_268 = arith.constant 0 : index
    %549 = vector.load %arg14[%c0_267, %c0_268] : memref<8x128xf32, #tpu.memory_space<vmem>>, vector<8x128xf32>
    %c0_269 = arith.constant 0 : index
    %c0_270 = arith.constant 0 : index
    %550 = vector.load %arg15[%c0_269, %c0_270] : memref<8x128xf32, #tpu.memory_space<vmem>>, vector<8x128xf32>
    %551 = arith.index_cast %c5_i32_266 : i32 to index
    %c0_271 = arith.constant 0 : index
    %c0_272 = arith.constant 0 : index
    %552 = vector.load %arg13[%551, %c0_271, %c0_272] : memref<8x8x512xf32, #tpu.memory_space<vmem>>, vector<1x8x512xf32>
    %553 = vector.shape_cast %552 : vector<1x8x512xf32> to vector<8x512xf32>
    %554 = arith.truncf %549 : vector<8x128xf32> to vector<8x128xbf16>
    %cst_273 = arith.constant dense<0.000000e+00> : vector<8x512xf32>
    %555 = tpu.matmul %554, %353, %cst_273 {dimension_numbers = #tpu.dot_dimension_numbers<[1], [0], [0], [1], [0, 0, 1, 1], [], []>} : vector<8x128xbf16>, vector<128x512xbf16>, vector<8x512xf32> -> vector<8x512xf32>
    %556 = arith.addf %553, %555 : vector<8x512xf32>
    %557 = vector.extract_strided_slice %556 {offsets = [0, 0], sizes = [8, 128], strides = [1, 1]} : vector<8x512xf32> to vector<8x128xf32>
    %558 = arith.negf %557 : vector<8x128xf32>
    %559 = math.exp %558 : vector<8x128xf32>
    %cst_274 = arith.constant 1.000000e+00 : f32
    %560 = vector.broadcast %cst_274 : f32 to vector<8x128xf32>
    %561 = arith.addf %560, %559 : vector<8x128xf32>
    %562 = arith.divf %560, %561 : vector<8x128xf32>
    %563 = vector.extract_strided_slice %556 {offsets = [0, 128], sizes = [8, 128], strides = [1, 1]} : vector<8x512xf32> to vector<8x128xf32>
    %564 = arith.negf %563 : vector<8x128xf32>
    %565 = math.exp %564 : vector<8x128xf32>
    %cst_275 = arith.constant 1.000000e+00 : f32
    %566 = vector.broadcast %cst_275 : f32 to vector<8x128xf32>
    %567 = arith.addf %566, %565 : vector<8x128xf32>
    %568 = arith.divf %566, %567 : vector<8x128xf32>
    %569 = vector.extract_strided_slice %556 {offsets = [0, 256], sizes = [8, 128], strides = [1, 1]} : vector<8x512xf32> to vector<8x128xf32>
    %570 = math.tanh %569 : vector<8x128xf32>
    %571 = vector.extract_strided_slice %556 {offsets = [0, 384], sizes = [8, 128], strides = [1, 1]} : vector<8x512xf32> to vector<8x128xf32>
    %572 = arith.negf %571 : vector<8x128xf32>
    %573 = math.exp %572 : vector<8x128xf32>
    %cst_276 = arith.constant 1.000000e+00 : f32
    %574 = vector.broadcast %cst_276 : f32 to vector<8x128xf32>
    %575 = arith.addf %574, %573 : vector<8x128xf32>
    %576 = arith.divf %574, %575 : vector<8x128xf32>
    %577 = arith.mulf %568, %550 : vector<8x128xf32>
    %578 = arith.mulf %562, %570 : vector<8x128xf32>
    %579 = arith.addf %577, %578 : vector<8x128xf32>
    %580 = math.tanh %579 : vector<8x128xf32>
    %581 = arith.mulf %576, %580 : vector<8x128xf32>
    %c0_277 = arith.constant 0 : index
    %c0_278 = arith.constant 0 : index
    %582 = vector.load %arg14[%c0_277, %c0_278] : memref<8x128xf32, #tpu.memory_space<vmem>>, vector<8x128xf32>
    tpu.vector_store %arg14[%c0_277, %c0_278], %581 {strides = array<i32>} : memref<8x128xf32, #tpu.memory_space<vmem>>, vector<8x128xf32>,
    %c0_279 = arith.constant 0 : index
    %c0_280 = arith.constant 0 : index
    %583 = vector.load %arg15[%c0_279, %c0_280] : memref<8x128xf32, #tpu.memory_space<vmem>>, vector<8x128xf32>
    tpu.vector_store %arg15[%c0_279, %c0_280], %579 {strides = array<i32>} : memref<8x128xf32, #tpu.memory_space<vmem>>, vector<8x128xf32>,
    %584 = arith.index_cast %c5_i32_266 : i32 to index
    %c0_281 = arith.constant 0 : index
    %c0_282 = arith.constant 0 : index
    %585 = vector.load %arg10[%584, %c0_281, %c0_282] : memref<8x8x128xf32, #tpu.memory_space<vmem>>, vector<1x8x128xf32>
    %586 = vector.shape_cast %585 : vector<1x8x128xf32> to vector<8x128xf32>
    %587 = vector.shape_cast %581 : vector<8x128xf32> to vector<1x8x128xf32>
    tpu.vector_store %arg10[%584, %c0_281, %c0_282], %587 {strides = array<i32>} : memref<8x8x128xf32, #tpu.memory_space<vmem>>, vector<1x8x128xf32>,
    %c6_i32_283 = arith.constant 6 : i32
    %c0_284 = arith.constant 0 : index
    %c0_285 = arith.constant 0 : index
    %588 = vector.load %arg14[%c0_284, %c0_285] : memref<8x128xf32, #tpu.memory_space<vmem>>, vector<8x128xf32>
    %c0_286 = arith.constant 0 : index
    %c0_287 = arith.constant 0 : index
    %589 = vector.load %arg15[%c0_286, %c0_287] : memref<8x128xf32, #tpu.memory_space<vmem>>, vector<8x128xf32>
    %590 = arith.index_cast %c6_i32_283 : i32 to index
    %c0_288 = arith.constant 0 : index
    %c0_289 = arith.constant 0 : index
    %591 = vector.load %arg13[%590, %c0_288, %c0_289] : memref<8x8x512xf32, #tpu.memory_space<vmem>>, vector<1x8x512xf32>
    %592 = vector.shape_cast %591 : vector<1x8x512xf32> to vector<8x512xf32>
    %593 = arith.truncf %588 : vector<8x128xf32> to vector<8x128xbf16>
    %cst_290 = arith.constant dense<0.000000e+00> : vector<8x512xf32>
    %594 = tpu.matmul %593, %353, %cst_290 {dimension_numbers = #tpu.dot_dimension_numbers<[1], [0], [0], [1], [0, 0, 1, 1], [], []>} : vector<8x128xbf16>, vector<128x512xbf16>, vector<8x512xf32> -> vector<8x512xf32>
    %595 = arith.addf %592, %594 : vector<8x512xf32>
    %596 = vector.extract_strided_slice %595 {offsets = [0, 0], sizes = [8, 128], strides = [1, 1]} : vector<8x512xf32> to vector<8x128xf32>
    %597 = arith.negf %596 : vector<8x128xf32>
    %598 = math.exp %597 : vector<8x128xf32>
    %cst_291 = arith.constant 1.000000e+00 : f32
    %599 = vector.broadcast %cst_291 : f32 to vector<8x128xf32>
    %600 = arith.addf %599, %598 : vector<8x128xf32>
    %601 = arith.divf %599, %600 : vector<8x128xf32>
    %602 = vector.extract_strided_slice %595 {offsets = [0, 128], sizes = [8, 128], strides = [1, 1]} : vector<8x512xf32> to vector<8x128xf32>
    %603 = arith.negf %602 : vector<8x128xf32>
    %604 = math.exp %603 : vector<8x128xf32>
    %cst_292 = arith.constant 1.000000e+00 : f32
    %605 = vector.broadcast %cst_292 : f32 to vector<8x128xf32>
    %606 = arith.addf %605, %604 : vector<8x128xf32>
    %607 = arith.divf %605, %606 : vector<8x128xf32>
    %608 = vector.extract_strided_slice %595 {offsets = [0, 256], sizes = [8, 128], strides = [1, 1]} : vector<8x512xf32> to vector<8x128xf32>
    %609 = math.tanh %608 : vector<8x128xf32>
    %610 = vector.extract_strided_slice %595 {offsets = [0, 384], sizes = [8, 128], strides = [1, 1]} : vector<8x512xf32> to vector<8x128xf32>
    %611 = arith.negf %610 : vector<8x128xf32>
    %612 = math.exp %611 : vector<8x128xf32>
    %cst_293 = arith.constant 1.000000e+00 : f32
    %613 = vector.broadcast %cst_293 : f32 to vector<8x128xf32>
    %614 = arith.addf %613, %612 : vector<8x128xf32>
    %615 = arith.divf %613, %614 : vector<8x128xf32>
    %616 = arith.mulf %607, %589 : vector<8x128xf32>
    %617 = arith.mulf %601, %609 : vector<8x128xf32>
    %618 = arith.addf %616, %617 : vector<8x128xf32>
    %619 = math.tanh %618 : vector<8x128xf32>
    %620 = arith.mulf %615, %619 : vector<8x128xf32>
    %c0_294 = arith.constant 0 : index
    %c0_295 = arith.constant 0 : index
    %621 = vector.load %arg14[%c0_294, %c0_295] : memref<8x128xf32, #tpu.memory_space<vmem>>, vector<8x128xf32>
    tpu.vector_store %arg14[%c0_294, %c0_295], %620 {strides = array<i32>} : memref<8x128xf32, #tpu.memory_space<vmem>>, vector<8x128xf32>,
    %c0_296 = arith.constant 0 : index
    %c0_297 = arith.constant 0 : index
    %622 = vector.load %arg15[%c0_296, %c0_297] : memref<8x128xf32, #tpu.memory_space<vmem>>, vector<8x128xf32>
    tpu.vector_store %arg15[%c0_296, %c0_297], %618 {strides = array<i32>} : memref<8x128xf32, #tpu.memory_space<vmem>>, vector<8x128xf32>,
    %623 = arith.index_cast %c6_i32_283 : i32 to index
    %c0_298 = arith.constant 0 : index
    %c0_299 = arith.constant 0 : index
    %624 = vector.load %arg10[%623, %c0_298, %c0_299] : memref<8x8x128xf32, #tpu.memory_space<vmem>>, vector<1x8x128xf32>
    %625 = vector.shape_cast %624 : vector<1x8x128xf32> to vector<8x128xf32>
    %626 = vector.shape_cast %620 : vector<8x128xf32> to vector<1x8x128xf32>
    tpu.vector_store %arg10[%623, %c0_298, %c0_299], %626 {strides = array<i32>} : memref<8x8x128xf32, #tpu.memory_space<vmem>>, vector<1x8x128xf32>,
    %c7_i32_300 = arith.constant 7 : i32
    %c0_301 = arith.constant 0 : index
    %c0_302 = arith.constant 0 : index
    %627 = vector.load %arg14[%c0_301, %c0_302] : memref<8x128xf32, #tpu.memory_space<vmem>>, vector<8x128xf32>
    %c0_303 = arith.constant 0 : index
    %c0_304 = arith.constant 0 : index
    %628 = vector.load %arg15[%c0_303, %c0_304] : memref<8x128xf32, #tpu.memory_space<vmem>>, vector<8x128xf32>
    %629 = arith.index_cast %c7_i32_300 : i32 to index
    %c0_305 = arith.constant 0 : index
    %c0_306 = arith.constant 0 : index
    %630 = vector.load %arg13[%629, %c0_305, %c0_306] : memref<8x8x512xf32, #tpu.memory_space<vmem>>, vector<1x8x512xf32>
    %631 = vector.shape_cast %630 : vector<1x8x512xf32> to vector<8x512xf32>
    %632 = arith.truncf %627 : vector<8x128xf32> to vector<8x128xbf16>
    %cst_307 = arith.constant dense<0.000000e+00> : vector<8x512xf32>
    %633 = tpu.matmul %632, %353, %cst_307 {dimension_numbers = #tpu.dot_dimension_numbers<[1], [0], [0], [1], [0, 0, 1, 1], [], []>} : vector<8x128xbf16>, vector<128x512xbf16>, vector<8x512xf32> -> vector<8x512xf32>
    %634 = arith.addf %631, %633 : vector<8x512xf32>
    %635 = vector.extract_strided_slice %634 {offsets = [0, 0], sizes = [8, 128], strides = [1, 1]} : vector<8x512xf32> to vector<8x128xf32>
    %636 = arith.negf %635 : vector<8x128xf32>
    %637 = math.exp %636 : vector<8x128xf32>
    %cst_308 = arith.constant 1.000000e+00 : f32
    %638 = vector.broadcast %cst_308 : f32 to vector<8x128xf32>
    %639 = arith.addf %638, %637 : vector<8x128xf32>
    %640 = arith.divf %638, %639 : vector<8x128xf32>
    %641 = vector.extract_strided_slice %634 {offsets = [0, 128], sizes = [8, 128], strides = [1, 1]} : vector<8x512xf32> to vector<8x128xf32>
    %642 = arith.negf %641 : vector<8x128xf32>
    %643 = math.exp %642 : vector<8x128xf32>
    %cst_309 = arith.constant 1.000000e+00 : f32
    %644 = vector.broadcast %cst_309 : f32 to vector<8x128xf32>
    %645 = arith.addf %644, %643 : vector<8x128xf32>
    %646 = arith.divf %644, %645 : vector<8x128xf32>
    %647 = vector.extract_strided_slice %634 {offsets = [0, 256], sizes = [8, 128], strides = [1, 1]} : vector<8x512xf32> to vector<8x128xf32>
    %648 = math.tanh %647 : vector<8x128xf32>
    %649 = vector.extract_strided_slice %634 {offsets = [0, 384], sizes = [8, 128], strides = [1, 1]} : vector<8x512xf32> to vector<8x128xf32>
    %650 = arith.negf %649 : vector<8x128xf32>
    %651 = math.exp %650 : vector<8x128xf32>
    %cst_310 = arith.constant 1.000000e+00 : f32
    %652 = vector.broadcast %cst_310 : f32 to vector<8x128xf32>
    %653 = arith.addf %652, %651 : vector<8x128xf32>
    %654 = arith.divf %652, %653 : vector<8x128xf32>
    %655 = arith.mulf %646, %628 : vector<8x128xf32>
    %656 = arith.mulf %640, %648 : vector<8x128xf32>
    %657 = arith.addf %655, %656 : vector<8x128xf32>
    %658 = math.tanh %657 : vector<8x128xf32>
    %659 = arith.mulf %654, %658 : vector<8x128xf32>
    %c0_311 = arith.constant 0 : index
    %c0_312 = arith.constant 0 : index
    %660 = vector.load %arg14[%c0_311, %c0_312] : memref<8x128xf32, #tpu.memory_space<vmem>>, vector<8x128xf32>
    tpu.vector_store %arg14[%c0_311, %c0_312], %659 {strides = array<i32>} : memref<8x128xf32, #tpu.memory_space<vmem>>, vector<8x128xf32>,
    %c0_313 = arith.constant 0 : index
    %c0_314 = arith.constant 0 : index
    %661 = vector.load %arg15[%c0_313, %c0_314] : memref<8x128xf32, #tpu.memory_space<vmem>>, vector<8x128xf32>
    tpu.vector_store %arg15[%c0_313, %c0_314], %657 {strides = array<i32>} : memref<8x128xf32, #tpu.memory_space<vmem>>, vector<8x128xf32>,
    %662 = arith.index_cast %c7_i32_300 : i32 to index
    %c0_315 = arith.constant 0 : index
    %c0_316 = arith.constant 0 : index
    %663 = vector.load %arg10[%662, %c0_315, %c0_316] : memref<8x8x128xf32, #tpu.memory_space<vmem>>, vector<1x8x128xf32>
    %664 = vector.shape_cast %663 : vector<1x8x128xf32> to vector<8x128xf32>
    %665 = vector.shape_cast %659 : vector<8x128xf32> to vector<1x8x128xf32>
    tpu.vector_store %arg10[%662, %c0_315, %c0_316], %665 {strides = array<i32>} : memref<8x8x128xf32, #tpu.memory_space<vmem>>, vector<1x8x128xf32>,
    %c8_i32_317 = arith.constant 8 : i32
    %c0_318 = arith.constant 0 : index
    %c0_319 = arith.constant 0 : index
    %666 = vector.load %arg14[%c0_318, %c0_319] : memref<8x128xf32, #tpu.memory_space<vmem>>, vector<8x128xf32>
    %c1_320 = arith.constant 1 : index
    %c0_321 = arith.constant 0 : index
    %c0_322 = arith.constant 0 : index
    %667 = vector.load %arg11[%c1_320, %c0_321, %c0_322] : memref<2x8x128xf32, #tpu.memory_space<vmem>>, vector<1x8x128xf32>
    %668 = vector.shape_cast %667 : vector<1x8x128xf32> to vector<8x128xf32>
    %669 = vector.shape_cast %666 : vector<8x128xf32> to vector<1x8x128xf32>
    tpu.vector_store %arg11[%c1_320, %c0_321, %c0_322], %669 {strides = array<i32>} : memref<2x8x128xf32, #tpu.memory_space<vmem>>, vector<1x8x128xf32>,
    %c0_323 = arith.constant 0 : index
    %c0_324 = arith.constant 0 : index
    %670 = vector.load %arg15[%c0_323, %c0_324] : memref<8x128xf32, #tpu.memory_space<vmem>>, vector<8x128xf32>
    %c1_325 = arith.constant 1 : index
    %c0_326 = arith.constant 0 : index
    %c0_327 = arith.constant 0 : index
    %671 = vector.load %arg12[%c1_325, %c0_326, %c0_327] : memref<2x8x128xf32, #tpu.memory_space<vmem>>, vector<1x8x128xf32>
    %672 = vector.shape_cast %671 : vector<1x8x128xf32> to vector<8x128xf32>
    %673 = vector.shape_cast %670 : vector<8x128xf32> to vector<1x8x128xf32>
    tpu.vector_store %arg12[%c1_325, %c0_326, %c0_327], %673 {strides = array<i32>} : memref<2x8x128xf32, #tpu.memory_space<vmem>>, vector<1x8x128xf32>,
    return
  }
  func.func @transform_0(%arg0: i32) -> (i32, i32, i32) {
    %c0_i32 = arith.constant 0 : i32
    %c0_i32_0 = arith.constant 0 : i32
    %c0_i32_1 = arith.constant 0 : i32
    %c0_i32_2 = arith.constant 0 : i32
    return %c0_i32, %c0_i32_0, %c0_i32_1 : i32, i32, i32
  }
  func.func @transform_1(%arg0: i32) -> (i32, i32, i32) {
    %c0_i32 = arith.constant 0 : i32
    %c0_i32_0 = arith.constant 0 : i32
    %c0_i32_1 = arith.constant 0 : i32
    %c0_i32_2 = arith.constant 0 : i32
    return %c0_i32, %c0_i32_0, %c0_i32_1 : i32, i32, i32
  }
  func.func @transform_2(%arg0: i32) -> (i32, i32, i32) {
    %c0_i32 = arith.constant 0 : i32
    %c0_i32_0 = arith.constant 0 : i32
    %c0_i32_1 = arith.constant 0 : i32
    %c0_i32_2 = arith.constant 0 : i32
    return %c0_i32, %c0_i32_0, %c0_i32_1 : i32, i32, i32
  }
  func.func @transform_3(%arg0: i32) -> (i32, i32) {
    %c0_i32 = arith.constant 0 : i32
    %c0_i32_0 = arith.constant 0 : i32
    %c0_i32_1 = arith.constant 0 : i32
    return %c0_i32, %c0_i32_0 : i32, i32
  }
  func.func @transform_4(%arg0: i32) -> (i32, i32) {
    %c0_i32 = arith.constant 0 : i32
    %c0_i32_0 = arith.constant 0 : i32
    %c0_i32_1 = arith.constant 0 : i32
    return %c0_i32, %c0_i32_0 : i32, i32
  }
  func.func @transform_5(%arg0: i32) -> (i32, i32) {
    %c0_i32 = arith.constant 0 : i32
    %c0_i32_0 = arith.constant 0 : i32
    %c0_i32_1 = arith.constant 0 : i32
    return %c0_i32, %c0_i32_0 : i32, i32
  }
  func.func @transform_6(%arg0: i32) -> (i32, i32) {
    %c0_i32 = arith.constant 0 : i32
    %c0_i32_0 = arith.constant 0 : i32
    %c0_i32_1 = arith.constant 0 : i32
    return %c0_i32, %c0_i32_0 : i32, i32
  }
  func.func @transform_7(%arg0: i32) -> (i32, i32) {
    %c0_i32 = arith.constant 0 : i32
    %c0_i32_0 = arith.constant 0 : i32
    %c0_i32_1 = arith.constant 0 : i32
    return %c0_i32, %c0_i32_0 : i32, i32
  }
  func.func @transform_8(%arg0: i32) -> (i32, i32) {
    %c0_i32 = arith.constant 0 : i32
    %c0_i32_0 = arith.constant 0 : i32
    %c0_i32_1 = arith.constant 0 : i32
    return %c0_i32, %c0_i32_0 : i32, i32
  }
  func.func @transform_9(%arg0: i32) -> (i32, i32, i32) {
    %c0_i32 = arith.constant 0 : i32
    %c0_i32_0 = arith.constant 0 : i32
    %c0_i32_1 = arith.constant 0 : i32
    %c0_i32_2 = arith.constant 0 : i32
    return %c0_i32, %c0_i32_0, %c0_i32_1 : i32, i32, i32
  }
  func.func @transform_10(%arg0: i32) -> (i32, i32, i32) {
    %c0_i32 = arith.constant 0 : i32
    %c0_i32_0 = arith.constant 0 : i32
    %c0_i32_1 = arith.constant 0 : i32
    %c0_i32_2 = arith.constant 0 : i32
    return %c0_i32, %c0_i32_0, %c0_i32_1 : i32, i32, i32
  }
  func.func @transform_11(%arg0: i32) -> (i32, i32, i32) {
    %c0_i32 = arith.constant 0 : i32
    %c0_i32_0 = arith.constant 0 : i32
    %c0_i32_1 = arith.constant 0 : i32
    %c0_i32_2 = arith.constant 0 : i32
    return %c0_i32, %c0_i32_0, %c0_i32_1 : i32, i32, i32
  }
}

</mosaic_0001>

<llo_original>
// kernel: s2s_forward.5
$region0: #{s2s_forward.5}
  #allocation0 [shape = 'u32[]', space=smem, size = 0x4, offset = 0x4, fixed_abs, tag = 'smem constant byte address 0x4 - core index']
  #allocation1 [shape = 'u32[144,128]{1,0:T(1,128)}', space=vmem, size = 0x12000, scoped, tag = 'internal scratch']
  %s0 = inlined_call_operand.vmem [shape: f32[56,128], index: 0, kind: input, shape index: {}]
  %s1 = inlined_call_operand.vmem [shape: bf16[128,256], index: 1, kind: input, shape index: {}]
  %s2 = inlined_call_operand.vmem [shape: f32[1,256], index: 2, kind: input, shape index: {}]
  %s3 = inlined_call_operand.hbm [shape: f32[56,256], index: 3, kind: output, shape index: {}]
  %s4 = sld [smem:[#allocation0]]
  $region22: #{s2s_forward.5} parent=0
    _
  %s6 = ssub.s32 1, %s4
  %s7 = scalar_select 0, %s6, %s4
  $region1: #{s2s_forward.5} parent=0
    #allocation2 [shape = 'u8[57344]{0}', space=vmem, size = 0xe000, scoped, tag = 'output window, operand 0, single buffered']
    #allocation3 [shape = 's32[1]{0}', space=sflag, size = 0x4, scoped, tag = 'scoped memory for s2s_forward.5']
    %8 = vsyncpa [#allocation3], 0
    // Predicated region
    $region2: #{s2s_forward.5} parent=1 // pred_check
      _
    $region3: #{s2s_forward.5} parent=1 // pred_check_branch
      %10 = sbr.rel (0) target = $region5
    $region4: #{s2s_forward.5} parent=1 // pred_region
      _
    $region5: #{s2s_forward.5} parent=1 // pred_fallthru
      _
    // Predicated region
    $region6: #{s2s_forward.5} parent=1 // pred_check
      _
    $region7: #{s2s_forward.5} parent=1 // pred_check_branch
      %12 = sbr.rel (0) target = $region9
    $region8: #{s2s_forward.5} parent=1 // pred_region
      _
    $region9: #{s2s_forward.5} parent=1 // pred_fallthru
      _
    // Predicated region
    $region10: #{s2s_forward.5} parent=1 // pred_check
      _
    $region11: #{s2s_forward.5} parent=1 // pred_check_branch
      %14 = sbr.rel (0) target = $region13
    $region12: #{s2s_forward.5} parent=1 // pred_region
      _
    $region13: #{s2s_forward.5} parent=1 // pred_fallthru
      _
    %v16 = vld [vmem:[%s0] sm:$0xff]
    %v17 = vld [vmem:[%s0 + $0x8] sm:$0xff]
    %v18 = vld [vmem:[%s0 + $0x10] sm:$0xff]
    %v19 = vld [vmem:[%s0 + $0x18] sm:$0xff]
    %v20 = vld [vmem:[%s0 + $0x20] sm:$0xff]
    %v21 = vld [vmem:[%s0 + $0x28] sm:$0xff]
    %v22 = vld [vmem:[%s0 + $0x30] sm:$0xff]
    %v23 = vpack.c.bf16 %v17, %v16
    %v24 = vpack.c.bf16 %v19, %v18
    %v25 = vpack.c.bf16 %v21, %v20
    %v26 = vpack.c.bf16 %v22, %v22
    %v27 = vld [vmem:[%s1] sm:$0xff]
    %v28 = vld [vmem:[%s1 + $0x8] sm:$0xff]
    %v29 = vld [vmem:[%s1 + $0x10] sm:$0xff]
    %v30 = vld [vmem:[%s1 + $0x18] sm:$0xff]
    %v31 = vld [vmem:[%s1 + $0x20] sm:$0xff]
    %v32 = vld [vmem:[%s1 + $0x28] sm:$0xff]
    %v33 = vld [vmem:[%s1 + $0x30] sm:$0xff]
    %v34 = vld [vmem:[%s1 + $0x38] sm:$0xff]
    %v35 = vld [vmem:[%s1 + $0x40] sm:$0xff]
    %v36 = vld [vmem:[%s1 + $0x48] sm:$0xff]
    %v37 = vld [vmem:[%s1 + $0x50] sm:$0xff]
    %v38 = vld [vmem:[%s1 + $0x58] sm:$0xff]
    %v39 = vld [vmem:[%s1 + $0x60] sm:$0xff]
    %v40 = vld [vmem:[%s1 + $0x68] sm:$0xff]
    %v41 = vld [vmem:[%s1 + $0x70] sm:$0xff]
    %v42 = vld [vmem:[%s1 + $0x78] sm:$0xff]
    %v43 = vld [vmem:[%s2] sm:$0x3]
    %v45 = vlaneseq
    %v46 = vshrl.u32 %v45, 7
    %v47 = vsub.s32 0, %v46
    %v48 = vrot.slane %v43, %v47
    %v49 = vlaneseq
    %v50 = vshrl.u32 %v49, 7
    %v51 = vsub.s32 1, %v50
    %v52 = vrot.slane %v43, %v51
    %v71 = vunpack.c.l.b16 %v27
    %v72 = vunpack.c.h.b16 %v27
    %v73 = vunpack.c.l.b16 %v28
    %v74 = vunpack.c.h.b16 %v28
    %v75 = vunpack.c.l.b16 %v29
    %v76 = vunpack.c.h.b16 %v29
    %v77 = vunpack.c.l.b16 %v30
    %v78 = vunpack.c.h.b16 %v30
    %v79 = vunpack.c.l.b16 %v31
    %v80 = vunpack.c.h.b16 %v31
    %v81 = vunpack.c.l.b16 %v32
    %v82 = vunpack.c.h.b16 %v32
    %v83 = vunpack.c.l.b16 %v33
    %v84 = vunpack.c.h.b16 %v33
    %v85 = vunpack.c.l.b16 %v34
    %v86 = vunpack.c.h.b16 %v34
    %v87 = vunpack.c.l.b16 %v35
    %v88 = vunpack.c.h.b16 %v35
    %v89 = vunpack.c.l.b16 %v36
    %v90 = vunpack.c.h.b16 %v36
    %v91 = vunpack.c.l.b16 %v37
    %v92 = vunpack.c.h.b16 %v37
    %v93 = vunpack.c.l.b16 %v38
    %v94 = vunpack.c.h.b16 %v38
    %v95 = vunpack.c.l.b16 %v39
    %v96 = vunpack.c.h.b16 %v39
    %v97 = vunpack.c.l.b16 %v40
    %v98 = vunpack.c.h.b16 %v40
    %v99 = vunpack.c.l.b16 %v41
    %v100 = vunpack.c.h.b16 %v41
    %v101 = vunpack.c.l.b16 %v42
    %v102 = vunpack.c.h.b16 %v42
    %v103 = vpack.c.b16 %v73, %v71
    %v104 = vpack.c.b16 %v74, %v72
    %v105 = vpack.c.b16 %v77, %v75
    %v106 = vpack.c.b16 %v78, %v76
    %v107 = vpack.c.b16 %v81, %v79
    %v108 = vpack.c.b16 %v82, %v80
    %v109 = vpack.c.b16 %v85, %v83
    %v110 = vpack.c.b16 %v86, %v84
    %v111 = vpack.c.b16 %v89, %v87
    %v112 = vpack.c.b16 %v90, %v88
    %v113 = vpack.c.b16 %v93, %v91
    %v114 = vpack.c.b16 %v94, %v92
    %v115 = vpack.c.b16 %v97, %v95
    %v116 = vpack.c.b16 %v98, %v96
    %v117 = vpack.c.b16 %v101, %v99
    %v118 = vpack.c.b16 %v102, %v100
    %135 = vmatprep.subr.bf16.mxu0 %v104
    %136 = vmatpush1.bf16.msra.mxu0 %v103
    %137 = vmatprep.subr.bf16.mxu0 %v106
    %138 = vmatpush1.bf16.msra.mxu0 %v105
    %139 = vmatprep.subr.bf16.mxu0 %v108
    %140 = vmatpush1.bf16.msra.mxu0 %v107
    %141 = vmatprep.subr.bf16.mxu0 %v110
    %142 = vmatpush1.bf16.msra.mxu0 %v109
    %143 = vmatprep.subr.bf16.mxu0 %v112
    %144 = vmatpush1.bf16.msra.mxu0 %v111
    %145 = vmatprep.subr.bf16.mxu0 %v114
    %146 = vmatpush1.bf16.msra.mxu0 %v113
    %147 = vmatprep.subr.bf16.mxu0 %v116
    %148 = vmatpush1.bf16.msra.mxu0 %v115
    %149 = vmatprep.subr.bf16.mxu0 %v118
    %150 = vmatpush1.bf16.msra.mxu0 %v117
    %151 = vmatprep.subr.bf16.mxu0 0
    %152 = vmatpush1.bf16.msra.mxu0 0
    %153 = vmatprep.subr.bf16.mxu0 0
    %154 = vmatpush1.bf16.msra.mxu0 0
    %155 = vmatprep.subr.bf16.mxu0 0
    %156 = vmatpush1.bf16.msra.mxu0 0
    %157 = vmatprep.subr.bf16.mxu0 0
    %158 = vmatpush1.bf16.msra.mxu0 0
    %159 = vmatprep.subr.bf16.mxu0 0
    %160 = vmatpush1.bf16.msra.mxu0 0
    %161 = vmatprep.subr.bf16.mxu0 0
    %162 = vmatpush1.bf16.msra.mxu0 0
    %163 = vmatprep.subr.bf16.mxu0 0
    %164 = vmatpush1.bf16.msra.mxu0 0
    %165 = vmatprep.subr.bf16.mxu0 0
    %166 = vmatpush1.bf16.msra.mxu0 0
    %167 = vmatprep.mubr.bf16.mxu0 0
    %168 = vmatmul.mubr.bf16.gmra.mrb[0].mxu0 %v23
    %v169 = vpop.f32.mrb[0].mxu0
    %v170 = vadd.f32 %v48, %v169
    %v171 = vpop.f32.mrb[0].mxu0
    %v172 = vadd.f32 %v52, %v171
    %v173 = vpop.f32.mrb[0].mxu0
    %v174 = vadd.f32 %v48, %v173
    %v175 = vpop.f32.mrb[0].mxu0
    %v176 = vadd.f32 %v52, %v175
    %177 = vmatprep.mubr.bf16.mxu0 0
    %178 = vmatmul.mubr.bf16.gmra.mrb[0].mxu0 %v24
    %v179 = vpop.f32.mrb[0].mxu0
    %v180 = vadd.f32 %v48, %v179
    %v181 = vpop.f32.mrb[0].mxu0
    %v182 = vadd.f32 %v52, %v181
    %v183 = vpop.f32.mrb[0].mxu0
    %v184 = vadd.f32 %v48, %v183
    %v185 = vpop.f32.mrb[0].mxu0
    %v186 = vadd.f32 %v52, %v185
    %187 = vmatprep.mubr.bf16.mxu0 0
    %188 = vmatmul.mubr.bf16.gmra.mrb[0].mxu0 %v25
    %v189 = vpop.f32.mrb[0].mxu0
    %v190 = vadd.f32 %v48, %v189
    %v191 = vpop.f32.mrb[0].mxu0
    %v192 = vadd.f32 %v52, %v191
    %v193 = vpop.f32.mrb[0].mxu0
    %v194 = vadd.f32 %v48, %v193
    %v195 = vpop.f32.mrb[0].mxu0
    %v196 = vadd.f32 %v52, %v195
    %197 = vmatprep.mubr.bf16.mxu0 0
    %198 = vmatmul.mubr.bf16.gmra.mrb[0].mxu0 %v26
    %v199 = vpop.f32.mrb[0].mxu0
    %v200 = vadd.f32 %v48, %v199
    %v201 = vpop.f32.mrb[0].mxu0
    %v202 = vadd.f32 %v52, %v201
    %v203 = vpop.f32.mrb[0].mxu0
    %v204 = vpop.f32.mrb[0].mxu0
    %205 = vdwg.mxu0
    %206 = vst [vmem:[#allocation2] sm:$0xff] %v170
    %207 = vst [vmem:[#allocation2 + $0x8] sm:$0xff] %v172
    %208 = vst [vmem:[#allocation2 + $0x10] sm:$0xff] %v174
    %209 = vst [vmem:[#allocation2 + $0x18] sm:$0xff] %v176
    %210 = vst [vmem:[#allocation2 + $0x20] sm:$0xff] %v180
    %211 = vst [vmem:[#allocation2 + $0x28] sm:$0xff] %v182
    %212 = vst [vmem:[#allocation2 + $0x30] sm:$0xff] %v184
    %213 = vst [vmem:[#allocation2 + $0x38] sm:$0xff] %v186
    %214 = vst [vmem:[#allocation2 + $0x40] sm:$0xff] %v190
    %215 = vst [vmem:[#allocation2 + $0x48] sm:$0xff] %v192
    %216 = vst [vmem:[#allocation2 + $0x50] sm:$0xff] %v194
    %217 = vst [vmem:[#allocation2 + $0x58] sm:$0xff] %v196
    %218 = vst [vmem:[#allocation2 + $0x60] sm:$0xff] %v200
    %219 = vst [vmem:[#allocation2 + $0x68] sm:$0xff] %v202
    // Predicated region
    $region14: #{s2s_forward.5} parent=1 // pred_check
      _
    $region15: #{s2s_forward.5} parent=1 // pred_check_branch
      %221 = sbr.rel (0) target = $region17
    $region16: #{s2s_forward.5} parent=1 // pred_region
      %s223 = ssub.s32 1792, 1792
      %224 = vsyncadd [#allocation3], %s223
      %s225 = sshll.u32 [#allocation2], 4
      %s226 = int_to_ptr.vmem [resolvable:$true] %s225
      %231 = dma.vmem_to_hbm [thread:$0]  %s226, 1792, %s3, [#allocation3], 256, 256, 16
    $region17: #{s2s_forward.5} parent=1 // pred_fallthru
      _
    // Predicated region
    $region18: #{s2s_forward.5} parent=1 // pred_check
      _
    $region19: #{s2s_forward.5} parent=1 // pred_check_branch
      %233 = sbr.rel (0) target = $region21
    $region20: #{s2s_forward.5} parent=1 // pred_region
      %234 = dma.done [#allocation3], 1792
    $region21: #{s2s_forward.5} parent=1 // pred_fallthru
      _
    %235 = vsyncpa [#allocation3], 1

// kernel: s2s_forward.4
$region0: #{s2s_forward.4}
  #allocation0 [shape = 'u32[]', space=smem, size = 0x4, offset = 0x4, fixed_abs, tag = 'smem constant byte address 0x4 - core index']
  #allocation1 [shape = 'u32[144,128]{1,0:T(1,128)}', space=vmem, size = 0x12000, scoped, tag = 'internal scratch']
  #allocation2 [shape = 'f32[7,8,512]{2,1,0:T(8,128)}', space=vmem, size = 0x1c000, scoped, tag = 'scratch operand']
  #allocation3 [shape = 'f32[8,128]{1,0:T(8,128)}', space=vmem, size = 0x1000, scoped, tag = 'scratch operand']
  #allocation4 [shape = 'f32[8,128]{1,0:T(8,128)}', space=vmem, size = 0x1000, scoped, tag = 'scratch operand']
  %s0 = inlined_call_operand.vmem [shape: f32[7,8,128], index: 0, kind: input, shape index: {}]
  %s1 = inlined_call_operand.vmem [shape: f32[2,8,128], index: 1, kind: input, shape index: {}]
  %s2 = inlined_call_operand.vmem [shape: f32[2,8,128], index: 2, kind: input, shape index: {}]
  %s3 = inlined_call_operand.vmem [shape: bf16[128,512], index: 3, kind: input, shape index: {}]
  %s4 = inlined_call_operand.vmem [shape: bf16[128,512], index: 4, kind: input, shape index: {}]
  %s5 = inlined_call_operand.vmem [shape: f32[1,512], index: 5, kind: input, shape index: {}]
  %s6 = inlined_call_operand.vmem [shape: bf16[128,512], index: 6, kind: input, shape index: {}]
  %s7 = inlined_call_operand.vmem [shape: bf16[128,512], index: 7, kind: input, shape index: {}]
  %s8 = inlined_call_operand.vmem [shape: f32[1,512], index: 8, kind: input, shape index: {}]
  %s9 = inlined_call_operand.vmem [shape: f32[7,8,128], index: 9, kind: output, shape index: {0}]
  %s10 = inlined_call_operand.hbm [shape: f32[2,8,128], index: 10, kind: output, shape index: {1}]
  %s11 = inlined_call_operand.hbm [shape: f32[2,8,128], index: 11, kind: output, shape index: {2}]
  %12 = xla_tuple %s9, %s10, %s11
  %s13 = sld [smem:[#allocation0]]
  $region62: #{s2s_forward.4} parent=0
    _
  %s15 = ssub.s32 1, %s13
  %s16 = scalar_select 0, %s15, %s13
  $region1: #{s2s_forward.4} parent=0
    #allocation5 [shape = 'u8[8192]{0}', space=vmem, size = 0x2000, scoped, tag = 'output window, operand 1, single buffered']
    #allocation6 [shape = 's32[1]{0}', space=sflag, size = 0x4, scoped, tag = 'scoped memory for s2s_forward.4']
    #allocation7 [shape = 'u8[8192]{0}', space=vmem, size = 0x2000, scoped, tag = 'output window, operand 2, single buffered']
    #allocation8 [shape = 's32[1]{0}', space=sflag, size = 0x4, scoped, tag = 'scoped memory for s2s_forward.4']
    %17 = vsyncpa [#allocation6], 0
    %18 = vsyncpa [#allocation8], 0
    // Predicated region
    $region2: #{s2s_forward.4} parent=1 // pred_check
      _
    $region3: #{s2s_forward.4} parent=1 // pred_check_branch
      %20 = sbr.rel (0) target = $region5
    $region4: #{s2s_forward.4} parent=1 // pred_region
      _
    $region5: #{s2s_forward.4} parent=1 // pred_fallthru
      _
    // Predicated region
    $region6: #{s2s_forward.4} parent=1 // pred_check
      _
    $region7: #{s2s_forward.4} parent=1 // pred_check_branch
      %22 = sbr.rel (0) target = $region9
    $region8: #{s2s_forward.4} parent=1 // pred_region
      _
    $region9: #{s2s_forward.4} parent=1 // pred_fallthru
      _
    // Predicated region
    $region10: #{s2s_forward.4} parent=1 // pred_check
      _
    $region11: #{s2s_forward.4} parent=1 // pred_check_branch
      %24 = sbr.rel (0) target = $region13
    $region12: #{s2s_forward.4} parent=1 // pred_region
      _
    $region13: #{s2s_forward.4} parent=1 // pred_fallthru
      _
    // Predicated region
    $region14: #{s2s_forward.4} parent=1 // pred_check
      _
    $region15: #{s2s_forward.4} parent=1 // pred_check_branch
      %26 = sbr.rel (0) target = $region17
    $region16: #{s2s_forward.4} parent=1 // pred_region
      _
    $region17: #{s2s_forward.4} parent=1 // pred_fallthru
      _
    // Predicated region
    $region18: #{s2s_forward.4} parent=1 // pred_check
      _
    $region19: #{s2s_forward.4} parent=1 // pred_check_branch
      %28 = sbr.rel (0) target = $region21
    $region20: #{s2s_forward.4} parent=1 // pred_region
      _
    $region21: #{s2s_forward.4} parent=1 // pred_fallthru
      _
    // Predicated region
    $region22: #{s2s_forward.4} parent=1 // pred_check
      _
    $region23: #{s2s_forward.4} parent=1 // pred_check_branch
      %30 = sbr.rel (0) target = $region25
    $region24: #{s2s_forward.4} parent=1 // pred_region
      _
    $region25: #{s2s_forward.4} parent=1 // pred_fallthru
      _
    // Predicated region
    $region26: #{s2s_forward.4} parent=1 // pred_check
      _
    $region27: #{s2s_forward.4} parent=1 // pred_check_branch
      %32 = sbr.rel (0) target = $region29
    $region28: #{s2s_forward.4} parent=1 // pred_region
      _
    $region29: #{s2s_forward.4} parent=1 // pred_fallthru
      _
    // Predicated region
    $region30: #{s2s_forward.4} parent=1 // pred_check
      _
    $region31: #{s2s_forward.4} parent=1 // pred_check_branch
      %34 = sbr.rel (0) target = $region33
    $region32: #{s2s_forward.4} parent=1 // pred_region
      _
    $region33: #{s2s_forward.4} parent=1 // pred_fallthru
      _
    // Predicated region
    $region34: #{s2s_forward.4} parent=1 // pred_check
      _
    $region35: #{s2s_forward.4} parent=1 // pred_check_branch
      %36 = sbr.rel (0) target = $region37
    $region36: #{s2s_forward.4} parent=1 // pred_region
      _
    $region37: #{s2s_forward.4} parent=1 // pred_fallthru
      _
    %v38 = vld [vmem:[%s0] sm:$0xff]
    %v39 = vld [vmem:[%s0 + $0x8] sm:$0xff]
    %v40 = vld [vmem:[%s0 + $0x10] sm:$0xff]
    %v41 = vld [vmem:[%s0 + $0x18] sm:$0xff]
    %v42 = vld [vmem:[%s0 + $0x20] sm:$0xff]
    %v43 = vld [vmem:[%s0 + $0x28] sm:$0xff]
    %v44 = vld [vmem:[%s0 + $0x30] sm:$0xff]
    %v45 = vpack.c.bf16 %v39, %v38
    %v46 = vpack.c.bf16 %v41, %v40
    %v47 = vpack.c.bf16 %v43, %v42
    %v48 = vpack.c.bf16 %v44, %v44
    %v49 = vld [vmem:[%s3] sm:$0xff]
    %v50 = vld [vmem:[%s3 + $0x8] sm:$0xff]
    %v51 = vld [vmem:[%s3 + $0x10] sm:$0xff]
    %v52 = vld [vmem:[%s3 + $0x18] sm:$0xff]
    %v53 = vld [vmem:[%s3 + $0x20] sm:$0xff]
    %v54 = vld [vmem:[%s3 + $0x28] sm:$0xff]
    %v55 = vld [vmem:[%s3 + $0x30] sm:$0xff]
    %v56 = vld [vmem:[%s3 + $0x38] sm:$0xff]
    %v57 = vld [vmem:[%s3 + $0x40] sm:$0xff]
    %v58 = vld [vmem:[%s3 + $0x48] sm:$0xff]
    %v59 = vld [vmem:[%s3 + $0x50] sm:$0xff]
    %v60 = vld [vmem:[%s3 + $0x58] sm:$0xff]
    %v61 = vld [vmem:[%s3 + $0x60] sm:$0xff]
    %v62 = vld [vmem:[%s3 + $0x68] sm:$0xff]
    %v63 = vld [vmem:[%s3 + $0x70] sm:$0xff]
    %v64 = vld [vmem:[%s3 + $0x78] sm:$0xff]
    %v65 = vld [vmem:[%s3 + $0x80] sm:$0xff]
    %v66 = vld [vmem:[%s3 + $0x88] sm:$0xff]
    %v67 = vld [vmem:[%s3 + $0x90] sm:$0xff]
    %v68 = vld [vmem:[%s3 + $0x98] sm:$0xff]
    %v69 = vld [vmem:[%s3 + $0xa0] sm:$0xff]
    %v70 = vld [vmem:[%s3 + $0xa8] sm:$0xff]
    %v71 = vld [vmem:[%s3 + $0xb0] sm:$0xff]
    %v72 = vld [vmem:[%s3 + $0xb8] sm:$0xff]
    %v73 = vld [vmem:[%s3 + $0xc0] sm:$0xff]
    %v74 = vld [vmem:[%s3 + $0xc8] sm:$0xff]
    %v75 = vld [vmem:[%s3 + $0xd0] sm:$0xff]
    %v76 = vld [vmem:[%s3 + $0xd8] sm:$0xff]
    %v77 = vld [vmem:[%s3 + $0xe0] sm:$0xff]
    %v78 = vld [vmem:[%s3 + $0xe8] sm:$0xff]
    %v79 = vld [vmem:[%s3 + $0xf0] sm:$0xff]
    %v80 = vld [vmem:[%s3 + $0xf8] sm:$0xff]
    %v81 = vld [vmem:[%s5] sm:$0xf]
    %v83 = vlaneseq
    %v84 = vshrl.u32 %v83, 7
    %v85 = vsub.s32 0, %v84
    %v86 = vrot.slane %v81, %v85
    %v87 = vlaneseq
    %v88 = vshrl.u32 %v87, 7
    %v89 = vsub.s32 1, %v88
    %v90 = vrot.slane %v81, %v89
    %v91 = vlaneseq
    %v92 = vshrl.u32 %v91, 7
    %v93 = vsub.s32 2, %v92
    %v94 = vrot.slane %v81, %v93
    %v95 = vlaneseq
    %v96 = vshrl.u32 %v95, 7
    %v97 = vsub.s32 3, %v96
    %v98 = vrot.slane %v81, %v97
    %v135 = vunpack.c.l.b16 %v49
    %v136 = vunpack.c.h.b16 %v49
    %v137 = vunpack.c.l.b16 %v50
    %v138 = vunpack.c.h.b16 %v50
    %v139 = vunpack.c.l.b16 %v51
    %v140 = vunpack.c.h.b16 %v51
    %v141 = vunpack.c.l.b16 %v52
    %v142 = vunpack.c.h.b16 %v52
    %v143 = vunpack.c.l.b16 %v53
    %v144 = vunpack.c.h.b16 %v53
    %v145 = vunpack.c.l.b16 %v54
    %v146 = vunpack.c.h.b16 %v54
    %v147 = vunpack.c.l.b16 %v55
    %v148 = vunpack.c.h.b16 %v55
    %v149 = vunpack.c.l.b16 %v56
    %v150 = vunpack.c.h.b16 %v56
    %v151 = vunpack.c.l.b16 %v57
    %v152 = vunpack.c.h.b16 %v57
    %v153 = vunpack.c.l.b16 %v58
    %v154 = vunpack.c.h.b16 %v58
    %v155 = vunpack.c.l.b16 %v59
    %v156 = vunpack.c.h.b16 %v59
    %v157 = vunpack.c.l.b16 %v60
    %v158 = vunpack.c.h.b16 %v60
    %v159 = vunpack.c.l.b16 %v61
    %v160 = vunpack.c.h.b16 %v61
    %v161 = vunpack.c.l.b16 %v62
    %v162 = vunpack.c.h.b16 %v62
    %v163 = vunpack.c.l.b16 %v63
    %v164 = vunpack.c.h.b16 %v63
    %v165 = vunpack.c.l.b16 %v64
    %v166 = vunpack.c.h.b16 %v64
    %v167 = vunpack.c.l.b16 %v65
    %v168 = vunpack.c.h.b16 %v65
    %v169 = vunpack.c.l.b16 %v66
    %v170 = vunpack.c.h.b16 %v66
    %v171 = vunpack.c.l.b16 %v67
    %v172 = vunpack.c.h.b16 %v67
    %v173 = vunpack.c.l.b16 %v68
    %v174 = vunpack.c.h.b16 %v68
    %v175 = vunpack.c.l.b16 %v69
    %v176 = vunpack.c.h.b16 %v69
    %v177 = vunpack.c.l.b16 %v70
    %v178 = vunpack.c.h.b16 %v70
    %v179 = vunpack.c.l.b16 %v71
    %v180 = vunpack.c.h.b16 %v71
    %v181 = vunpack.c.l.b16 %v72
    %v182 = vunpack.c.h.b16 %v72
    %v183 = vunpack.c.l.b16 %v73
    %v184 = vunpack.c.h.b16 %v73
    %v185 = vunpack.c.l.b16 %v74
    %v186 = vunpack.c.h.b16 %v74
    %v187 = vunpack.c.l.b16 %v75
    %v188 = vunpack.c.h.b16 %v75
    %v189 = vunpack.c.l.b16 %v76
    %v190 = vunpack.c.h.b16 %v76
    %v191 = vunpack.c.l.b16 %v77
    %v192 = vunpack.c.h.b16 %v77
    %v193 = vunpack.c.l.b16 %v78
    %v194 = vunpack.c.h.b16 %v78
    %v195 = vunpack.c.l.b16 %v79
    %v196 = vunpack.c.h.b16 %v79
    %v197 = vunpack.c.l.b16 %v80
    %v198 = vunpack.c.h.b16 %v80
    %v199 = vpack.c.b16 %v139, %v135
    %v200 = vpack.c.b16 %v140, %v136
    %v201 = vpack.c.b16 %v141, %v137
    %v202 = vpack.c.b16 %v142, %v138
    %v203 = vpack.c.b16 %v147, %v143
    %v204 = vpack.c.b16 %v148, %v144
    %v205 = vpack.c.b16 %v149, %v145
    %v206 = vpack.c.b16 %v150, %v146
    %v207 = vpack.c.b16 %v155, %v151
    %v208 = vpack.c.b16 %v156, %v152
    %v209 = vpack.c.b16 %v157, %v153
    %v210 = vpack.c.b16 %v158, %v154
    %v211 = vpack.c.b16 %v163, %v159
    %v212 = vpack.c.b16 %v164, %v160
    %v213 = vpack.c.b16 %v165, %v161
    %v214 = vpack.c.b16 %v166, %v162
    %v215 = vpack.c.b16 %v171, %v167
    %v216 = vpack.c.b16 %v172, %v168
    %v217 = vpack.c.b16 %v173, %v169
    %v218 = vpack.c.b16 %v174, %v170
    %v219 = vpack.c.b16 %v179, %v175
    %v220 = vpack.c.b16 %v180, %v176
    %v221 = vpack.c.b16 %v181, %v177
    %v222 = vpack.c.b16 %v182, %v178
    %v223 = vpack.c.b16 %v187, %v183
    %v224 = vpack.c.b16 %v188, %v184
    %v225 = vpack.c.b16 %v189, %v185
    %v226 = vpack.c.b16 %v190, %v186
    %v227 = vpack.c.b16 %v195, %v191
    %v228 = vpack.c.b16 %v196, %v192
    %v229 = vpack.c.b16 %v197, %v193
    %v230 = vpack.c.b16 %v198, %v194
    %263 = vmatprep.subr.bf16.mxu0 %v200
    %264 = vmatpush1.bf16.msra.mxu0 %v199
    %265 = vmatprep.subr.bf16.mxu0 %v204
    %266 = vmatpush1.bf16.msra.mxu0 %v203
    %267 = vmatprep.subr.bf16.mxu0 %v208
    %268 = vmatpush1.bf16.msra.mxu0 %v207
    %269 = vmatprep.subr.bf16.mxu0 %v212
    %270 = vmatpush1.bf16.msra.mxu0 %v211
    %271 = vmatprep.subr.bf16.mxu0 %v216
    %272 = vmatpush1.bf16.msra.mxu0 %v215
    %273 = vmatprep.subr.bf16.mxu0 %v220
    %274 = vmatpush1.bf16.msra.mxu0 %v219
    %275 = vmatprep.subr.bf16.mxu0 %v224
    %276 = vmatpush1.bf16.msra.mxu0 %v223
    %277 = vmatprep.subr.bf16.mxu0 %v228
    %278 = vmatpush1.bf16.msra.mxu0 %v227
    %279 = vmatprep.subr.bf16.mxu0 0
    %280 = vmatpush1.bf16.msra.mxu0 0
    %281 = vmatprep.subr.bf16.mxu0 0
    %282 = vmatpush1.bf16.msra.mxu0 0
    %283 = vmatprep.subr.bf16.mxu0 0
    %284 = vmatpush1.bf16.msra.mxu0 0
    %285 = vmatprep.subr.bf16.mxu0 0
    %286 = vmatpush1.bf16.msra.mxu0 0
    %287 = vmatprep.subr.bf16.mxu0 0
    %288 = vmatpush1.bf16.msra.mxu0 0
    %289 = vmatprep.subr.bf16.mxu0 0
    %290 = vmatpush1.bf16.msra.mxu0 0
    %291 = vmatprep.subr.bf16.mxu0 0
    %292 = vmatpush1.bf16.msra.mxu0 0
    %293 = vmatprep.subr.bf16.mxu0 0
    %294 = vmatpush1.bf16.msra.mxu0 0
    %295 = vmatprep.mubr.bf16.mxu0 0
    %296 = vmatmul.mubr.bf16.gmra.mrb[0].mxu0 %v45
    %v297 = vpop.f32.mrb[0].mxu0
    %v298 = vadd.f32 %v86, %v297
    %v299 = vpop.f32.mrb[0].mxu0
    %v300 = vadd.f32 %v90, %v299
    %v301 = vpop.f32.mrb[0].mxu0
    %v302 = vadd.f32 %v86, %v301
    %v303 = vpop.f32.mrb[0].mxu0
    %v304 = vadd.f32 %v90, %v303
    %305 = vmatprep.mubr.bf16.mxu0 0
    %306 = vmatmul.mubr.bf16.gmra.mrb[0].mxu0 %v46
    %v307 = vpop.f32.mrb[0].mxu0
    %v308 = vadd.f32 %v86, %v307
    %v309 = vpop.f32.mrb[0].mxu0
    %v310 = vadd.f32 %v90, %v309
    %v311 = vpop.f32.mrb[0].mxu0
    %v312 = vadd.f32 %v86, %v311
    %v313 = vpop.f32.mrb[0].mxu0
    %v314 = vadd.f32 %v90, %v313
    %315 = vmatprep.mubr.bf16.mxu0 0
    %316 = vmatmul.mubr.bf16.gmra.mrb[0].mxu0 %v47
    %v317 = vpop.f32.mrb[0].mxu0
    %v318 = vadd.f32 %v86, %v317
    %v319 = vpop.f32.mrb[0].mxu0
    %v320 = vadd.f32 %v90, %v319
    %v321 = vpop.f32.mrb[0].mxu0
    %v322 = vadd.f32 %v86, %v321
    %v323 = vpop.f32.mrb[0].mxu0
    %v324 = vadd.f32 %v90, %v323
    %325 = vmatprep.mubr.bf16.mxu0 0
    %326 = vmatmul.mubr.bf16.gmra.mrb[0].mxu0 %v48
    %v327 = vpop.f32.mrb[0].mxu0
    %v328 = vadd.f32 %v86, %v327
    %v329 = vpop.f32.mrb[0].mxu0
    %v330 = vadd.f32 %v90, %v329
    %v331 = vpop.f32.mrb[0].mxu0
    %v332 = vpop.f32.mrb[0].mxu0
    %333 = vdwg.mxu0
    %334 = vmatprep.subr.bf16.mxu0 %v202
    %335 = vmatpush1.bf16.msra.mxu0 %v201
    %336 = vmatprep.subr.bf16.mxu0 %v206
    %337 = vmatpush1.bf16.msra.mxu0 %v205
    %338 = vmatprep.subr.bf16.mxu0 %v210
    %339 = vmatpush1.bf16.msra.mxu0 %v209
    %340 = vmatprep.subr.bf16.mxu0 %v214
    %341 = vmatpush1.bf16.msra.mxu0 %v213
    %342 = vmatprep.subr.bf16.mxu0 %v218
    %343 = vmatpush1.bf16.msra.mxu0 %v217
    %344 = vmatprep.subr.bf16.mxu0 %v222
    %345 = vmatpush1.bf16.msra.mxu0 %v221
    %346 = vmatprep.subr.bf16.mxu0 %v226
    %347 = vmatpush1.bf16.msra.mxu0 %v225
    %348 = vmatprep.subr.bf16.mxu0 %v230
    %349 = vmatpush1.bf16.msra.mxu0 %v229
    %350 = vmatprep.subr.bf16.mxu0 0
    %351 = vmatpush1.bf16.msra.mxu0 0
    %352 = vmatprep.subr.bf16.mxu0 0
    %353 = vmatpush1.bf16.msra.mxu0 0
    %354 = vmatprep.subr.bf16.mxu0 0
    %355 = vmatpush1.bf16.msra.mxu0 0
    %356 = vmatprep.subr.bf16.mxu0 0
    %357 = vmatpush1.bf16.msra.mxu0 0
    %358 = vmatprep.subr.bf16.mxu0 0
    %359 = vmatpush1.bf16.msra.mxu0 0
    %360 = vmatprep.subr.bf16.mxu0 0
    %361 = vmatpush1.bf16.msra.mxu0 0
    %362 = vmatprep.subr.bf16.mxu0 0
    %363 = vmatpush1.bf16.msra.mxu0 0
    %364 = vmatprep.subr.bf16.mxu0 0
    %365 = vmatpush1.bf16.msra.mxu0 0
    %366 = vmatprep.mubr.bf16.mxu0 0
    %367 = vmatmul.mubr.bf16.gmra.mrb[0].mxu0 %v45
    %v368 = vpop.f32.mrb[0].mxu0
    %v369 = vadd.f32 %v94, %v368
    %v370 = vpop.f32.mrb[0].mxu0
    %v371 = vadd.f32 %v98, %v370
    %v372 = vpop.f32.mrb[0].mxu0
    %v373 = vadd.f32 %v94, %v372
    %v374 = vpop.f32.mrb[0].mxu0
    %v375 = vadd.f32 %v98, %v374
    %376 = vmatprep.mubr.bf16.mxu0 0
    %377 = vmatmul.mubr.bf16.gmra.mrb[0].mxu0 %v46
    %v378 = vpop.f32.mrb[0].mxu0
    %v379 = vadd.f32 %v94, %v378
    %v380 = vpop.f32.mrb[0].mxu0
    %v381 = vadd.f32 %v98, %v380
    %v382 = vpop.f32.mrb[0].mxu0
    %v383 = vadd.f32 %v94, %v382
    %v384 = vpop.f32.mrb[0].mxu0
    %v385 = vadd.f32 %v98, %v384
    %386 = vmatprep.mubr.bf16.mxu0 0
    %387 = vmatmul.mubr.bf16.gmra.mrb[0].mxu0 %v47
    %v388 = vpop.f32.mrb[0].mxu0
    %v389 = vadd.f32 %v94, %v388
    %v390 = vpop.f32.mrb[0].mxu0
    %v391 = vadd.f32 %v98, %v390
    %v392 = vpop.f32.mrb[0].mxu0
    %v393 = vadd.f32 %v94, %v392
    %v394 = vpop.f32.mrb[0].mxu0
    %v395 = vadd.f32 %v98, %v394
    %396 = vmatprep.mubr.bf16.mxu0 0
    %397 = vmatmul.mubr.bf16.gmra.mrb[0].mxu0 %v48
    %v398 = vpop.f32.mrb[0].mxu0
    %v399 = vadd.f32 %v94, %v398
    %v400 = vpop.f32.mrb[0].mxu0
    %v401 = vadd.f32 %v98, %v400
    %v402 = vpop.f32.mrb[0].mxu0
    %v403 = vpop.f32.mrb[0].mxu0
    %404 = vdwg.mxu0
    %405 = vst [vmem:[#allocation2] sm:$0xff] %v298
    %406 = vst [vmem:[#allocation2 + $0x8] sm:$0xff] %v300
    %407 = vst [vmem:[#allocation2 + $0x10] sm:$0xff] %v369
    %408 = vst [vmem:[#allocation2 + $0x18] sm:$0xff] %v371
    %409 = vst [vmem:[#allocation2 + $0x20] sm:$0xff] %v302
    %410 = vst [vmem:[#allocation2 + $0x28] sm:$0xff] %v304
    %411 = vst [vmem:[#allocation2 + $0x30] sm:$0xff] %v373
    %412 = vst [vmem:[#allocation2 + $0x38] sm:$0xff] %v375
    %413 = vst [vmem:[#allocation2 + $0x40] sm:$0xff] %v308
    %414 = vst [vmem:[#allocation2 + $0x48] sm:$0xff] %v310
    %415 = vst [vmem:[#allocation2 + $0x50] sm:$0xff] %v379
    %416 = vst [vmem:[#allocation2 + $0x58] sm:$0xff] %v381
    %417 = vst [vmem:[#allocation2 + $0x60] sm:$0xff] %v312
    %418 = vst [vmem:[#allocation2 + $0x68] sm:$0xff] %v314
    %419 = vst [vmem:[#allocation2 + $0x70] sm:$0xff] %v383
    %420 = vst [vmem:[#allocation2 + $0x78] sm:$0xff] %v385
    %421 = vst [vmem:[#allocation2 + $0x80] sm:$0xff] %v318
    %422 = vst [vmem:[#allocation2 + $0x88] sm:$0xff] %v320
    %423 = vst [vmem:[#allocation2 + $0x90] sm:$0xff] %v389
    %424 = vst [vmem:[#allocation2 + $0x98] sm:$0xff] %v391
    %425 = vst [vmem:[#allocation2 + $0xa0] sm:$0xff] %v322
    %426 = vst [vmem:[#allocation2 + $0xa8] sm:$0xff] %v324
    %427 = vst [vmem:[#allocation2 + $0xb0] sm:$0xff] %v393
    %428 = vst [vmem:[#allocation2 + $0xb8] sm:$0xff] %v395
    %429 = vst [vmem:[#allocation2 + $0xc0] sm:$0xff] %v328
    %430 = vst [vmem:[#allocation2 + $0xc8] sm:$0xff] %v330
    %431 = vst [vmem:[#allocation2 + $0xd0] sm:$0xff] %v399
    %432 = vst [vmem:[#allocation2 + $0xd8] sm:$0xff] %v401
    %v433 = vld [vmem:[%s1] sm:$0xff]
    %434 = vst [vmem:[#allocation3] sm:$0xff] %v433
    %v435 = vld [vmem:[%s2] sm:$0xff]
    %436 = vst [vmem:[#allocation4] sm:$0xff] %v435
    %v437 = vld [vmem:[%s4] sm:$0xff]
    %v438 = vld [vmem:[%s4 + $0x8] sm:$0xff]
    %v439 = vld [vmem:[%s4 + $0x10] sm:$0xff]
    %v440 = vld [vmem:[%s4 + $0x18] sm:$0xff]
    %v441 = vld [vmem:[%s4 + $0x20] sm:$0xff]
    %v442 = vld [vmem:[%s4 + $0x28] sm:$0xff]
    %v443 = vld [vmem:[%s4 + $0x30] sm:$0xff]
    %v444 = vld [vmem:[%s4 + $0x38] sm:$0xff]
    %v445 = vld [vmem:[%s4 + $0x40] sm:$0xff]
    %v446 = vld [vmem:[%s4 + $0x48] sm:$0xff]
    %v447 = vld [vmem:[%s4 + $0x50] sm:$0xff]
    %v448 = vld [vmem:[%s4 + $0x58] sm:$0xff]
    %v449 = vld [vmem:[%s4 + $0x60] sm:$0xff]
    %v450 = vld [vmem:[%s4 + $0x68] sm:$0xff]
    %v451 = vld [vmem:[%s4 + $0x70] sm:$0xff]
    %v452 = vld [vmem:[%s4 + $0x78] sm:$0xff]
    %v453 = vld [vmem:[%s4 + $0x80] sm:$0xff]
    %v454 = vld [vmem:[%s4 + $0x88] sm:$0xff]
    %v455 = vld [vmem:[%s4 + $0x90] sm:$0xff]
    %v456 = vld [vmem:[%s4 + $0x98] sm:$0xff]
    %v457 = vld [vmem:[%s4 + $0xa0] sm:$0xff]
    %v458 = vld [vmem:[%s4 + $0xa8] sm:$0xff]
    %v459 = vld [vmem:[%s4 + $0xb0] sm:$0xff]
    %v460 = vld [vmem:[%s4 + $0xb8] sm:$0xff]
    %v461 = vld [vmem:[%s4 + $0xc0] sm:$0xff]
    %v462 = vld [vmem:[%s4 + $0xc8] sm:$0xff]
    %v463 = vld [vmem:[%s4 + $0xd0] sm:$0xff]
    %v464 = vld [vmem:[%s4 + $0xd8] sm:$0xff]
    %v465 = vld [vmem:[%s4 + $0xe0] sm:$0xff]
    %v466 = vld [vmem:[%s4 + $0xe8] sm:$0xff]
    %v467 = vld [vmem:[%s4 + $0xf0] sm:$0xff]
    %v468 = vld [vmem:[%s4 + $0xf8] sm:$0xff]
    %v469 = vld [vmem:[#allocation3] sm:$0xff]
    %v470 = vld [vmem:[#allocation4] sm:$0xff]
    %v471 = vld [vmem:[#allocation2] sm:$0xff]
    %v472 = vld [vmem:[#allocation2 + $0x8] sm:$0xff]
    %v473 = vld [vmem:[#allocation2 + $0x10] sm:$0xff]
    %v474 = vld [vmem:[#allocation2 + $0x18] sm:$0xff]
    %v475 = vpack.c.bf16 %v469, %v469
    %v508 = vunpack.c.l.b16 %v437
    %v509 = vunpack.c.h.b16 %v437
    %v510 = vunpack.c.l.b16 %v438
    %v511 = vunpack.c.h.b16 %v438
    %v512 = vunpack.c.l.b16 %v439
    %v513 = vunpack.c.h.b16 %v439
    %v514 = vunpack.c.l.b16 %v440
    %v515 = vunpack.c.h.b16 %v440
    %v516 = vunpack.c.l.b16 %v441
    %v517 = vunpack.c.h.b16 %v441
    %v518 = vunpack.c.l.b16 %v442
    %v519 = vunpack.c.h.b16 %v442
    %v520 = vunpack.c.l.b16 %v443
    %v521 = vunpack.c.h.b16 %v443
    %v522 = vunpack.c.l.b16 %v444
    %v523 = vunpack.c.h.b16 %v444
    %v524 = vunpack.c.l.b16 %v445
    %v525 = vunpack.c.h.b16 %v445
    %v526 = vunpack.c.l.b16 %v446
    %v527 = vunpack.c.h.b16 %v446
    %v528 = vunpack.c.l.b16 %v447
    %v529 = vunpack.c.h.b16 %v447
    %v530 = vunpack.c.l.b16 %v448
    %v531 = vunpack.c.h.b16 %v448
    %v532 = vunpack.c.l.b16 %v449
    %v533 = vunpack.c.h.b16 %v449
    %v534 = vunpack.c.l.b16 %v450
    %v535 = vunpack.c.h.b16 %v450
    %v536 = vunpack.c.l.b16 %v451
    %v537 = vunpack.c.h.b16 %v451
    %v538 = vunpack.c.l.b16 %v452
    %v539 = vunpack.c.h.b16 %v452
    %v540 = vunpack.c.l.b16 %v453
    %v541 = vunpack.c.h.b16 %v453
    %v542 = vunpack.c.l.b16 %v454
    %v543 = vunpack.c.h.b16 %v454
    %v544 = vunpack.c.l.b16 %v455
    %v545 = vunpack.c.h.b16 %v455
    %v546 = vunpack.c.l.b16 %v456
    %v547 = vunpack.c.h.b16 %v456
    %v548 = vunpack.c.l.b16 %v457
    %v549 = vunpack.c.h.b16 %v457
    %v550 = vunpack.c.l.b16 %v458
    %v551 = vunpack.c.h.b16 %v458
    %v552 = vunpack.c.l.b16 %v459
    %v553 = vunpack.c.h.b16 %v459
    %v554 = vunpack.c.l.b16 %v460
    %v555 = vunpack.c.h.b16 %v460
    %v556 = vunpack.c.l.b16 %v461
    %v557 = vunpack.c.h.b16 %v461
    %v558 = vunpack.c.l.b16 %v462
    %v559 = vunpack.c.h.b16 %v462
    %v560 = vunpack.c.l.b16 %v463
    %v561 = vunpack.c.h.b16 %v463
    %v562 = vunpack.c.l.b16 %v464
    %v563 = vunpack.c.h.b16 %v464
    %v564 = vunpack.c.l.b16 %v465
    %v565 = vunpack.c.h.b16 %v465
    %v566 = vunpack.c.l.b16 %v466
    %v567 = vunpack.c.h.b16 %v466
    %v568 = vunpack.c.l.b16 %v467
    %v569 = vunpack.c.h.b16 %v467
    %v570 = vunpack.c.l.b16 %v468
    %v571 = vunpack.c.h.b16 %v468
    %v572 = vpack.c.b16 %v512, %v508
    %v573 = vpack.c.b16 %v513, %v509
    %v574 = vpack.c.b16 %v514, %v510
    %v575 = vpack.c.b16 %v515, %v511
    %v576 = vpack.c.b16 %v520, %v516
    %v577 = vpack.c.b16 %v521, %v517
    %v578 = vpack.c.b16 %v522, %v518
    %v579 = vpack.c.b16 %v523, %v519
    %v580 = vpack.c.b16 %v528, %v524
    %v581 = vpack.c.b16 %v529, %v525
    %v582 = vpack.c.b16 %v530, %v526
    %v583 = vpack.c.b16 %v531, %v527
    %v584 = vpack.c.b16 %v536, %v532
    %v585 = vpack.c.b16 %v537, %v533
    %v586 = vpack.c.b16 %v538, %v534
    %v587 = vpack.c.b16 %v539, %v535
    %v588 = vpack.c.b16 %v544, %v540
    %v589 = vpack.c.b16 %v545, %v541
    %v590 = vpack.c.b16 %v546, %v542
    %v591 = vpack.c.b16 %v547, %v543
    %v592 = vpack.c.b16 %v552, %v548
    %v593 = vpack.c.b16 %v553, %v549
    %v594 = vpack.c.b16 %v554, %v550
    %v595 = vpack.c.b16 %v555, %v551
    %v596 = vpack.c.b16 %v560, %v556
    %v597 = vpack.c.b16 %v561, %v557
    %v598 = vpack.c.b16 %v562, %v558
    %v599 = vpack.c.b16 %v563, %v559
    %v600 = vpack.c.b16 %v568, %v564
    %v601 = vpack.c.b16 %v569, %v565
    %v602 = vpack.c.b16 %v570, %v566
    %v603 = vpack.c.b16 %v571, %v567
    %636 = vmatprep.subr.bf16.mxu0 %v573
    %637 = vmatpush1.bf16.msra.mxu0 %v572
    %638 = vmatprep.subr.bf16.mxu0 %v577
    %639 = vmatpush1.bf16.msra.mxu0 %v576
    %640 = vmatprep.subr.bf16.mxu0 %v581
    %641 = vmatpush1.bf16.msra.mxu0 %v580
    %642 = vmatprep.subr.bf16.mxu0 %v585
    %643 = vmatpush1.bf16.msra.mxu0 %v584
    %644 = vmatprep.subr.bf16.mxu0 %v589
    %645 = vmatpush1.bf16.msra.mxu0 %v588
    %646 = vmatprep.subr.bf16.mxu0 %v593
    %647 = vmatpush1.bf16.msra.mxu0 %v592
    %648 = vmatprep.subr.bf16.mxu0 %v597
    %649 = vmatpush1.bf16.msra.mxu0 %v596
    %650 = vmatprep.subr.bf16.mxu0 %v601
    %651 = vmatpush1.bf16.msra.mxu0 %v600
    %652 = vmatprep.subr.bf16.mxu0 0
    %653 = vmatpush1.bf16.msra.mxu0 0
    %654 = vmatprep.subr.bf16.mxu0 0
    %655 = vmatpush1.bf16.msra.mxu0 0
    %656 = vmatprep.subr.bf16.mxu0 0
    %657 = vmatpush1.bf16.msra.mxu0 0
    %658 = vmatprep.subr.bf16.mxu0 0
    %659 = vmatpush1.bf16.msra.mxu0 0
    %660 = vmatprep.subr.bf16.mxu0 0
    %661 = vmatpush1.bf16.msra.mxu0 0
    %662 = vmatprep.subr.bf16.mxu0 0
    %663 = vmatpush1.bf16.msra.mxu0 0
    %664 = vmatprep.subr.bf16.mxu0 0
    %665 = vmatpush1.bf16.msra.mxu0 0
    %666 = vmatprep.subr.bf16.mxu0 0
    %667 = vmatpush1.bf16.msra.mxu0 0
    %668 = vmatprep.mubr.bf16.mxu0 0
    %669 = vmatmul.mubr.bf16.gmra.mrb[0].mxu0 %v475
    %v670 = vpop.f32.mrb[0].mxu0
    %v671 = vadd.f32 0.0, %v670
    %v672 = vpop.f32.mrb[0].mxu0
    %v673 = vadd.f32 0.0, %v672
    %v674 = vpop.f32.mrb[0].mxu0
    %v675 = vpop.f32.mrb[0].mxu0
    %676 = vdwg.mxu0
    %677 = vmatprep.subr.bf16.mxu0 %v575
    %678 = vmatpush1.bf16.msra.mxu0 %v574
    %679 = vmatprep.subr.bf16.mxu0 %v579
    %680 = vmatpush1.bf16.msra.mxu0 %v578
    %681 = vmatprep.subr.bf16.mxu0 %v583
    %682 = vmatpush1.bf16.msra.mxu0 %v582
    %683 = vmatprep.subr.bf16.mxu0 %v587
    %684 = vmatpush1.bf16.msra.mxu0 %v586
    %685 = vmatprep.subr.bf16.mxu0 %v591
    %686 = vmatpush1.bf16.msra.mxu0 %v590
    %687 = vmatprep.subr.bf16.mxu0 %v595
    %688 = vmatpush1.bf16.msra.mxu0 %v594
    %689 = vmatprep.subr.bf16.mxu0 %v599
    %690 = vmatpush1.bf16.msra.mxu0 %v598
    %691 = vmatprep.subr.bf16.mxu0 %v603
    %692 = vmatpush1.bf16.msra.mxu0 %v602
    %693 = vmatprep.subr.bf16.mxu0 0
    %694 = vmatpush1.bf16.msra.mxu0 0
    %695 = vmatprep.subr.bf16.mxu0 0
    %696 = vmatpush1.bf16.msra.mxu0 0
    %697 = vmatprep.subr.bf16.mxu0 0
    %698 = vmatpush1.bf16.msra.mxu0 0
    %699 = vmatprep.subr.bf16.mxu0 0
    %700 = vmatpush1.bf16.msra.mxu0 0
    %701 = vmatprep.subr.bf16.mxu0 0
    %702 = vmatpush1.bf16.msra.mxu0 0
    %703 = vmatprep.subr.bf16.mxu0 0
    %704 = vmatpush1.bf16.msra.mxu0 0
    %705 = vmatprep.subr.bf16.mxu0 0
    %706 = vmatpush1.bf16.msra.mxu0 0
    %707 = vmatprep.subr.bf16.mxu0 0
    %708 = vmatpush1.bf16.msra.mxu0 0
    %709 = vmatprep.mubr.bf16.mxu0 0
    %710 = vmatmul.mubr.bf16.gmra.mrb[0].mxu0 %v475
    %v711 = vpop.f32.mrb[0].mxu0
    %v712 = vadd.f32 0.0, %v711
    %v713 = vpop.f32.mrb[0].mxu0
    %v714 = vadd.f32 0.0, %v713
    %v715 = vpop.f32.mrb[0].mxu0
    %v716 = vpop.f32.mrb[0].mxu0
    %717 = vdwg.mxu0
    %v718 = vadd.f32 %v471, %v671
    %v719 = vadd.f32 %v472, %v673
    %v720 = vadd.f32 %v473, %v712
    %v721 = vadd.f32 %v474, %v714
    %v722 = vxor.u32 %v718, 2147483648
    %v723 = vmul.f32 %v722, 1.442695
    %v724 = vpow.pop %v723
    %v725 = vadd.f32 %v724, 1.0
    %v726 = vrcp.pop %v725
    %v727 = vmul.f32 1.0, %v726
    %v728 = vxor.u32 %v719, 2147483648
    %v729 = vmul.f32 %v728, 1.442695
    %v730 = vpow.pop %v729
    %v731 = vadd.f32 %v730, 1.0
    %v732 = vrcp.pop %v731
    %v733 = vmul.f32 1.0, %v732
    %v734 = vtanh.pop %v720
    %v735 = vxor.u32 %v721, 2147483648
    %v736 = vmul.f32 %v735, 1.442695
    %v737 = vpow.pop %v736
    %v738 = vadd.f32 %v737, 1.0
    %v739 = vrcp.pop %v738
    %v740 = vmul.f32 1.0, %v739
    %v741 = vmul.f32 %v733, %v470
    %v742 = vmul.f32 %v727, %v734
    %v743 = vadd.f32 %v741, %v742
    %v744 = vtanh.pop %v743
    %v745 = vmul.f32 %v740, %v744
    %746 = vst [vmem:[#allocation3] sm:$0xff] %v745
    %747 = vst [vmem:[#allocation4] sm:$0xff] %v743
    %748 = vst [vmem:[%s9] sm:$0xff] %v745
    %v749 = vld [vmem:[#allocation3] sm:$0xff]
    %v750 = vld [vmem:[#allocation4] sm:$0xff]
    %s751 = scalar_lea.vmem [#allocation2], 32
    %v752 = vld [vmem:[%s751] sm:$0xff]
    %v753 = vld [vmem:[%s751 + $0x8] sm:$0xff]
    %v754 = vld [vmem:[%s751 + $0x10] sm:$0xff]
    %v755 = vld [vmem:[%s751 + $0x18] sm:$0xff]
    %v756 = vpack.c.bf16 %v749, %v749
    %757 = vmatprep.subr.bf16.mxu0 %v573
    %758 = vmatpush1.bf16.msra.mxu0 %v572
    %759 = vmatprep.subr.bf16.mxu0 %v577
    %760 = vmatpush1.bf16.msra.mxu0 %v576
    %761 = vmatprep.subr.bf16.mxu0 %v581
    %762 = vmatpush1.bf16.msra.mxu0 %v580
    %763 = vmatprep.subr.bf16.mxu0 %v585
    %764 = vmatpush1.bf16.msra.mxu0 %v584
    %765 = vmatprep.subr.bf16.mxu0 %v589
    %766 = vmatpush1.bf16.msra.mxu0 %v588
    %767 = vmatprep.subr.bf16.mxu0 %v593
    %768 = vmatpush1.bf16.msra.mxu0 %v592
    %769 = vmatprep.subr.bf16.mxu0 %v597
    %770 = vmatpush1.bf16.msra.mxu0 %v596
    %771 = vmatprep.subr.bf16.mxu0 %v601
    %772 = vmatpush1.bf16.msra.mxu0 %v600
    %773 = vmatprep.subr.bf16.mxu0 0
    %774 = vmatpush1.bf16.msra.mxu0 0
    %775 = vmatprep.subr.bf16.mxu0 0
    %776 = vmatpush1.bf16.msra.mxu0 0
    %777 = vmatprep.subr.bf16.mxu0 0
    %778 = vmatpush1.bf16.msra.mxu0 0
    %779 = vmatprep.subr.bf16.mxu0 0
    %780 = vmatpush1.bf16.msra.mxu0 0
    %781 = vmatprep.subr.bf16.mxu0 0
    %782 = vmatpush1.bf16.msra.mxu0 0
    %783 = vmatprep.subr.bf16.mxu0 0
    %784 = vmatpush1.bf16.msra.mxu0 0
    %785 = vmatprep.subr.bf16.mxu0 0
    %786 = vmatpush1.bf16.msra.mxu0 0
    %787 = vmatprep.subr.bf16.mxu0 0
    %788 = vmatpush1.bf16.msra.mxu0 0
    %789 = vmatprep.mubr.bf16.mxu0 0
    %790 = vmatmul.mubr.bf16.gmra.mrb[0].mxu0 %v756
    %v791 = vpop.f32.mrb[0].mxu0
    %v792 = vadd.f32 0.0, %v791
    %v793 = vpop.f32.mrb[0].mxu0
    %v794 = vadd.f32 0.0, %v793
    %v795 = vpop.f32.mrb[0].mxu0
    %v796 = vpop.f32.mrb[0].mxu0
    %797 = vdwg.mxu0
    %798 = vmatprep.subr.bf16.mxu0 %v575
    %799 = vmatpush1.bf16.msra.mxu0 %v574
    %800 = vmatprep.subr.bf16.mxu0 %v579
    %801 = vmatpush1.bf16.msra.mxu0 %v578
    %802 = vmatprep.subr.bf16.mxu0 %v583
    %803 = vmatpush1.bf16.msra.mxu0 %v582
    %804 = vmatprep.subr.bf16.mxu0 %v587
    %805 = vmatpush1.bf16.msra.mxu0 %v586
    %806 = vmatprep.subr.bf16.mxu0 %v591
    %807 = vmatpush1.bf16.msra.mxu0 %v590
    %808 = vmatprep.subr.bf16.mxu0 %v595
    %809 = vmatpush1.bf16.msra.mxu0 %v594
    %810 = vmatprep.subr.bf16.mxu0 %v599
    %811 = vmatpush1.bf16.msra.mxu0 %v598
    %812 = vmatprep.subr.bf16.mxu0 %v603
    %813 = vmatpush1.bf16.msra.mxu0 %v602
    %814 = vmatprep.subr.bf16.mxu0 0
    %815 = vmatpush1.bf16.msra.mxu0 0
    %816 = vmatprep.subr.bf16.mxu0 0
    %817 = vmatpush1.bf16.msra.mxu0 0
    %818 = vmatprep.subr.bf16.mxu0 0
    %819 = vmatpush1.bf16.msra.mxu0 0
    %820 = vmatprep.subr.bf16.mxu0 0
    %821 = vmatpush1.bf16.msra.mxu0 0
    %822 = vmatprep.subr.bf16.mxu0 0
    %823 = vmatpush1.bf16.msra.mxu0 0
    %824 = vmatprep.subr.bf16.mxu0 0
    %825 = vmatpush1.bf16.msra.mxu0 0
    %826 = vmatprep.subr.bf16.mxu0 0
    %827 = vmatpush1.bf16.msra.mxu0 0
    %828 = vmatprep.subr.bf16.mxu0 0
    %829 = vmatpush1.bf16.msra.mxu0 0
    %830 = vmatprep.mubr.bf16.mxu0 0
    %831 = vmatmul.mubr.bf16.gmra.mrb[0].mxu0 %v756
    %v832 = vpop.f32.mrb[0].mxu0
    %v833 = vadd.f32 0.0, %v832
    %v834 = vpop.f32.mrb[0].mxu0
    %v835 = vadd.f32 0.0, %v834
    %v836 = vpop.f32.mrb[0].mxu0
    %v837 = vpop.f32.mrb[0].mxu0
    %838 = vdwg.mxu0
    %v839 = vadd.f32 %v752, %v792
    %v840 = vadd.f32 %v753, %v794
    %v841 = vadd.f32 %v754, %v833
    %v842 = vadd.f32 %v755, %v835
    %v843 = vxor.u32 %v839, 2147483648
    %v844 = vmul.f32 %v843, 1.442695
    %v845 = vpow.pop %v844
    %v846 = vadd.f32 %v845, 1.0
    %v847 = vrcp.pop %v846
    %v848 = vmul.f32 1.0, %v847
    %v849 = vxor.u32 %v840, 2147483648
    %v850 = vmul.f32 %v849, 1.442695
    %v851 = vpow.pop %v850
    %v852 = vadd.f32 %v851, 1.0
    %v853 = vrcp.pop %v852
    %v854 = vmul.f32 1.0, %v853
    %v855 = vtanh.pop %v841
    %v856 = vxor.u32 %v842, 2147483648
    %v857 = vmul.f32 %v856, 1.442695
    %v858 = vpow.pop %v857
    %v859 = vadd.f32 %v858, 1.0
    %v860 = vrcp.pop %v859
    %v861 = vmul.f32 1.0, %v860
    %v862 = vmul.f32 %v854, %v750
    %v863 = vmul.f32 %v848, %v855
    %v864 = vadd.f32 %v862, %v863
    %v865 = vtanh.pop %v864
    %v866 = vmul.f32 %v861, %v865
    %867 = vst [vmem:[#allocation3] sm:$0xff] %v866
    %868 = vst [vmem:[#allocation4] sm:$0xff] %v864
    %s869 = scalar_lea.vmem %s9, 8
    %870 = vst [vmem:[%s869] sm:$0xff] %v866
    %v871 = vld [vmem:[#allocation3] sm:$0xff]
    %v872 = vld [vmem:[#allocation4] sm:$0xff]
    %s873 = scalar_lea.vmem [#allocation2], 64
    %v874 = vld [vmem:[%s873] sm:$0xff]
    %v875 = vld [vmem:[%s873 + $0x8] sm:$0xff]
    %v876 = vld [vmem:[%s873 + $0x10] sm:$0xff]
    %v877 = vld [vmem:[%s873 + $0x18] sm:$0xff]
    %v878 = vpack.c.bf16 %v871, %v871
    %879 = vmatprep.subr.bf16.mxu0 %v573
    %880 = vmatpush1.bf16.msra.mxu0 %v572
    %881 = vmatprep.subr.bf16.mxu0 %v577
    %882 = vmatpush1.bf16.msra.mxu0 %v576
    %883 = vmatprep.subr.bf16.mxu0 %v581
    %884 = vmatpush1.bf16.msra.mxu0 %v580
    %885 = vmatprep.subr.bf16.mxu0 %v585
    %886 = vmatpush1.bf16.msra.mxu0 %v584
    %887 = vmatprep.subr.bf16.mxu0 %v589
    %888 = vmatpush1.bf16.msra.mxu0 %v588
    %889 = vmatprep.subr.bf16.mxu0 %v593
    %890 = vmatpush1.bf16.msra.mxu0 %v592
    %891 = vmatprep.subr.bf16.mxu0 %v597
    %892 = vmatpush1.bf16.msra.mxu0 %v596
    %893 = vmatprep.subr.bf16.mxu0 %v601
    %894 = vmatpush1.bf16.msra.mxu0 %v600
    %895 = vmatprep.subr.bf16.mxu0 0
    %896 = vmatpush1.bf16.msra.mxu0 0
    %897 = vmatprep.subr.bf16.mxu0 0
    %898 = vmatpush1.bf16.msra.mxu0 0
    %899 = vmatprep.subr.bf16.mxu0 0
    %900 = vmatpush1.bf16.msra.mxu0 0
    %901 = vmatprep.subr.bf16.mxu0 0
    %902 = vmatpush1.bf16.msra.mxu0 0
    %903 = vmatprep.subr.bf16.mxu0 0
    %904 = vmatpush1.bf16.msra.mxu0 0
    %905 = vmatprep.subr.bf16.mxu0 0
    %906 = vmatpush1.bf16.msra.mxu0 0
    %907 = vmatprep.subr.bf16.mxu0 0
    %908 = vmatpush1.bf16.msra.mxu0 0
    %909 = vmatprep.subr.bf16.mxu0 0
    %910 = vmatpush1.bf16.msra.mxu0 0
    %911 = vmatprep.mubr.bf16.mxu0 0
    %912 = vmatmul.mubr.bf16.gmra.mrb[0].mxu0 %v878
    %v913 = vpop.f32.mrb[0].mxu0
    %v914 = vadd.f32 0.0, %v913
    %v915 = vpop.f32.mrb[0].mxu0
    %v916 = vadd.f32 0.0, %v915
    %v917 = vpop.f32.mrb[0].mxu0
    %v918 = vpop.f32.mrb[0].mxu0
    %919 = vdwg.mxu0
    %920 = vmatprep.subr.bf16.mxu0 %v575
    %921 = vmatpush1.bf16.msra.mxu0 %v574
    %922 = vmatprep.subr.bf16.mxu0 %v579
    %923 = vmatpush1.bf16.msra.mxu0 %v578
    %924 = vmatprep.subr.bf16.mxu0 %v583
    %925 = vmatpush1.bf16.msra.mxu0 %v582
    %926 = vmatprep.subr.bf16.mxu0 %v587
    %927 = vmatpush1.bf16.msra.mxu0 %v586
    %928 = vmatprep.subr.bf16.mxu0 %v591
    %929 = vmatpush1.bf16.msra.mxu0 %v590
    %930 = vmatprep.subr.bf16.mxu0 %v595
    %931 = vmatpush1.bf16.msra.mxu0 %v594
    %932 = vmatprep.subr.bf16.mxu0 %v599
    %933 = vmatpush1.bf16.msra.mxu0 %v598
    %934 = vmatprep.subr.bf16.mxu0 %v603
    %935 = vmatpush1.bf16.msra.mxu0 %v602
    %936 = vmatprep.subr.bf16.mxu0 0
    %937 = vmatpush1.bf16.msra.mxu0 0
    %938 = vmatprep.subr.bf16.mxu0 0
    %939 = vmatpush1.bf16.msra.mxu0 0
    %940 = vmatprep.subr.bf16.mxu0 0
    %941 = vmatpush1.bf16.msra.mxu0 0
    %942 = vmatprep.subr.bf16.mxu0 0
    %943 = vmatpush1.bf16.msra.mxu0 0
    %944 = vmatprep.subr.bf16.mxu0 0
    %945 = vmatpush1.bf16.msra.mxu0 0
    %946 = vmatprep.subr.bf16.mxu0 0
    %947 = vmatpush1.bf16.msra.mxu0 0
    %948 = vmatprep.subr.bf16.mxu0 0
    %949 = vmatpush1.bf16.msra.mxu0 0
    %950 = vmatprep.subr.bf16.mxu0 0
    %951 = vmatpush1.bf16.msra.mxu0 0
    %952 = vmatprep.mubr.bf16.mxu0 0
    %953 = vmatmul.mubr.bf16.gmra.mrb[0].mxu0 %v878
    %v954 = vpop.f32.mrb[0].mxu0
    %v955 = vadd.f32 0.0, %v954
    %v956 = vpop.f32.mrb[0].mxu0
    %v957 = vadd.f32 0.0, %v956
    %v958 = vpop.f32.mrb[0].mxu0
    %v959 = vpop.f32.mrb[0].mxu0
    %960 = vdwg.mxu0
    %v961 = vadd.f32 %v874, %v914
    %v962 = vadd.f32 %v875, %v916
    %v963 = vadd.f32 %v876, %v955
    %v964 = vadd.f32 %v877, %v957
    %v965 = vxor.u32 %v961, 2147483648
    %v966 = vmul.f32 %v965, 1.442695
    %v967 = vpow.pop %v966
    %v968 = vadd.f32 %v967, 1.0
    %v969 = vrcp.pop %v968
    %v970 = vmul.f32 1.0, %v969
    %v971 = vxor.u32 %v962, 2147483648
    %v972 = vmul.f32 %v971, 1.442695
    %v973 = vpow.pop %v972
    %v974 = vadd.f32 %v973, 1.0
    %v975 = vrcp.pop %v974
    %v976 = vmul.f32 1.0, %v975
    %v977 = vtanh.pop %v963
    %v978 = vxor.u32 %v964, 2147483648
    %v979 = vmul.f32 %v978, 1.442695
    %v980 = vpow.pop %v979
    %v981 = vadd.f32 %v980, 1.0
    %v982 = vrcp.pop %v981
    %v983 = vmul.f32 1.0, %v982
    %v984 = vmul.f32 %v976, %v872
    %v985 = vmul.f32 %v970, %v977
    %v986 = vadd.f32 %v984, %v985
    %v987 = vtanh.pop %v986
    %v988 = vmul.f32 %v983, %v987
    %989 = vst [vmem:[#allocation3] sm:$0xff] %v988
    %990 = vst [vmem:[#allocation4] sm:$0xff] %v986
    %s991 = scalar_lea.vmem %s9, 16
    %992 = vst [vmem:[%s991] sm:$0xff] %v988
    %v993 = vld [vmem:[#allocation3] sm:$0xff]
    %v994 = vld [vmem:[#allocation4] sm:$0xff]
    %s995 = scalar_lea.vmem [#allocation2], 96
    %v996 = vld [vmem:[%s995] sm:$0xff]
    %v997 = vld [vmem:[%s995 + $0x8] sm:$0xff]
    %v998 = vld [vmem:[%s995 + $0x10] sm:$0xff]
    %v999 = vld [vmem:[%s995 + $0x18] sm:$0xff]
    %v1000 = vpack.c.bf16 %v993, %v993
    %1001 = vmatprep.subr.bf16.mxu0 %v573
    %1002 = vmatpush1.bf16.msra.mxu0 %v572
    %1003 = vmatprep.subr.bf16.mxu0 %v577
    %1004 = vmatpush1.bf16.msra.mxu0 %v576
    %1005 = vmatprep.subr.bf16.mxu0 %v581
    %1006 = vmatpush1.bf16.msra.mxu0 %v580
    %1007 = vmatprep.subr.bf16.mxu0 %v585
    %1008 = vmatpush1.bf16.msra.mxu0 %v584
    %1009 = vmatprep.subr.bf16.mxu0 %v589
    %1010 = vmatpush1.bf16.msra.mxu0 %v588
    %1011 = vmatprep.subr.bf16.mxu0 %v593
    %1012 = vmatpush1.bf16.msra.mxu0 %v592
    %1013 = vmatprep.subr.bf16.mxu0 %v597
    %1014 = vmatpush1.bf16.msra.mxu0 %v596
    %1015 = vmatprep.subr.bf16.mxu0 %v601
    %1016 = vmatpush1.bf16.msra.mxu0 %v600
    %1017 = vmatprep.subr.bf16.mxu0 0
    %1018 = vmatpush1.bf16.msra.mxu0 0
    %1019 = vmatprep.subr.bf16.mxu0 0
    %1020 = vmatpush1.bf16.msra.mxu0 0
    %1021 = vmatprep.subr.bf16.mxu0 0
    %1022 = vmatpush1.bf16.msra.mxu0 0
    %1023 = vmatprep.subr.bf16.mxu0 0
    %1024 = vmatpush1.bf16.msra.mxu0 0
    %1025 = vmatprep.subr.bf16.mxu0 0
    %1026 = vmatpush1.bf16.msra.mxu0 0
    %1027 = vmatprep.subr.bf16.mxu0 0
    %1028 = vmatpush1.bf16.msra.mxu0 0
    %1029 = vmatprep.subr.bf16.mxu0 0
    %1030 = vmatpush1.bf16.msra.mxu0 0
    %1031 = vmatprep.subr.bf16.mxu0 0
    %1032 = vmatpush1.bf16.msra.mxu0 0
    %1033 = vmatprep.mubr.bf16.mxu0 0
    %1034 = vmatmul.mubr.bf16.gmra.mrb[0].mxu0 %v1000
    %v1035 = vpop.f32.mrb[0].mxu0
    %v1036 = vadd.f32 0.0, %v1035
    %v1037 = vpop.f32.mrb[0].mxu0
    %v1038 = vadd.f32 0.0, %v1037
    %v1039 = vpop.f32.mrb[0].mxu0
    %v1040 = vpop.f32.mrb[0].mxu0
    %1041 = vdwg.mxu0
    %1042 = vmatprep.subr.bf16.mxu0 %v575
    %1043 = vmatpush1.bf16.msra.mxu0 %v574
    %1044 = vmatprep.subr.bf16.mxu0 %v579
    %1045 = vmatpush1.bf16.msra.mxu0 %v578
    %1046 = vmatprep.subr.bf16.mxu0 %v583
    %1047 = vmatpush1.bf16.msra.mxu0 %v582
    %1048 = vmatprep.subr.bf16.mxu0 %v587
    %1049 = vmatpush1.bf16.msra.mxu0 %v586
    %1050 = vmatprep.subr.bf16.mxu0 %v591
    %1051 = vmatpush1.bf16.msra.mxu0 %v590
    %1052 = vmatprep.subr.bf16.mxu0 %v595
    %1053 = vmatpush1.bf16.msra.mxu0 %v594
    %1054 = vmatprep.subr.bf16.mxu0 %v599
    %1055 = vmatpush1.bf16.msra.mxu0 %v598
    %1056 = vmatprep.subr.bf16.mxu0 %v603
    %1057 = vmatpush1.bf16.msra.mxu0 %v602
    %1058 = vmatprep.subr.bf16.mxu0 0
    %1059 = vmatpush1.bf16.msra.mxu0 0
    %1060 = vmatprep.subr.bf16.mxu0 0
    %1061 = vmatpush1.bf16.msra.mxu0 0
    %1062 = vmatprep.subr.bf16.mxu0 0
    %1063 = vmatpush1.bf16.msra.mxu0 0
    %1064 = vmatprep.subr.bf16.mxu0 0
    %1065 = vmatpush1.bf16.msra.mxu0 0
    %1066 = vmatprep.subr.bf16.mxu0 0
    %1067 = vmatpush1.bf16.msra.mxu0 0
    %1068 = vmatprep.subr.bf16.mxu0 0
    %1069 = vmatpush1.bf16.msra.mxu0 0
    %1070 = vmatprep.subr.bf16.mxu0 0
    %1071 = vmatpush1.bf16.msra.mxu0 0
    %1072 = vmatprep.subr.bf16.mxu0 0
    %1073 = vmatpush1.bf16.msra.mxu0 0
    %1074 = vmatprep.mubr.bf16.mxu0 0
    %1075 = vmatmul.mubr.bf16.gmra.mrb[0].mxu0 %v1000
    %v1076 = vpop.f32.mrb[0].mxu0
    %v1077 = vadd.f32 0.0, %v1076
    %v1078 = vpop.f32.mrb[0].mxu0
    %v1079 = vadd.f32 0.0, %v1078
    %v1080 = vpop.f32.mrb[0].mxu0
    %v1081 = vpop.f32.mrb[0].mxu0
    %1082 = vdwg.mxu0
    %v1083 = vadd.f32 %v996, %v1036
    %v1084 = vadd.f32 %v997, %v1038
    %v1085 = vadd.f32 %v998, %v1077
    %v1086 = vadd.f32 %v999, %v1079
    %v1087 = vxor.u32 %v1083, 2147483648
    %v1088 = vmul.f32 %v1087, 1.442695
    %v1089 = vpow.pop %v1088
    %v1090 = vadd.f32 %v1089, 1.0
    %v1091 = vrcp.pop %v1090
    %v1092 = vmul.f32 1.0, %v1091
    %v1093 = vxor.u32 %v1084, 2147483648
    %v1094 = vmul.f32 %v1093, 1.442695
    %v1095 = vpow.pop %v1094
    %v1096 = vadd.f32 %v1095, 1.0
    %v1097 = vrcp.pop %v1096
    %v1098 = vmul.f32 1.0, %v1097
    %v1099 = vtanh.pop %v1085
    %v1100 = vxor.u32 %v1086, 2147483648
    %v1101 = vmul.f32 %v1100, 1.442695
    %v1102 = vpow.pop %v1101
    %v1103 = vadd.f32 %v1102, 1.0
    %v1104 = vrcp.pop %v1103
    %v1105 = vmul.f32 1.0, %v1104
    %v1106 = vmul.f32 %v1098, %v994
    %v1107 = vmul.f32 %v1092, %v1099
    %v1108 = vadd.f32 %v1106, %v1107
    %v1109 = vtanh.pop %v1108
    %v1110 = vmul.f32 %v1105, %v1109
    %1111 = vst [vmem:[#allocation3] sm:$0xff] %v1110
    %1112 = vst [vmem:[#allocation4] sm:$0xff] %v1108
    %s1113 = scalar_lea.vmem %s9, 24
    %1114 = vst [vmem:[%s1113] sm:$0xff] %v1110
    %v1115 = vld [vmem:[#allocation3] sm:$0xff]
    %v1116 = vld [vmem:[#allocation4] sm:$0xff]
    %s1117 = scalar_lea.vmem [#allocation2], 128
    %v1118 = vld [vmem:[%s1117] sm:$0xff]
    %v1119 = vld [vmem:[%s1117 + $0x8] sm:$0xff]
    %v1120 = vld [vmem:[%s1117 + $0x10] sm:$0xff]
    %v1121 = vld [vmem:[%s1117 + $0x18] sm:$0xff]
    %v1122 = vpack.c.bf16 %v1115, %v1115
    %1123 = vmatprep.subr.bf16.mxu0 %v573
    %1124 = vmatpush1.bf16.msra.mxu0 %v572
    %1125 = vmatprep.subr.bf16.mxu0 %v577
    %1126 = vmatpush1.bf16.msra.mxu0 %v576
    %1127 = vmatprep.subr.bf16.mxu0 %v581
    %1128 = vmatpush1.bf16.msra.mxu0 %v580
    %1129 = vmatprep.subr.bf16.mxu0 %v585
    %1130 = vmatpush1.bf16.msra.mxu0 %v584
    %1131 = vmatprep.subr.bf16.mxu0 %v589
    %1132 = vmatpush1.bf16.msra.mxu0 %v588
    %1133 = vmatprep.subr.bf16.mxu0 %v593
    %1134 = vmatpush1.bf16.msra.mxu0 %v592
    %1135 = vmatprep.subr.bf16.mxu0 %v597
    %1136 = vmatpush1.bf16.msra.mxu0 %v596
    %1137 = vmatprep.subr.bf16.mxu0 %v601
    %1138 = vmatpush1.bf16.msra.mxu0 %v600
    %1139 = vmatprep.subr.bf16.mxu0 0
    %1140 = vmatpush1.bf16.msra.mxu0 0
    %1141 = vmatprep.subr.bf16.mxu0 0
    %1142 = vmatpush1.bf16.msra.mxu0 0
    %1143 = vmatprep.subr.bf16.mxu0 0
    %1144 = vmatpush1.bf16.msra.mxu0 0
    %1145 = vmatprep.subr.bf16.mxu0 0
    %1146 = vmatpush1.bf16.msra.mxu0 0
    %1147 = vmatprep.subr.bf16.mxu0 0
    %1148 = vmatpush1.bf16.msra.mxu0 0
    %1149 = vmatprep.subr.bf16.mxu0 0
    %1150 = vmatpush1.bf16.msra.mxu0 0
    %1151 = vmatprep.subr.bf16.mxu0 0
    %1152 = vmatpush1.bf16.msra.mxu0 0
    %1153 = vmatprep.subr.bf16.mxu0 0
    %1154 = vmatpush1.bf16.msra.mxu0 0
    %1155 = vmatprep.mubr.bf16.mxu0 0
    %1156 = vmatmul.mubr.bf16.gmra.mrb[0].mxu0 %v1122
    %v1157 = vpop.f32.mrb[0].mxu0
    %v1158 = vadd.f32 0.0, %v1157
    %v1159 = vpop.f32.mrb[0].mxu0
    %v1160 = vadd.f32 0.0, %v1159
    %v1161 = vpop.f32.mrb[0].mxu0
    %v1162 = vpop.f32.mrb[0].mxu0
    %1163 = vdwg.mxu0
    %1164 = vmatprep.subr.bf16.mxu0 %v575
    %1165 = vmatpush1.bf16.msra.mxu0 %v574
    %1166 = vmatprep.subr.bf16.mxu0 %v579
    %1167 = vmatpush1.bf16.msra.mxu0 %v578
    %1168 = vmatprep.subr.bf16.mxu0 %v583
    %1169 = vmatpush1.bf16.msra.mxu0 %v582
    %1170 = vmatprep.subr.bf16.mxu0 %v587
    %1171 = vmatpush1.bf16.msra.mxu0 %v586
    %1172 = vmatprep.subr.bf16.mxu0 %v591
    %1173 = vmatpush1.bf16.msra.mxu0 %v590
    %1174 = vmatprep.subr.bf16.mxu0 %v595
    %1175 = vmatpush1.bf16.msra.mxu0 %v594
    %1176 = vmatprep.subr.bf16.mxu0 %v599
    %1177 = vmatpush1.bf16.msra.mxu0 %v598
    %1178 = vmatprep.subr.bf16.mxu0 %v603
    %1179 = vmatpush1.bf16.msra.mxu0 %v602
    %1180 = vmatprep.subr.bf16.mxu0 0
    %1181 = vmatpush1.bf16.msra.mxu0 0
    %1182 = vmatprep.subr.bf16.mxu0 0
    %1183 = vmatpush1.bf16.msra.mxu0 0
    %1184 = vmatprep.subr.bf16.mxu0 0
    %1185 = vmatpush1.bf16.msra.mxu0 0
    %1186 = vmatprep.subr.bf16.mxu0 0
    %1187 = vmatpush1.bf16.msra.mxu0 0
    %1188 = vmatprep.subr.bf16.mxu0 0
    %1189 = vmatpush1.bf16.msra.mxu0 0
    %1190 = vmatprep.subr.bf16.mxu0 0
    %1191 = vmatpush1.bf16.msra.mxu0 0
    %1192 = vmatprep.subr.bf16.mxu0 0
    %1193 = vmatpush1.bf16.msra.mxu0 0
    %1194 = vmatprep.subr.bf16.mxu0 0
    %1195 = vmatpush1.bf16.msra.mxu0 0
    %1196 = vmatprep.mubr.bf16.mxu0 0
    %1197 = vmatmul.mubr.bf16.gmra.mrb[0].mxu0 %v1122
    %v1198 = vpop.f32.mrb[0].mxu0
    %v1199 = vadd.f32 0.0, %v1198
    %v1200 = vpop.f32.mrb[0].mxu0
    %v1201 = vadd.f32 0.0, %v1200
    %v1202 = vpop.f32.mrb[0].mxu0
    %v1203 = vpop.f32.mrb[0].mxu0
    %1204 = vdwg.mxu0
    %v1205 = vadd.f32 %v1118, %v1158
    %v1206 = vadd.f32 %v1119, %v1160
    %v1207 = vadd.f32 %v1120, %v1199
    %v1208 = vadd.f32 %v1121, %v1201
    %v1209 = vxor.u32 %v1205, 2147483648
    %v1210 = vmul.f32 %v1209, 1.442695
    %v1211 = vpow.pop %v1210
    %v1212 = vadd.f32 %v1211, 1.0
    %v1213 = vrcp.pop %v1212
    %v1214 = vmul.f32 1.0, %v1213
    %v1215 = vxor.u32 %v1206, 2147483648
    %v1216 = vmul.f32 %v1215, 1.442695
    %v1217 = vpow.pop %v1216
    %v1218 = vadd.f32 %v1217, 1.0
    %v1219 = vrcp.pop %v1218
    %v1220 = vmul.f32 1.0, %v1219
    %v1221 = vtanh.pop %v1207
    %v1222 = vxor.u32 %v1208, 2147483648
    %v1223 = vmul.f32 %v1222, 1.442695
    %v1224 = vpow.pop %v1223
    %v1225 = vadd.f32 %v1224, 1.0
    %v1226 = vrcp.pop %v1225
    %v1227 = vmul.f32 1.0, %v1226
    %v1228 = vmul.f32 %v1220, %v1116
    %v1229 = vmul.f32 %v1214, %v1221
    %v1230 = vadd.f32 %v1228, %v1229
    %v1231 = vtanh.pop %v1230
    %v1232 = vmul.f32 %v1227, %v1231
    %1233 = vst [vmem:[#allocation3] sm:$0xff] %v1232
    %1234 = vst [vmem:[#allocation4] sm:$0xff] %v1230
    %s1235 = scalar_lea.vmem %s9, 32
    %1236 = vst [vmem:[%s1235] sm:$0xff] %v1232
    %v1237 = vld [vmem:[#allocation3] sm:$0xff]
    %v1238 = vld [vmem:[#allocation4] sm:$0xff]
    %s1239 = scalar_lea.vmem [#allocation2], 160
    %v1240 = vld [vmem:[%s1239] sm:$0xff]
    %v1241 = vld [vmem:[%s1239 + $0x8] sm:$0xff]
    %v1242 = vld [vmem:[%s1239 + $0x10] sm:$0xff]
    %v1243 = vld [vmem:[%s1239 + $0x18] sm:$0xff]
    %v1244 = vpack.c.bf16 %v1237, %v1237
    %1245 = vmatprep.subr.bf16.mxu0 %v573
    %1246 = vmatpush1.bf16.msra.mxu0 %v572
    %1247 = vmatprep.subr.bf16.mxu0 %v577
    %1248 = vmatpush1.bf16.msra.mxu0 %v576
    %1249 = vmatprep.subr.bf16.mxu0 %v581
    %1250 = vmatpush1.bf16.msra.mxu0 %v580
    %1251 = vmatprep.subr.bf16.mxu0 %v585
    %1252 = vmatpush1.bf16.msra.mxu0 %v584
    %1253 = vmatprep.subr.bf16.mxu0 %v589
    %1254 = vmatpush1.bf16.msra.mxu0 %v588
    %1255 = vmatprep.subr.bf16.mxu0 %v593
    %1256 = vmatpush1.bf16.msra.mxu0 %v592
    %1257 = vmatprep.subr.bf16.mxu0 %v597
    %1258 = vmatpush1.bf16.msra.mxu0 %v596
    %1259 = vmatprep.subr.bf16.mxu0 %v601
    %1260 = vmatpush1.bf16.msra.mxu0 %v600
    %1261 = vmatprep.subr.bf16.mxu0 0
    %1262 = vmatpush1.bf16.msra.mxu0 0
    %1263 = vmatprep.subr.bf16.mxu0 0
    %1264 = vmatpush1.bf16.msra.mxu0 0
    %1265 = vmatprep.subr.bf16.mxu0 0
    %1266 = vmatpush1.bf16.msra.mxu0 0
    %1267 = vmatprep.subr.bf16.mxu0 0
    %1268 = vmatpush1.bf16.msra.mxu0 0
    %1269 = vmatprep.subr.bf16.mxu0 0
    %1270 = vmatpush1.bf16.msra.mxu0 0
    %1271 = vmatprep.subr.bf16.mxu0 0
    %1272 = vmatpush1.bf16.msra.mxu0 0
    %1273 = vmatprep.subr.bf16.mxu0 0
    %1274 = vmatpush1.bf16.msra.mxu0 0
    %1275 = vmatprep.subr.bf16.mxu0 0
    %1276 = vmatpush1.bf16.msra.mxu0 0
    %1277 = vmatprep.mubr.bf16.mxu0 0
    %1278 = vmatmul.mubr.bf16.gmra.mrb[0].mxu0 %v1244
    %v1279 = vpop.f32.mrb[0].mxu0
    %v1280 = vadd.f32 0.0, %v1279
    %v1281 = vpop.f32.mrb[0].mxu0
    %v1282 = vadd.f32 0.0, %v1281
    %v1283 = vpop.f32.mrb[0].mxu0
    %v1284 = vpop.f32.mrb[0].mxu0
    %1285 = vdwg.mxu0
    %1286 = vmatprep.subr.bf16.mxu0 %v575
    %1287 = vmatpush1.bf16.msra.mxu0 %v574
    %1288 = vmatprep.subr.bf16.mxu0 %v579
    %1289 = vmatpush1.bf16.msra.mxu0 %v578
    %1290 = vmatprep.subr.bf16.mxu0 %v583
    %1291 = vmatpush1.bf16.msra.mxu0 %v582
    %1292 = vmatprep.subr.bf16.mxu0 %v587
    %1293 = vmatpush1.bf16.msra.mxu0 %v586
    %1294 = vmatprep.subr.bf16.mxu0 %v591
    %1295 = vmatpush1.bf16.msra.mxu0 %v590
    %1296 = vmatprep.subr.bf16.mxu0 %v595
    %1297 = vmatpush1.bf16.msra.mxu0 %v594
    %1298 = vmatprep.subr.bf16.mxu0 %v599
    %1299 = vmatpush1.bf16.msra.mxu0 %v598
    %1300 = vmatprep.subr.bf16.mxu0 %v603
    %1301 = vmatpush1.bf16.msra.mxu0 %v602
    %1302 = vmatprep.subr.bf16.mxu0 0
    %1303 = vmatpush1.bf16.msra.mxu0 0
    %1304 = vmatprep.subr.bf16.mxu0 0
    %1305 = vmatpush1.bf16.msra.mxu0 0
    %1306 = vmatprep.subr.bf16.mxu0 0
    %1307 = vmatpush1.bf16.msra.mxu0 0
    %1308 = vmatprep.subr.bf16.mxu0 0
    %1309 = vmatpush1.bf16.msra.mxu0 0
    %1310 = vmatprep.subr.bf16.mxu0 0
    %1311 = vmatpush1.bf16.msra.mxu0 0
    %1312 = vmatprep.subr.bf16.mxu0 0
    %1313 = vmatpush1.bf16.msra.mxu0 0
    %1314 = vmatprep.subr.bf16.mxu0 0
    %1315 = vmatpush1.bf16.msra.mxu0 0
    %1316 = vmatprep.subr.bf16.mxu0 0
    %1317 = vmatpush1.bf16.msra.mxu0 0
    %1318 = vmatprep.mubr.bf16.mxu0 0
    %1319 = vmatmul.mubr.bf16.gmra.mrb[0].mxu0 %v1244
    %v1320 = vpop.f32.mrb[0].mxu0
    %v1321 = vadd.f32 0.0, %v1320
    %v1322 = vpop.f32.mrb[0].mxu0
    %v1323 = vadd.f32 0.0, %v1322
    %v1324 = vpop.f32.mrb[0].mxu0
    %v1325 = vpop.f32.mrb[0].mxu0
    %1326 = vdwg.mxu0
    %v1327 = vadd.f32 %v1240, %v1280
    %v1328 = vadd.f32 %v1241, %v1282
    %v1329 = vadd.f32 %v1242, %v1321
    %v1330 = vadd.f32 %v1243, %v1323
    %v1331 = vxor.u32 %v1327, 2147483648
    %v1332 = vmul.f32 %v1331, 1.442695
    %v1333 = vpow.pop %v1332
    %v1334 = vadd.f32 %v1333, 1.0
    %v1335 = vrcp.pop %v1334
    %v1336 = vmul.f32 1.0, %v1335
    %v1337 = vxor.u32 %v1328, 2147483648
    %v1338 = vmul.f32 %v1337, 1.442695
    %v1339 = vpow.pop %v1338
    %v1340 = vadd.f32 %v1339, 1.0
    %v1341 = vrcp.pop %v1340
    %v1342 = vmul.f32 1.0, %v1341
    %v1343 = vtanh.pop %v1329
    %v1344 = vxor.u32 %v1330, 2147483648
    %v1345 = vmul.f32 %v1344, 1.442695
    %v1346 = vpow.pop %v1345
    %v1347 = vadd.f32 %v1346, 1.0
    %v1348 = vrcp.pop %v1347
    %v1349 = vmul.f32 1.0, %v1348
    %v1350 = vmul.f32 %v1342, %v1238
    %v1351 = vmul.f32 %v1336, %v1343
    %v1352 = vadd.f32 %v1350, %v1351
    %v1353 = vtanh.pop %v1352
    %v1354 = vmul.f32 %v1349, %v1353
    %1355 = vst [vmem:[#allocation3] sm:$0xff] %v1354
    %1356 = vst [vmem:[#allocation4] sm:$0xff] %v1352
    %s1357 = scalar_lea.vmem %s9, 40
    %1358 = vst [vmem:[%s1357] sm:$0xff] %v1354
    %v1359 = vld [vmem:[#allocation3] sm:$0xff]
    %v1360 = vld [vmem:[#allocation4] sm:$0xff]
    %s1361 = scalar_lea.vmem [#allocation2], 192
    %v1362 = vld [vmem:[%s1361] sm:$0xff]
    %v1363 = vld [vmem:[%s1361 + $0x8] sm:$0xff]
    %v1364 = vld [vmem:[%s1361 + $0x10] sm:$0xff]
    %v1365 = vld [vmem:[%s1361 + $0x18] sm:$0xff]
    %v1366 = vpack.c.bf16 %v1359, %v1359
    %1367 = vmatprep.subr.bf16.mxu0 %v573
    %1368 = vmatpush1.bf16.msra.mxu0 %v572
    %1369 = vmatprep.subr.bf16.mxu0 %v577
    %1370 = vmatpush1.bf16.msra.mxu0 %v576
    %1371 = vmatprep.subr.bf16.mxu0 %v581
    %1372 = vmatpush1.bf16.msra.mxu0 %v580
    %1373 = vmatprep.subr.bf16.mxu0 %v585
    %1374 = vmatpush1.bf16.msra.mxu0 %v584
    %1375 = vmatprep.subr.bf16.mxu0 %v589
    %1376 = vmatpush1.bf16.msra.mxu0 %v588
    %1377 = vmatprep.subr.bf16.mxu0 %v593
    %1378 = vmatpush1.bf16.msra.mxu0 %v592
    %1379 = vmatprep.subr.bf16.mxu0 %v597
    %1380 = vmatpush1.bf16.msra.mxu0 %v596
    %1381 = vmatprep.subr.bf16.mxu0 %v601
    %1382 = vmatpush1.bf16.msra.mxu0 %v600
    %1383 = vmatprep.subr.bf16.mxu0 0
    %1384 = vmatpush1.bf16.msra.mxu0 0
    %1385 = vmatprep.subr.bf16.mxu0 0
    %1386 = vmatpush1.bf16.msra.mxu0 0
    %1387 = vmatprep.subr.bf16.mxu0 0
    %1388 = vmatpush1.bf16.msra.mxu0 0
    %1389 = vmatprep.subr.bf16.mxu0 0
    %1390 = vmatpush1.bf16.msra.mxu0 0
    %1391 = vmatprep.subr.bf16.mxu0 0
    %1392 = vmatpush1.bf16.msra.mxu0 0
    %1393 = vmatprep.subr.bf16.mxu0 0
    %1394 = vmatpush1.bf16.msra.mxu0 0
    %1395 = vmatprep.subr.bf16.mxu0 0
    %1396 = vmatpush1.bf16.msra.mxu0 0
    %1397 = vmatprep.subr.bf16.mxu0 0
    %1398 = vmatpush1.bf16.msra.mxu0 0
    %1399 = vmatprep.mubr.bf16.mxu0 0
    %1400 = vmatmul.mubr.bf16.gmra.mrb[0].mxu0 %v1366
    %v1401 = vpop.f32.mrb[0].mxu0
    %v1402 = vadd.f32 0.0, %v1401
    %v1403 = vpop.f32.mrb[0].mxu0
    %v1404 = vadd.f32 0.0, %v1403
    %v1405 = vpop.f32.mrb[0].mxu0
    %v1406 = vpop.f32.mrb[0].mxu0
    %1407 = vdwg.mxu0
    %1408 = vmatprep.subr.bf16.mxu0 %v575
    %1409 = vmatpush1.bf16.msra.mxu0 %v574
    %1410 = vmatprep.subr.bf16.mxu0 %v579
    %1411 = vmatpush1.bf16.msra.mxu0 %v578
    %1412 = vmatprep.subr.bf16.mxu0 %v583
    %1413 = vmatpush1.bf16.msra.mxu0 %v582
    %1414 = vmatprep.subr.bf16.mxu0 %v587
    %1415 = vmatpush1.bf16.msra.mxu0 %v586
    %1416 = vmatprep.subr.bf16.mxu0 %v591
    %1417 = vmatpush1.bf16.msra.mxu0 %v590
    %1418 = vmatprep.subr.bf16.mxu0 %v595
    %1419 = vmatpush1.bf16.msra.mxu0 %v594
    %1420 = vmatprep.subr.bf16.mxu0 %v599
    %1421 = vmatpush1.bf16.msra.mxu0 %v598
    %1422 = vmatprep.subr.bf16.mxu0 %v603
    %1423 = vmatpush1.bf16.msra.mxu0 %v602
    %1424 = vmatprep.subr.bf16.mxu0 0
    %1425 = vmatpush1.bf16.msra.mxu0 0
    %1426 = vmatprep.subr.bf16.mxu0 0
    %1427 = vmatpush1.bf16.msra.mxu0 0
    %1428 = vmatprep.subr.bf16.mxu0 0
    %1429 = vmatpush1.bf16.msra.mxu0 0
    %1430 = vmatprep.subr.bf16.mxu0 0
    %1431 = vmatpush1.bf16.msra.mxu0 0
    %1432 = vmatprep.subr.bf16.mxu0 0
    %1433 = vmatpush1.bf16.msra.mxu0 0
    %1434 = vmatprep.subr.bf16.mxu0 0
    %1435 = vmatpush1.bf16.msra.mxu0 0
    %1436 = vmatprep.subr.bf16.mxu0 0
    %1437 = vmatpush1.bf16.msra.mxu0 0
    %1438 = vmatprep.subr.bf16.mxu0 0
    %1439 = vmatpush1.bf16.msra.mxu0 0
    %1440 = vmatprep.mubr.bf16.mxu0 0
    %1441 = vmatmul.mubr.bf16.gmra.mrb[0].mxu0 %v1366
    %v1442 = vpop.f32.mrb[0].mxu0
    %v1443 = vadd.f32 0.0, %v1442
    %v1444 = vpop.f32.mrb[0].mxu0
    %v1445 = vadd.f32 0.0, %v1444
    %v1446 = vpop.f32.mrb[0].mxu0
    %v1447 = vpop.f32.mrb[0].mxu0
    %1448 = vdwg.mxu0
    %v1449 = vadd.f32 %v1362, %v1402
    %v1450 = vadd.f32 %v1363, %v1404
    %v1451 = vadd.f32 %v1364, %v1443
    %v1452 = vadd.f32 %v1365, %v1445
    %v1453 = vxor.u32 %v1449, 2147483648
    %v1454 = vmul.f32 %v1453, 1.442695
    %v1455 = vpow.pop %v1454
    %v1456 = vadd.f32 %v1455, 1.0
    %v1457 = vrcp.pop %v1456
    %v1458 = vmul.f32 1.0, %v1457
    %v1459 = vxor.u32 %v1450, 2147483648
    %v1460 = vmul.f32 %v1459, 1.442695
    %v1461 = vpow.pop %v1460
    %v1462 = vadd.f32 %v1461, 1.0
    %v1463 = vrcp.pop %v1462
    %v1464 = vmul.f32 1.0, %v1463
    %v1465 = vtanh.pop %v1451
    %v1466 = vxor.u32 %v1452, 2147483648
    %v1467 = vmul.f32 %v1466, 1.442695
    %v1468 = vpow.pop %v1467
    %v1469 = vadd.f32 %v1468, 1.0
    %v1470 = vrcp.pop %v1469
    %v1471 = vmul.f32 1.0, %v1470
    %v1472 = vmul.f32 %v1464, %v1360
    %v1473 = vmul.f32 %v1458, %v1465
    %v1474 = vadd.f32 %v1472, %v1473
    %v1475 = vtanh.pop %v1474
    %v1476 = vmul.f32 %v1471, %v1475
    %1477 = vst [vmem:[#allocation3] sm:$0xff] %v1476
    %1478 = vst [vmem:[#allocation4] sm:$0xff] %v1474
    %s1479 = scalar_lea.vmem %s9, 48
    %1480 = vst [vmem:[%s1479] sm:$0xff] %v1476
    %v1481 = vld [vmem:[#allocation3] sm:$0xff]
    %1482 = vst [vmem:[#allocation5] sm:$0xff] %v1481
    %v1483 = vld [vmem:[#allocation4] sm:$0xff]
    %1484 = vst [vmem:[#allocation7] sm:$0xff] %v1483
    %v1485 = vld [vmem:[%s9] sm:$0xff]
    %v1486 = vld [vmem:[%s9 + $0x8] sm:$0xff]
    %v1487 = vld [vmem:[%s9 + $0x10] sm:$0xff]
    %v1488 = vld [vmem:[%s9 + $0x18] sm:$0xff]
    %v1489 = vld [vmem:[%s9 + $0x20] sm:$0xff]
    %v1490 = vld [vmem:[%s9 + $0x28] sm:$0xff]
    %v1491 = vld [vmem:[%s9 + $0x30] sm:$0xff]
    %v1492 = vpack.c.bf16 %v1486, %v1485
    %v1493 = vpack.c.bf16 %v1488, %v1487
    %v1494 = vpack.c.bf16 %v1490, %v1489
    %v1495 = vpack.c.bf16 %v1491, %v1491
    %v1496 = vld [vmem:[%s6] sm:$0xff]
    %v1497 = vld [vmem:[%s6 + $0x8] sm:$0xff]
    %v1498 = vld [vmem:[%s6 + $0x10] sm:$0xff]
    %v1499 = vld [vmem:[%s6 + $0x18] sm:$0xff]
    %v1500 = vld [vmem:[%s6 + $0x20] sm:$0xff]
    %v1501 = vld [vmem:[%s6 + $0x28] sm:$0xff]
    %v1502 = vld [vmem:[%s6 + $0x30] sm:$0xff]
    %v1503 = vld [vmem:[%s6 + $0x38] sm:$0xff]
    %v1504 = vld [vmem:[%s6 + $0x40] sm:$0xff]
    %v1505 = vld [vmem:[%s6 + $0x48] sm:$0xff]
    %v1506 = vld [vmem:[%s6 + $0x50] sm:$0xff]
    %v1507 = vld [vmem:[%s6 + $0x58] sm:$0xff]
    %v1508 = vld [vmem:[%s6 + $0x60] sm:$0xff]
    %v1509 = vld [vmem:[%s6 + $0x68] sm:$0xff]
    %v1510 = vld [vmem:[%s6 + $0x70] sm:$0xff]
    %v1511 = vld [vmem:[%s6 + $0x78] sm:$0xff]
    %v1512 = vld [vmem:[%s6 + $0x80] sm:$0xff]
    %v1513 = vld [vmem:[%s6 + $0x88] sm:$0xff]
    %v1514 = vld [vmem:[%s6 + $0x90] sm:$0xff]
    %v1515 = vld [vmem:[%s6 + $0x98] sm:$0xff]
    %v1516 = vld [vmem:[%s6 + $0xa0] sm:$0xff]
    %v1517 = vld [vmem:[%s6 + $0xa8] sm:$0xff]
    %v1518 = vld [vmem:[%s6 + $0xb0] sm:$0xff]
    %v1519 = vld [vmem:[%s6 + $0xb8] sm:$0xff]
    %v1520 = vld [vmem:[%s6 + $0xc0] sm:$0xff]
    %v1521 = vld [vmem:[%s6 + $0xc8] sm:$0xff]
    %v1522 = vld [vmem:[%s6 + $0xd0] sm:$0xff]
    %v1523 = vld [vmem:[%s6 + $0xd8] sm:$0xff]
    %v1524 = vld [vmem:[%s6 + $0xe0] sm:$0xff]
    %v1525 = vld [vmem:[%s6 + $0xe8] sm:$0xff]
    %v1526 = vld [vmem:[%s6 + $0xf0] sm:$0xff]
    %v1527 = vld [vmem:[%s6 + $0xf8] sm:$0xff]
    %v1528 = vld [vmem:[%s8] sm:$0xf]
    %v1530 = vlaneseq
    %v1531 = vshrl.u32 %v1530, 7
    %v1532 = vsub.s32 0, %v1531
    %v1533 = vrot.slane %v1528, %v1532
    %v1534 = vlaneseq
    %v1535 = vshrl.u32 %v1534, 7
    %v1536 = vsub.s32 1, %v1535
    %v1537 = vrot.slane %v1528, %v1536
    %v1538 = vlaneseq
    %v1539 = vshrl.u32 %v1538, 7
    %v1540 = vsub.s32 2, %v1539
    %v1541 = vrot.slane %v1528, %v1540
    %v1542 = vlaneseq
    %v1543 = vshrl.u32 %v1542, 7
    %v1544 = vsub.s32 3, %v1543
    %v1545 = vrot.slane %v1528, %v1544
    %v1582 = vunpack.c.l.b16 %v1496
    %v1583 = vunpack.c.h.b16 %v1496
    %v1584 = vunpack.c.l.b16 %v1497
    %v1585 = vunpack.c.h.b16 %v1497
    %v1586 = vunpack.c.l.b16 %v1498
    %v1587 = vunpack.c.h.b16 %v1498
    %v1588 = vunpack.c.l.b16 %v1499
    %v1589 = vunpack.c.h.b16 %v1499
    %v1590 = vunpack.c.l.b16 %v1500
    %v1591 = vunpack.c.h.b16 %v1500
    %v1592 = vunpack.c.l.b16 %v1501
    %v1593 = vunpack.c.h.b16 %v1501
    %v1594 = vunpack.c.l.b16 %v1502
    %v1595 = vunpack.c.h.b16 %v1502
    %v1596 = vunpack.c.l.b16 %v1503
    %v1597 = vunpack.c.h.b16 %v1503
    %v1598 = vunpack.c.l.b16 %v1504
    %v1599 = vunpack.c.h.b16 %v1504
    %v1600 = vunpack.c.l.b16 %v1505
    %v1601 = vunpack.c.h.b16 %v1505
    %v1602 = vunpack.c.l.b16 %v1506
    %v1603 = vunpack.c.h.b16 %v1506
    %v1604 = vunpack.c.l.b16 %v1507
    %v1605 = vunpack.c.h.b16 %v1507
    %v1606 = vunpack.c.l.b16 %v1508
    %v1607 = vunpack.c.h.b16 %v1508
    %v1608 = vunpack.c.l.b16 %v1509
    %v1609 = vunpack.c.h.b16 %v1509
    %v1610 = vunpack.c.l.b16 %v1510
    %v1611 = vunpack.c.h.b16 %v1510
    %v1612 = vunpack.c.l.b16 %v1511
    %v1613 = vunpack.c.h.b16 %v1511
    %v1614 = vunpack.c.l.b16 %v1512
    %v1615 = vunpack.c.h.b16 %v1512
    %v1616 = vunpack.c.l.b16 %v1513
    %v1617 = vunpack.c.h.b16 %v1513
    %v1618 = vunpack.c.l.b16 %v1514
    %v1619 = vunpack.c.h.b16 %v1514
    %v1620 = vunpack.c.l.b16 %v1515
    %v1621 = vunpack.c.h.b16 %v1515
    %v1622 = vunpack.c.l.b16 %v1516
    %v1623 = vunpack.c.h.b16 %v1516
    %v1624 = vunpack.c.l.b16 %v1517
    %v1625 = vunpack.c.h.b16 %v1517
    %v1626 = vunpack.c.l.b16 %v1518
    %v1627 = vunpack.c.h.b16 %v1518
    %v1628 = vunpack.c.l.b16 %v1519
    %v1629 = vunpack.c.h.b16 %v1519
    %v1630 = vunpack.c.l.b16 %v1520
    %v1631 = vunpack.c.h.b16 %v1520
    %v1632 = vunpack.c.l.b16 %v1521
    %v1633 = vunpack.c.h.b16 %v1521
    %v1634 = vunpack.c.l.b16 %v1522
    %v1635 = vunpack.c.h.b16 %v1522
    %v1636 = vunpack.c.l.b16 %v1523
    %v1637 = vunpack.c.h.b16 %v1523
    %v1638 = vunpack.c.l.b16 %v1524
    %v1639 = vunpack.c.h.b16 %v1524
    %v1640 = vunpack.c.l.b16 %v1525
    %v1641 = vunpack.c.h.b16 %v1525
    %v1642 = vunpack.c.l.b16 %v1526
    %v1643 = vunpack.c.h.b16 %v1526
    %v1644 = vunpack.c.l.b16 %v1527
    %v1645 = vunpack.c.h.b16 %v1527
    %v1646 = vpack.c.b16 %v1586, %v1582
    %v1647 = vpack.c.b16 %v1587, %v1583
    %v1648 = vpack.c.b16 %v1588, %v1584
    %v1649 = vpack.c.b16 %v1589, %v1585
    %v1650 = vpack.c.b16 %v1594, %v1590
    %v1651 = vpack.c.b16 %v1595, %v1591
    %v1652 = vpack.c.b16 %v1596, %v1592
    %v1653 = vpack.c.b16 %v1597, %v1593
    %v1654 = vpack.c.b16 %v1602, %v1598
    %v1655 = vpack.c.b16 %v1603, %v1599
    %v1656 = vpack.c.b16 %v1604, %v1600
    %v1657 = vpack.c.b16 %v1605, %v1601
    %v1658 = vpack.c.b16 %v1610, %v1606
    %v1659 = vpack.c.b16 %v1611, %v1607
    %v1660 = vpack.c.b16 %v1612, %v1608
    %v1661 = vpack.c.b16 %v1613, %v1609
    %v1662 = vpack.c.b16 %v1618, %v1614
    %v1663 = vpack.c.b16 %v1619, %v1615
    %v1664 = vpack.c.b16 %v1620, %v1616
    %v1665 = vpack.c.b16 %v1621, %v1617
    %v1666 = vpack.c.b16 %v1626, %v1622
    %v1667 = vpack.c.b16 %v1627, %v1623
    %v1668 = vpack.c.b16 %v1628, %v1624
    %v1669 = vpack.c.b16 %v1629, %v1625
    %v1670 = vpack.c.b16 %v1634, %v1630
    %v1671 = vpack.c.b16 %v1635, %v1631
    %v1672 = vpack.c.b16 %v1636, %v1632
    %v1673 = vpack.c.b16 %v1637, %v1633
    %v1674 = vpack.c.b16 %v1642, %v1638
    %v1675 = vpack.c.b16 %v1643, %v1639
    %v1676 = vpack.c.b16 %v1644, %v1640
    %v1677 = vpack.c.b16 %v1645, %v1641
    %1710 = vmatprep.subr.bf16.mxu0 %v1647
    %1711 = vmatpush1.bf16.msra.mxu0 %v1646
    %1712 = vmatprep.subr.bf16.mxu0 %v1651
    %1713 = vmatpush1.bf16.msra.mxu0 %v1650
    %1714 = vmatprep.subr.bf16.mxu0 %v1655
    %1715 = vmatpush1.bf16.msra.mxu0 %v1654
    %1716 = vmatprep.subr.bf16.mxu0 %v1659
    %1717 = vmatpush1.bf16.msra.mxu0 %v1658
    %1718 = vmatprep.subr.bf16.mxu0 %v1663
    %1719 = vmatpush1.bf16.msra.mxu0 %v1662
    %1720 = vmatprep.subr.bf16.mxu0 %v1667
    %1721 = vmatpush1.bf16.msra.mxu0 %v1666
    %1722 = vmatprep.subr.bf16.mxu0 %v1671
    %1723 = vmatpush1.bf16.msra.mxu0 %v1670
    %1724 = vmatprep.subr.bf16.mxu0 %v1675
    %1725 = vmatpush1.bf16.msra.mxu0 %v1674
    %1726 = vmatprep.subr.bf16.mxu0 0
    %1727 = vmatpush1.bf16.msra.mxu0 0
    %1728 = vmatprep.subr.bf16.mxu0 0
    %1729 = vmatpush1.bf16.msra.mxu0 0
    %1730 = vmatprep.subr.bf16.mxu0 0
    %1731 = vmatpush1.bf16.msra.mxu0 0
    %1732 = vmatprep.subr.bf16.mxu0 0
    %1733 = vmatpush1.bf16.msra.mxu0 0
    %1734 = vmatprep.subr.bf16.mxu0 0
    %1735 = vmatpush1.bf16.msra.mxu0 0
    %1736 = vmatprep.subr.bf16.mxu0 0
    %1737 = vmatpush1.bf16.msra.mxu0 0
    %1738 = vmatprep.subr.bf16.mxu0 0
    %1739 = vmatpush1.bf16.msra.mxu0 0
    %1740 = vmatprep.subr.bf16.mxu0 0
    %1741 = vmatpush1.bf16.msra.mxu0 0
    %1742 = vmatprep.mubr.bf16.mxu0 0
    %1743 = vmatmul.mubr.bf16.gmra.mrb[0].mxu0 %v1492
    %v1744 = vpop.f32.mrb[0].mxu0
    %v1745 = vadd.f32 %v1533, %v1744
    %v1746 = vpop.f32.mrb[0].mxu0
    %v1747 = vadd.f32 %v1537, %v1746
    %v1748 = vpop.f32.mrb[0].mxu0
    %v1749 = vadd.f32 %v1533, %v1748
    %v1750 = vpop.f32.mrb[0].mxu0
    %v1751 = vadd.f32 %v1537, %v1750
    %1752 = vmatprep.mubr.bf16.mxu0 0
    %1753 = vmatmul.mubr.bf16.gmra.mrb[0].mxu0 %v1493
    %v1754 = vpop.f32.mrb[0].mxu0
    %v1755 = vadd.f32 %v1533, %v1754
    %v1756 = vpop.f32.mrb[0].mxu0
    %v1757 = vadd.f32 %v1537, %v1756
    %v1758 = vpop.f32.mrb[0].mxu0
    %v1759 = vadd.f32 %v1533, %v1758
    %v1760 = vpop.f32.mrb[0].mxu0
    %v1761 = vadd.f32 %v1537, %v1760
    %1762 = vmatprep.mubr.bf16.mxu0 0
    %1763 = vmatmul.mubr.bf16.gmra.mrb[0].mxu0 %v1494
    %v1764 = vpop.f32.mrb[0].mxu0
    %v1765 = vadd.f32 %v1533, %v1764
    %v1766 = vpop.f32.mrb[0].mxu0
    %v1767 = vadd.f32 %v1537, %v1766
    %v1768 = vpop.f32.mrb[0].mxu0
    %v1769 = vadd.f32 %v1533, %v1768
    %v1770 = vpop.f32.mrb[0].mxu0
    %v1771 = vadd.f32 %v1537, %v1770
    %1772 = vmatprep.mubr.bf16.mxu0 0
    %1773 = vmatmul.mubr.bf16.gmra.mrb[0].mxu0 %v1495
    %v1774 = vpop.f32.mrb[0].mxu0
    %v1775 = vadd.f32 %v1533, %v1774
    %v1776 = vpop.f32.mrb[0].mxu0
    %v1777 = vadd.f32 %v1537, %v1776
    %v1778 = vpop.f32.mrb[0].mxu0
    %v1779 = vpop.f32.mrb[0].mxu0
    %1780 = vdwg.mxu0
    %1781 = vmatprep.subr.bf16.mxu0 %v1649
    %1782 = vmatpush1.bf16.msra.mxu0 %v1648
    %1783 = vmatprep.subr.bf16.mxu0 %v1653
    %1784 = vmatpush1.bf16.msra.mxu0 %v1652
    %1785 = vmatprep.subr.bf16.mxu0 %v1657
    %1786 = vmatpush1.bf16.msra.mxu0 %v1656
    %1787 = vmatprep.subr.bf16.mxu0 %v1661
    %1788 = vmatpush1.bf16.msra.mxu0 %v1660
    %1789 = vmatprep.subr.bf16.mxu0 %v1665
    %1790 = vmatpush1.bf16.msra.mxu0 %v1664
    %1791 = vmatprep.subr.bf16.mxu0 %v1669
    %1792 = vmatpush1.bf16.msra.mxu0 %v1668
    %1793 = vmatprep.subr.bf16.mxu0 %v1673
    %1794 = vmatpush1.bf16.msra.mxu0 %v1672
    %1795 = vmatprep.subr.bf16.mxu0 %v1677
    %1796 = vmatpush1.bf16.msra.mxu0 %v1676
    %1797 = vmatprep.subr.bf16.mxu0 0
    %1798 = vmatpush1.bf16.msra.mxu0 0
    %1799 = vmatprep.subr.bf16.mxu0 0
    %1800 = vmatpush1.bf16.msra.mxu0 0
    %1801 = vmatprep.subr.bf16.mxu0 0
    %1802 = vmatpush1.bf16.msra.mxu0 0
    %1803 = vmatprep.subr.bf16.mxu0 0
    %1804 = vmatpush1.bf16.msra.mxu0 0
    %1805 = vmatprep.subr.bf16.mxu0 0
    %1806 = vmatpush1.bf16.msra.mxu0 0
    %1807 = vmatprep.subr.bf16.mxu0 0
    %1808 = vmatpush1.bf16.msra.mxu0 0
    %1809 = vmatprep.subr.bf16.mxu0 0
    %1810 = vmatpush1.bf16.msra.mxu0 0
    %1811 = vmatprep.subr.bf16.mxu0 0
    %1812 = vmatpush1.bf16.msra.mxu0 0
    %1813 = vmatprep.mubr.bf16.mxu0 0
    %1814 = vmatmul.mubr.bf16.gmra.mrb[0].mxu0 %v1492
    %v1815 = vpop.f32.mrb[0].mxu0
    %v1816 = vadd.f32 %v1541, %v1815
    %v1817 = vpop.f32.mrb[0].mxu0
    %v1818 = vadd.f32 %v1545, %v1817
    %v1819 = vpop.f32.mrb[0].mxu0
    %v1820 = vadd.f32 %v1541, %v1819
    %v1821 = vpop.f32.mrb[0].mxu0
    %v1822 = vadd.f32 %v1545, %v1821
    %1823 = vmatprep.mubr.bf16.mxu0 0
    %1824 = vmatmul.mubr.bf16.gmra.mrb[0].mxu0 %v1493
    %v1825 = vpop.f32.mrb[0].mxu0
    %v1826 = vadd.f32 %v1541, %v1825
    %v1827 = vpop.f32.mrb[0].mxu0
    %v1828 = vadd.f32 %v1545, %v1827
    %v1829 = vpop.f32.mrb[0].mxu0
    %v1830 = vadd.f32 %v1541, %v1829
    %v1831 = vpop.f32.mrb[0].mxu0
    %v1832 = vadd.f32 %v1545, %v1831
    %1833 = vmatprep.mubr.bf16.mxu0 0
    %1834 = vmatmul.mubr.bf16.gmra.mrb[0].mxu0 %v1494
    %v1835 = vpop.f32.mrb[0].mxu0
    %v1836 = vadd.f32 %v1541, %v1835
    %v1837 = vpop.f32.mrb[0].mxu0
    %v1838 = vadd.f32 %v1545, %v1837
    %v1839 = vpop.f32.mrb[0].mxu0
    %v1840 = vadd.f32 %v1541, %v1839
    %v1841 = vpop.f32.mrb[0].mxu0
    %v1842 = vadd.f32 %v1545, %v1841
    %1843 = vmatprep.mubr.bf16.mxu0 0
    %1844 = vmatmul.mubr.bf16.gmra.mrb[0].mxu0 %v1495
    %v1845 = vpop.f32.mrb[0].mxu0
    %v1846 = vadd.f32 %v1541, %v1845
    %v1847 = vpop.f32.mrb[0].mxu0
    %v1848 = vadd.f32 %v1545, %v1847
    %v1849 = vpop.f32.mrb[0].mxu0
    %v1850 = vpop.f32.mrb[0].mxu0
    %1851 = vdwg.mxu0
    %1852 = vst [vmem:[#allocation2] sm:$0xff] %v1745
    %1853 = vst [vmem:[#allocation2 + $0x8] sm:$0xff] %v1747
    %1854 = vst [vmem:[#allocation2 + $0x10] sm:$0xff] %v1816
    %1855 = vst [vmem:[#allocation2 + $0x18] sm:$0xff] %v1818
    %1856 = vst [vmem:[#allocation2 + $0x20] sm:$0xff] %v1749
    %1857 = vst [vmem:[#allocation2 + $0x28] sm:$0xff] %v1751
    %1858 = vst [vmem:[#allocation2 + $0x30] sm:$0xff] %v1820
    %1859 = vst [vmem:[#allocation2 + $0x38] sm:$0xff] %v1822
    %1860 = vst [vmem:[#allocation2 + $0x40] sm:$0xff] %v1755
    %1861 = vst [vmem:[#allocation2 + $0x48] sm:$0xff] %v1757
    %1862 = vst [vmem:[#allocation2 + $0x50] sm:$0xff] %v1826
    %1863 = vst [vmem:[#allocation2 + $0x58] sm:$0xff] %v1828
    %1864 = vst [vmem:[#allocation2 + $0x60] sm:$0xff] %v1759
    %1865 = vst [vmem:[#allocation2 + $0x68] sm:$0xff] %v1761
    %1866 = vst [vmem:[#allocation2 + $0x70] sm:$0xff] %v1830
    %1867 = vst [vmem:[#allocation2 + $0x78] sm:$0xff] %v1832
    %1868 = vst [vmem:[#allocation2 + $0x80] sm:$0xff] %v1765
    %1869 = vst [vmem:[#allocation2 + $0x88] sm:$0xff] %v1767
    %1870 = vst [vmem:[#allocation2 + $0x90] sm:$0xff] %v1836
    %1871 = vst [vmem:[#allocation2 + $0x98] sm:$0xff] %v1838
    %1872 = vst [vmem:[#allocation2 + $0xa0] sm:$0xff] %v1769
    %1873 = vst [vmem:[#allocation2 + $0xa8] sm:$0xff] %v1771
    %1874 = vst [vmem:[#allocation2 + $0xb0] sm:$0xff] %v1840
    %1875 = vst [vmem:[#allocation2 + $0xb8] sm:$0xff] %v1842
    %1876 = vst [vmem:[#allocation2 + $0xc0] sm:$0xff] %v1775
    %1877 = vst [vmem:[#allocation2 + $0xc8] sm:$0xff] %v1777
    %1878 = vst [vmem:[#allocation2 + $0xd0] sm:$0xff] %v1846
    %1879 = vst [vmem:[#allocation2 + $0xd8] sm:$0xff] %v1848
    %s1880 = scalar_lea.vmem %s1, 8
    %v1881 = vld [vmem:[%s1880] sm:$0xff]
    %1882 = vst [vmem:[#allocation3] sm:$0xff] %v1881
    %s1883 = scalar_lea.vmem %s2, 8
    %v1884 = vld [vmem:[%s1883] sm:$0xff]
    %1885 = vst [vmem:[#allocation4] sm:$0xff] %v1884
    %v1886 = vld [vmem:[%s7] sm:$0xff]
    %v1887 = vld [vmem:[%s7 + $0x8] sm:$0xff]
    %v1888 = vld [vmem:[%s7 + $0x10] sm:$0xff]
    %v1889 = vld [vmem:[%s7 + $0x18] sm:$0xff]
    %v1890 = vld [vmem:[%s7 + $0x20] sm:$0xff]
    %v1891 = vld [vmem:[%s7 + $0x28] sm:$0xff]
    %v1892 = vld [vmem:[%s7 + $0x30] sm:$0xff]
    %v1893 = vld [vmem:[%s7 + $0x38] sm:$0xff]
    %v1894 = vld [vmem:[%s7 + $0x40] sm:$0xff]
    %v1895 = vld [vmem:[%s7 + $0x48] sm:$0xff]
    %v1896 = vld [vmem:[%s7 + $0x50] sm:$0xff]
    %v1897 = vld [vmem:[%s7 + $0x58] sm:$0xff]
    %v1898 = vld [vmem:[%s7 + $0x60] sm:$0xff]
    %v1899 = vld [vmem:[%s7 + $0x68] sm:$0xff]
    %v1900 = vld [vmem:[%s7 + $0x70] sm:$0xff]
    %v1901 = vld [vmem:[%s7 + $0x78] sm:$0xff]
    %v1902 = vld [vmem:[%s7 + $0x80] sm:$0xff]
    %v1903 = vld [vmem:[%s7 + $0x88] sm:$0xff]
    %v1904 = vld [vmem:[%s7 + $0x90] sm:$0xff]
    %v1905 = vld [vmem:[%s7 + $0x98] sm:$0xff]
    %v1906 = vld [vmem:[%s7 + $0xa0] sm:$0xff]
    %v1907 = vld [vmem:[%s7 + $0xa8] sm:$0xff]
    %v1908 = vld [vmem:[%s7 + $0xb0] sm:$0xff]
    %v1909 = vld [vmem:[%s7 + $0xb8] sm:$0xff]
    %v1910 = vld [vmem:[%s7 + $0xc0] sm:$0xff]
    %v1911 = vld [vmem:[%s7 + $0xc8] sm:$0xff]
    %v1912 = vld [vmem:[%s7 + $0xd0] sm:$0xff]
    %v1913 = vld [vmem:[%s7 + $0xd8] sm:$0xff]
    %v1914 = vld [vmem:[%s7 + $0xe0] sm:$0xff]
    %v1915 = vld [vmem:[%s7 + $0xe8] sm:$0xff]
    %v1916 = vld [vmem:[%s7 + $0xf0] sm:$0xff]
    %v1917 = vld [vmem:[%s7 + $0xf8] sm:$0xff]
    %v1918 = vld [vmem:[#allocation3] sm:$0xff]
    %v1919 = vld [vmem:[#allocation4] sm:$0xff]
    %v1920 = vld [vmem:[#allocation2] sm:$0xff]
    %v1921 = vld [vmem:[#allocation2 + $0x8] sm:$0xff]
    %v1922 = vld [vmem:[#allocation2 + $0x10] sm:$0xff]
    %v1923 = vld [vmem:[#allocation2 + $0x18] sm:$0xff]
    %v1924 = vpack.c.bf16 %v1918, %v1918
    %v1957 = vunpack.c.l.b16 %v1886
    %v1958 = vunpack.c.h.b16 %v1886
    %v1959 = vunpack.c.l.b16 %v1887
    %v1960 = vunpack.c.h.b16 %v1887
    %v1961 = vunpack.c.l.b16 %v1888
    %v1962 = vunpack.c.h.b16 %v1888
    %v1963 = vunpack.c.l.b16 %v1889
    %v1964 = vunpack.c.h.b16 %v1889
    %v1965 = vunpack.c.l.b16 %v1890
    %v1966 = vunpack.c.h.b16 %v1890
    %v1967 = vunpack.c.l.b16 %v1891
    %v1968 = vunpack.c.h.b16 %v1891
    %v1969 = vunpack.c.l.b16 %v1892
    %v1970 = vunpack.c.h.b16 %v1892
    %v1971 = vunpack.c.l.b16 %v1893
    %v1972 = vunpack.c.h.b16 %v1893
    %v1973 = vunpack.c.l.b16 %v1894
    %v1974 = vunpack.c.h.b16 %v1894
    %v1975 = vunpack.c.l.b16 %v1895
    %v1976 = vunpack.c.h.b16 %v1895
    %v1977 = vunpack.c.l.b16 %v1896
    %v1978 = vunpack.c.h.b16 %v1896
    %v1979 = vunpack.c.l.b16 %v1897
    %v1980 = vunpack.c.h.b16 %v1897
    %v1981 = vunpack.c.l.b16 %v1898
    %v1982 = vunpack.c.h.b16 %v1898
    %v1983 = vunpack.c.l.b16 %v1899
    %v1984 = vunpack.c.h.b16 %v1899
    %v1985 = vunpack.c.l.b16 %v1900
    %v1986 = vunpack.c.h.b16 %v1900
    %v1987 = vunpack.c.l.b16 %v1901
    %v1988 = vunpack.c.h.b16 %v1901
    %v1989 = vunpack.c.l.b16 %v1902
    %v1990 = vunpack.c.h.b16 %v1902
    %v1991 = vunpack.c.l.b16 %v1903
    %v1992 = vunpack.c.h.b16 %v1903
    %v1993 = vunpack.c.l.b16 %v1904
    %v1994 = vunpack.c.h.b16 %v1904
    %v1995 = vunpack.c.l.b16 %v1905
    %v1996 = vunpack.c.h.b16 %v1905
    %v1997 = vunpack.c.l.b16 %v1906
    %v1998 = vunpack.c.h.b16 %v1906
    %v1999 = vunpack.c.l.b16 %v1907
    %v2000 = vunpack.c.h.b16 %v1907
    %v2001 = vunpack.c.l.b16 %v1908
    %v2002 = vunpack.c.h.b16 %v1908
    %v2003 = vunpack.c.l.b16 %v1909
    %v2004 = vunpack.c.h.b16 %v1909
    %v2005 = vunpack.c.l.b16 %v1910
    %v2006 = vunpack.c.h.b16 %v1910
    %v2007 = vunpack.c.l.b16 %v1911
    %v2008 = vunpack.c.h.b16 %v1911
    %v2009 = vunpack.c.l.b16 %v1912
    %v2010 = vunpack.c.h.b16 %v1912
    %v2011 = vunpack.c.l.b16 %v1913
    %v2012 = vunpack.c.h.b16 %v1913
    %v2013 = vunpack.c.l.b16 %v1914
    %v2014 = vunpack.c.h.b16 %v1914
    %v2015 = vunpack.c.l.b16 %v1915
    %v2016 = vunpack.c.h.b16 %v1915
    %v2017 = vunpack.c.l.b16 %v1916
    %v2018 = vunpack.c.h.b16 %v1916
    %v2019 = vunpack.c.l.b16 %v1917
    %v2020 = vunpack.c.h.b16 %v1917
    %v2021 = vpack.c.b16 %v1961, %v1957
    %v2022 = vpack.c.b16 %v1962, %v1958
    %v2023 = vpack.c.b16 %v1963, %v1959
    %v2024 = vpack.c.b16 %v1964, %v1960
    %v2025 = vpack.c.b16 %v1969, %v1965
    %v2026 = vpack.c.b16 %v1970, %v1966
    %v2027 = vpack.c.b16 %v1971, %v1967
    %v2028 = vpack.c.b16 %v1972, %v1968
    %v2029 = vpack.c.b16 %v1977, %v1973
    %v2030 = vpack.c.b16 %v1978, %v1974
    %v2031 = vpack.c.b16 %v1979, %v1975
    %v2032 = vpack.c.b16 %v1980, %v1976
    %v2033 = vpack.c.b16 %v1985, %v1981
    %v2034 = vpack.c.b16 %v1986, %v1982
    %v2035 = vpack.c.b16 %v1987, %v1983
    %v2036 = vpack.c.b16 %v1988, %v1984
    %v2037 = vpack.c.b16 %v1993, %v1989
    %v2038 = vpack.c.b16 %v1994, %v1990
    %v2039 = vpack.c.b16 %v1995, %v1991
    %v2040 = vpack.c.b16 %v1996, %v1992
    %v2041 = vpack.c.b16 %v2001, %v1997
    %v2042 = vpack.c.b16 %v2002, %v1998
    %v2043 = vpack.c.b16 %v2003, %v1999
    %v2044 = vpack.c.b16 %v2004, %v2000
    %v2045 = vpack.c.b16 %v2009, %v2005
    %v2046 = vpack.c.b16 %v2010, %v2006
    %v2047 = vpack.c.b16 %v2011, %v2007
    %v2048 = vpack.c.b16 %v2012, %v2008
    %v2049 = vpack.c.b16 %v2017, %v2013
    %v2050 = vpack.c.b16 %v2018, %v2014
    %v2051 = vpack.c.b16 %v2019, %v2015
    %v2052 = vpack.c.b16 %v2020, %v2016
    %2085 = vmatprep.subr.bf16.mxu0 %v2022
    %2086 = vmatpush1.bf16.msra.mxu0 %v2021
    %2087 = vmatprep.subr.bf16.mxu0 %v2026
    %2088 = vmatpush1.bf16.msra.mxu0 %v2025
    %2089 = vmatprep.subr.bf16.mxu0 %v2030
    %2090 = vmatpush1.bf16.msra.mxu0 %v2029
    %2091 = vmatprep.subr.bf16.mxu0 %v2034
    %2092 = vmatpush1.bf16.msra.mxu0 %v2033
    %2093 = vmatprep.subr.bf16.mxu0 %v2038
    %2094 = vmatpush1.bf16.msra.mxu0 %v2037
    %2095 = vmatprep.subr.bf16.mxu0 %v2042
    %2096 = vmatpush1.bf16.msra.mxu0 %v2041
    %2097 = vmatprep.subr.bf16.mxu0 %v2046
    %2098 = vmatpush1.bf16.msra.mxu0 %v2045
    %2099 = vmatprep.subr.bf16.mxu0 %v2050
    %2100 = vmatpush1.bf16.msra.mxu0 %v2049
    %2101 = vmatprep.subr.bf16.mxu0 0
    %2102 = vmatpush1.bf16.msra.mxu0 0
    %2103 = vmatprep.subr.bf16.mxu0 0
    %2104 = vmatpush1.bf16.msra.mxu0 0
    %2105 = vmatprep.subr.bf16.mxu0 0
    %2106 = vmatpush1.bf16.msra.mxu0 0
    %2107 = vmatprep.subr.bf16.mxu0 0
    %2108 = vmatpush1.bf16.msra.mxu0 0
    %2109 = vmatprep.subr.bf16.mxu0 0
    %2110 = vmatpush1.bf16.msra.mxu0 0
    %2111 = vmatprep.subr.bf16.mxu0 0
    %2112 = vmatpush1.bf16.msra.mxu0 0
    %2113 = vmatprep.subr.bf16.mxu0 0
    %2114 = vmatpush1.bf16.msra.mxu0 0
    %2115 = vmatprep.subr.bf16.mxu0 0
    %2116 = vmatpush1.bf16.msra.mxu0 0
    %2117 = vmatprep.mubr.bf16.mxu0 0
    %2118 = vmatmul.mubr.bf16.gmra.mrb[0].mxu0 %v1924
    %v2119 = vpop.f32.mrb[0].mxu0
    %v2120 = vadd.f32 0.0, %v2119
    %v2121 = vpop.f32.mrb[0].mxu0
    %v2122 = vadd.f32 0.0, %v2121
    %v2123 = vpop.f32.mrb[0].mxu0
    %v2124 = vpop.f32.mrb[0].mxu0
    %2125 = vdwg.mxu0
    %2126 = vmatprep.subr.bf16.mxu0 %v2024
    %2127 = vmatpush1.bf16.msra.mxu0 %v2023
    %2128 = vmatprep.subr.bf16.mxu0 %v2028
    %2129 = vmatpush1.bf16.msra.mxu0 %v2027
    %2130 = vmatprep.subr.bf16.mxu0 %v2032
    %2131 = vmatpush1.bf16.msra.mxu0 %v2031
    %2132 = vmatprep.subr.bf16.mxu0 %v2036
    %2133 = vmatpush1.bf16.msra.mxu0 %v2035
    %2134 = vmatprep.subr.bf16.mxu0 %v2040
    %2135 = vmatpush1.bf16.msra.mxu0 %v2039
    %2136 = vmatprep.subr.bf16.mxu0 %v2044
    %2137 = vmatpush1.bf16.msra.mxu0 %v2043
    %2138 = vmatprep.subr.bf16.mxu0 %v2048
    %2139 = vmatpush1.bf16.msra.mxu0 %v2047
    %2140 = vmatprep.subr.bf16.mxu0 %v2052
    %2141 = vmatpush1.bf16.msra.mxu0 %v2051
    %2142 = vmatprep.subr.bf16.mxu0 0
    %2143 = vmatpush1.bf16.msra.mxu0 0
    %2144 = vmatprep.subr.bf16.mxu0 0
    %2145 = vmatpush1.bf16.msra.mxu0 0
    %2146 = vmatprep.subr.bf16.mxu0 0
    %2147 = vmatpush1.bf16.msra.mxu0 0
    %2148 = vmatprep.subr.bf16.mxu0 0
    %2149 = vmatpush1.bf16.msra.mxu0 0
    %2150 = vmatprep.subr.bf16.mxu0 0
    %2151 = vmatpush1.bf16.msra.mxu0 0
    %2152 = vmatprep.subr.bf16.mxu0 0
    %2153 = vmatpush1.bf16.msra.mxu0 0
    %2154 = vmatprep.subr.bf16.mxu0 0
    %2155 = vmatpush1.bf16.msra.mxu0 0
    %2156 = vmatprep.subr.bf16.mxu0 0
    %2157 = vmatpush1.bf16.msra.mxu0 0
    %2158 = vmatprep.mubr.bf16.mxu0 0
    %2159 = vmatmul.mubr.bf16.gmra.mrb[0].mxu0 %v1924
    %v2160 = vpop.f32.mrb[0].mxu0
    %v2161 = vadd.f32 0.0, %v2160
    %v2162 = vpop.f32.mrb[0].mxu0
    %v2163 = vadd.f32 0.0, %v2162
    %v2164 = vpop.f32.mrb[0].mxu0
    %v2165 = vpop.f32.mrb[0].mxu0
    %2166 = vdwg.mxu0
    %v2167 = vadd.f32 %v1920, %v2120
    %v2168 = vadd.f32 %v1921, %v2122
    %v2169 = vadd.f32 %v1922, %v2161
    %v2170 = vadd.f32 %v1923, %v2163
    %v2171 = vxor.u32 %v2167, 2147483648
    %v2172 = vmul.f32 %v2171, 1.442695
    %v2173 = vpow.pop %v2172
    %v2174 = vadd.f32 %v2173, 1.0
    %v2175 = vrcp.pop %v2174
    %v2176 = vmul.f32 1.0, %v2175
    %v2177 = vxor.u32 %v2168, 2147483648
    %v2178 = vmul.f32 %v2177, 1.442695
    %v2179 = vpow.pop %v2178
    %v2180 = vadd.f32 %v2179, 1.0
    %v2181 = vrcp.pop %v2180
    %v2182 = vmul.f32 1.0, %v2181
    %v2183 = vtanh.pop %v2169
    %v2184 = vxor.u32 %v2170, 2147483648
    %v2185 = vmul.f32 %v2184, 1.442695
    %v2186 = vpow.pop %v2185
    %v2187 = vadd.f32 %v2186, 1.0
    %v2188 = vrcp.pop %v2187
    %v2189 = vmul.f32 1.0, %v2188
    %v2190 = vmul.f32 %v2182, %v1919
    %v2191 = vmul.f32 %v2176, %v2183
    %v2192 = vadd.f32 %v2190, %v2191
    %v2193 = vtanh.pop %v2192
    %v2194 = vmul.f32 %v2189, %v2193
    %2195 = vst [vmem:[#allocation3] sm:$0xff] %v2194
    %2196 = vst [vmem:[#allocation4] sm:$0xff] %v2192
    %2197 = vst [vmem:[%s9] sm:$0xff] %v2194
    %v2198 = vld [vmem:[#allocation3] sm:$0xff]
    %v2199 = vld [vmem:[#allocation4] sm:$0xff]
    %v2200 = vld [vmem:[%s751] sm:$0xff]
    %v2201 = vld [vmem:[%s751 + $0x8] sm:$0xff]
    %v2202 = vld [vmem:[%s751 + $0x10] sm:$0xff]
    %v2203 = vld [vmem:[%s751 + $0x18] sm:$0xff]
    %v2204 = vpack.c.bf16 %v2198, %v2198
    %2205 = vmatprep.subr.bf16.mxu0 %v2022
    %2206 = vmatpush1.bf16.msra.mxu0 %v2021
    %2207 = vmatprep.subr.bf16.mxu0 %v2026
    %2208 = vmatpush1.bf16.msra.mxu0 %v2025
    %2209 = vmatprep.subr.bf16.mxu0 %v2030
    %2210 = vmatpush1.bf16.msra.mxu0 %v2029
    %2211 = vmatprep.subr.bf16.mxu0 %v2034
    %2212 = vmatpush1.bf16.msra.mxu0 %v2033
    %2213 = vmatprep.subr.bf16.mxu0 %v2038
    %2214 = vmatpush1.bf16.msra.mxu0 %v2037
    %2215 = vmatprep.subr.bf16.mxu0 %v2042
    %2216 = vmatpush1.bf16.msra.mxu0 %v2041
    %2217 = vmatprep.subr.bf16.mxu0 %v2046
    %2218 = vmatpush1.bf16.msra.mxu0 %v2045
    %2219 = vmatprep.subr.bf16.mxu0 %v2050
    %2220 = vmatpush1.bf16.msra.mxu0 %v2049
    %2221 = vmatprep.subr.bf16.mxu0 0
    %2222 = vmatpush1.bf16.msra.mxu0 0
    %2223 = vmatprep.subr.bf16.mxu0 0
    %2224 = vmatpush1.bf16.msra.mxu0 0
    %2225 = vmatprep.subr.bf16.mxu0 0
    %2226 = vmatpush1.bf16.msra.mxu0 0
    %2227 = vmatprep.subr.bf16.mxu0 0
    %2228 = vmatpush1.bf16.msra.mxu0 0
    %2229 = vmatprep.subr.bf16.mxu0 0
    %2230 = vmatpush1.bf16.msra.mxu0 0
    %2231 = vmatprep.subr.bf16.mxu0 0
    %2232 = vmatpush1.bf16.msra.mxu0 0
    %2233 = vmatprep.subr.bf16.mxu0 0
    %2234 = vmatpush1.bf16.msra.mxu0 0
    %2235 = vmatprep.subr.bf16.mxu0 0
    %2236 = vmatpush1.bf16.msra.mxu0 0
    %2237 = vmatprep.mubr.bf16.mxu0 0
    %2238 = vmatmul.mubr.bf16.gmra.mrb[0].mxu0 %v2204
    %v2239 = vpop.f32.mrb[0].mxu0
    %v2240 = vadd.f32 0.0, %v2239
    %v2241 = vpop.f32.mrb[0].mxu0
    %v2242 = vadd.f32 0.0, %v2241
    %v2243 = vpop.f32.mrb[0].mxu0
    %v2244 = vpop.f32.mrb[0].mxu0
    %2245 = vdwg.mxu0
    %2246 = vmatprep.subr.bf16.mxu0 %v2024
    %2247 = vmatpush1.bf16.msra.mxu0 %v2023
    %2248 = vmatprep.subr.bf16.mxu0 %v2028
    %2249 = vmatpush1.bf16.msra.mxu0 %v2027
    %2250 = vmatprep.subr.bf16.mxu0 %v2032
    %2251 = vmatpush1.bf16.msra.mxu0 %v2031
    %2252 = vmatprep.subr.bf16.mxu0 %v2036
    %2253 = vmatpush1.bf16.msra.mxu0 %v2035
    %2254 = vmatprep.subr.bf16.mxu0 %v2040
    %2255 = vmatpush1.bf16.msra.mxu0 %v2039
    %2256 = vmatprep.subr.bf16.mxu0 %v2044
    %2257 = vmatpush1.bf16.msra.mxu0 %v2043
    %2258 = vmatprep.subr.bf16.mxu0 %v2048
    %2259 = vmatpush1.bf16.msra.mxu0 %v2047
    %2260 = vmatprep.subr.bf16.mxu0 %v2052
    %2261 = vmatpush1.bf16.msra.mxu0 %v2051
    %2262 = vmatprep.subr.bf16.mxu0 0
    %2263 = vmatpush1.bf16.msra.mxu0 0
    %2264 = vmatprep.subr.bf16.mxu0 0
    %2265 = vmatpush1.bf16.msra.mxu0 0
    %2266 = vmatprep.subr.bf16.mxu0 0
    %2267 = vmatpush1.bf16.msra.mxu0 0
    %2268 = vmatprep.subr.bf16.mxu0 0
    %2269 = vmatpush1.bf16.msra.mxu0 0
    %2270 = vmatprep.subr.bf16.mxu0 0
    %2271 = vmatpush1.bf16.msra.mxu0 0
    %2272 = vmatprep.subr.bf16.mxu0 0
    %2273 = vmatpush1.bf16.msra.mxu0 0
    %2274 = vmatprep.subr.bf16.mxu0 0
    %2275 = vmatpush1.bf16.msra.mxu0 0
    %2276 = vmatprep.subr.bf16.mxu0 0
    %2277 = vmatpush1.bf16.msra.mxu0 0
    %2278 = vmatprep.mubr.bf16.mxu0 0
    %2279 = vmatmul.mubr.bf16.gmra.mrb[0].mxu0 %v2204
    %v2280 = vpop.f32.mrb[0].mxu0
    %v2281 = vadd.f32 0.0, %v2280
    %v2282 = vpop.f32.mrb[0].mxu0
    %v2283 = vadd.f32 0.0, %v2282
    %v2284 = vpop.f32.mrb[0].mxu0
    %v2285 = vpop.f32.mrb[0].mxu0
    %2286 = vdwg.mxu0
    %v2287 = vadd.f32 %v2200, %v2240
    %v2288 = vadd.f32 %v2201, %v2242
    %v2289 = vadd.f32 %v2202, %v2281
    %v2290 = vadd.f32 %v2203, %v2283
    %v2291 = vxor.u32 %v2287, 2147483648
    %v2292 = vmul.f32 %v2291, 1.442695
    %v2293 = vpow.pop %v2292
    %v2294 = vadd.f32 %v2293, 1.0
    %v2295 = vrcp.pop %v2294
    %v2296 = vmul.f32 1.0, %v2295
    %v2297 = vxor.u32 %v2288, 2147483648
    %v2298 = vmul.f32 %v2297, 1.442695
    %v2299 = vpow.pop %v2298
    %v2300 = vadd.f32 %v2299, 1.0
    %v2301 = vrcp.pop %v2300
    %v2302 = vmul.f32 1.0, %v2301
    %v2303 = vtanh.pop %v2289
    %v2304 = vxor.u32 %v2290, 2147483648
    %v2305 = vmul.f32 %v2304, 1.442695
    %v2306 = vpow.pop %v2305
    %v2307 = vadd.f32 %v2306, 1.0
    %v2308 = vrcp.pop %v2307
    %v2309 = vmul.f32 1.0, %v2308
    %v2310 = vmul.f32 %v2302, %v2199
    %v2311 = vmul.f32 %v2296, %v2303
    %v2312 = vadd.f32 %v2310, %v2311
    %v2313 = vtanh.pop %v2312
    %v2314 = vmul.f32 %v2309, %v2313
    %2315 = vst [vmem:[#allocation3] sm:$0xff] %v2314
    %2316 = vst [vmem:[#allocation4] sm:$0xff] %v2312
    %2317 = vst [vmem:[%s869] sm:$0xff] %v2314
    %v2318 = vld [vmem:[#allocation3] sm:$0xff]
    %v2319 = vld [vmem:[#allocation4] sm:$0xff]
    %v2320 = vld [vmem:[%s873] sm:$0xff]
    %v2321 = vld [vmem:[%s873 + $0x8] sm:$0xff]
    %v2322 = vld [vmem:[%s873 + $0x10] sm:$0xff]
    %v2323 = vld [vmem:[%s873 + $0x18] sm:$0xff]
    %v2324 = vpack.c.bf16 %v2318, %v2318
    %2325 = vmatprep.subr.bf16.mxu0 %v2022
    %2326 = vmatpush1.bf16.msra.mxu0 %v2021
    %2327 = vmatprep.subr.bf16.mxu0 %v2026
    %2328 = vmatpush1.bf16.msra.mxu0 %v2025
    %2329 = vmatprep.subr.bf16.mxu0 %v2030
    %2330 = vmatpush1.bf16.msra.mxu0 %v2029
    %2331 = vmatprep.subr.bf16.mxu0 %v2034
    %2332 = vmatpush1.bf16.msra.mxu0 %v2033
    %2333 = vmatprep.subr.bf16.mxu0 %v2038
    %2334 = vmatpush1.bf16.msra.mxu0 %v2037
    %2335 = vmatprep.subr.bf16.mxu0 %v2042
    %2336 = vmatpush1.bf16.msra.mxu0 %v2041
    %2337 = vmatprep.subr.bf16.mxu0 %v2046
    %2338 = vmatpush1.bf16.msra.mxu0 %v2045
    %2339 = vmatprep.subr.bf16.mxu0 %v2050
    %2340 = vmatpush1.bf16.msra.mxu0 %v2049
    %2341 = vmatprep.subr.bf16.mxu0 0
    %2342 = vmatpush1.bf16.msra.mxu0 0
    %2343 = vmatprep.subr.bf16.mxu0 0
    %2344 = vmatpush1.bf16.msra.mxu0 0
    %2345 = vmatprep.subr.bf16.mxu0 0
    %2346 = vmatpush1.bf16.msra.mxu0 0
    %2347 = vmatprep.subr.bf16.mxu0 0
    %2348 = vmatpush1.bf16.msra.mxu0 0
    %2349 = vmatprep.subr.bf16.mxu0 0
    %2350 = vmatpush1.bf16.msra.mxu0 0
    %2351 = vmatprep.subr.bf16.mxu0 0
    %2352 = vmatpush1.bf16.msra.mxu0 0
    %2353 = vmatprep.subr.bf16.mxu0 0
    %2354 = vmatpush1.bf16.msra.mxu0 0
    %2355 = vmatprep.subr.bf16.mxu0 0
    %2356 = vmatpush1.bf16.msra.mxu0 0
    %2357 = vmatprep.mubr.bf16.mxu0 0
    %2358 = vmatmul.mubr.bf16.gmra.mrb[0].mxu0 %v2324
    %v2359 = vpop.f32.mrb[0].mxu0
    %v2360 = vadd.f32 0.0, %v2359
    %v2361 = vpop.f32.mrb[0].mxu0
    %v2362 = vadd.f32 0.0, %v2361
    %v2363 = vpop.f32.mrb[0].mxu0
    %v2364 = vpop.f32.mrb[0].mxu0
    %2365 = vdwg.mxu0
    %2366 = vmatprep.subr.bf16.mxu0 %v2024
    %2367 = vmatpush1.bf16.msra.mxu0 %v2023
    %2368 = vmatprep.subr.bf16.mxu0 %v2028
    %2369 = vmatpush1.bf16.msra.mxu0 %v2027
    %2370 = vmatprep.subr.bf16.mxu0 %v2032
    %2371 = vmatpush1.bf16.msra.mxu0 %v2031
    %2372 = vmatprep.subr.bf16.mxu0 %v2036
    %2373 = vmatpush1.bf16.msra.mxu0 %v2035
    %2374 = vmatprep.subr.bf16.mxu0 %v2040
    %2375 = vmatpush1.bf16.msra.mxu0 %v2039
    %2376 = vmatprep.subr.bf16.mxu0 %v2044
    %2377 = vmatpush1.bf16.msra.mxu0 %v2043
    %2378 = vmatprep.subr.bf16.mxu0 %v2048
    %2379 = vmatpush1.bf16.msra.mxu0 %v2047
    %2380 = vmatprep.subr.bf16.mxu0 %v2052
    %2381 = vmatpush1.bf16.msra.mxu0 %v2051
    %2382 = vmatprep.subr.bf16.mxu0 0
    %2383 = vmatpush1.bf16.msra.mxu0 0
    %2384 = vmatprep.subr.bf16.mxu0 0
    %2385 = vmatpush1.bf16.msra.mxu0 0
    %2386 = vmatprep.subr.bf16.mxu0 0
    %2387 = vmatpush1.bf16.msra.mxu0 0
    %2388 = vmatprep.subr.bf16.mxu0 0
    %2389 = vmatpush1.bf16.msra.mxu0 0
    %2390 = vmatprep.subr.bf16.mxu0 0
    %2391 = vmatpush1.bf16.msra.mxu0 0
    %2392 = vmatprep.subr.bf16.mxu0 0
    %2393 = vmatpush1.bf16.msra.mxu0 0
    %2394 = vmatprep.subr.bf16.mxu0 0
    %2395 = vmatpush1.bf16.msra.mxu0 0
    %2396 = vmatprep.subr.bf16.mxu0 0
    %2397 = vmatpush1.bf16.msra.mxu0 0
    %2398 = vmatprep.mubr.bf16.mxu0 0
    %2399 = vmatmul.mubr.bf16.gmra.mrb[0].mxu0 %v2324
    %v2400 = vpop.f32.mrb[0].mxu0
    %v2401 = vadd.f32 0.0, %v2400
    %v2402 = vpop.f32.mrb[0].mxu0
    %v2403 = vadd.f32 0.0, %v2402
    %v2404 = vpop.f32.mrb[0].mxu0
    %v2405 = vpop.f32.mrb[0].mxu0
    %2406 = vdwg.mxu0
    %v2407 = vadd.f32 %v2320, %v2360
    %v2408 = vadd.f32 %v2321, %v2362
    %v2409 = vadd.f32 %v2322, %v2401
    %v2410 = vadd.f32 %v2323, %v2403
    %v2411 = vxor.u32 %v2407, 2147483648
    %v2412 = vmul.f32 %v2411, 1.442695
    %v2413 = vpow.pop %v2412
    %v2414 = vadd.f32 %v2413, 1.0
    %v2415 = vrcp.pop %v2414
    %v2416 = vmul.f32 1.0, %v2415
    %v2417 = vxor.u32 %v2408, 2147483648
    %v2418 = vmul.f32 %v2417, 1.442695
    %v2419 = vpow.pop %v2418
    %v2420 = vadd.f32 %v2419, 1.0
    %v2421 = vrcp.pop %v2420
    %v2422 = vmul.f32 1.0, %v2421
    %v2423 = vtanh.pop %v2409
    %v2424 = vxor.u32 %v2410, 2147483648
    %v2425 = vmul.f32 %v2424, 1.442695
    %v2426 = vpow.pop %v2425
    %v2427 = vadd.f32 %v2426, 1.0
    %v2428 = vrcp.pop %v2427
    %v2429 = vmul.f32 1.0, %v2428
    %v2430 = vmul.f32 %v2422, %v2319
    %v2431 = vmul.f32 %v2416, %v2423
    %v2432 = vadd.f32 %v2430, %v2431
    %v2433 = vtanh.pop %v2432
    %v2434 = vmul.f32 %v2429, %v2433
    %2435 = vst [vmem:[#allocation3] sm:$0xff] %v2434
    %2436 = vst [vmem:[#allocation4] sm:$0xff] %v2432
    %2437 = vst [vmem:[%s991] sm:$0xff] %v2434
    %v2438 = vld [vmem:[#allocation3] sm:$0xff]
    %v2439 = vld [vmem:[#allocation4] sm:$0xff]
    %v2440 = vld [vmem:[%s995] sm:$0xff]
    %v2441 = vld [vmem:[%s995 + $0x8] sm:$0xff]
    %v2442 = vld [vmem:[%s995 + $0x10] sm:$0xff]
    %v2443 = vld [vmem:[%s995 + $0x18] sm:$0xff]
    %v2444 = vpack.c.bf16 %v2438, %v2438
    %2445 = vmatprep.subr.bf16.mxu0 %v2022
    %2446 = vmatpush1.bf16.msra.mxu0 %v2021
    %2447 = vmatprep.subr.bf16.mxu0 %v2026
    %2448 = vmatpush1.bf16.msra.mxu0 %v2025
    %2449 = vmatprep.subr.bf16.mxu0 %v2030
    %2450 = vmatpush1.bf16.msra.mxu0 %v2029
    %2451 = vmatprep.subr.bf16.mxu0 %v2034
    %2452 = vmatpush1.bf16.msra.mxu0 %v2033
    %2453 = vmatprep.subr.bf16.mxu0 %v2038
    %2454 = vmatpush1.bf16.msra.mxu0 %v2037
    %2455 = vmatprep.subr.bf16.mxu0 %v2042
    %2456 = vmatpush1.bf16.msra.mxu0 %v2041
    %2457 = vmatprep.subr.bf16.mxu0 %v2046
    %2458 = vmatpush1.bf16.msra.mxu0 %v2045
    %2459 = vmatprep.subr.bf16.mxu0 %v2050
    %2460 = vmatpush1.bf16.msra.mxu0 %v2049
    %2461 = vmatprep.subr.bf16.mxu0 0
    %2462 = vmatpush1.bf16.msra.mxu0 0
    %2463 = vmatprep.subr.bf16.mxu0 0
    %2464 = vmatpush1.bf16.msra.mxu0 0
    %2465 = vmatprep.subr.bf16.mxu0 0
    %2466 = vmatpush1.bf16.msra.mxu0 0
    %2467 = vmatprep.subr.bf16.mxu0 0
    %2468 = vmatpush1.bf16.msra.mxu0 0
    %2469 = vmatprep.subr.bf16.mxu0 0
    %2470 = vmatpush1.bf16.msra.mxu0 0
    %2471 = vmatprep.subr.bf16.mxu0 0
    %2472 = vmatpush1.bf16.msra.mxu0 0
    %2473 = vmatprep.subr.bf16.mxu0 0
    %2474 = vmatpush1.bf16.msra.mxu0 0
    %2475 = vmatprep.subr.bf16.mxu0 0
    %2476 = vmatpush1.bf16.msra.mxu0 0
    %2477 = vmatprep.mubr.bf16.mxu0 0
    %2478 = vmatmul.mubr.bf16.gmra.mrb[0].mxu0 %v2444
    %v2479 = vpop.f32.mrb[0].mxu0
    %v2480 = vadd.f32 0.0, %v2479
    %v2481 = vpop.f32.mrb[0].mxu0
    %v2482 = vadd.f32 0.0, %v2481
    %v2483 = vpop.f32.mrb[0].mxu0
    %v2484 = vpop.f32.mrb[0].mxu0
    %2485 = vdwg.mxu0
    %2486 = vmatprep.subr.bf16.mxu0 %v2024
    %2487 = vmatpush1.bf16.msra.mxu0 %v2023
    %2488 = vmatprep.subr.bf16.mxu0 %v2028
    %2489 = vmatpush1.bf16.msra.mxu0 %v2027
    %2490 = vmatprep.subr.bf16.mxu0 %v2032
    %2491 = vmatpush1.bf16.msra.mxu0 %v2031
    %2492 = vmatprep.subr.bf16.mxu0 %v2036
    %2493 = vmatpush1.bf16.msra.mxu0 %v2035
    %2494 = vmatprep.subr.bf16.mxu0 %v2040
    %2495 = vmatpush1.bf16.msra.mxu0 %v2039
    %2496 = vmatprep.subr.bf16.mxu0 %v2044
    %2497 = vmatpush1.bf16.msra.mxu0 %v2043
    %2498 = vmatprep.subr.bf16.mxu0 %v2048
    %2499 = vmatpush1.bf16.msra.mxu0 %v2047
    %2500 = vmatprep.subr.bf16.mxu0 %v2052
    %2501 = vmatpush1.bf16.msra.mxu0 %v2051
    %2502 = vmatprep.subr.bf16.mxu0 0
    %2503 = vmatpush1.bf16.msra.mxu0 0
    %2504 = vmatprep.subr.bf16.mxu0 0
    %2505 = vmatpush1.bf16.msra.mxu0 0
    %2506 = vmatprep.subr.bf16.mxu0 0
    %2507 = vmatpush1.bf16.msra.mxu0 0
    %2508 = vmatprep.subr.bf16.mxu0 0
    %2509 = vmatpush1.bf16.msra.mxu0 0
    %2510 = vmatprep.subr.bf16.mxu0 0
    %2511 = vmatpush1.bf16.msra.mxu0 0
    %2512 = vmatprep.subr.bf16.mxu0 0
    %2513 = vmatpush1.bf16.msra.mxu0 0
    %2514 = vmatprep.subr.bf16.mxu0 0
    %2515 = vmatpush1.bf16.msra.mxu0 0
    %2516 = vmatprep.subr.bf16.mxu0 0
    %2517 = vmatpush1.bf16.msra.mxu0 0
    %2518 = vmatprep.mubr.bf16.mxu0 0
    %2519 = vmatmul.mubr.bf16.gmra.mrb[0].mxu0 %v2444
    %v2520 = vpop.f32.mrb[0].mxu0
    %v2521 = vadd.f32 0.0, %v2520
    %v2522 = vpop.f32.mrb[0].mxu0
    %v2523 = vadd.f32 0.0, %v2522
    %v2524 = vpop.f32.mrb[0].mxu0
    %v2525 = vpop.f32.mrb[0].mxu0
    %2526 = vdwg.mxu0
    %v2527 = vadd.f32 %v2440, %v2480
    %v2528 = vadd.f32 %v2441, %v2482
    %v2529 = vadd.f32 %v2442, %v2521
    %v2530 = vadd.f32 %v2443, %v2523
    %v2531 = vxor.u32 %v2527, 2147483648
    %v2532 = vmul.f32 %v2531, 1.442695
    %v2533 = vpow.pop %v2532
    %v2534 = vadd.f32 %v2533, 1.0
    %v2535 = vrcp.pop %v2534
    %v2536 = vmul.f32 1.0, %v2535
    %v2537 = vxor.u32 %v2528, 2147483648
    %v2538 = vmul.f32 %v2537, 1.442695
    %v2539 = vpow.pop %v2538
    %v2540 = vadd.f32 %v2539, 1.0
    %v2541 = vrcp.pop %v2540
    %v2542 = vmul.f32 1.0, %v2541
    %v2543 = vtanh.pop %v2529
    %v2544 = vxor.u32 %v2530, 2147483648
    %v2545 = vmul.f32 %v2544, 1.442695
    %v2546 = vpow.pop %v2545
    %v2547 = vadd.f32 %v2546, 1.0
    %v2548 = vrcp.pop %v2547
    %v2549 = vmul.f32 1.0, %v2548
    %v2550 = vmul.f32 %v2542, %v2439
    %v2551 = vmul.f32 %v2536, %v2543
    %v2552 = vadd.f32 %v2550, %v2551
    %v2553 = vtanh.pop %v2552
    %v2554 = vmul.f32 %v2549, %v2553
    %2555 = vst [vmem:[#allocation3] sm:$0xff] %v2554
    %2556 = vst [vmem:[#allocation4] sm:$0xff] %v2552
    %2557 = vst [vmem:[%s1113] sm:$0xff] %v2554
    %v2558 = vld [vmem:[#allocation3] sm:$0xff]
    %v2559 = vld [vmem:[#allocation4] sm:$0xff]
    %v2560 = vld [vmem:[%s1117] sm:$0xff]
    %v2561 = vld [vmem:[%s1117 + $0x8] sm:$0xff]
    %v2562 = vld [vmem:[%s1117 + $0x10] sm:$0xff]
    %v2563 = vld [vmem:[%s1117 + $0x18] sm:$0xff]
    %v2564 = vpack.c.bf16 %v2558, %v2558
    %2565 = vmatprep.subr.bf16.mxu0 %v2022
    %2566 = vmatpush1.bf16.msra.mxu0 %v2021
    %2567 = vmatprep.subr.bf16.mxu0 %v2026
    %2568 = vmatpush1.bf16.msra.mxu0 %v2025
    %2569 = vmatprep.subr.bf16.mxu0 %v2030
    %2570 = vmatpush1.bf16.msra.mxu0 %v2029
    %2571 = vmatprep.subr.bf16.mxu0 %v2034
    %2572 = vmatpush1.bf16.msra.mxu0 %v2033
    %2573 = vmatprep.subr.bf16.mxu0 %v2038
    %2574 = vmatpush1.bf16.msra.mxu0 %v2037
    %2575 = vmatprep.subr.bf16.mxu0 %v2042
    %2576 = vmatpush1.bf16.msra.mxu0 %v2041
    %2577 = vmatprep.subr.bf16.mxu0 %v2046
    %2578 = vmatpush1.bf16.msra.mxu0 %v2045
    %2579 = vmatprep.subr.bf16.mxu0 %v2050
    %2580 = vmatpush1.bf16.msra.mxu0 %v2049
    %2581 = vmatprep.subr.bf16.mxu0 0
    %2582 = vmatpush1.bf16.msra.mxu0 0
    %2583 = vmatprep.subr.bf16.mxu0 0
    %2584 = vmatpush1.bf16.msra.mxu0 0
    %2585 = vmatprep.subr.bf16.mxu0 0
    %2586 = vmatpush1.bf16.msra.mxu0 0
    %2587 = vmatprep.subr.bf16.mxu0 0
    %2588 = vmatpush1.bf16.msra.mxu0 0
    %2589 = vmatprep.subr.bf16.mxu0 0
    %2590 = vmatpush1.bf16.msra.mxu0 0
    %2591 = vmatprep.subr.bf16.mxu0 0
    %2592 = vmatpush1.bf16.msra.mxu0 0
    %2593 = vmatprep.subr.bf16.mxu0 0
    %2594 = vmatpush1.bf16.msra.mxu0 0
    %2595 = vmatprep.subr.bf16.mxu0 0
    %2596 = vmatpush1.bf16.msra.mxu0 0
    %2597 = vmatprep.mubr.bf16.mxu0 0
    %2598 = vmatmul.mubr.bf16.gmra.mrb[0].mxu0 %v2564
    %v2599 = vpop.f32.mrb[0].mxu0
    %v2600 = vadd.f32 0.0, %v2599
    %v2601 = vpop.f32.mrb[0].mxu0
    %v2602 = vadd.f32 0.0, %v2601
    %v2603 = vpop.f32.mrb[0].mxu0
    %v2604 = vpop.f32.mrb[0].mxu0
    %2605 = vdwg.mxu0
    %2606 = vmatprep.subr.bf16.mxu0 %v2024
    %2607 = vmatpush1.bf16.msra.mxu0 %v2023
    %2608 = vmatprep.subr.bf16.mxu0 %v2028
    %2609 = vmatpush1.bf16.msra.mxu0 %v2027
    %2610 = vmatprep.subr.bf16.mxu0 %v2032
    %2611 = vmatpush1.bf16.msra.mxu0 %v2031
    %2612 = vmatprep.subr.bf16.mxu0 %v2036
    %2613 = vmatpush1.bf16.msra.mxu0 %v2035
    %2614 = vmatprep.subr.bf16.mxu0 %v2040
    %2615 = vmatpush1.bf16.msra.mxu0 %v2039
    %2616 = vmatprep.subr.bf16.mxu0 %v2044
    %2617 = vmatpush1.bf16.msra.mxu0 %v2043
    %2618 = vmatprep.subr.bf16.mxu0 %v2048
    %2619 = vmatpush1.bf16.msra.mxu0 %v2047
    %2620 = vmatprep.subr.bf16.mxu0 %v2052
    %2621 = vmatpush1.bf16.msra.mxu0 %v2051
    %2622 = vmatprep.subr.bf16.mxu0 0
    %2623 = vmatpush1.bf16.msra.mxu0 0
    %2624 = vmatprep.subr.bf16.mxu0 0
    %2625 = vmatpush1.bf16.msra.mxu0 0
    %2626 = vmatprep.subr.bf16.mxu0 0
    %2627 = vmatpush1.bf16.msra.mxu0 0
    %2628 = vmatprep.subr.bf16.mxu0 0
    %2629 = vmatpush1.bf16.msra.mxu0 0
    %2630 = vmatprep.subr.bf16.mxu0 0
    %2631 = vmatpush1.bf16.msra.mxu0 0
    %2632 = vmatprep.subr.bf16.mxu0 0
    %2633 = vmatpush1.bf16.msra.mxu0 0
    %2634 = vmatprep.subr.bf16.mxu0 0
    %2635 = vmatpush1.bf16.msra.mxu0 0
    %2636 = vmatprep.subr.bf16.mxu0 0
    %2637 = vmatpush1.bf16.msra.mxu0 0
    %2638 = vmatprep.mubr.bf16.mxu0 0
    %2639 = vmatmul.mubr.bf16.gmra.mrb[0].mxu0 %v2564
    %v2640 = vpop.f32.mrb[0].mxu0
    %v2641 = vadd.f32 0.0, %v2640
    %v2642 = vpop.f32.mrb[0].mxu0
    %v2643 = vadd.f32 0.0, %v2642
    %v2644 = vpop.f32.mrb[0].mxu0
    %v2645 = vpop.f32.mrb[0].mxu0
    %2646 = vdwg.mxu0
    %v2647 = vadd.f32 %v2560, %v2600
    %v2648 = vadd.f32 %v2561, %v2602
    %v2649 = vadd.f32 %v2562, %v2641
    %v2650 = vadd.f32 %v2563, %v2643
    %v2651 = vxor.u32 %v2647, 2147483648
    %v2652 = vmul.f32 %v2651, 1.442695
    %v2653 = vpow.pop %v2652
    %v2654 = vadd.f32 %v2653, 1.0
    %v2655 = vrcp.pop %v2654
    %v2656 = vmul.f32 1.0, %v2655
    %v2657 = vxor.u32 %v2648, 2147483648
    %v2658 = vmul.f32 %v2657, 1.442695
    %v2659 = vpow.pop %v2658
    %v2660 = vadd.f32 %v2659, 1.0
    %v2661 = vrcp.pop %v2660
    %v2662 = vmul.f32 1.0, %v2661
    %v2663 = vtanh.pop %v2649
    %v2664 = vxor.u32 %v2650, 2147483648
    %v2665 = vmul.f32 %v2664, 1.442695
    %v2666 = vpow.pop %v2665
    %v2667 = vadd.f32 %v2666, 1.0
    %v2668 = vrcp.pop %v2667
    %v2669 = vmul.f32 1.0, %v2668
    %v2670 = vmul.f32 %v2662, %v2559
    %v2671 = vmul.f32 %v2656, %v2663
    %v2672 = vadd.f32 %v2670, %v2671
    %v2673 = vtanh.pop %v2672
    %v2674 = vmul.f32 %v2669, %v2673
    %2675 = vst [vmem:[#allocation3] sm:$0xff] %v2674
    %2676 = vst [vmem:[#allocation4] sm:$0xff] %v2672
    %2677 = vst [vmem:[%s1235] sm:$0xff] %v2674
    %v2678 = vld [vmem:[#allocation3] sm:$0xff]
    %v2679 = vld [vmem:[#allocation4] sm:$0xff]
    %v2680 = vld [vmem:[%s1239] sm:$0xff]
    %v2681 = vld [vmem:[%s1239 + $0x8] sm:$0xff]
    %v2682 = vld [vmem:[%s1239 + $0x10] sm:$0xff]
    %v2683 = vld [vmem:[%s1239 + $0x18] sm:$0xff]
    %v2684 = vpack.c.bf16 %v2678, %v2678
    %2685 = vmatprep.subr.bf16.mxu0 %v2022
    %2686 = vmatpush1.bf16.msra.mxu0 %v2021
    %2687 = vmatprep.subr.bf16.mxu0 %v2026
    %2688 = vmatpush1.bf16.msra.mxu0 %v2025
    %2689 = vmatprep.subr.bf16.mxu0 %v2030
    %2690 = vmatpush1.bf16.msra.mxu0 %v2029
    %2691 = vmatprep.subr.bf16.mxu0 %v2034
    %2692 = vmatpush1.bf16.msra.mxu0 %v2033
    %2693 = vmatprep.subr.bf16.mxu0 %v2038
    %2694 = vmatpush1.bf16.msra.mxu0 %v2037
    %2695 = vmatprep.subr.bf16.mxu0 %v2042
    %2696 = vmatpush1.bf16.msra.mxu0 %v2041
    %2697 = vmatprep.subr.bf16.mxu0 %v2046
    %2698 = vmatpush1.bf16.msra.mxu0 %v2045
    %2699 = vmatprep.subr.bf16.mxu0 %v2050
    %2700 = vmatpush1.bf16.msra.mxu0 %v2049
    %2701 = vmatprep.subr.bf16.mxu0 0
    %2702 = vmatpush1.bf16.msra.mxu0 0
    %2703 = vmatprep.subr.bf16.mxu0 0
    %2704 = vmatpush1.bf16.msra.mxu0 0
    %2705 = vmatprep.subr.bf16.mxu0 0
    %2706 = vmatpush1.bf16.msra.mxu0 0
    %2707 = vmatprep.subr.bf16.mxu0 0
    %2708 = vmatpush1.bf16.msra.mxu0 0
    %2709 = vmatprep.subr.bf16.mxu0 0
    %2710 = vmatpush1.bf16.msra.mxu0 0
    %2711 = vmatprep.subr.bf16.mxu0 0
    %2712 = vmatpush1.bf16.msra.mxu0 0
    %2713 = vmatprep.subr.bf16.mxu0 0
    %2714 = vmatpush1.bf16.msra.mxu0 0
    %2715 = vmatprep.subr.bf16.mxu0 0
    %2716 = vmatpush1.bf16.msra.mxu0 0
    %2717 = vmatprep.mubr.bf16.mxu0 0
    %2718 = vmatmul.mubr.bf16.gmra.mrb[0].mxu0 %v2684
    %v2719 = vpop.f32.mrb[0].mxu0
    %v2720 = vadd.f32 0.0, %v2719
    %v2721 = vpop.f32.mrb[0].mxu0
    %v2722 = vadd.f32 0.0, %v2721
    %v2723 = vpop.f32.mrb[0].mxu0
    %v2724 = vpop.f32.mrb[0].mxu0
    %2725 = vdwg.mxu0
    %2726 = vmatprep.subr.bf16.mxu0 %v2024
    %2727 = vmatpush1.bf16.msra.mxu0 %v2023
    %2728 = vmatprep.subr.bf16.mxu0 %v2028
    %2729 = vmatpush1.bf16.msra.mxu0 %v2027
    %2730 = vmatprep.subr.bf16.mxu0 %v2032
    %2731 = vmatpush1.bf16.msra.mxu0 %v2031
    %2732 = vmatprep.subr.bf16.mxu0 %v2036
    %2733 = vmatpush1.bf16.msra.mxu0 %v2035
    %2734 = vmatprep.subr.bf16.mxu0 %v2040
    %2735 = vmatpush1.bf16.msra.mxu0 %v2039
    %2736 = vmatprep.subr.bf16.mxu0 %v2044
    %2737 = vmatpush1.bf16.msra.mxu0 %v2043
    %2738 = vmatprep.subr.bf16.mxu0 %v2048
    %2739 = vmatpush1.bf16.msra.mxu0 %v2047
    %2740 = vmatprep.subr.bf16.mxu0 %v2052
    %2741 = vmatpush1.bf16.msra.mxu0 %v2051
    %2742 = vmatprep.subr.bf16.mxu0 0
    %2743 = vmatpush1.bf16.msra.mxu0 0
    %2744 = vmatprep.subr.bf16.mxu0 0
    %2745 = vmatpush1.bf16.msra.mxu0 0
    %2746 = vmatprep.subr.bf16.mxu0 0
    %2747 = vmatpush1.bf16.msra.mxu0 0
    %2748 = vmatprep.subr.bf16.mxu0 0
    %2749 = vmatpush1.bf16.msra.mxu0 0
    %2750 = vmatprep.subr.bf16.mxu0 0
    %2751 = vmatpush1.bf16.msra.mxu0 0
    %2752 = vmatprep.subr.bf16.mxu0 0
    %2753 = vmatpush1.bf16.msra.mxu0 0
    %2754 = vmatprep.subr.bf16.mxu0 0
    %2755 = vmatpush1.bf16.msra.mxu0 0
    %2756 = vmatprep.subr.bf16.mxu0 0
    %2757 = vmatpush1.bf16.msra.mxu0 0
    %2758 = vmatprep.mubr.bf16.mxu0 0
    %2759 = vmatmul.mubr.bf16.gmra.mrb[0].mxu0 %v2684
    %v2760 = vpop.f32.mrb[0].mxu0
    %v2761 = vadd.f32 0.0, %v2760
    %v2762 = vpop.f32.mrb[0].mxu0
    %v2763 = vadd.f32 0.0, %v2762
    %v2764 = vpop.f32.mrb[0].mxu0
    %v2765 = vpop.f32.mrb[0].mxu0
    %2766 = vdwg.mxu0
    %v2767 = vadd.f32 %v2680, %v2720
    %v2768 = vadd.f32 %v2681, %v2722
    %v2769 = vadd.f32 %v2682, %v2761
    %v2770 = vadd.f32 %v2683, %v2763
    %v2771 = vxor.u32 %v2767, 2147483648
    %v2772 = vmul.f32 %v2771, 1.442695
    %v2773 = vpow.pop %v2772
    %v2774 = vadd.f32 %v2773, 1.0
    %v2775 = vrcp.pop %v2774
    %v2776 = vmul.f32 1.0, %v2775
    %v2777 = vxor.u32 %v2768, 2147483648
    %v2778 = vmul.f32 %v2777, 1.442695
    %v2779 = vpow.pop %v2778
    %v2780 = vadd.f32 %v2779, 1.0
    %v2781 = vrcp.pop %v2780
    %v2782 = vmul.f32 1.0, %v2781
    %v2783 = vtanh.pop %v2769
    %v2784 = vxor.u32 %v2770, 2147483648
    %v2785 = vmul.f32 %v2784, 1.442695
    %v2786 = vpow.pop %v2785
    %v2787 = vadd.f32 %v2786, 1.0
    %v2788 = vrcp.pop %v2787
    %v2789 = vmul.f32 1.0, %v2788
    %v2790 = vmul.f32 %v2782, %v2679
    %v2791 = vmul.f32 %v2776, %v2783
    %v2792 = vadd.f32 %v2790, %v2791
    %v2793 = vtanh.pop %v2792
    %v2794 = vmul.f32 %v2789, %v2793
    %2795 = vst [vmem:[#allocation3] sm:$0xff] %v2794
    %2796 = vst [vmem:[#allocation4] sm:$0xff] %v2792
    %2797 = vst [vmem:[%s1357] sm:$0xff] %v2794
    %v2798 = vld [vmem:[#allocation3] sm:$0xff]
    %v2799 = vld [vmem:[#allocation4] sm:$0xff]
    %v2800 = vld [vmem:[%s1361] sm:$0xff]
    %v2801 = vld [vmem:[%s1361 + $0x8] sm:$0xff]
    %v2802 = vld [vmem:[%s1361 + $0x10] sm:$0xff]
    %v2803 = vld [vmem:[%s1361 + $0x18] sm:$0xff]
    %v2804 = vpack.c.bf16 %v2798, %v2798
    %2805 = vmatprep.subr.bf16.mxu0 %v2022
    %2806 = vmatpush1.bf16.msra.mxu0 %v2021
    %2807 = vmatprep.subr.bf16.mxu0 %v2026
    %2808 = vmatpush1.bf16.msra.mxu0 %v2025
    %2809 = vmatprep.subr.bf16.mxu0 %v2030
    %2810 = vmatpush1.bf16.msra.mxu0 %v2029
    %2811 = vmatprep.subr.bf16.mxu0 %v2034
    %2812 = vmatpush1.bf16.msra.mxu0 %v2033
    %2813 = vmatprep.subr.bf16.mxu0 %v2038
    %2814 = vmatpush1.bf16.msra.mxu0 %v2037
    %2815 = vmatprep.subr.bf16.mxu0 %v2042
    %2816 = vmatpush1.bf16.msra.mxu0 %v2041
    %2817 = vmatprep.subr.bf16.mxu0 %v2046
    %2818 = vmatpush1.bf16.msra.mxu0 %v2045
    %2819 = vmatprep.subr.bf16.mxu0 %v2050
    %2820 = vmatpush1.bf16.msra.mxu0 %v2049
    %2821 = vmatprep.subr.bf16.mxu0 0
    %2822 = vmatpush1.bf16.msra.mxu0 0
    %2823 = vmatprep.subr.bf16.mxu0 0
    %2824 = vmatpush1.bf16.msra.mxu0 0
    %2825 = vmatprep.subr.bf16.mxu0 0
    %2826 = vmatpush1.bf16.msra.mxu0 0
    %2827 = vmatprep.subr.bf16.mxu0 0
    %2828 = vmatpush1.bf16.msra.mxu0 0
    %2829 = vmatprep.subr.bf16.mxu0 0
    %2830 = vmatpush1.bf16.msra.mxu0 0
    %2831 = vmatprep.subr.bf16.mxu0 0
    %2832 = vmatpush1.bf16.msra.mxu0 0
    %2833 = vmatprep.subr.bf16.mxu0 0
    %2834 = vmatpush1.bf16.msra.mxu0 0
    %2835 = vmatprep.subr.bf16.mxu0 0
    %2836 = vmatpush1.bf16.msra.mxu0 0
    %2837 = vmatprep.mubr.bf16.mxu0 0
    %2838 = vmatmul.mubr.bf16.gmra.mrb[0].mxu0 %v2804
    %v2839 = vpop.f32.mrb[0].mxu0
    %v2840 = vadd.f32 0.0, %v2839
    %v2841 = vpop.f32.mrb[0].mxu0
    %v2842 = vadd.f32 0.0, %v2841
    %v2843 = vpop.f32.mrb[0].mxu0
    %v2844 = vpop.f32.mrb[0].mxu0
    %2845 = vdwg.mxu0
    %2846 = vmatprep.subr.bf16.mxu0 %v2024
    %2847 = vmatpush1.bf16.msra.mxu0 %v2023
    %2848 = vmatprep.subr.bf16.mxu0 %v2028
    %2849 = vmatpush1.bf16.msra.mxu0 %v2027
    %2850 = vmatprep.subr.bf16.mxu0 %v2032
    %2851 = vmatpush1.bf16.msra.mxu0 %v2031
    %2852 = vmatprep.subr.bf16.mxu0 %v2036
    %2853 = vmatpush1.bf16.msra.mxu0 %v2035
    %2854 = vmatprep.subr.bf16.mxu0 %v2040
    %2855 = vmatpush1.bf16.msra.mxu0 %v2039
    %2856 = vmatprep.subr.bf16.mxu0 %v2044
    %2857 = vmatpush1.bf16.msra.mxu0 %v2043
    %2858 = vmatprep.subr.bf16.mxu0 %v2048
    %2859 = vmatpush1.bf16.msra.mxu0 %v2047
    %2860 = vmatprep.subr.bf16.mxu0 %v2052
    %2861 = vmatpush1.bf16.msra.mxu0 %v2051
    %2862 = vmatprep.subr.bf16.mxu0 0
    %2863 = vmatpush1.bf16.msra.mxu0 0
    %2864 = vmatprep.subr.bf16.mxu0 0
    %2865 = vmatpush1.bf16.msra.mxu0 0
    %2866 = vmatprep.subr.bf16.mxu0 0
    %2867 = vmatpush1.bf16.msra.mxu0 0
    %2868 = vmatprep.subr.bf16.mxu0 0
    %2869 = vmatpush1.bf16.msra.mxu0 0
    %2870 = vmatprep.subr.bf16.mxu0 0
    %2871 = vmatpush1.bf16.msra.mxu0 0
    %2872 = vmatprep.subr.bf16.mxu0 0
    %2873 = vmatpush1.bf16.msra.mxu0 0
    %2874 = vmatprep.subr.bf16.mxu0 0
    %2875 = vmatpush1.bf16.msra.mxu0 0
    %2876 = vmatprep.subr.bf16.mxu0 0
    %2877 = vmatpush1.bf16.msra.mxu0 0
    %2878 = vmatprep.mubr.bf16.mxu0 0
    %2879 = vmatmul.mubr.bf16.gmra.mrb[0].mxu0 %v2804
    %v2880 = vpop.f32.mrb[0].mxu0
    %v2881 = vadd.f32 0.0, %v2880
    %v2882 = vpop.f32.mrb[0].mxu0
    %v2883 = vadd.f32 0.0, %v2882
    %v2884 = vpop.f32.mrb[0].mxu0
    %v2885 = vpop.f32.mrb[0].mxu0
    %2886 = vdwg.mxu0
    %v2887 = vadd.f32 %v2800, %v2840
    %v2888 = vadd.f32 %v2801, %v2842
    %v2889 = vadd.f32 %v2802, %v2881
    %v2890 = vadd.f32 %v2803, %v2883
    %v2891 = vxor.u32 %v2887, 2147483648
    %v2892 = vmul.f32 %v2891, 1.442695
    %v2893 = vpow.pop %v2892
    %v2894 = vadd.f32 %v2893, 1.0
    %v2895 = vrcp.pop %v2894
    %v2896 = vmul.f32 1.0, %v2895
    %v2897 = vxor.u32 %v2888, 2147483648
    %v2898 = vmul.f32 %v2897, 1.442695
    %v2899 = vpow.pop %v2898
    %v2900 = vadd.f32 %v2899, 1.0
    %v2901 = vrcp.pop %v2900
    %v2902 = vmul.f32 1.0, %v2901
    %v2903 = vtanh.pop %v2889
    %v2904 = vxor.u32 %v2890, 2147483648
    %v2905 = vmul.f32 %v2904, 1.442695
    %v2906 = vpow.pop %v2905
    %v2907 = vadd.f32 %v2906, 1.0
    %v2908 = vrcp.pop %v2907
    %v2909 = vmul.f32 1.0, %v2908
    %v2910 = vmul.f32 %v2902, %v2799
    %v2911 = vmul.f32 %v2896, %v2903
    %v2912 = vadd.f32 %v2910, %v2911
    %v2913 = vtanh.pop %v2912
    %v2914 = vmul.f32 %v2909, %v2913
    %2915 = vst [vmem:[#allocation3] sm:$0xff] %v2914
    %2916 = vst [vmem:[#allocation4] sm:$0xff] %v2912
    %2917 = vst [vmem:[%s1479] sm:$0xff] %v2914
    %v2918 = vld [vmem:[#allocation3] sm:$0xff]
    %s2919 = scalar_lea.vmem [#allocation5], 8
    %2920 = vst [vmem:[%s2919] sm:$0xff] %v2918
    %v2921 = vld [vmem:[#allocation4] sm:$0xff]
    %s2922 = scalar_lea.vmem [#allocation7], 8
    %2923 = vst [vmem:[%s2922] sm:$0xff] %v2921
    // Predicated region
    $region38: #{s2s_forward.4} parent=1 // pred_check
      _
    $region39: #{s2s_forward.4} parent=1 // pred_check_branch
      %2925 = sbr.rel (0) target = $region41
    $region40: #{s2s_forward.4} parent=1 // pred_region
      _
    $region41: #{s2s_forward.4} parent=1 // pred_fallthru
      _
    // Predicated region
    $region42: #{s2s_forward.4} parent=1 // pred_check
      _
    $region43: #{s2s_forward.4} parent=1 // pred_check_branch
      %2927 = sbr.rel (0) target = $region45
    $region44: #{s2s_forward.4} parent=1 // pred_region
      %s2929 = ssub.s32 256, 256
      %2930 = vsyncadd [#allocation6], %s2929
      %s2931 = sshll.u32 [#allocation5], 4
      %s2932 = int_to_ptr.vmem [resolvable:$true] %s2931
      %2937 = dma.vmem_to_hbm [thread:$0]  %s2932, 256, %s10, [#allocation6], 128, 128, 8
    $region45: #{s2s_forward.4} parent=1 // pred_fallthru
      _
    // Predicated region
    $region46: #{s2s_forward.4} parent=1 // pred_check
      _
    $region47: #{s2s_forward.4} parent=1 // pred_check_branch
      %2939 = sbr.rel (0) target = $region49
    $region48: #{s2s_forward.4} parent=1 // pred_region
      %s2941 = ssub.s32 256, 256
      %2942 = vsyncadd [#allocation8], %s2941
      %s2943 = sshll.u32 [#allocation7], 4
      %s2944 = int_to_ptr.vmem [resolvable:$true] %s2943
      %2949 = dma.vmem_to_hbm [thread:$0]  %s2944, 256, %s11, [#allocation8], 128, 128, 8
    $region49: #{s2s_forward.4} parent=1 // pred_fallthru
      _
    // Predicated region
    $region50: #{s2s_forward.4} parent=1 // pred_check
      _
    $region51: #{s2s_forward.4} parent=1 // pred_check_branch
      %2951 = sbr.rel (0) target = $region53
    $region52: #{s2s_forward.4} parent=1 // pred_region
      _
    $region53: #{s2s_forward.4} parent=1 // pred_fallthru
      _
    // Predicated region
    $region54: #{s2s_forward.4} parent=1 // pred_check
      _
    $region55: #{s2s_forward.4} parent=1 // pred_check_branch
      %2953 = sbr.rel (0) target = $region57
    $region56: #{s2s_forward.4} parent=1 // pred_region
      %2954 = dma.done [#allocation6], 256
    $region57: #{s2s_forward.4} parent=1 // pred_fallthru
      _
    // Predicated region
    $region58: #{s2s_forward.4} parent=1 // pred_check
      _
    $region59: #{s2s_forward.4} parent=1 // pred_check_branch
      %2956 = sbr.rel (0) target = $region61
    $region60: #{s2s_forward.4} parent=1 // pred_region
      %2957 = dma.done [#allocation8], 256
    $region61: #{s2s_forward.4} parent=1 // pred_fallthru
      _
    %2958 = vsyncpa [#allocation6], 1
    %2959 = vsyncpa [#allocation8], 1

// kernel: s2s_forward.3
$region0: #{s2s_forward.3}
  #allocation0 [shape = 'u32[]', space=smem, size = 0x4, offset = 0x4, fixed_abs, tag = 'smem constant byte address 0x4 - core index']
  #allocation1 [shape = 'u32[144,128]{1,0:T(1,128)}', space=vmem, size = 0x12000, scoped, tag = 'internal scratch']
  #allocation2 [shape = 'f32[8,8,512]{2,1,0:T(8,128)}', space=vmem, size = 0x20000, scoped, tag = 'scratch operand']
  #allocation3 [shape = 'f32[8,128]{1,0:T(8,128)}', space=vmem, size = 0x1000, scoped, tag = 'scratch operand']
  #allocation4 [shape = 'f32[8,128]{1,0:T(8,128)}', space=vmem, size = 0x1000, scoped, tag = 'scratch operand']
  %s0 = inlined_call_operand.vmem [shape: f32[8,8,128], index: 0, kind: input, shape index: {}]
  %s1 = inlined_call_operand.vmem [shape: f32[2,8,128], index: 1, kind: input, shape index: {}]
  %s2 = inlined_call_operand.vmem [shape: f32[2,8,128], index: 2, kind: input, shape index: {}]
  %s3 = inlined_call_operand.vmem [shape: bf16[128,512], index: 3, kind: input, shape index: {}]
  %s4 = inlined_call_operand.vmem [shape: bf16[128,512], index: 4, kind: input, shape index: {}]
  %s5 = inlined_call_operand.vmem [shape: f32[1,512], index: 5, kind: input, shape index: {}]
  %s6 = inlined_call_operand.vmem [shape: bf16[128,512], index: 6, kind: input, shape index: {}]
  %s7 = inlined_call_operand.vmem [shape: bf16[128,512], index: 7, kind: input, shape index: {}]
  %s8 = inlined_call_operand.vmem [shape: f32[1,512], index: 8, kind: input, shape index: {}]
  %s9 = inlined_call_operand.hbm [shape: f32[8,8,128], index: 9, kind: output, shape index: {0}]
  %s10 = inlined_call_operand.vmem [shape: f32[2,8,128], index: 10, kind: output, shape index: {1}]
  %s11 = inlined_call_operand.vmem [shape: f32[2,8,128], index: 11, kind: output, shape index: {2}]
  %12 = xla_tuple %s9, %s10, %s11
  %s13 = sld [smem:[#allocation0]]
  $region62: #{s2s_forward.3} parent=0
    _
  %s15 = ssub.s32 1, %s13
  %s16 = scalar_select 0, %s15, %s13
  $region1: #{s2s_forward.3} parent=0
    #allocation5 [shape = 'u8[32768]{0}', space=vmem, size = 0x8000, scoped, tag = 'output window, operand 0, single buffered']
    #allocation6 [shape = 's32[1]{0}', space=sflag, size = 0x4, scoped, tag = 'scoped memory for s2s_forward.3']
    %17 = vsyncpa [#allocation6], 0
    // Predicated region
    $region2: #{s2s_forward.3} parent=1 // pred_check
      _
    $region3: #{s2s_forward.3} parent=1 // pred_check_branch
      %19 = sbr.rel (0) target = $region5
    $region4: #{s2s_forward.3} parent=1 // pred_region
      _
    $region5: #{s2s_forward.3} parent=1 // pred_fallthru
      _
    // Predicated region
    $region6: #{s2s_forward.3} parent=1 // pred_check
      _
    $region7: #{s2s_forward.3} parent=1 // pred_check_branch
      %21 = sbr.rel (0) target = $region9
    $region8: #{s2s_forward.3} parent=1 // pred_region
      _
    $region9: #{s2s_forward.3} parent=1 // pred_fallthru
      _
    // Predicated region
    $region10: #{s2s_forward.3} parent=1 // pred_check
      _
    $region11: #{s2s_forward.3} parent=1 // pred_check_branch
      %23 = sbr.rel (0) target = $region13
    $region12: #{s2s_forward.3} parent=1 // pred_region
      _
    $region13: #{s2s_forward.3} parent=1 // pred_fallthru
      _
    // Predicated region
    $region14: #{s2s_forward.3} parent=1 // pred_check
      _
    $region15: #{s2s_forward.3} parent=1 // pred_check_branch
      %25 = sbr.rel (0) target = $region17
    $region16: #{s2s_forward.3} parent=1 // pred_region
      _
    $region17: #{s2s_forward.3} parent=1 // pred_fallthru
      _
    // Predicated region
    $region18: #{s2s_forward.3} parent=1 // pred_check
      _
    $region19: #{s2s_forward.3} parent=1 // pred_check_branch
      %27 = sbr.rel (0) target = $region21
    $region20: #{s2s_forward.3} parent=1 // pred_region
      _
    $region21: #{s2s_forward.3} parent=1 // pred_fallthru
      _
    // Predicated region
    $region22: #{s2s_forward.3} parent=1 // pred_check
      _
    $region23: #{s2s_forward.3} parent=1 // pred_check_branch
      %29 = sbr.rel (0) target = $region25
    $region24: #{s2s_forward.3} parent=1 // pred_region
      _
    $region25: #{s2s_forward.3} parent=1 // pred_fallthru
      _
    // Predicated region
    $region26: #{s2s_forward.3} parent=1 // pred_check
      _
    $region27: #{s2s_forward.3} parent=1 // pred_check_branch
      %31 = sbr.rel (0) target = $region29
    $region28: #{s2s_forward.3} parent=1 // pred_region
      _
    $region29: #{s2s_forward.3} parent=1 // pred_fallthru
      _
    // Predicated region
    $region30: #{s2s_forward.3} parent=1 // pred_check
      _
    $region31: #{s2s_forward.3} parent=1 // pred_check_branch
      %33 = sbr.rel (0) target = $region33
    $region32: #{s2s_forward.3} parent=1 // pred_region
      _
    $region33: #{s2s_forward.3} parent=1 // pred_fallthru
      _
    // Predicated region
    $region34: #{s2s_forward.3} parent=1 // pred_check
      _
    $region35: #{s2s_forward.3} parent=1 // pred_check_branch
      %35 = sbr.rel (0) target = $region37
    $region36: #{s2s_forward.3} parent=1 // pred_region
      _
    $region37: #{s2s_forward.3} parent=1 // pred_fallthru
      _
    %v37 = vld [vmem:[%s0] sm:$0xff]
    %v38 = vld [vmem:[%s0 + $0x8] sm:$0xff]
    %v39 = vld [vmem:[%s0 + $0x10] sm:$0xff]
    %v40 = vld [vmem:[%s0 + $0x18] sm:$0xff]
    %v41 = vld [vmem:[%s0 + $0x20] sm:$0xff]
    %v42 = vld [vmem:[%s0 + $0x28] sm:$0xff]
    %v43 = vld [vmem:[%s0 + $0x30] sm:$0xff]
    %v44 = vld [vmem:[%s0 + $0x38] sm:$0xff]
    %v45 = vpack.c.bf16 %v38, %v37
    %v46 = vpack.c.bf16 %v40, %v39
    %v47 = vpack.c.bf16 %v42, %v41
    %v48 = vpack.c.bf16 %v44, %v43
    %v49 = vld [vmem:[%s3] sm:$0xff]
    %v50 = vld [vmem:[%s3 + $0x8] sm:$0xff]
    %v51 = vld [vmem:[%s3 + $0x10] sm:$0xff]
    %v52 = vld [vmem:[%s3 + $0x18] sm:$0xff]
    %v53 = vld [vmem:[%s3 + $0x20] sm:$0xff]
    %v54 = vld [vmem:[%s3 + $0x28] sm:$0xff]
    %v55 = vld [vmem:[%s3 + $0x30] sm:$0xff]
    %v56 = vld [vmem:[%s3 + $0x38] sm:$0xff]
    %v57 = vld [vmem:[%s3 + $0x40] sm:$0xff]
    %v58 = vld [vmem:[%s3 + $0x48] sm:$0xff]
    %v59 = vld [vmem:[%s3 + $0x50] sm:$0xff]
    %v60 = vld [vmem:[%s3 + $0x58] sm:$0xff]
    %v61 = vld [vmem:[%s3 + $0x60] sm:$0xff]
    %v62 = vld [vmem:[%s3 + $0x68] sm:$0xff]
    %v63 = vld [vmem:[%s3 + $0x70] sm:$0xff]
    %v64 = vld [vmem:[%s3 + $0x78] sm:$0xff]
    %v65 = vld [vmem:[%s3 + $0x80] sm:$0xff]
    %v66 = vld [vmem:[%s3 + $0x88] sm:$0xff]
    %v67 = vld [vmem:[%s3 + $0x90] sm:$0xff]
    %v68 = vld [vmem:[%s3 + $0x98] sm:$0xff]
    %v69 = vld [vmem:[%s3 + $0xa0] sm:$0xff]
    %v70 = vld [vmem:[%s3 + $0xa8] sm:$0xff]
    %v71 = vld [vmem:[%s3 + $0xb0] sm:$0xff]
    %v72 = vld [vmem:[%s3 + $0xb8] sm:$0xff]
    %v73 = vld [vmem:[%s3 + $0xc0] sm:$0xff]
    %v74 = vld [vmem:[%s3 + $0xc8] sm:$0xff]
    %v75 = vld [vmem:[%s3 + $0xd0] sm:$0xff]
    %v76 = vld [vmem:[%s3 + $0xd8] sm:$0xff]
    %v77 = vld [vmem:[%s3 + $0xe0] sm:$0xff]
    %v78 = vld [vmem:[%s3 + $0xe8] sm:$0xff]
    %v79 = vld [vmem:[%s3 + $0xf0] sm:$0xff]
    %v80 = vld [vmem:[%s3 + $0xf8] sm:$0xff]
    %v81 = vld [vmem:[%s5] sm:$0xf]
    %v83 = vlaneseq
    %v84 = vshrl.u32 %v83, 7
    %v85 = vsub.s32 0, %v84
    %v86 = vrot.slane %v81, %v85
    %v87 = vlaneseq
    %v88 = vshrl.u32 %v87, 7
    %v89 = vsub.s32 1, %v88
    %v90 = vrot.slane %v81, %v89
    %v91 = vlaneseq
    %v92 = vshrl.u32 %v91, 7
    %v93 = vsub.s32 2, %v92
    %v94 = vrot.slane %v81, %v93
    %v95 = vlaneseq
    %v96 = vshrl.u32 %v95, 7
    %v97 = vsub.s32 3, %v96
    %v98 = vrot.slane %v81, %v97
    %v135 = vunpack.c.l.b16 %v49
    %v136 = vunpack.c.h.b16 %v49
    %v137 = vunpack.c.l.b16 %v50
    %v138 = vunpack.c.h.b16 %v50
    %v139 = vunpack.c.l.b16 %v51
    %v140 = vunpack.c.h.b16 %v51
    %v141 = vunpack.c.l.b16 %v52
    %v142 = vunpack.c.h.b16 %v52
    %v143 = vunpack.c.l.b16 %v53
    %v144 = vunpack.c.h.b16 %v53
    %v145 = vunpack.c.l.b16 %v54
    %v146 = vunpack.c.h.b16 %v54
    %v147 = vunpack.c.l.b16 %v55
    %v148 = vunpack.c.h.b16 %v55
    %v149 = vunpack.c.l.b16 %v56
    %v150 = vunpack.c.h.b16 %v56
    %v151 = vunpack.c.l.b16 %v57
    %v152 = vunpack.c.h.b16 %v57
    %v153 = vunpack.c.l.b16 %v58
    %v154 = vunpack.c.h.b16 %v58
    %v155 = vunpack.c.l.b16 %v59
    %v156 = vunpack.c.h.b16 %v59
    %v157 = vunpack.c.l.b16 %v60
    %v158 = vunpack.c.h.b16 %v60
    %v159 = vunpack.c.l.b16 %v61
    %v160 = vunpack.c.h.b16 %v61
    %v161 = vunpack.c.l.b16 %v62
    %v162 = vunpack.c.h.b16 %v62
    %v163 = vunpack.c.l.b16 %v63
    %v164 = vunpack.c.h.b16 %v63
    %v165 = vunpack.c.l.b16 %v64
    %v166 = vunpack.c.h.b16 %v64
    %v167 = vunpack.c.l.b16 %v65
    %v168 = vunpack.c.h.b16 %v65
    %v169 = vunpack.c.l.b16 %v66
    %v170 = vunpack.c.h.b16 %v66
    %v171 = vunpack.c.l.b16 %v67
    %v172 = vunpack.c.h.b16 %v67
    %v173 = vunpack.c.l.b16 %v68
    %v174 = vunpack.c.h.b16 %v68
    %v175 = vunpack.c.l.b16 %v69
    %v176 = vunpack.c.h.b16 %v69
    %v177 = vunpack.c.l.b16 %v70
    %v178 = vunpack.c.h.b16 %v70
    %v179 = vunpack.c.l.b16 %v71
    %v180 = vunpack.c.h.b16 %v71
    %v181 = vunpack.c.l.b16 %v72
    %v182 = vunpack.c.h.b16 %v72
    %v183 = vunpack.c.l.b16 %v73
    %v184 = vunpack.c.h.b16 %v73
    %v185 = vunpack.c.l.b16 %v74
    %v186 = vunpack.c.h.b16 %v74
    %v187 = vunpack.c.l.b16 %v75
    %v188 = vunpack.c.h.b16 %v75
    %v189 = vunpack.c.l.b16 %v76
    %v190 = vunpack.c.h.b16 %v76
    %v191 = vunpack.c.l.b16 %v77
    %v192 = vunpack.c.h.b16 %v77
    %v193 = vunpack.c.l.b16 %v78
    %v194 = vunpack.c.h.b16 %v78
    %v195 = vunpack.c.l.b16 %v79
    %v196 = vunpack.c.h.b16 %v79
    %v197 = vunpack.c.l.b16 %v80
    %v198 = vunpack.c.h.b16 %v80
    %v199 = vpack.c.b16 %v139, %v135
    %v200 = vpack.c.b16 %v140, %v136
    %v201 = vpack.c.b16 %v141, %v137
    %v202 = vpack.c.b16 %v142, %v138
    %v203 = vpack.c.b16 %v147, %v143
    %v204 = vpack.c.b16 %v148, %v144
    %v205 = vpack.c.b16 %v149, %v145
    %v206 = vpack.c.b16 %v150, %v146
    %v207 = vpack.c.b16 %v155, %v151
    %v208 = vpack.c.b16 %v156, %v152
    %v209 = vpack.c.b16 %v157, %v153
    %v210 = vpack.c.b16 %v158, %v154
    %v211 = vpack.c.b16 %v163, %v159
    %v212 = vpack.c.b16 %v164, %v160
    %v213 = vpack.c.b16 %v165, %v161
    %v214 = vpack.c.b16 %v166, %v162
    %v215 = vpack.c.b16 %v171, %v167
    %v216 = vpack.c.b16 %v172, %v168
    %v217 = vpack.c.b16 %v173, %v169
    %v218 = vpack.c.b16 %v174, %v170
    %v219 = vpack.c.b16 %v179, %v175
    %v220 = vpack.c.b16 %v180, %v176
    %v221 = vpack.c.b16 %v181, %v177
    %v222 = vpack.c.b16 %v182, %v178
    %v223 = vpack.c.b16 %v187, %v183
    %v224 = vpack.c.b16 %v188, %v184
    %v225 = vpack.c.b16 %v189, %v185
    %v226 = vpack.c.b16 %v190, %v186
    %v227 = vpack.c.b16 %v195, %v191
    %v228 = vpack.c.b16 %v196, %v192
    %v229 = vpack.c.b16 %v197, %v193
    %v230 = vpack.c.b16 %v198, %v194
    %263 = vmatprep.subr.bf16.mxu0 %v200
    %264 = vmatpush1.bf16.msra.mxu0 %v199
    %265 = vmatprep.subr.bf16.mxu0 %v204
    %266 = vmatpush1.bf16.msra.mxu0 %v203
    %267 = vmatprep.subr.bf16.mxu0 %v208
    %268 = vmatpush1.bf16.msra.mxu0 %v207
    %269 = vmatprep.subr.bf16.mxu0 %v212
    %270 = vmatpush1.bf16.msra.mxu0 %v211
    %271 = vmatprep.subr.bf16.mxu0 %v216
    %272 = vmatpush1.bf16.msra.mxu0 %v215
    %273 = vmatprep.subr.bf16.mxu0 %v220
    %274 = vmatpush1.bf16.msra.mxu0 %v219
    %275 = vmatprep.subr.bf16.mxu0 %v224
    %276 = vmatpush1.bf16.msra.mxu0 %v223
    %277 = vmatprep.subr.bf16.mxu0 %v228
    %278 = vmatpush1.bf16.msra.mxu0 %v227
    %279 = vmatprep.subr.bf16.mxu0 0
    %280 = vmatpush1.bf16.msra.mxu0 0
    %281 = vmatprep.subr.bf16.mxu0 0
    %282 = vmatpush1.bf16.msra.mxu0 0
    %283 = vmatprep.subr.bf16.mxu0 0
    %284 = vmatpush1.bf16.msra.mxu0 0
    %285 = vmatprep.subr.bf16.mxu0 0
    %286 = vmatpush1.bf16.msra.mxu0 0
    %287 = vmatprep.subr.bf16.mxu0 0
    %288 = vmatpush1.bf16.msra.mxu0 0
    %289 = vmatprep.subr.bf16.mxu0 0
    %290 = vmatpush1.bf16.msra.mxu0 0
    %291 = vmatprep.subr.bf16.mxu0 0
    %292 = vmatpush1.bf16.msra.mxu0 0
    %293 = vmatprep.subr.bf16.mxu0 0
    %294 = vmatpush1.bf16.msra.mxu0 0
    %295 = vmatprep.mubr.bf16.mxu0 0
    %296 = vmatmul.mubr.bf16.gmra.mrb[0].mxu0 %v45
    %v297 = vpop.f32.mrb[0].mxu0
    %v298 = vadd.f32 %v86, %v297
    %v299 = vpop.f32.mrb[0].mxu0
    %v300 = vadd.f32 %v90, %v299
    %v301 = vpop.f32.mrb[0].mxu0
    %v302 = vadd.f32 %v86, %v301
    %v303 = vpop.f32.mrb[0].mxu0
    %v304 = vadd.f32 %v90, %v303
    %305 = vmatprep.mubr.bf16.mxu0 0
    %306 = vmatmul.mubr.bf16.gmra.mrb[0].mxu0 %v46
    %v307 = vpop.f32.mrb[0].mxu0
    %v308 = vadd.f32 %v86, %v307
    %v309 = vpop.f32.mrb[0].mxu0
    %v310 = vadd.f32 %v90, %v309
    %v311 = vpop.f32.mrb[0].mxu0
    %v312 = vadd.f32 %v86, %v311
    %v313 = vpop.f32.mrb[0].mxu0
    %v314 = vadd.f32 %v90, %v313
    %315 = vmatprep.mubr.bf16.mxu0 0
    %316 = vmatmul.mubr.bf16.gmra.mrb[0].mxu0 %v47
    %v317 = vpop.f32.mrb[0].mxu0
    %v318 = vadd.f32 %v86, %v317
    %v319 = vpop.f32.mrb[0].mxu0
    %v320 = vadd.f32 %v90, %v319
    %v321 = vpop.f32.mrb[0].mxu0
    %v322 = vadd.f32 %v86, %v321
    %v323 = vpop.f32.mrb[0].mxu0
    %v324 = vadd.f32 %v90, %v323
    %325 = vmatprep.mubr.bf16.mxu0 0
    %326 = vmatmul.mubr.bf16.gmra.mrb[0].mxu0 %v48
    %v327 = vpop.f32.mrb[0].mxu0
    %v328 = vadd.f32 %v86, %v327
    %v329 = vpop.f32.mrb[0].mxu0
    %v330 = vadd.f32 %v90, %v329
    %v331 = vpop.f32.mrb[0].mxu0
    %v332 = vadd.f32 %v86, %v331
    %v333 = vpop.f32.mrb[0].mxu0
    %v334 = vadd.f32 %v90, %v333
    %335 = vdwg.mxu0
    %336 = vmatprep.subr.bf16.mxu0 %v202
    %337 = vmatpush1.bf16.msra.mxu0 %v201
    %338 = vmatprep.subr.bf16.mxu0 %v206
    %339 = vmatpush1.bf16.msra.mxu0 %v205
    %340 = vmatprep.subr.bf16.mxu0 %v210
    %341 = vmatpush1.bf16.msra.mxu0 %v209
    %342 = vmatprep.subr.bf16.mxu0 %v214
    %343 = vmatpush1.bf16.msra.mxu0 %v213
    %344 = vmatprep.subr.bf16.mxu0 %v218
    %345 = vmatpush1.bf16.msra.mxu0 %v217
    %346 = vmatprep.subr.bf16.mxu0 %v222
    %347 = vmatpush1.bf16.msra.mxu0 %v221
    %348 = vmatprep.subr.bf16.mxu0 %v226
    %349 = vmatpush1.bf16.msra.mxu0 %v225
    %350 = vmatprep.subr.bf16.mxu0 %v230
    %351 = vmatpush1.bf16.msra.mxu0 %v229
    %352 = vmatprep.subr.bf16.mxu0 0
    %353 = vmatpush1.bf16.msra.mxu0 0
    %354 = vmatprep.subr.bf16.mxu0 0
    %355 = vmatpush1.bf16.msra.mxu0 0
    %356 = vmatprep.subr.bf16.mxu0 0
    %357 = vmatpush1.bf16.msra.mxu0 0
    %358 = vmatprep.subr.bf16.mxu0 0
    %359 = vmatpush1.bf16.msra.mxu0 0
    %360 = vmatprep.subr.bf16.mxu0 0
    %361 = vmatpush1.bf16.msra.mxu0 0
    %362 = vmatprep.subr.bf16.mxu0 0
    %363 = vmatpush1.bf16.msra.mxu0 0
    %364 = vmatprep.subr.bf16.mxu0 0
    %365 = vmatpush1.bf16.msra.mxu0 0
    %366 = vmatprep.subr.bf16.mxu0 0
    %367 = vmatpush1.bf16.msra.mxu0 0
    %368 = vmatprep.mubr.bf16.mxu0 0
    %369 = vmatmul.mubr.bf16.gmra.mrb[0].mxu0 %v45
    %v370 = vpop.f32.mrb[0].mxu0
    %v371 = vadd.f32 %v94, %v370
    %v372 = vpop.f32.mrb[0].mxu0
    %v373 = vadd.f32 %v98, %v372
    %v374 = vpop.f32.mrb[0].mxu0
    %v375 = vadd.f32 %v94, %v374
    %v376 = vpop.f32.mrb[0].mxu0
    %v377 = vadd.f32 %v98, %v376
    %378 = vmatprep.mubr.bf16.mxu0 0
    %379 = vmatmul.mubr.bf16.gmra.mrb[0].mxu0 %v46
    %v380 = vpop.f32.mrb[0].mxu0
    %v381 = vadd.f32 %v94, %v380
    %v382 = vpop.f32.mrb[0].mxu0
    %v383 = vadd.f32 %v98, %v382
    %v384 = vpop.f32.mrb[0].mxu0
    %v385 = vadd.f32 %v94, %v384
    %v386 = vpop.f32.mrb[0].mxu0
    %v387 = vadd.f32 %v98, %v386
    %388 = vmatprep.mubr.bf16.mxu0 0
    %389 = vmatmul.mubr.bf16.gmra.mrb[0].mxu0 %v47
    %v390 = vpop.f32.mrb[0].mxu0
    %v391 = vadd.f32 %v94, %v390
    %v392 = vpop.f32.mrb[0].mxu0
    %v393 = vadd.f32 %v98, %v392
    %v394 = vpop.f32.mrb[0].mxu0
    %v395 = vadd.f32 %v94, %v394
    %v396 = vpop.f32.mrb[0].mxu0
    %v397 = vadd.f32 %v98, %v396
    %398 = vmatprep.mubr.bf16.mxu0 0
    %399 = vmatmul.mubr.bf16.gmra.mrb[0].mxu0 %v48
    %v400 = vpop.f32.mrb[0].mxu0
    %v401 = vadd.f32 %v94, %v400
    %v402 = vpop.f32.mrb[0].mxu0
    %v403 = vadd.f32 %v98, %v402
    %v404 = vpop.f32.mrb[0].mxu0
    %v405 = vadd.f32 %v94, %v404
    %v406 = vpop.f32.mrb[0].mxu0
    %v407 = vadd.f32 %v98, %v406
    %408 = vdwg.mxu0
    %409 = vst [vmem:[#allocation2] sm:$0xff] %v298
    %410 = vst [vmem:[#allocation2 + $0x8] sm:$0xff] %v300
    %411 = vst [vmem:[#allocation2 + $0x10] sm:$0xff] %v371
    %412 = vst [vmem:[#allocation2 + $0x18] sm:$0xff] %v373
    %413 = vst [vmem:[#allocation2 + $0x20] sm:$0xff] %v302
    %414 = vst [vmem:[#allocation2 + $0x28] sm:$0xff] %v304
    %415 = vst [vmem:[#allocation2 + $0x30] sm:$0xff] %v375
    %416 = vst [vmem:[#allocation2 + $0x38] sm:$0xff] %v377
    %417 = vst [vmem:[#allocation2 + $0x40] sm:$0xff] %v308
    %418 = vst [vmem:[#allocation2 + $0x48] sm:$0xff] %v310
    %419 = vst [vmem:[#allocation2 + $0x50] sm:$0xff] %v381
    %420 = vst [vmem:[#allocation2 + $0x58] sm:$0xff] %v383
    %421 = vst [vmem:[#allocation2 + $0x60] sm:$0xff] %v312
    %422 = vst [vmem:[#allocation2 + $0x68] sm:$0xff] %v314
    %423 = vst [vmem:[#allocation2 + $0x70] sm:$0xff] %v385
    %424 = vst [vmem:[#allocation2 + $0x78] sm:$0xff] %v387
    %425 = vst [vmem:[#allocation2 + $0x80] sm:$0xff] %v318
    %426 = vst [vmem:[#allocation2 + $0x88] sm:$0xff] %v320
    %427 = vst [vmem:[#allocation2 + $0x90] sm:$0xff] %v391
    %428 = vst [vmem:[#allocation2 + $0x98] sm:$0xff] %v393
    %429 = vst [vmem:[#allocation2 + $0xa0] sm:$0xff] %v322
    %430 = vst [vmem:[#allocation2 + $0xa8] sm:$0xff] %v324
    %431 = vst [vmem:[#allocation2 + $0xb0] sm:$0xff] %v395
    %432 = vst [vmem:[#allocation2 + $0xb8] sm:$0xff] %v397
    %433 = vst [vmem:[#allocation2 + $0xc0] sm:$0xff] %v328
    %434 = vst [vmem:[#allocation2 + $0xc8] sm:$0xff] %v330
    %435 = vst [vmem:[#allocation2 + $0xd0] sm:$0xff] %v401
    %436 = vst [vmem:[#allocation2 + $0xd8] sm:$0xff] %v403
    %437 = vst [vmem:[#allocation2 + $0xe0] sm:$0xff] %v332
    %438 = vst [vmem:[#allocation2 + $0xe8] sm:$0xff] %v334
    %439 = vst [vmem:[#allocation2 + $0xf0] sm:$0xff] %v405
    %440 = vst [vmem:[#allocation2 + $0xf8] sm:$0xff] %v407
    %v441 = vld [vmem:[%s1] sm:$0xff]
    %442 = vst [vmem:[#allocation3] sm:$0xff] %v441
    %v443 = vld [vmem:[%s2] sm:$0xff]
    %444 = vst [vmem:[#allocation4] sm:$0xff] %v443
    %v445 = vld [vmem:[%s4] sm:$0xff]
    %v446 = vld [vmem:[%s4 + $0x8] sm:$0xff]
    %v447 = vld [vmem:[%s4 + $0x10] sm:$0xff]
    %v448 = vld [vmem:[%s4 + $0x18] sm:$0xff]
    %v449 = vld [vmem:[%s4 + $0x20] sm:$0xff]
    %v450 = vld [vmem:[%s4 + $0x28] sm:$0xff]
    %v451 = vld [vmem:[%s4 + $0x30] sm:$0xff]
    %v452 = vld [vmem:[%s4 + $0x38] sm:$0xff]
    %v453 = vld [vmem:[%s4 + $0x40] sm:$0xff]
    %v454 = vld [vmem:[%s4 + $0x48] sm:$0xff]
    %v455 = vld [vmem:[%s4 + $0x50] sm:$0xff]
    %v456 = vld [vmem:[%s4 + $0x58] sm:$0xff]
    %v457 = vld [vmem:[%s4 + $0x60] sm:$0xff]
    %v458 = vld [vmem:[%s4 + $0x68] sm:$0xff]
    %v459 = vld [vmem:[%s4 + $0x70] sm:$0xff]
    %v460 = vld [vmem:[%s4 + $0x78] sm:$0xff]
    %v461 = vld [vmem:[%s4 + $0x80] sm:$0xff]
    %v462 = vld [vmem:[%s4 + $0x88] sm:$0xff]
    %v463 = vld [vmem:[%s4 + $0x90] sm:$0xff]
    %v464 = vld [vmem:[%s4 + $0x98] sm:$0xff]
    %v465 = vld [vmem:[%s4 + $0xa0] sm:$0xff]
    %v466 = vld [vmem:[%s4 + $0xa8] sm:$0xff]
    %v467 = vld [vmem:[%s4 + $0xb0] sm:$0xff]
    %v468 = vld [vmem:[%s4 + $0xb8] sm:$0xff]
    %v469 = vld [vmem:[%s4 + $0xc0] sm:$0xff]
    %v470 = vld [vmem:[%s4 + $0xc8] sm:$0xff]
    %v471 = vld [vmem:[%s4 + $0xd0] sm:$0xff]
    %v472 = vld [vmem:[%s4 + $0xd8] sm:$0xff]
    %v473 = vld [vmem:[%s4 + $0xe0] sm:$0xff]
    %v474 = vld [vmem:[%s4 + $0xe8] sm:$0xff]
    %v475 = vld [vmem:[%s4 + $0xf0] sm:$0xff]
    %v476 = vld [vmem:[%s4 + $0xf8] sm:$0xff]
    %v477 = vld [vmem:[#allocation3] sm:$0xff]
    %v478 = vld [vmem:[#allocation4] sm:$0xff]
    %v479 = vld [vmem:[#allocation2] sm:$0xff]
    %v480 = vld [vmem:[#allocation2 + $0x8] sm:$0xff]
    %v481 = vld [vmem:[#allocation2 + $0x10] sm:$0xff]
    %v482 = vld [vmem:[#allocation2 + $0x18] sm:$0xff]
    %v483 = vpack.c.bf16 %v477, %v477
    %v516 = vunpack.c.l.b16 %v445
    %v517 = vunpack.c.h.b16 %v445
    %v518 = vunpack.c.l.b16 %v446
    %v519 = vunpack.c.h.b16 %v446
    %v520 = vunpack.c.l.b16 %v447
    %v521 = vunpack.c.h.b16 %v447
    %v522 = vunpack.c.l.b16 %v448
    %v523 = vunpack.c.h.b16 %v448
    %v524 = vunpack.c.l.b16 %v449
    %v525 = vunpack.c.h.b16 %v449
    %v526 = vunpack.c.l.b16 %v450
    %v527 = vunpack.c.h.b16 %v450
    %v528 = vunpack.c.l.b16 %v451
    %v529 = vunpack.c.h.b16 %v451
    %v530 = vunpack.c.l.b16 %v452
    %v531 = vunpack.c.h.b16 %v452
    %v532 = vunpack.c.l.b16 %v453
    %v533 = vunpack.c.h.b16 %v453
    %v534 = vunpack.c.l.b16 %v454
    %v535 = vunpack.c.h.b16 %v454
    %v536 = vunpack.c.l.b16 %v455
    %v537 = vunpack.c.h.b16 %v455
    %v538 = vunpack.c.l.b16 %v456
    %v539 = vunpack.c.h.b16 %v456
    %v540 = vunpack.c.l.b16 %v457
    %v541 = vunpack.c.h.b16 %v457
    %v542 = vunpack.c.l.b16 %v458
    %v543 = vunpack.c.h.b16 %v458
    %v544 = vunpack.c.l.b16 %v459
    %v545 = vunpack.c.h.b16 %v459
    %v546 = vunpack.c.l.b16 %v460
    %v547 = vunpack.c.h.b16 %v460
    %v548 = vunpack.c.l.b16 %v461
    %v549 = vunpack.c.h.b16 %v461
    %v550 = vunpack.c.l.b16 %v462
    %v551 = vunpack.c.h.b16 %v462
    %v552 = vunpack.c.l.b16 %v463
    %v553 = vunpack.c.h.b16 %v463
    %v554 = vunpack.c.l.b16 %v464
    %v555 = vunpack.c.h.b16 %v464
    %v556 = vunpack.c.l.b16 %v465
    %v557 = vunpack.c.h.b16 %v465
    %v558 = vunpack.c.l.b16 %v466
    %v559 = vunpack.c.h.b16 %v466
    %v560 = vunpack.c.l.b16 %v467
    %v561 = vunpack.c.h.b16 %v467
    %v562 = vunpack.c.l.b16 %v468
    %v563 = vunpack.c.h.b16 %v468
    %v564 = vunpack.c.l.b16 %v469
    %v565 = vunpack.c.h.b16 %v469
    %v566 = vunpack.c.l.b16 %v470
    %v567 = vunpack.c.h.b16 %v470
    %v568 = vunpack.c.l.b16 %v471
    %v569 = vunpack.c.h.b16 %v471
    %v570 = vunpack.c.l.b16 %v472
    %v571 = vunpack.c.h.b16 %v472
    %v572 = vunpack.c.l.b16 %v473
    %v573 = vunpack.c.h.b16 %v473
    %v574 = vunpack.c.l.b16 %v474
    %v575 = vunpack.c.h.b16 %v474
    %v576 = vunpack.c.l.b16 %v475
    %v577 = vunpack.c.h.b16 %v475
    %v578 = vunpack.c.l.b16 %v476
    %v579 = vunpack.c.h.b16 %v476
    %v580 = vpack.c.b16 %v520, %v516
    %v581 = vpack.c.b16 %v521, %v517
    %v582 = vpack.c.b16 %v522, %v518
    %v583 = vpack.c.b16 %v523, %v519
    %v584 = vpack.c.b16 %v528, %v524
    %v585 = vpack.c.b16 %v529, %v525
    %v586 = vpack.c.b16 %v530, %v526
    %v587 = vpack.c.b16 %v531, %v527
    %v588 = vpack.c.b16 %v536, %v532
    %v589 = vpack.c.b16 %v537, %v533
    %v590 = vpack.c.b16 %v538, %v534
    %v591 = vpack.c.b16 %v539, %v535
    %v592 = vpack.c.b16 %v544, %v540
    %v593 = vpack.c.b16 %v545, %v541
    %v594 = vpack.c.b16 %v546, %v542
    %v595 = vpack.c.b16 %v547, %v543
    %v596 = vpack.c.b16 %v552, %v548
    %v597 = vpack.c.b16 %v553, %v549
    %v598 = vpack.c.b16 %v554, %v550
    %v599 = vpack.c.b16 %v555, %v551
    %v600 = vpack.c.b16 %v560, %v556
    %v601 = vpack.c.b16 %v561, %v557
    %v602 = vpack.c.b16 %v562, %v558
    %v603 = vpack.c.b16 %v563, %v559
    %v604 = vpack.c.b16 %v568, %v564
    %v605 = vpack.c.b16 %v569, %v565
    %v606 = vpack.c.b16 %v570, %v566
    %v607 = vpack.c.b16 %v571, %v567
    %v608 = vpack.c.b16 %v576, %v572
    %v609 = vpack.c.b16 %v577, %v573
    %v610 = vpack.c.b16 %v578, %v574
    %v611 = vpack.c.b16 %v579, %v575
    %644 = vmatprep.subr.bf16.mxu0 %v581
    %645 = vmatpush1.bf16.msra.mxu0 %v580
    %646 = vmatprep.subr.bf16.mxu0 %v585
    %647 = vmatpush1.bf16.msra.mxu0 %v584
    %648 = vmatprep.subr.bf16.mxu0 %v589
    %649 = vmatpush1.bf16.msra.mxu0 %v588
    %650 = vmatprep.subr.bf16.mxu0 %v593
    %651 = vmatpush1.bf16.msra.mxu0 %v592
    %652 = vmatprep.subr.bf16.mxu0 %v597
    %653 = vmatpush1.bf16.msra.mxu0 %v596
    %654 = vmatprep.subr.bf16.mxu0 %v601
    %655 = vmatpush1.bf16.msra.mxu0 %v600
    %656 = vmatprep.subr.bf16.mxu0 %v605
    %657 = vmatpush1.bf16.msra.mxu0 %v604
    %658 = vmatprep.subr.bf16.mxu0 %v609
    %659 = vmatpush1.bf16.msra.mxu0 %v608
    %660 = vmatprep.subr.bf16.mxu0 0
    %661 = vmatpush1.bf16.msra.mxu0 0
    %662 = vmatprep.subr.bf16.mxu0 0
    %663 = vmatpush1.bf16.msra.mxu0 0
    %664 = vmatprep.subr.bf16.mxu0 0
    %665 = vmatpush1.bf16.msra.mxu0 0
    %666 = vmatprep.subr.bf16.mxu0 0
    %667 = vmatpush1.bf16.msra.mxu0 0
    %668 = vmatprep.subr.bf16.mxu0 0
    %669 = vmatpush1.bf16.msra.mxu0 0
    %670 = vmatprep.subr.bf16.mxu0 0
    %671 = vmatpush1.bf16.msra.mxu0 0
    %672 = vmatprep.subr.bf16.mxu0 0
    %673 = vmatpush1.bf16.msra.mxu0 0
    %674 = vmatprep.subr.bf16.mxu0 0
    %675 = vmatpush1.bf16.msra.mxu0 0
    %676 = vmatprep.mubr.bf16.mxu0 0
    %677 = vmatmul.mubr.bf16.gmra.mrb[0].mxu0 %v483
    %v678 = vpop.f32.mrb[0].mxu0
    %v679 = vadd.f32 0.0, %v678
    %v680 = vpop.f32.mrb[0].mxu0
    %v681 = vadd.f32 0.0, %v680
    %v682 = vpop.f32.mrb[0].mxu0
    %v683 = vpop.f32.mrb[0].mxu0
    %684 = vdwg.mxu0
    %685 = vmatprep.subr.bf16.mxu0 %v583
    %686 = vmatpush1.bf16.msra.mxu0 %v582
    %687 = vmatprep.subr.bf16.mxu0 %v587
    %688 = vmatpush1.bf16.msra.mxu0 %v586
    %689 = vmatprep.subr.bf16.mxu0 %v591
    %690 = vmatpush1.bf16.msra.mxu0 %v590
    %691 = vmatprep.subr.bf16.mxu0 %v595
    %692 = vmatpush1.bf16.msra.mxu0 %v594
    %693 = vmatprep.subr.bf16.mxu0 %v599
    %694 = vmatpush1.bf16.msra.mxu0 %v598
    %695 = vmatprep.subr.bf16.mxu0 %v603
    %696 = vmatpush1.bf16.msra.mxu0 %v602
    %697 = vmatprep.subr.bf16.mxu0 %v607
    %698 = vmatpush1.bf16.msra.mxu0 %v606
    %699 = vmatprep.subr.bf16.mxu0 %v611
    %700 = vmatpush1.bf16.msra.mxu0 %v610
    %701 = vmatprep.subr.bf16.mxu0 0
    %702 = vmatpush1.bf16.msra.mxu0 0
    %703 = vmatprep.subr.bf16.mxu0 0
    %704 = vmatpush1.bf16.msra.mxu0 0
    %705 = vmatprep.subr.bf16.mxu0 0
    %706 = vmatpush1.bf16.msra.mxu0 0
    %707 = vmatprep.subr.bf16.mxu0 0
    %708 = vmatpush1.bf16.msra.mxu0 0
    %709 = vmatprep.subr.bf16.mxu0 0
    %710 = vmatpush1.bf16.msra.mxu0 0
    %711 = vmatprep.subr.bf16.mxu0 0
    %712 = vmatpush1.bf16.msra.mxu0 0
    %713 = vmatprep.subr.bf16.mxu0 0
    %714 = vmatpush1.bf16.msra.mxu0 0
    %715 = vmatprep.subr.bf16.mxu0 0
    %716 = vmatpush1.bf16.msra.mxu0 0
    %717 = vmatprep.mubr.bf16.mxu0 0
    %718 = vmatmul.mubr.bf16.gmra.mrb[0].mxu0 %v483
    %v719 = vpop.f32.mrb[0].mxu0
    %v720 = vadd.f32 0.0, %v719
    %v721 = vpop.f32.mrb[0].mxu0
    %v722 = vadd.f32 0.0, %v721
    %v723 = vpop.f32.mrb[0].mxu0
    %v724 = vpop.f32.mrb[0].mxu0
    %725 = vdwg.mxu0
    %v726 = vadd.f32 %v479, %v679
    %v727 = vadd.f32 %v480, %v681
    %v728 = vadd.f32 %v481, %v720
    %v729 = vadd.f32 %v482, %v722
    %v730 = vxor.u32 %v726, 2147483648
    %v731 = vmul.f32 %v730, 1.442695
    %v732 = vpow.pop %v731
    %v733 = vadd.f32 %v732, 1.0
    %v734 = vrcp.pop %v733
    %v735 = vmul.f32 1.0, %v734
    %v736 = vxor.u32 %v727, 2147483648
    %v737 = vmul.f32 %v736, 1.442695
    %v738 = vpow.pop %v737
    %v739 = vadd.f32 %v738, 1.0
    %v740 = vrcp.pop %v739
    %v741 = vmul.f32 1.0, %v740
    %v742 = vtanh.pop %v728
    %v743 = vxor.u32 %v729, 2147483648
    %v744 = vmul.f32 %v743, 1.442695
    %v745 = vpow.pop %v744
    %v746 = vadd.f32 %v745, 1.0
    %v747 = vrcp.pop %v746
    %v748 = vmul.f32 1.0, %v747
    %v749 = vmul.f32 %v741, %v478
    %v750 = vmul.f32 %v735, %v742
    %v751 = vadd.f32 %v749, %v750
    %v752 = vtanh.pop %v751
    %v753 = vmul.f32 %v748, %v752
    %754 = vst [vmem:[#allocation3] sm:$0xff] %v753
    %755 = vst [vmem:[#allocation4] sm:$0xff] %v751
    %756 = vst [vmem:[#allocation5] sm:$0xff] %v753
    %v757 = vld [vmem:[#allocation3] sm:$0xff]
    %v758 = vld [vmem:[#allocation4] sm:$0xff]
    %s759 = scalar_lea.vmem [#allocation2], 32
    %v760 = vld [vmem:[%s759] sm:$0xff]
    %v761 = vld [vmem:[%s759 + $0x8] sm:$0xff]
    %v762 = vld [vmem:[%s759 + $0x10] sm:$0xff]
    %v763 = vld [vmem:[%s759 + $0x18] sm:$0xff]
    %v764 = vpack.c.bf16 %v757, %v757
    %765 = vmatprep.subr.bf16.mxu0 %v581
    %766 = vmatpush1.bf16.msra.mxu0 %v580
    %767 = vmatprep.subr.bf16.mxu0 %v585
    %768 = vmatpush1.bf16.msra.mxu0 %v584
    %769 = vmatprep.subr.bf16.mxu0 %v589
    %770 = vmatpush1.bf16.msra.mxu0 %v588
    %771 = vmatprep.subr.bf16.mxu0 %v593
    %772 = vmatpush1.bf16.msra.mxu0 %v592
    %773 = vmatprep.subr.bf16.mxu0 %v597
    %774 = vmatpush1.bf16.msra.mxu0 %v596
    %775 = vmatprep.subr.bf16.mxu0 %v601
    %776 = vmatpush1.bf16.msra.mxu0 %v600
    %777 = vmatprep.subr.bf16.mxu0 %v605
    %778 = vmatpush1.bf16.msra.mxu0 %v604
    %779 = vmatprep.subr.bf16.mxu0 %v609
    %780 = vmatpush1.bf16.msra.mxu0 %v608
    %781 = vmatprep.subr.bf16.mxu0 0
    %782 = vmatpush1.bf16.msra.mxu0 0
    %783 = vmatprep.subr.bf16.mxu0 0
    %784 = vmatpush1.bf16.msra.mxu0 0
    %785 = vmatprep.subr.bf16.mxu0 0
    %786 = vmatpush1.bf16.msra.mxu0 0
    %787 = vmatprep.subr.bf16.mxu0 0
    %788 = vmatpush1.bf16.msra.mxu0 0
    %789 = vmatprep.subr.bf16.mxu0 0
    %790 = vmatpush1.bf16.msra.mxu0 0
    %791 = vmatprep.subr.bf16.mxu0 0
    %792 = vmatpush1.bf16.msra.mxu0 0
    %793 = vmatprep.subr.bf16.mxu0 0
    %794 = vmatpush1.bf16.msra.mxu0 0
    %795 = vmatprep.subr.bf16.mxu0 0
    %796 = vmatpush1.bf16.msra.mxu0 0
    %797 = vmatprep.mubr.bf16.mxu0 0
    %798 = vmatmul.mubr.bf16.gmra.mrb[0].mxu0 %v764
    %v799 = vpop.f32.mrb[0].mxu0
    %v800 = vadd.f32 0.0, %v799
    %v801 = vpop.f32.mrb[0].mxu0
    %v802 = vadd.f32 0.0, %v801
    %v803 = vpop.f32.mrb[0].mxu0
    %v804 = vpop.f32.mrb[0].mxu0
    %805 = vdwg.mxu0
    %806 = vmatprep.subr.bf16.mxu0 %v583
    %807 = vmatpush1.bf16.msra.mxu0 %v582
    %808 = vmatprep.subr.bf16.mxu0 %v587
    %809 = vmatpush1.bf16.msra.mxu0 %v586
    %810 = vmatprep.subr.bf16.mxu0 %v591
    %811 = vmatpush1.bf16.msra.mxu0 %v590
    %812 = vmatprep.subr.bf16.mxu0 %v595
    %813 = vmatpush1.bf16.msra.mxu0 %v594
    %814 = vmatprep.subr.bf16.mxu0 %v599
    %815 = vmatpush1.bf16.msra.mxu0 %v598
    %816 = vmatprep.subr.bf16.mxu0 %v603
    %817 = vmatpush1.bf16.msra.mxu0 %v602
    %818 = vmatprep.subr.bf16.mxu0 %v607
    %819 = vmatpush1.bf16.msra.mxu0 %v606
    %820 = vmatprep.subr.bf16.mxu0 %v611
    %821 = vmatpush1.bf16.msra.mxu0 %v610
    %822 = vmatprep.subr.bf16.mxu0 0
    %823 = vmatpush1.bf16.msra.mxu0 0
    %824 = vmatprep.subr.bf16.mxu0 0
    %825 = vmatpush1.bf16.msra.mxu0 0
    %826 = vmatprep.subr.bf16.mxu0 0
    %827 = vmatpush1.bf16.msra.mxu0 0
    %828 = vmatprep.subr.bf16.mxu0 0
    %829 = vmatpush1.bf16.msra.mxu0 0
    %830 = vmatprep.subr.bf16.mxu0 0
    %831 = vmatpush1.bf16.msra.mxu0 0
    %832 = vmatprep.subr.bf16.mxu0 0
    %833 = vmatpush1.bf16.msra.mxu0 0
    %834 = vmatprep.subr.bf16.mxu0 0
    %835 = vmatpush1.bf16.msra.mxu0 0
    %836 = vmatprep.subr.bf16.mxu0 0
    %837 = vmatpush1.bf16.msra.mxu0 0
    %838 = vmatprep.mubr.bf16.mxu0 0
    %839 = vmatmul.mubr.bf16.gmra.mrb[0].mxu0 %v764
    %v840 = vpop.f32.mrb[0].mxu0
    %v841 = vadd.f32 0.0, %v840
    %v842 = vpop.f32.mrb[0].mxu0
    %v843 = vadd.f32 0.0, %v842
    %v844 = vpop.f32.mrb[0].mxu0
    %v845 = vpop.f32.mrb[0].mxu0
    %846 = vdwg.mxu0
    %v847 = vadd.f32 %v760, %v800
    %v848 = vadd.f32 %v761, %v802
    %v849 = vadd.f32 %v762, %v841
    %v850 = vadd.f32 %v763, %v843
    %v851 = vxor.u32 %v847, 2147483648
    %v852 = vmul.f32 %v851, 1.442695
    %v853 = vpow.pop %v852
    %v854 = vadd.f32 %v853, 1.0
    %v855 = vrcp.pop %v854
    %v856 = vmul.f32 1.0, %v855
    %v857 = vxor.u32 %v848, 2147483648
    %v858 = vmul.f32 %v857, 1.442695
    %v859 = vpow.pop %v858
    %v860 = vadd.f32 %v859, 1.0
    %v861 = vrcp.pop %v860
    %v862 = vmul.f32 1.0, %v861
    %v863 = vtanh.pop %v849
    %v864 = vxor.u32 %v850, 2147483648
    %v865 = vmul.f32 %v864, 1.442695
    %v866 = vpow.pop %v865
    %v867 = vadd.f32 %v866, 1.0
    %v868 = vrcp.pop %v867
    %v869 = vmul.f32 1.0, %v868
    %v870 = vmul.f32 %v862, %v758
    %v871 = vmul.f32 %v856, %v863
    %v872 = vadd.f32 %v870, %v871
    %v873 = vtanh.pop %v872
    %v874 = vmul.f32 %v869, %v873
    %875 = vst [vmem:[#allocation3] sm:$0xff] %v874
    %876 = vst [vmem:[#allocation4] sm:$0xff] %v872
    %s877 = scalar_lea.vmem [#allocation5], 8
    %878 = vst [vmem:[%s877] sm:$0xff] %v874
    %v879 = vld [vmem:[#allocation3] sm:$0xff]
    %v880 = vld [vmem:[#allocation4] sm:$0xff]
    %s881 = scalar_lea.vmem [#allocation2], 64
    %v882 = vld [vmem:[%s881] sm:$0xff]
    %v883 = vld [vmem:[%s881 + $0x8] sm:$0xff]
    %v884 = vld [vmem:[%s881 + $0x10] sm:$0xff]
    %v885 = vld [vmem:[%s881 + $0x18] sm:$0xff]
    %v886 = vpack.c.bf16 %v879, %v879
    %887 = vmatprep.subr.bf16.mxu0 %v581
    %888 = vmatpush1.bf16.msra.mxu0 %v580
    %889 = vmatprep.subr.bf16.mxu0 %v585
    %890 = vmatpush1.bf16.msra.mxu0 %v584
    %891 = vmatprep.subr.bf16.mxu0 %v589
    %892 = vmatpush1.bf16.msra.mxu0 %v588
    %893 = vmatprep.subr.bf16.mxu0 %v593
    %894 = vmatpush1.bf16.msra.mxu0 %v592
    %895 = vmatprep.subr.bf16.mxu0 %v597
    %896 = vmatpush1.bf16.msra.mxu0 %v596
    %897 = vmatprep.subr.bf16.mxu0 %v601
    %898 = vmatpush1.bf16.msra.mxu0 %v600
    %899 = vmatprep.subr.bf16.mxu0 %v605
    %900 = vmatpush1.bf16.msra.mxu0 %v604
    %901 = vmatprep.subr.bf16.mxu0 %v609
    %902 = vmatpush1.bf16.msra.mxu0 %v608
    %903 = vmatprep.subr.bf16.mxu0 0
    %904 = vmatpush1.bf16.msra.mxu0 0
    %905 = vmatprep.subr.bf16.mxu0 0
    %906 = vmatpush1.bf16.msra.mxu0 0
    %907 = vmatprep.subr.bf16.mxu0 0
    %908 = vmatpush1.bf16.msra.mxu0 0
    %909 = vmatprep.subr.bf16.mxu0 0
    %910 = vmatpush1.bf16.msra.mxu0 0
    %911 = vmatprep.subr.bf16.mxu0 0
    %912 = vmatpush1.bf16.msra.mxu0 0
    %913 = vmatprep.subr.bf16.mxu0 0
    %914 = vmatpush1.bf16.msra.mxu0 0
    %915 = vmatprep.subr.bf16.mxu0 0
    %916 = vmatpush1.bf16.msra.mxu0 0
    %917 = vmatprep.subr.bf16.mxu0 0
    %918 = vmatpush1.bf16.msra.mxu0 0
    %919 = vmatprep.mubr.bf16.mxu0 0
    %920 = vmatmul.mubr.bf16.gmra.mrb[0].mxu0 %v886
    %v921 = vpop.f32.mrb[0].mxu0
    %v922 = vadd.f32 0.0, %v921
    %v923 = vpop.f32.mrb[0].mxu0
    %v924 = vadd.f32 0.0, %v923
    %v925 = vpop.f32.mrb[0].mxu0
    %v926 = vpop.f32.mrb[0].mxu0
    %927 = vdwg.mxu0
    %928 = vmatprep.subr.bf16.mxu0 %v583
    %929 = vmatpush1.bf16.msra.mxu0 %v582
    %930 = vmatprep.subr.bf16.mxu0 %v587
    %931 = vmatpush1.bf16.msra.mxu0 %v586
    %932 = vmatprep.subr.bf16.mxu0 %v591
    %933 = vmatpush1.bf16.msra.mxu0 %v590
    %934 = vmatprep.subr.bf16.mxu0 %v595
    %935 = vmatpush1.bf16.msra.mxu0 %v594
    %936 = vmatprep.subr.bf16.mxu0 %v599
    %937 = vmatpush1.bf16.msra.mxu0 %v598
    %938 = vmatprep.subr.bf16.mxu0 %v603
    %939 = vmatpush1.bf16.msra.mxu0 %v602
    %940 = vmatprep.subr.bf16.mxu0 %v607
    %941 = vmatpush1.bf16.msra.mxu0 %v606
    %942 = vmatprep.subr.bf16.mxu0 %v611
    %943 = vmatpush1.bf16.msra.mxu0 %v610
    %944 = vmatprep.subr.bf16.mxu0 0
    %945 = vmatpush1.bf16.msra.mxu0 0
    %946 = vmatprep.subr.bf16.mxu0 0
    %947 = vmatpush1.bf16.msra.mxu0 0
    %948 = vmatprep.subr.bf16.mxu0 0
    %949 = vmatpush1.bf16.msra.mxu0 0
    %950 = vmatprep.subr.bf16.mxu0 0
    %951 = vmatpush1.bf16.msra.mxu0 0
    %952 = vmatprep.subr.bf16.mxu0 0
    %953 = vmatpush1.bf16.msra.mxu0 0
    %954 = vmatprep.subr.bf16.mxu0 0
    %955 = vmatpush1.bf16.msra.mxu0 0
    %956 = vmatprep.subr.bf16.mxu0 0
    %957 = vmatpush1.bf16.msra.mxu0 0
    %958 = vmatprep.subr.bf16.mxu0 0
    %959 = vmatpush1.bf16.msra.mxu0 0
    %960 = vmatprep.mubr.bf16.mxu0 0
    %961 = vmatmul.mubr.bf16.gmra.mrb[0].mxu0 %v886
    %v962 = vpop.f32.mrb[0].mxu0
    %v963 = vadd.f32 0.0, %v962
    %v964 = vpop.f32.mrb[0].mxu0
    %v965 = vadd.f32 0.0, %v964
    %v966 = vpop.f32.mrb[0].mxu0
    %v967 = vpop.f32.mrb[0].mxu0
    %968 = vdwg.mxu0
    %v969 = vadd.f32 %v882, %v922
    %v970 = vadd.f32 %v883, %v924
    %v971 = vadd.f32 %v884, %v963
    %v972 = vadd.f32 %v885, %v965
    %v973 = vxor.u32 %v969, 2147483648
    %v974 = vmul.f32 %v973, 1.442695
    %v975 = vpow.pop %v974
    %v976 = vadd.f32 %v975, 1.0
    %v977 = vrcp.pop %v976
    %v978 = vmul.f32 1.0, %v977
    %v979 = vxor.u32 %v970, 2147483648
    %v980 = vmul.f32 %v979, 1.442695
    %v981 = vpow.pop %v980
    %v982 = vadd.f32 %v981, 1.0
    %v983 = vrcp.pop %v982
    %v984 = vmul.f32 1.0, %v983
    %v985 = vtanh.pop %v971
    %v986 = vxor.u32 %v972, 2147483648
    %v987 = vmul.f32 %v986, 1.442695
    %v988 = vpow.pop %v987
    %v989 = vadd.f32 %v988, 1.0
    %v990 = vrcp.pop %v989
    %v991 = vmul.f32 1.0, %v990
    %v992 = vmul.f32 %v984, %v880
    %v993 = vmul.f32 %v978, %v985
    %v994 = vadd.f32 %v992, %v993
    %v995 = vtanh.pop %v994
    %v996 = vmul.f32 %v991, %v995
    %997 = vst [vmem:[#allocation3] sm:$0xff] %v996
    %998 = vst [vmem:[#allocation4] sm:$0xff] %v994
    %s999 = scalar_lea.vmem [#allocation5], 16
    %1000 = vst [vmem:[%s999] sm:$0xff] %v996
    %v1001 = vld [vmem:[#allocation3] sm:$0xff]
    %v1002 = vld [vmem:[#allocation4] sm:$0xff]
    %s1003 = scalar_lea.vmem [#allocation2], 96
    %v1004 = vld [vmem:[%s1003] sm:$0xff]
    %v1005 = vld [vmem:[%s1003 + $0x8] sm:$0xff]
    %v1006 = vld [vmem:[%s1003 + $0x10] sm:$0xff]
    %v1007 = vld [vmem:[%s1003 + $0x18] sm:$0xff]
    %v1008 = vpack.c.bf16 %v1001, %v1001
    %1009 = vmatprep.subr.bf16.mxu0 %v581
    %1010 = vmatpush1.bf16.msra.mxu0 %v580
    %1011 = vmatprep.subr.bf16.mxu0 %v585
    %1012 = vmatpush1.bf16.msra.mxu0 %v584
    %1013 = vmatprep.subr.bf16.mxu0 %v589
    %1014 = vmatpush1.bf16.msra.mxu0 %v588
    %1015 = vmatprep.subr.bf16.mxu0 %v593
    %1016 = vmatpush1.bf16.msra.mxu0 %v592
    %1017 = vmatprep.subr.bf16.mxu0 %v597
    %1018 = vmatpush1.bf16.msra.mxu0 %v596
    %1019 = vmatprep.subr.bf16.mxu0 %v601
    %1020 = vmatpush1.bf16.msra.mxu0 %v600
    %1021 = vmatprep.subr.bf16.mxu0 %v605
    %1022 = vmatpush1.bf16.msra.mxu0 %v604
    %1023 = vmatprep.subr.bf16.mxu0 %v609
    %1024 = vmatpush1.bf16.msra.mxu0 %v608
    %1025 = vmatprep.subr.bf16.mxu0 0
    %1026 = vmatpush1.bf16.msra.mxu0 0
    %1027 = vmatprep.subr.bf16.mxu0 0
    %1028 = vmatpush1.bf16.msra.mxu0 0
    %1029 = vmatprep.subr.bf16.mxu0 0
    %1030 = vmatpush1.bf16.msra.mxu0 0
    %1031 = vmatprep.subr.bf16.mxu0 0
    %1032 = vmatpush1.bf16.msra.mxu0 0
    %1033 = vmatprep.subr.bf16.mxu0 0
    %1034 = vmatpush1.bf16.msra.mxu0 0
    %1035 = vmatprep.subr.bf16.mxu0 0
    %1036 = vmatpush1.bf16.msra.mxu0 0
    %1037 = vmatprep.subr.bf16.mxu0 0
    %1038 = vmatpush1.bf16.msra.mxu0 0
    %1039 = vmatprep.subr.bf16.mxu0 0
    %1040 = vmatpush1.bf16.msra.mxu0 0
    %1041 = vmatprep.mubr.bf16.mxu0 0
    %1042 = vmatmul.mubr.bf16.gmra.mrb[0].mxu0 %v1008
    %v1043 = vpop.f32.mrb[0].mxu0
    %v1044 = vadd.f32 0.0, %v1043
    %v1045 = vpop.f32.mrb[0].mxu0
    %v1046 = vadd.f32 0.0, %v1045
    %v1047 = vpop.f32.mrb[0].mxu0
    %v1048 = vpop.f32.mrb[0].mxu0
    %1049 = vdwg.mxu0
    %1050 = vmatprep.subr.bf16.mxu0 %v583
    %1051 = vmatpush1.bf16.msra.mxu0 %v582
    %1052 = vmatprep.subr.bf16.mxu0 %v587
    %1053 = vmatpush1.bf16.msra.mxu0 %v586
    %1054 = vmatprep.subr.bf16.mxu0 %v591
    %1055 = vmatpush1.bf16.msra.mxu0 %v590
    %1056 = vmatprep.subr.bf16.mxu0 %v595
    %1057 = vmatpush1.bf16.msra.mxu0 %v594
    %1058 = vmatprep.subr.bf16.mxu0 %v599
    %1059 = vmatpush1.bf16.msra.mxu0 %v598
    %1060 = vmatprep.subr.bf16.mxu0 %v603
    %1061 = vmatpush1.bf16.msra.mxu0 %v602
    %1062 = vmatprep.subr.bf16.mxu0 %v607
    %1063 = vmatpush1.bf16.msra.mxu0 %v606
    %1064 = vmatprep.subr.bf16.mxu0 %v611
    %1065 = vmatpush1.bf16.msra.mxu0 %v610
    %1066 = vmatprep.subr.bf16.mxu0 0
    %1067 = vmatpush1.bf16.msra.mxu0 0
    %1068 = vmatprep.subr.bf16.mxu0 0
    %1069 = vmatpush1.bf16.msra.mxu0 0
    %1070 = vmatprep.subr.bf16.mxu0 0
    %1071 = vmatpush1.bf16.msra.mxu0 0
    %1072 = vmatprep.subr.bf16.mxu0 0
    %1073 = vmatpush1.bf16.msra.mxu0 0
    %1074 = vmatprep.subr.bf16.mxu0 0
    %1075 = vmatpush1.bf16.msra.mxu0 0
    %1076 = vmatprep.subr.bf16.mxu0 0
    %1077 = vmatpush1.bf16.msra.mxu0 0
    %1078 = vmatprep.subr.bf16.mxu0 0
    %1079 = vmatpush1.bf16.msra.mxu0 0
    %1080 = vmatprep.subr.bf16.mxu0 0
    %1081 = vmatpush1.bf16.msra.mxu0 0
    %1082 = vmatprep.mubr.bf16.mxu0 0
    %1083 = vmatmul.mubr.bf16.gmra.mrb[0].mxu0 %v1008
    %v1084 = vpop.f32.mrb[0].mxu0
    %v1085 = vadd.f32 0.0, %v1084
    %v1086 = vpop.f32.mrb[0].mxu0
    %v1087 = vadd.f32 0.0, %v1086
    %v1088 = vpop.f32.mrb[0].mxu0
    %v1089 = vpop.f32.mrb[0].mxu0
    %1090 = vdwg.mxu0
    %v1091 = vadd.f32 %v1004, %v1044
    %v1092 = vadd.f32 %v1005, %v1046
    %v1093 = vadd.f32 %v1006, %v1085
    %v1094 = vadd.f32 %v1007, %v1087
    %v1095 = vxor.u32 %v1091, 2147483648
    %v1096 = vmul.f32 %v1095, 1.442695
    %v1097 = vpow.pop %v1096
    %v1098 = vadd.f32 %v1097, 1.0
    %v1099 = vrcp.pop %v1098
    %v1100 = vmul.f32 1.0, %v1099
    %v1101 = vxor.u32 %v1092, 2147483648
    %v1102 = vmul.f32 %v1101, 1.442695
    %v1103 = vpow.pop %v1102
    %v1104 = vadd.f32 %v1103, 1.0
    %v1105 = vrcp.pop %v1104
    %v1106 = vmul.f32 1.0, %v1105
    %v1107 = vtanh.pop %v1093
    %v1108 = vxor.u32 %v1094, 2147483648
    %v1109 = vmul.f32 %v1108, 1.442695
    %v1110 = vpow.pop %v1109
    %v1111 = vadd.f32 %v1110, 1.0
    %v1112 = vrcp.pop %v1111
    %v1113 = vmul.f32 1.0, %v1112
    %v1114 = vmul.f32 %v1106, %v1002
    %v1115 = vmul.f32 %v1100, %v1107
    %v1116 = vadd.f32 %v1114, %v1115
    %v1117 = vtanh.pop %v1116
    %v1118 = vmul.f32 %v1113, %v1117
    %1119 = vst [vmem:[#allocation3] sm:$0xff] %v1118
    %1120 = vst [vmem:[#allocation4] sm:$0xff] %v1116
    %s1121 = scalar_lea.vmem [#allocation5], 24
    %1122 = vst [vmem:[%s1121] sm:$0xff] %v1118
    %v1123 = vld [vmem:[#allocation3] sm:$0xff]
    %v1124 = vld [vmem:[#allocation4] sm:$0xff]
    %s1125 = scalar_lea.vmem [#allocation2], 128
    %v1126 = vld [vmem:[%s1125] sm:$0xff]
    %v1127 = vld [vmem:[%s1125 + $0x8] sm:$0xff]
    %v1128 = vld [vmem:[%s1125 + $0x10] sm:$0xff]
    %v1129 = vld [vmem:[%s1125 + $0x18] sm:$0xff]
    %v1130 = vpack.c.bf16 %v1123, %v1123
    %1131 = vmatprep.subr.bf16.mxu0 %v581
    %1132 = vmatpush1.bf16.msra.mxu0 %v580
    %1133 = vmatprep.subr.bf16.mxu0 %v585
    %1134 = vmatpush1.bf16.msra.mxu0 %v584
    %1135 = vmatprep.subr.bf16.mxu0 %v589
    %1136 = vmatpush1.bf16.msra.mxu0 %v588
    %1137 = vmatprep.subr.bf16.mxu0 %v593
    %1138 = vmatpush1.bf16.msra.mxu0 %v592
    %1139 = vmatprep.subr.bf16.mxu0 %v597
    %1140 = vmatpush1.bf16.msra.mxu0 %v596
    %1141 = vmatprep.subr.bf16.mxu0 %v601
    %1142 = vmatpush1.bf16.msra.mxu0 %v600
    %1143 = vmatprep.subr.bf16.mxu0 %v605
    %1144 = vmatpush1.bf16.msra.mxu0 %v604
    %1145 = vmatprep.subr.bf16.mxu0 %v609
    %1146 = vmatpush1.bf16.msra.mxu0 %v608
    %1147 = vmatprep.subr.bf16.mxu0 0
    %1148 = vmatpush1.bf16.msra.mxu0 0
    %1149 = vmatprep.subr.bf16.mxu0 0
    %1150 = vmatpush1.bf16.msra.mxu0 0
    %1151 = vmatprep.subr.bf16.mxu0 0
    %1152 = vmatpush1.bf16.msra.mxu0 0
    %1153 = vmatprep.subr.bf16.mxu0 0
    %1154 = vmatpush1.bf16.msra.mxu0 0
    %1155 = vmatprep.subr.bf16.mxu0 0
    %1156 = vmatpush1.bf16.msra.mxu0 0
    %1157 = vmatprep.subr.bf16.mxu0 0
    %1158 = vmatpush1.bf16.msra.mxu0 0
    %1159 = vmatprep.subr.bf16.mxu0 0
    %1160 = vmatpush1.bf16.msra.mxu0 0
    %1161 = vmatprep.subr.bf16.mxu0 0
    %1162 = vmatpush1.bf16.msra.mxu0 0
    %1163 = vmatprep.mubr.bf16.mxu0 0
    %1164 = vmatmul.mubr.bf16.gmra.mrb[0].mxu0 %v1130
    %v1165 = vpop.f32.mrb[0].mxu0
    %v1166 = vadd.f32 0.0, %v1165
    %v1167 = vpop.f32.mrb[0].mxu0
    %v1168 = vadd.f32 0.0, %v1167
    %v1169 = vpop.f32.mrb[0].mxu0
    %v1170 = vpop.f32.mrb[0].mxu0
    %1171 = vdwg.mxu0
    %1172 = vmatprep.subr.bf16.mxu0 %v583
    %1173 = vmatpush1.bf16.msra.mxu0 %v582
    %1174 = vmatprep.subr.bf16.mxu0 %v587
    %1175 = vmatpush1.bf16.msra.mxu0 %v586
    %1176 = vmatprep.subr.bf16.mxu0 %v591
    %1177 = vmatpush1.bf16.msra.mxu0 %v590
    %1178 = vmatprep.subr.bf16.mxu0 %v595
    %1179 = vmatpush1.bf16.msra.mxu0 %v594
    %1180 = vmatprep.subr.bf16.mxu0 %v599
    %1181 = vmatpush1.bf16.msra.mxu0 %v598
    %1182 = vmatprep.subr.bf16.mxu0 %v603
    %1183 = vmatpush1.bf16.msra.mxu0 %v602
    %1184 = vmatprep.subr.bf16.mxu0 %v607
    %1185 = vmatpush1.bf16.msra.mxu0 %v606
    %1186 = vmatprep.subr.bf16.mxu0 %v611
    %1187 = vmatpush1.bf16.msra.mxu0 %v610
    %1188 = vmatprep.subr.bf16.mxu0 0
    %1189 = vmatpush1.bf16.msra.mxu0 0
    %1190 = vmatprep.subr.bf16.mxu0 0
    %1191 = vmatpush1.bf16.msra.mxu0 0
    %1192 = vmatprep.subr.bf16.mxu0 0
    %1193 = vmatpush1.bf16.msra.mxu0 0
    %1194 = vmatprep.subr.bf16.mxu0 0
    %1195 = vmatpush1.bf16.msra.mxu0 0
    %1196 = vmatprep.subr.bf16.mxu0 0
    %1197 = vmatpush1.bf16.msra.mxu0 0
    %1198 = vmatprep.subr.bf16.mxu0 0
    %1199 = vmatpush1.bf16.msra.mxu0 0
    %1200 = vmatprep.subr.bf16.mxu0 0
    %1201 = vmatpush1.bf16.msra.mxu0 0
    %1202 = vmatprep.subr.bf16.mxu0 0
    %1203 = vmatpush1.bf16.msra.mxu0 0
    %1204 = vmatprep.mubr.bf16.mxu0 0
    %1205 = vmatmul.mubr.bf16.gmra.mrb[0].mxu0 %v1130
    %v1206 = vpop.f32.mrb[0].mxu0
    %v1207 = vadd.f32 0.0, %v1206
    %v1208 = vpop.f32.mrb[0].mxu0
    %v1209 = vadd.f32 0.0, %v1208
    %v1210 = vpop.f32.mrb[0].mxu0
    %v1211 = vpop.f32.mrb[0].mxu0
    %1212 = vdwg.mxu0
    %v1213 = vadd.f32 %v1126, %v1166
    %v1214 = vadd.f32 %v1127, %v1168
    %v1215 = vadd.f32 %v1128, %v1207
    %v1216 = vadd.f32 %v1129, %v1209
    %v1217 = vxor.u32 %v1213, 2147483648
    %v1218 = vmul.f32 %v1217, 1.442695
    %v1219 = vpow.pop %v1218
    %v1220 = vadd.f32 %v1219, 1.0
    %v1221 = vrcp.pop %v1220
    %v1222 = vmul.f32 1.0, %v1221
    %v1223 = vxor.u32 %v1214, 2147483648
    %v1224 = vmul.f32 %v1223, 1.442695
    %v1225 = vpow.pop %v1224
    %v1226 = vadd.f32 %v1225, 1.0
    %v1227 = vrcp.pop %v1226
    %v1228 = vmul.f32 1.0, %v1227
    %v1229 = vtanh.pop %v1215
    %v1230 = vxor.u32 %v1216, 2147483648
    %v1231 = vmul.f32 %v1230, 1.442695
    %v1232 = vpow.pop %v1231
    %v1233 = vadd.f32 %v1232, 1.0
    %v1234 = vrcp.pop %v1233
    %v1235 = vmul.f32 1.0, %v1234
    %v1236 = vmul.f32 %v1228, %v1124
    %v1237 = vmul.f32 %v1222, %v1229
    %v1238 = vadd.f32 %v1236, %v1237
    %v1239 = vtanh.pop %v1238
    %v1240 = vmul.f32 %v1235, %v1239
    %1241 = vst [vmem:[#allocation3] sm:$0xff] %v1240
    %1242 = vst [vmem:[#allocation4] sm:$0xff] %v1238
    %s1243 = scalar_lea.vmem [#allocation5], 32
    %1244 = vst [vmem:[%s1243] sm:$0xff] %v1240
    %v1245 = vld [vmem:[#allocation3] sm:$0xff]
    %v1246 = vld [vmem:[#allocation4] sm:$0xff]
    %s1247 = scalar_lea.vmem [#allocation2], 160
    %v1248 = vld [vmem:[%s1247] sm:$0xff]
    %v1249 = vld [vmem:[%s1247 + $0x8] sm:$0xff]
    %v1250 = vld [vmem:[%s1247 + $0x10] sm:$0xff]
    %v1251 = vld [vmem:[%s1247 + $0x18] sm:$0xff]
    %v1252 = vpack.c.bf16 %v1245, %v1245
    %1253 = vmatprep.subr.bf16.mxu0 %v581
    %1254 = vmatpush1.bf16.msra.mxu0 %v580
    %1255 = vmatprep.subr.bf16.mxu0 %v585
    %1256 = vmatpush1.bf16.msra.mxu0 %v584
    %1257 = vmatprep.subr.bf16.mxu0 %v589
    %1258 = vmatpush1.bf16.msra.mxu0 %v588
    %1259 = vmatprep.subr.bf16.mxu0 %v593
    %1260 = vmatpush1.bf16.msra.mxu0 %v592
    %1261 = vmatprep.subr.bf16.mxu0 %v597
    %1262 = vmatpush1.bf16.msra.mxu0 %v596
    %1263 = vmatprep.subr.bf16.mxu0 %v601
    %1264 = vmatpush1.bf16.msra.mxu0 %v600
    %1265 = vmatprep.subr.bf16.mxu0 %v605
    %1266 = vmatpush1.bf16.msra.mxu0 %v604
    %1267 = vmatprep.subr.bf16.mxu0 %v609
    %1268 = vmatpush1.bf16.msra.mxu0 %v608
    %1269 = vmatprep.subr.bf16.mxu0 0
    %1270 = vmatpush1.bf16.msra.mxu0 0
    %1271 = vmatprep.subr.bf16.mxu0 0
    %1272 = vmatpush1.bf16.msra.mxu0 0
    %1273 = vmatprep.subr.bf16.mxu0 0
    %1274 = vmatpush1.bf16.msra.mxu0 0
    %1275 = vmatprep.subr.bf16.mxu0 0
    %1276 = vmatpush1.bf16.msra.mxu0 0
    %1277 = vmatprep.subr.bf16.mxu0 0
    %1278 = vmatpush1.bf16.msra.mxu0 0
    %1279 = vmatprep.subr.bf16.mxu0 0
    %1280 = vmatpush1.bf16.msra.mxu0 0
    %1281 = vmatprep.subr.bf16.mxu0 0
    %1282 = vmatpush1.bf16.msra.mxu0 0
    %1283 = vmatprep.subr.bf16.mxu0 0
    %1284 = vmatpush1.bf16.msra.mxu0 0
    %1285 = vmatprep.mubr.bf16.mxu0 0
    %1286 = vmatmul.mubr.bf16.gmra.mrb[0].mxu0 %v1252
    %v1287 = vpop.f32.mrb[0].mxu0
    %v1288 = vadd.f32 0.0, %v1287
    %v1289 = vpop.f32.mrb[0].mxu0
    %v1290 = vadd.f32 0.0, %v1289
    %v1291 = vpop.f32.mrb[0].mxu0
    %v1292 = vpop.f32.mrb[0].mxu0
    %1293 = vdwg.mxu0
    %1294 = vmatprep.subr.bf16.mxu0 %v583
    %1295 = vmatpush1.bf16.msra.mxu0 %v582
    %1296 = vmatprep.subr.bf16.mxu0 %v587
    %1297 = vmatpush1.bf16.msra.mxu0 %v586
    %1298 = vmatprep.subr.bf16.mxu0 %v591
    %1299 = vmatpush1.bf16.msra.mxu0 %v590
    %1300 = vmatprep.subr.bf16.mxu0 %v595
    %1301 = vmatpush1.bf16.msra.mxu0 %v594
    %1302 = vmatprep.subr.bf16.mxu0 %v599
    %1303 = vmatpush1.bf16.msra.mxu0 %v598
    %1304 = vmatprep.subr.bf16.mxu0 %v603
    %1305 = vmatpush1.bf16.msra.mxu0 %v602
    %1306 = vmatprep.subr.bf16.mxu0 %v607
    %1307 = vmatpush1.bf16.msra.mxu0 %v606
    %1308 = vmatprep.subr.bf16.mxu0 %v611
    %1309 = vmatpush1.bf16.msra.mxu0 %v610
    %1310 = vmatprep.subr.bf16.mxu0 0
    %1311 = vmatpush1.bf16.msra.mxu0 0
    %1312 = vmatprep.subr.bf16.mxu0 0
    %1313 = vmatpush1.bf16.msra.mxu0 0
    %1314 = vmatprep.subr.bf16.mxu0 0
    %1315 = vmatpush1.bf16.msra.mxu0 0
    %1316 = vmatprep.subr.bf16.mxu0 0
    %1317 = vmatpush1.bf16.msra.mxu0 0
    %1318 = vmatprep.subr.bf16.mxu0 0
    %1319 = vmatpush1.bf16.msra.mxu0 0
    %1320 = vmatprep.subr.bf16.mxu0 0
    %1321 = vmatpush1.bf16.msra.mxu0 0
    %1322 = vmatprep.subr.bf16.mxu0 0
    %1323 = vmatpush1.bf16.msra.mxu0 0
    %1324 = vmatprep.subr.bf16.mxu0 0
    %1325 = vmatpush1.bf16.msra.mxu0 0
    %1326 = vmatprep.mubr.bf16.mxu0 0
    %1327 = vmatmul.mubr.bf16.gmra.mrb[0].mxu0 %v1252
    %v1328 = vpop.f32.mrb[0].mxu0
    %v1329 = vadd.f32 0.0, %v1328
    %v1330 = vpop.f32.mrb[0].mxu0
    %v1331 = vadd.f32 0.0, %v1330
    %v1332 = vpop.f32.mrb[0].mxu0
    %v1333 = vpop.f32.mrb[0].mxu0
    %1334 = vdwg.mxu0
    %v1335 = vadd.f32 %v1248, %v1288
    %v1336 = vadd.f32 %v1249, %v1290
    %v1337 = vadd.f32 %v1250, %v1329
    %v1338 = vadd.f32 %v1251, %v1331
    %v1339 = vxor.u32 %v1335, 2147483648
    %v1340 = vmul.f32 %v1339, 1.442695
    %v1341 = vpow.pop %v1340
    %v1342 = vadd.f32 %v1341, 1.0
    %v1343 = vrcp.pop %v1342
    %v1344 = vmul.f32 1.0, %v1343
    %v1345 = vxor.u32 %v1336, 2147483648
    %v1346 = vmul.f32 %v1345, 1.442695
    %v1347 = vpow.pop %v1346
    %v1348 = vadd.f32 %v1347, 1.0
    %v1349 = vrcp.pop %v1348
    %v1350 = vmul.f32 1.0, %v1349
    %v1351 = vtanh.pop %v1337
    %v1352 = vxor.u32 %v1338, 2147483648
    %v1353 = vmul.f32 %v1352, 1.442695
    %v1354 = vpow.pop %v1353
    %v1355 = vadd.f32 %v1354, 1.0
    %v1356 = vrcp.pop %v1355
    %v1357 = vmul.f32 1.0, %v1356
    %v1358 = vmul.f32 %v1350, %v1246
    %v1359 = vmul.f32 %v1344, %v1351
    %v1360 = vadd.f32 %v1358, %v1359
    %v1361 = vtanh.pop %v1360
    %v1362 = vmul.f32 %v1357, %v1361
    %1363 = vst [vmem:[#allocation3] sm:$0xff] %v1362
    %1364 = vst [vmem:[#allocation4] sm:$0xff] %v1360
    %s1365 = scalar_lea.vmem [#allocation5], 40
    %1366 = vst [vmem:[%s1365] sm:$0xff] %v1362
    %v1367 = vld [vmem:[#allocation3] sm:$0xff]
    %v1368 = vld [vmem:[#allocation4] sm:$0xff]
    %s1369 = scalar_lea.vmem [#allocation2], 192
    %v1370 = vld [vmem:[%s1369] sm:$0xff]
    %v1371 = vld [vmem:[%s1369 + $0x8] sm:$0xff]
    %v1372 = vld [vmem:[%s1369 + $0x10] sm:$0xff]
    %v1373 = vld [vmem:[%s1369 + $0x18] sm:$0xff]
    %v1374 = vpack.c.bf16 %v1367, %v1367
    %1375 = vmatprep.subr.bf16.mxu0 %v581
    %1376 = vmatpush1.bf16.msra.mxu0 %v580
    %1377 = vmatprep.subr.bf16.mxu0 %v585
    %1378 = vmatpush1.bf16.msra.mxu0 %v584
    %1379 = vmatprep.subr.bf16.mxu0 %v589
    %1380 = vmatpush1.bf16.msra.mxu0 %v588
    %1381 = vmatprep.subr.bf16.mxu0 %v593
    %1382 = vmatpush1.bf16.msra.mxu0 %v592
    %1383 = vmatprep.subr.bf16.mxu0 %v597
    %1384 = vmatpush1.bf16.msra.mxu0 %v596
    %1385 = vmatprep.subr.bf16.mxu0 %v601
    %1386 = vmatpush1.bf16.msra.mxu0 %v600
    %1387 = vmatprep.subr.bf16.mxu0 %v605
    %1388 = vmatpush1.bf16.msra.mxu0 %v604
    %1389 = vmatprep.subr.bf16.mxu0 %v609
    %1390 = vmatpush1.bf16.msra.mxu0 %v608
    %1391 = vmatprep.subr.bf16.mxu0 0
    %1392 = vmatpush1.bf16.msra.mxu0 0
    %1393 = vmatprep.subr.bf16.mxu0 0
    %1394 = vmatpush1.bf16.msra.mxu0 0
    %1395 = vmatprep.subr.bf16.mxu0 0
    %1396 = vmatpush1.bf16.msra.mxu0 0
    %1397 = vmatprep.subr.bf16.mxu0 0
    %1398 = vmatpush1.bf16.msra.mxu0 0
    %1399 = vmatprep.subr.bf16.mxu0 0
    %1400 = vmatpush1.bf16.msra.mxu0 0
    %1401 = vmatprep.subr.bf16.mxu0 0
    %1402 = vmatpush1.bf16.msra.mxu0 0
    %1403 = vmatprep.subr.bf16.mxu0 0
    %1404 = vmatpush1.bf16.msra.mxu0 0
    %1405 = vmatprep.subr.bf16.mxu0 0
    %1406 = vmatpush1.bf16.msra.mxu0 0
    %1407 = vmatprep.mubr.bf16.mxu0 0
    %1408 = vmatmul.mubr.bf16.gmra.mrb[0].mxu0 %v1374
    %v1409 = vpop.f32.mrb[0].mxu0
    %v1410 = vadd.f32 0.0, %v1409
    %v1411 = vpop.f32.mrb[0].mxu0
    %v1412 = vadd.f32 0.0, %v1411
    %v1413 = vpop.f32.mrb[0].mxu0
    %v1414 = vpop.f32.mrb[0].mxu0
    %1415 = vdwg.mxu0
    %1416 = vmatprep.subr.bf16.mxu0 %v583
    %1417 = vmatpush1.bf16.msra.mxu0 %v582
    %1418 = vmatprep.subr.bf16.mxu0 %v587
    %1419 = vmatpush1.bf16.msra.mxu0 %v586
    %1420 = vmatprep.subr.bf16.mxu0 %v591
    %1421 = vmatpush1.bf16.msra.mxu0 %v590
    %1422 = vmatprep.subr.bf16.mxu0 %v595
    %1423 = vmatpush1.bf16.msra.mxu0 %v594
    %1424 = vmatprep.subr.bf16.mxu0 %v599
    %1425 = vmatpush1.bf16.msra.mxu0 %v598
    %1426 = vmatprep.subr.bf16.mxu0 %v603
    %1427 = vmatpush1.bf16.msra.mxu0 %v602
    %1428 = vmatprep.subr.bf16.mxu0 %v607
    %1429 = vmatpush1.bf16.msra.mxu0 %v606
    %1430 = vmatprep.subr.bf16.mxu0 %v611
    %1431 = vmatpush1.bf16.msra.mxu0 %v610
    %1432 = vmatprep.subr.bf16.mxu0 0
    %1433 = vmatpush1.bf16.msra.mxu0 0
    %1434 = vmatprep.subr.bf16.mxu0 0
    %1435 = vmatpush1.bf16.msra.mxu0 0
    %1436 = vmatprep.subr.bf16.mxu0 0
    %1437 = vmatpush1.bf16.msra.mxu0 0
    %1438 = vmatprep.subr.bf16.mxu0 0
    %1439 = vmatpush1.bf16.msra.mxu0 0
    %1440 = vmatprep.subr.bf16.mxu0 0
    %1441 = vmatpush1.bf16.msra.mxu0 0
    %1442 = vmatprep.subr.bf16.mxu0 0
    %1443 = vmatpush1.bf16.msra.mxu0 0
    %1444 = vmatprep.subr.bf16.mxu0 0
    %1445 = vmatpush1.bf16.msra.mxu0 0
    %1446 = vmatprep.subr.bf16.mxu0 0
    %1447 = vmatpush1.bf16.msra.mxu0 0
    %1448 = vmatprep.mubr.bf16.mxu0 0
    %1449 = vmatmul.mubr.bf16.gmra.mrb[0].mxu0 %v1374
    %v1450 = vpop.f32.mrb[0].mxu0
    %v1451 = vadd.f32 0.0, %v1450
    %v1452 = vpop.f32.mrb[0].mxu0
    %v1453 = vadd.f32 0.0, %v1452
    %v1454 = vpop.f32.mrb[0].mxu0
    %v1455 = vpop.f32.mrb[0].mxu0
    %1456 = vdwg.mxu0
    %v1457 = vadd.f32 %v1370, %v1410
    %v1458 = vadd.f32 %v1371, %v1412
    %v1459 = vadd.f32 %v1372, %v1451
    %v1460 = vadd.f32 %v1373, %v1453
    %v1461 = vxor.u32 %v1457, 2147483648
    %v1462 = vmul.f32 %v1461, 1.442695
    %v1463 = vpow.pop %v1462
    %v1464 = vadd.f32 %v1463, 1.0
    %v1465 = vrcp.pop %v1464
    %v1466 = vmul.f32 1.0, %v1465
    %v1467 = vxor.u32 %v1458, 2147483648
    %v1468 = vmul.f32 %v1467, 1.442695
    %v1469 = vpow.pop %v1468
    %v1470 = vadd.f32 %v1469, 1.0
    %v1471 = vrcp.pop %v1470
    %v1472 = vmul.f32 1.0, %v1471
    %v1473 = vtanh.pop %v1459
    %v1474 = vxor.u32 %v1460, 2147483648
    %v1475 = vmul.f32 %v1474, 1.442695
    %v1476 = vpow.pop %v1475
    %v1477 = vadd.f32 %v1476, 1.0
    %v1478 = vrcp.pop %v1477
    %v1479 = vmul.f32 1.0, %v1478
    %v1480 = vmul.f32 %v1472, %v1368
    %v1481 = vmul.f32 %v1466, %v1473
    %v1482 = vadd.f32 %v1480, %v1481
    %v1483 = vtanh.pop %v1482
    %v1484 = vmul.f32 %v1479, %v1483
    %1485 = vst [vmem:[#allocation3] sm:$0xff] %v1484
    %1486 = vst [vmem:[#allocation4] sm:$0xff] %v1482
    %s1487 = scalar_lea.vmem [#allocation5], 48
    %1488 = vst [vmem:[%s1487] sm:$0xff] %v1484
    %v1489 = vld [vmem:[#allocation3] sm:$0xff]
    %v1490 = vld [vmem:[#allocation4] sm:$0xff]
    %s1491 = scalar_lea.vmem [#allocation2], 224
    %v1492 = vld [vmem:[%s1491] sm:$0xff]
    %v1493 = vld [vmem:[%s1491 + $0x8] sm:$0xff]
    %v1494 = vld [vmem:[%s1491 + $0x10] sm:$0xff]
    %v1495 = vld [vmem:[%s1491 + $0x18] sm:$0xff]
    %v1496 = vpack.c.bf16 %v1489, %v1489
    %1497 = vmatprep.subr.bf16.mxu0 %v581
    %1498 = vmatpush1.bf16.msra.mxu0 %v580
    %1499 = vmatprep.subr.bf16.mxu0 %v585
    %1500 = vmatpush1.bf16.msra.mxu0 %v584
    %1501 = vmatprep.subr.bf16.mxu0 %v589
    %1502 = vmatpush1.bf16.msra.mxu0 %v588
    %1503 = vmatprep.subr.bf16.mxu0 %v593
    %1504 = vmatpush1.bf16.msra.mxu0 %v592
    %1505 = vmatprep.subr.bf16.mxu0 %v597
    %1506 = vmatpush1.bf16.msra.mxu0 %v596
    %1507 = vmatprep.subr.bf16.mxu0 %v601
    %1508 = vmatpush1.bf16.msra.mxu0 %v600
    %1509 = vmatprep.subr.bf16.mxu0 %v605
    %1510 = vmatpush1.bf16.msra.mxu0 %v604
    %1511 = vmatprep.subr.bf16.mxu0 %v609
    %1512 = vmatpush1.bf16.msra.mxu0 %v608
    %1513 = vmatprep.subr.bf16.mxu0 0
    %1514 = vmatpush1.bf16.msra.mxu0 0
    %1515 = vmatprep.subr.bf16.mxu0 0
    %1516 = vmatpush1.bf16.msra.mxu0 0
    %1517 = vmatprep.subr.bf16.mxu0 0
    %1518 = vmatpush1.bf16.msra.mxu0 0
    %1519 = vmatprep.subr.bf16.mxu0 0
    %1520 = vmatpush1.bf16.msra.mxu0 0
    %1521 = vmatprep.subr.bf16.mxu0 0
    %1522 = vmatpush1.bf16.msra.mxu0 0
    %1523 = vmatprep.subr.bf16.mxu0 0
    %1524 = vmatpush1.bf16.msra.mxu0 0
    %1525 = vmatprep.subr.bf16.mxu0 0
    %1526 = vmatpush1.bf16.msra.mxu0 0
    %1527 = vmatprep.subr.bf16.mxu0 0
    %1528 = vmatpush1.bf16.msra.mxu0 0
    %1529 = vmatprep.mubr.bf16.mxu0 0
    %1530 = vmatmul.mubr.bf16.gmra.mrb[0].mxu0 %v1496
    %v1531 = vpop.f32.mrb[0].mxu0
    %v1532 = vadd.f32 0.0, %v1531
    %v1533 = vpop.f32.mrb[0].mxu0
    %v1534 = vadd.f32 0.0, %v1533
    %v1535 = vpop.f32.mrb[0].mxu0
    %v1536 = vpop.f32.mrb[0].mxu0
    %1537 = vdwg.mxu0
    %1538 = vmatprep.subr.bf16.mxu0 %v583
    %1539 = vmatpush1.bf16.msra.mxu0 %v582
    %1540 = vmatprep.subr.bf16.mxu0 %v587
    %1541 = vmatpush1.bf16.msra.mxu0 %v586
    %1542 = vmatprep.subr.bf16.mxu0 %v591
    %1543 = vmatpush1.bf16.msra.mxu0 %v590
    %1544 = vmatprep.subr.bf16.mxu0 %v595
    %1545 = vmatpush1.bf16.msra.mxu0 %v594
    %1546 = vmatprep.subr.bf16.mxu0 %v599
    %1547 = vmatpush1.bf16.msra.mxu0 %v598
    %1548 = vmatprep.subr.bf16.mxu0 %v603
    %1549 = vmatpush1.bf16.msra.mxu0 %v602
    %1550 = vmatprep.subr.bf16.mxu0 %v607
    %1551 = vmatpush1.bf16.msra.mxu0 %v606
    %1552 = vmatprep.subr.bf16.mxu0 %v611
    %1553 = vmatpush1.bf16.msra.mxu0 %v610
    %1554 = vmatprep.subr.bf16.mxu0 0
    %1555 = vmatpush1.bf16.msra.mxu0 0
    %1556 = vmatprep.subr.bf16.mxu0 0
    %1557 = vmatpush1.bf16.msra.mxu0 0
    %1558 = vmatprep.subr.bf16.mxu0 0
    %1559 = vmatpush1.bf16.msra.mxu0 0
    %1560 = vmatprep.subr.bf16.mxu0 0
    %1561 = vmatpush1.bf16.msra.mxu0 0
    %1562 = vmatprep.subr.bf16.mxu0 0
    %1563 = vmatpush1.bf16.msra.mxu0 0
    %1564 = vmatprep.subr.bf16.mxu0 0
    %1565 = vmatpush1.bf16.msra.mxu0 0
    %1566 = vmatprep.subr.bf16.mxu0 0
    %1567 = vmatpush1.bf16.msra.mxu0 0
    %1568 = vmatprep.subr.bf16.mxu0 0
    %1569 = vmatpush1.bf16.msra.mxu0 0
    %1570 = vmatprep.mubr.bf16.mxu0 0
    %1571 = vmatmul.mubr.bf16.gmra.mrb[0].mxu0 %v1496
    %v1572 = vpop.f32.mrb[0].mxu0
    %v1573 = vadd.f32 0.0, %v1572
    %v1574 = vpop.f32.mrb[0].mxu0
    %v1575 = vadd.f32 0.0, %v1574
    %v1576 = vpop.f32.mrb[0].mxu0
    %v1577 = vpop.f32.mrb[0].mxu0
    %1578 = vdwg.mxu0
    %v1579 = vadd.f32 %v1492, %v1532
    %v1580 = vadd.f32 %v1493, %v1534
    %v1581 = vadd.f32 %v1494, %v1573
    %v1582 = vadd.f32 %v1495, %v1575
    %v1583 = vxor.u32 %v1579, 2147483648
    %v1584 = vmul.f32 %v1583, 1.442695
    %v1585 = vpow.pop %v1584
    %v1586 = vadd.f32 %v1585, 1.0
    %v1587 = vrcp.pop %v1586
    %v1588 = vmul.f32 1.0, %v1587
    %v1589 = vxor.u32 %v1580, 2147483648
    %v1590 = vmul.f32 %v1589, 1.442695
    %v1591 = vpow.pop %v1590
    %v1592 = vadd.f32 %v1591, 1.0
    %v1593 = vrcp.pop %v1592
    %v1594 = vmul.f32 1.0, %v1593
    %v1595 = vtanh.pop %v1581
    %v1596 = vxor.u32 %v1582, 2147483648
    %v1597 = vmul.f32 %v1596, 1.442695
    %v1598 = vpow.pop %v1597
    %v1599 = vadd.f32 %v1598, 1.0
    %v1600 = vrcp.pop %v1599
    %v1601 = vmul.f32 1.0, %v1600
    %v1602 = vmul.f32 %v1594, %v1490
    %v1603 = vmul.f32 %v1588, %v1595
    %v1604 = vadd.f32 %v1602, %v1603
    %v1605 = vtanh.pop %v1604
    %v1606 = vmul.f32 %v1601, %v1605
    %1607 = vst [vmem:[#allocation3] sm:$0xff] %v1606
    %1608 = vst [vmem:[#allocation4] sm:$0xff] %v1604
    %s1609 = scalar_lea.vmem [#allocation5], 56
    %1610 = vst [vmem:[%s1609] sm:$0xff] %v1606
    %v1611 = vld [vmem:[#allocation3] sm:$0xff]
    %1612 = vst [vmem:[%s10] sm:$0xff] %v1611
    %v1613 = vld [vmem:[#allocation4] sm:$0xff]
    %1614 = vst [vmem:[%s11] sm:$0xff] %v1613
    %v1615 = vld [vmem:[#allocation5] sm:$0xff]
    %v1616 = vld [vmem:[#allocation5 + $0x8] sm:$0xff]
    %v1617 = vld [vmem:[#allocation5 + $0x10] sm:$0xff]
    %v1618 = vld [vmem:[#allocation5 + $0x18] sm:$0xff]
    %v1619 = vld [vmem:[#allocation5 + $0x20] sm:$0xff]
    %v1620 = vld [vmem:[#allocation5 + $0x28] sm:$0xff]
    %v1621 = vld [vmem:[#allocation5 + $0x30] sm:$0xff]
    %v1622 = vld [vmem:[#allocation5 + $0x38] sm:$0xff]
    %v1623 = vpack.c.bf16 %v1616, %v1615
    %v1624 = vpack.c.bf16 %v1618, %v1617
    %v1625 = vpack.c.bf16 %v1620, %v1619
    %v1626 = vpack.c.bf16 %v1622, %v1621
    %v1627 = vld [vmem:[%s6] sm:$0xff]
    %v1628 = vld [vmem:[%s6 + $0x8] sm:$0xff]
    %v1629 = vld [vmem:[%s6 + $0x10] sm:$0xff]
    %v1630 = vld [vmem:[%s6 + $0x18] sm:$0xff]
    %v1631 = vld [vmem:[%s6 + $0x20] sm:$0xff]
    %v1632 = vld [vmem:[%s6 + $0x28] sm:$0xff]
    %v1633 = vld [vmem:[%s6 + $0x30] sm:$0xff]
    %v1634 = vld [vmem:[%s6 + $0x38] sm:$0xff]
    %v1635 = vld [vmem:[%s6 + $0x40] sm:$0xff]
    %v1636 = vld [vmem:[%s6 + $0x48] sm:$0xff]
    %v1637 = vld [vmem:[%s6 + $0x50] sm:$0xff]
    %v1638 = vld [vmem:[%s6 + $0x58] sm:$0xff]
    %v1639 = vld [vmem:[%s6 + $0x60] sm:$0xff]
    %v1640 = vld [vmem:[%s6 + $0x68] sm:$0xff]
    %v1641 = vld [vmem:[%s6 + $0x70] sm:$0xff]
    %v1642 = vld [vmem:[%s6 + $0x78] sm:$0xff]
    %v1643 = vld [vmem:[%s6 + $0x80] sm:$0xff]
    %v1644 = vld [vmem:[%s6 + $0x88] sm:$0xff]
    %v1645 = vld [vmem:[%s6 + $0x90] sm:$0xff]
    %v1646 = vld [vmem:[%s6 + $0x98] sm:$0xff]
    %v1647 = vld [vmem:[%s6 + $0xa0] sm:$0xff]
    %v1648 = vld [vmem:[%s6 + $0xa8] sm:$0xff]
    %v1649 = vld [vmem:[%s6 + $0xb0] sm:$0xff]
    %v1650 = vld [vmem:[%s6 + $0xb8] sm:$0xff]
    %v1651 = vld [vmem:[%s6 + $0xc0] sm:$0xff]
    %v1652 = vld [vmem:[%s6 + $0xc8] sm:$0xff]
    %v1653 = vld [vmem:[%s6 + $0xd0] sm:$0xff]
    %v1654 = vld [vmem:[%s6 + $0xd8] sm:$0xff]
    %v1655 = vld [vmem:[%s6 + $0xe0] sm:$0xff]
    %v1656 = vld [vmem:[%s6 + $0xe8] sm:$0xff]
    %v1657 = vld [vmem:[%s6 + $0xf0] sm:$0xff]
    %v1658 = vld [vmem:[%s6 + $0xf8] sm:$0xff]
    %v1659 = vld [vmem:[%s8] sm:$0xf]
    %v1661 = vlaneseq
    %v1662 = vshrl.u32 %v1661, 7
    %v1663 = vsub.s32 0, %v1662
    %v1664 = vrot.slane %v1659, %v1663
    %v1665 = vlaneseq
    %v1666 = vshrl.u32 %v1665, 7
    %v1667 = vsub.s32 1, %v1666
    %v1668 = vrot.slane %v1659, %v1667
    %v1669 = vlaneseq
    %v1670 = vshrl.u32 %v1669, 7
    %v1671 = vsub.s32 2, %v1670
    %v1672 = vrot.slane %v1659, %v1671
    %v1673 = vlaneseq
    %v1674 = vshrl.u32 %v1673, 7
    %v1675 = vsub.s32 3, %v1674
    %v1676 = vrot.slane %v1659, %v1675
    %v1713 = vunpack.c.l.b16 %v1627
    %v1714 = vunpack.c.h.b16 %v1627
    %v1715 = vunpack.c.l.b16 %v1628
    %v1716 = vunpack.c.h.b16 %v1628
    %v1717 = vunpack.c.l.b16 %v1629
    %v1718 = vunpack.c.h.b16 %v1629
    %v1719 = vunpack.c.l.b16 %v1630
    %v1720 = vunpack.c.h.b16 %v1630
    %v1721 = vunpack.c.l.b16 %v1631
    %v1722 = vunpack.c.h.b16 %v1631
    %v1723 = vunpack.c.l.b16 %v1632
    %v1724 = vunpack.c.h.b16 %v1632
    %v1725 = vunpack.c.l.b16 %v1633
    %v1726 = vunpack.c.h.b16 %v1633
    %v1727 = vunpack.c.l.b16 %v1634
    %v1728 = vunpack.c.h.b16 %v1634
    %v1729 = vunpack.c.l.b16 %v1635
    %v1730 = vunpack.c.h.b16 %v1635
    %v1731 = vunpack.c.l.b16 %v1636
    %v1732 = vunpack.c.h.b16 %v1636
    %v1733 = vunpack.c.l.b16 %v1637
    %v1734 = vunpack.c.h.b16 %v1637
    %v1735 = vunpack.c.l.b16 %v1638
    %v1736 = vunpack.c.h.b16 %v1638
    %v1737 = vunpack.c.l.b16 %v1639
    %v1738 = vunpack.c.h.b16 %v1639
    %v1739 = vunpack.c.l.b16 %v1640
    %v1740 = vunpack.c.h.b16 %v1640
    %v1741 = vunpack.c.l.b16 %v1641
    %v1742 = vunpack.c.h.b16 %v1641
    %v1743 = vunpack.c.l.b16 %v1642
    %v1744 = vunpack.c.h.b16 %v1642
    %v1745 = vunpack.c.l.b16 %v1643
    %v1746 = vunpack.c.h.b16 %v1643
    %v1747 = vunpack.c.l.b16 %v1644
    %v1748 = vunpack.c.h.b16 %v1644
    %v1749 = vunpack.c.l.b16 %v1645
    %v1750 = vunpack.c.h.b16 %v1645
    %v1751 = vunpack.c.l.b16 %v1646
    %v1752 = vunpack.c.h.b16 %v1646
    %v1753 = vunpack.c.l.b16 %v1647
    %v1754 = vunpack.c.h.b16 %v1647
    %v1755 = vunpack.c.l.b16 %v1648
    %v1756 = vunpack.c.h.b16 %v1648
    %v1757 = vunpack.c.l.b16 %v1649
    %v1758 = vunpack.c.h.b16 %v1649
    %v1759 = vunpack.c.l.b16 %v1650
    %v1760 = vunpack.c.h.b16 %v1650
    %v1761 = vunpack.c.l.b16 %v1651
    %v1762 = vunpack.c.h.b16 %v1651
    %v1763 = vunpack.c.l.b16 %v1652
    %v1764 = vunpack.c.h.b16 %v1652
    %v1765 = vunpack.c.l.b16 %v1653
    %v1766 = vunpack.c.h.b16 %v1653
    %v1767 = vunpack.c.l.b16 %v1654
    %v1768 = vunpack.c.h.b16 %v1654
    %v1769 = vunpack.c.l.b16 %v1655
    %v1770 = vunpack.c.h.b16 %v1655
    %v1771 = vunpack.c.l.b16 %v1656
    %v1772 = vunpack.c.h.b16 %v1656
    %v1773 = vunpack.c.l.b16 %v1657
    %v1774 = vunpack.c.h.b16 %v1657
    %v1775 = vunpack.c.l.b16 %v1658
    %v1776 = vunpack.c.h.b16 %v1658
    %v1777 = vpack.c.b16 %v1717, %v1713
    %v1778 = vpack.c.b16 %v1718, %v1714
    %v1779 = vpack.c.b16 %v1719, %v1715
    %v1780 = vpack.c.b16 %v1720, %v1716
    %v1781 = vpack.c.b16 %v1725, %v1721
    %v1782 = vpack.c.b16 %v1726, %v1722
    %v1783 = vpack.c.b16 %v1727, %v1723
    %v1784 = vpack.c.b16 %v1728, %v1724
    %v1785 = vpack.c.b16 %v1733, %v1729
    %v1786 = vpack.c.b16 %v1734, %v1730
    %v1787 = vpack.c.b16 %v1735, %v1731
    %v1788 = vpack.c.b16 %v1736, %v1732
    %v1789 = vpack.c.b16 %v1741, %v1737
    %v1790 = vpack.c.b16 %v1742, %v1738
    %v1791 = vpack.c.b16 %v1743, %v1739
    %v1792 = vpack.c.b16 %v1744, %v1740
    %v1793 = vpack.c.b16 %v1749, %v1745
    %v1794 = vpack.c.b16 %v1750, %v1746
    %v1795 = vpack.c.b16 %v1751, %v1747
    %v1796 = vpack.c.b16 %v1752, %v1748
    %v1797 = vpack.c.b16 %v1757, %v1753
    %v1798 = vpack.c.b16 %v1758, %v1754
    %v1799 = vpack.c.b16 %v1759, %v1755
    %v1800 = vpack.c.b16 %v1760, %v1756
    %v1801 = vpack.c.b16 %v1765, %v1761
    %v1802 = vpack.c.b16 %v1766, %v1762
    %v1803 = vpack.c.b16 %v1767, %v1763
    %v1804 = vpack.c.b16 %v1768, %v1764
    %v1805 = vpack.c.b16 %v1773, %v1769
    %v1806 = vpack.c.b16 %v1774, %v1770
    %v1807 = vpack.c.b16 %v1775, %v1771
    %v1808 = vpack.c.b16 %v1776, %v1772
    %1841 = vmatprep.subr.bf16.mxu0 %v1778
    %1842 = vmatpush1.bf16.msra.mxu0 %v1777
    %1843 = vmatprep.subr.bf16.mxu0 %v1782
    %1844 = vmatpush1.bf16.msra.mxu0 %v1781
    %1845 = vmatprep.subr.bf16.mxu0 %v1786
    %1846 = vmatpush1.bf16.msra.mxu0 %v1785
    %1847 = vmatprep.subr.bf16.mxu0 %v1790
    %1848 = vmatpush1.bf16.msra.mxu0 %v1789
    %1849 = vmatprep.subr.bf16.mxu0 %v1794
    %1850 = vmatpush1.bf16.msra.mxu0 %v1793
    %1851 = vmatprep.subr.bf16.mxu0 %v1798
    %1852 = vmatpush1.bf16.msra.mxu0 %v1797
    %1853 = vmatprep.subr.bf16.mxu0 %v1802
    %1854 = vmatpush1.bf16.msra.mxu0 %v1801
    %1855 = vmatprep.subr.bf16.mxu0 %v1806
    %1856 = vmatpush1.bf16.msra.mxu0 %v1805
    %1857 = vmatprep.subr.bf16.mxu0 0
    %1858 = vmatpush1.bf16.msra.mxu0 0
    %1859 = vmatprep.subr.bf16.mxu0 0
    %1860 = vmatpush1.bf16.msra.mxu0 0
    %1861 = vmatprep.subr.bf16.mxu0 0
    %1862 = vmatpush1.bf16.msra.mxu0 0
    %1863 = vmatprep.subr.bf16.mxu0 0
    %1864 = vmatpush1.bf16.msra.mxu0 0
    %1865 = vmatprep.subr.bf16.mxu0 0
    %1866 = vmatpush1.bf16.msra.mxu0 0
    %1867 = vmatprep.subr.bf16.mxu0 0
    %1868 = vmatpush1.bf16.msra.mxu0 0
    %1869 = vmatprep.subr.bf16.mxu0 0
    %1870 = vmatpush1.bf16.msra.mxu0 0
    %1871 = vmatprep.subr.bf16.mxu0 0
    %1872 = vmatpush1.bf16.msra.mxu0 0
    %1873 = vmatprep.mubr.bf16.mxu0 0
    %1874 = vmatmul.mubr.bf16.gmra.mrb[0].mxu0 %v1623
    %v1875 = vpop.f32.mrb[0].mxu0
    %v1876 = vadd.f32 %v1664, %v1875
    %v1877 = vpop.f32.mrb[0].mxu0
    %v1878 = vadd.f32 %v1668, %v1877
    %v1879 = vpop.f32.mrb[0].mxu0
    %v1880 = vadd.f32 %v1664, %v1879
    %v1881 = vpop.f32.mrb[0].mxu0
    %v1882 = vadd.f32 %v1668, %v1881
    %1883 = vmatprep.mubr.bf16.mxu0 0
    %1884 = vmatmul.mubr.bf16.gmra.mrb[0].mxu0 %v1624
    %v1885 = vpop.f32.mrb[0].mxu0
    %v1886 = vadd.f32 %v1664, %v1885
    %v1887 = vpop.f32.mrb[0].mxu0
    %v1888 = vadd.f32 %v1668, %v1887
    %v1889 = vpop.f32.mrb[0].mxu0
    %v1890 = vadd.f32 %v1664, %v1889
    %v1891 = vpop.f32.mrb[0].mxu0
    %v1892 = vadd.f32 %v1668, %v1891
    %1893 = vmatprep.mubr.bf16.mxu0 0
    %1894 = vmatmul.mubr.bf16.gmra.mrb[0].mxu0 %v1625
    %v1895 = vpop.f32.mrb[0].mxu0
    %v1896 = vadd.f32 %v1664, %v1895
    %v1897 = vpop.f32.mrb[0].mxu0
    %v1898 = vadd.f32 %v1668, %v1897
    %v1899 = vpop.f32.mrb[0].mxu0
    %v1900 = vadd.f32 %v1664, %v1899
    %v1901 = vpop.f32.mrb[0].mxu0
    %v1902 = vadd.f32 %v1668, %v1901
    %1903 = vmatprep.mubr.bf16.mxu0 0
    %1904 = vmatmul.mubr.bf16.gmra.mrb[0].mxu0 %v1626
    %v1905 = vpop.f32.mrb[0].mxu0
    %v1906 = vadd.f32 %v1664, %v1905
    %v1907 = vpop.f32.mrb[0].mxu0
    %v1908 = vadd.f32 %v1668, %v1907
    %v1909 = vpop.f32.mrb[0].mxu0
    %v1910 = vadd.f32 %v1664, %v1909
    %v1911 = vpop.f32.mrb[0].mxu0
    %v1912 = vadd.f32 %v1668, %v1911
    %1913 = vdwg.mxu0
    %1914 = vmatprep.subr.bf16.mxu0 %v1780
    %1915 = vmatpush1.bf16.msra.mxu0 %v1779
    %1916 = vmatprep.subr.bf16.mxu0 %v1784
    %1917 = vmatpush1.bf16.msra.mxu0 %v1783
    %1918 = vmatprep.subr.bf16.mxu0 %v1788
    %1919 = vmatpush1.bf16.msra.mxu0 %v1787
    %1920 = vmatprep.subr.bf16.mxu0 %v1792
    %1921 = vmatpush1.bf16.msra.mxu0 %v1791
    %1922 = vmatprep.subr.bf16.mxu0 %v1796
    %1923 = vmatpush1.bf16.msra.mxu0 %v1795
    %1924 = vmatprep.subr.bf16.mxu0 %v1800
    %1925 = vmatpush1.bf16.msra.mxu0 %v1799
    %1926 = vmatprep.subr.bf16.mxu0 %v1804
    %1927 = vmatpush1.bf16.msra.mxu0 %v1803
    %1928 = vmatprep.subr.bf16.mxu0 %v1808
    %1929 = vmatpush1.bf16.msra.mxu0 %v1807
    %1930 = vmatprep.subr.bf16.mxu0 0
    %1931 = vmatpush1.bf16.msra.mxu0 0
    %1932 = vmatprep.subr.bf16.mxu0 0
    %1933 = vmatpush1.bf16.msra.mxu0 0
    %1934 = vmatprep.subr.bf16.mxu0 0
    %1935 = vmatpush1.bf16.msra.mxu0 0
    %1936 = vmatprep.subr.bf16.mxu0 0
    %1937 = vmatpush1.bf16.msra.mxu0 0
    %1938 = vmatprep.subr.bf16.mxu0 0
    %1939 = vmatpush1.bf16.msra.mxu0 0
    %1940 = vmatprep.subr.bf16.mxu0 0
    %1941 = vmatpush1.bf16.msra.mxu0 0
    %1942 = vmatprep.subr.bf16.mxu0 0
    %1943 = vmatpush1.bf16.msra.mxu0 0
    %1944 = vmatprep.subr.bf16.mxu0 0
    %1945 = vmatpush1.bf16.msra.mxu0 0
    %1946 = vmatprep.mubr.bf16.mxu0 0
    %1947 = vmatmul.mubr.bf16.gmra.mrb[0].mxu0 %v1623
    %v1948 = vpop.f32.mrb[0].mxu0
    %v1949 = vadd.f32 %v1672, %v1948
    %v1950 = vpop.f32.mrb[0].mxu0
    %v1951 = vadd.f32 %v1676, %v1950
    %v1952 = vpop.f32.mrb[0].mxu0
    %v1953 = vadd.f32 %v1672, %v1952
    %v1954 = vpop.f32.mrb[0].mxu0
    %v1955 = vadd.f32 %v1676, %v1954
    %1956 = vmatprep.mubr.bf16.mxu0 0
    %1957 = vmatmul.mubr.bf16.gmra.mrb[0].mxu0 %v1624
    %v1958 = vpop.f32.mrb[0].mxu0
    %v1959 = vadd.f32 %v1672, %v1958
    %v1960 = vpop.f32.mrb[0].mxu0
    %v1961 = vadd.f32 %v1676, %v1960
    %v1962 = vpop.f32.mrb[0].mxu0
    %v1963 = vadd.f32 %v1672, %v1962
    %v1964 = vpop.f32.mrb[0].mxu0
    %v1965 = vadd.f32 %v1676, %v1964
    %1966 = vmatprep.mubr.bf16.mxu0 0
    %1967 = vmatmul.mubr.bf16.gmra.mrb[0].mxu0 %v1625
    %v1968 = vpop.f32.mrb[0].mxu0
    %v1969 = vadd.f32 %v1672, %v1968
    %v1970 = vpop.f32.mrb[0].mxu0
    %v1971 = vadd.f32 %v1676, %v1970
    %v1972 = vpop.f32.mrb[0].mxu0
    %v1973 = vadd.f32 %v1672, %v1972
    %v1974 = vpop.f32.mrb[0].mxu0
    %v1975 = vadd.f32 %v1676, %v1974
    %1976 = vmatprep.mubr.bf16.mxu0 0
    %1977 = vmatmul.mubr.bf16.gmra.mrb[0].mxu0 %v1626
    %v1978 = vpop.f32.mrb[0].mxu0
    %v1979 = vadd.f32 %v1672, %v1978
    %v1980 = vpop.f32.mrb[0].mxu0
    %v1981 = vadd.f32 %v1676, %v1980
    %v1982 = vpop.f32.mrb[0].mxu0
    %v1983 = vadd.f32 %v1672, %v1982
    %v1984 = vpop.f32.mrb[0].mxu0
    %v1985 = vadd.f32 %v1676, %v1984
    %1986 = vdwg.mxu0
    %1987 = vst [vmem:[#allocation2] sm:$0xff] %v1876
    %1988 = vst [vmem:[#allocation2 + $0x8] sm:$0xff] %v1878
    %1989 = vst [vmem:[#allocation2 + $0x10] sm:$0xff] %v1949
    %1990 = vst [vmem:[#allocation2 + $0x18] sm:$0xff] %v1951
    %1991 = vst [vmem:[#allocation2 + $0x20] sm:$0xff] %v1880
    %1992 = vst [vmem:[#allocation2 + $0x28] sm:$0xff] %v1882
    %1993 = vst [vmem:[#allocation2 + $0x30] sm:$0xff] %v1953
    %1994 = vst [vmem:[#allocation2 + $0x38] sm:$0xff] %v1955
    %1995 = vst [vmem:[#allocation2 + $0x40] sm:$0xff] %v1886
    %1996 = vst [vmem:[#allocation2 + $0x48] sm:$0xff] %v1888
    %1997 = vst [vmem:[#allocation2 + $0x50] sm:$0xff] %v1959
    %1998 = vst [vmem:[#allocation2 + $0x58] sm:$0xff] %v1961
    %1999 = vst [vmem:[#allocation2 + $0x60] sm:$0xff] %v1890
    %2000 = vst [vmem:[#allocation2 + $0x68] sm:$0xff] %v1892
    %2001 = vst [vmem:[#allocation2 + $0x70] sm:$0xff] %v1963
    %2002 = vst [vmem:[#allocation2 + $0x78] sm:$0xff] %v1965
    %2003 = vst [vmem:[#allocation2 + $0x80] sm:$0xff] %v1896
    %2004 = vst [vmem:[#allocation2 + $0x88] sm:$0xff] %v1898
    %2005 = vst [vmem:[#allocation2 + $0x90] sm:$0xff] %v1969
    %2006 = vst [vmem:[#allocation2 + $0x98] sm:$0xff] %v1971
    %2007 = vst [vmem:[#allocation2 + $0xa0] sm:$0xff] %v1900
    %2008 = vst [vmem:[#allocation2 + $0xa8] sm:$0xff] %v1902
    %2009 = vst [vmem:[#allocation2 + $0xb0] sm:$0xff] %v1973
    %2010 = vst [vmem:[#allocation2 + $0xb8] sm:$0xff] %v1975
    %2011 = vst [vmem:[#allocation2 + $0xc0] sm:$0xff] %v1906
    %2012 = vst [vmem:[#allocation2 + $0xc8] sm:$0xff] %v1908
    %2013 = vst [vmem:[#allocation2 + $0xd0] sm:$0xff] %v1979
    %2014 = vst [vmem:[#allocation2 + $0xd8] sm:$0xff] %v1981
    %2015 = vst [vmem:[#allocation2 + $0xe0] sm:$0xff] %v1910
    %2016 = vst [vmem:[#allocation2 + $0xe8] sm:$0xff] %v1912
    %2017 = vst [vmem:[#allocation2 + $0xf0] sm:$0xff] %v1983
    %2018 = vst [vmem:[#allocation2 + $0xf8] sm:$0xff] %v1985
    %s2019 = scalar_lea.vmem %s1, 8
    %v2020 = vld [vmem:[%s2019] sm:$0xff]
    %2021 = vst [vmem:[#allocation3] sm:$0xff] %v2020
    %s2022 = scalar_lea.vmem %s2, 8
    %v2023 = vld [vmem:[%s2022] sm:$0xff]
    %2024 = vst [vmem:[#allocation4] sm:$0xff] %v2023
    %v2025 = vld [vmem:[%s7] sm:$0xff]
    %v2026 = vld [vmem:[%s7 + $0x8] sm:$0xff]
    %v2027 = vld [vmem:[%s7 + $0x10] sm:$0xff]
    %v2028 = vld [vmem:[%s7 + $0x18] sm:$0xff]
    %v2029 = vld [vmem:[%s7 + $0x20] sm:$0xff]
    %v2030 = vld [vmem:[%s7 + $0x28] sm:$0xff]
    %v2031 = vld [vmem:[%s7 + $0x30] sm:$0xff]
    %v2032 = vld [vmem:[%s7 + $0x38] sm:$0xff]
    %v2033 = vld [vmem:[%s7 + $0x40] sm:$0xff]
    %v2034 = vld [vmem:[%s7 + $0x48] sm:$0xff]
    %v2035 = vld [vmem:[%s7 + $0x50] sm:$0xff]
    %v2036 = vld [vmem:[%s7 + $0x58] sm:$0xff]
    %v2037 = vld [vmem:[%s7 + $0x60] sm:$0xff]
    %v2038 = vld [vmem:[%s7 + $0x68] sm:$0xff]
    %v2039 = vld [vmem:[%s7 + $0x70] sm:$0xff]
    %v2040 = vld [vmem:[%s7 + $0x78] sm:$0xff]
    %v2041 = vld [vmem:[%s7 + $0x80] sm:$0xff]
    %v2042 = vld [vmem:[%s7 + $0x88] sm:$0xff]
    %v2043 = vld [vmem:[%s7 + $0x90] sm:$0xff]
    %v2044 = vld [vmem:[%s7 + $0x98] sm:$0xff]
    %v2045 = vld [vmem:[%s7 + $0xa0] sm:$0xff]
    %v2046 = vld [vmem:[%s7 + $0xa8] sm:$0xff]
    %v2047 = vld [vmem:[%s7 + $0xb0] sm:$0xff]
    %v2048 = vld [vmem:[%s7 + $0xb8] sm:$0xff]
    %v2049 = vld [vmem:[%s7 + $0xc0] sm:$0xff]
    %v2050 = vld [vmem:[%s7 + $0xc8] sm:$0xff]
    %v2051 = vld [vmem:[%s7 + $0xd0] sm:$0xff]
    %v2052 = vld [vmem:[%s7 + $0xd8] sm:$0xff]
    %v2053 = vld [vmem:[%s7 + $0xe0] sm:$0xff]
    %v2054 = vld [vmem:[%s7 + $0xe8] sm:$0xff]
    %v2055 = vld [vmem:[%s7 + $0xf0] sm:$0xff]
    %v2056 = vld [vmem:[%s7 + $0xf8] sm:$0xff]
    %v2057 = vld [vmem:[#allocation3] sm:$0xff]
    %v2058 = vld [vmem:[#allocation4] sm:$0xff]
    %v2059 = vld [vmem:[#allocation2] sm:$0xff]
    %v2060 = vld [vmem:[#allocation2 + $0x8] sm:$0xff]
    %v2061 = vld [vmem:[#allocation2 + $0x10] sm:$0xff]
    %v2062 = vld [vmem:[#allocation2 + $0x18] sm:$0xff]
    %v2063 = vpack.c.bf16 %v2057, %v2057
    %v2096 = vunpack.c.l.b16 %v2025
    %v2097 = vunpack.c.h.b16 %v2025
    %v2098 = vunpack.c.l.b16 %v2026
    %v2099 = vunpack.c.h.b16 %v2026
    %v2100 = vunpack.c.l.b16 %v2027
    %v2101 = vunpack.c.h.b16 %v2027
    %v2102 = vunpack.c.l.b16 %v2028
    %v2103 = vunpack.c.h.b16 %v2028
    %v2104 = vunpack.c.l.b16 %v2029
    %v2105 = vunpack.c.h.b16 %v2029
    %v2106 = vunpack.c.l.b16 %v2030
    %v2107 = vunpack.c.h.b16 %v2030
    %v2108 = vunpack.c.l.b16 %v2031
    %v2109 = vunpack.c.h.b16 %v2031
    %v2110 = vunpack.c.l.b16 %v2032
    %v2111 = vunpack.c.h.b16 %v2032
    %v2112 = vunpack.c.l.b16 %v2033
    %v2113 = vunpack.c.h.b16 %v2033
    %v2114 = vunpack.c.l.b16 %v2034
    %v2115 = vunpack.c.h.b16 %v2034
    %v2116 = vunpack.c.l.b16 %v2035
    %v2117 = vunpack.c.h.b16 %v2035
    %v2118 = vunpack.c.l.b16 %v2036
    %v2119 = vunpack.c.h.b16 %v2036
    %v2120 = vunpack.c.l.b16 %v2037
    %v2121 = vunpack.c.h.b16 %v2037
    %v2122 = vunpack.c.l.b16 %v2038
    %v2123 = vunpack.c.h.b16 %v2038
    %v2124 = vunpack.c.l.b16 %v2039
    %v2125 = vunpack.c.h.b16 %v2039
    %v2126 = vunpack.c.l.b16 %v2040
    %v2127 = vunpack.c.h.b16 %v2040
    %v2128 = vunpack.c.l.b16 %v2041
    %v2129 = vunpack.c.h.b16 %v2041
    %v2130 = vunpack.c.l.b16 %v2042
    %v2131 = vunpack.c.h.b16 %v2042
    %v2132 = vunpack.c.l.b16 %v2043
    %v2133 = vunpack.c.h.b16 %v2043
    %v2134 = vunpack.c.l.b16 %v2044
    %v2135 = vunpack.c.h.b16 %v2044
    %v2136 = vunpack.c.l.b16 %v2045
    %v2137 = vunpack.c.h.b16 %v2045
    %v2138 = vunpack.c.l.b16 %v2046
    %v2139 = vunpack.c.h.b16 %v2046
    %v2140 = vunpack.c.l.b16 %v2047
    %v2141 = vunpack.c.h.b16 %v2047
    %v2142 = vunpack.c.l.b16 %v2048
    %v2143 = vunpack.c.h.b16 %v2048
    %v2144 = vunpack.c.l.b16 %v2049
    %v2145 = vunpack.c.h.b16 %v2049
    %v2146 = vunpack.c.l.b16 %v2050
    %v2147 = vunpack.c.h.b16 %v2050
    %v2148 = vunpack.c.l.b16 %v2051
    %v2149 = vunpack.c.h.b16 %v2051
    %v2150 = vunpack.c.l.b16 %v2052
    %v2151 = vunpack.c.h.b16 %v2052
    %v2152 = vunpack.c.l.b16 %v2053
    %v2153 = vunpack.c.h.b16 %v2053
    %v2154 = vunpack.c.l.b16 %v2054
    %v2155 = vunpack.c.h.b16 %v2054
    %v2156 = vunpack.c.l.b16 %v2055
    %v2157 = vunpack.c.h.b16 %v2055
    %v2158 = vunpack.c.l.b16 %v2056
    %v2159 = vunpack.c.h.b16 %v2056
    %v2160 = vpack.c.b16 %v2100, %v2096
    %v2161 = vpack.c.b16 %v2101, %v2097
    %v2162 = vpack.c.b16 %v2102, %v2098
    %v2163 = vpack.c.b16 %v2103, %v2099
    %v2164 = vpack.c.b16 %v2108, %v2104
    %v2165 = vpack.c.b16 %v2109, %v2105
    %v2166 = vpack.c.b16 %v2110, %v2106
    %v2167 = vpack.c.b16 %v2111, %v2107
    %v2168 = vpack.c.b16 %v2116, %v2112
    %v2169 = vpack.c.b16 %v2117, %v2113
    %v2170 = vpack.c.b16 %v2118, %v2114
    %v2171 = vpack.c.b16 %v2119, %v2115
    %v2172 = vpack.c.b16 %v2124, %v2120
    %v2173 = vpack.c.b16 %v2125, %v2121
    %v2174 = vpack.c.b16 %v2126, %v2122
    %v2175 = vpack.c.b16 %v2127, %v2123
    %v2176 = vpack.c.b16 %v2132, %v2128
    %v2177 = vpack.c.b16 %v2133, %v2129
    %v2178 = vpack.c.b16 %v2134, %v2130
    %v2179 = vpack.c.b16 %v2135, %v2131
    %v2180 = vpack.c.b16 %v2140, %v2136
    %v2181 = vpack.c.b16 %v2141, %v2137
    %v2182 = vpack.c.b16 %v2142, %v2138
    %v2183 = vpack.c.b16 %v2143, %v2139
    %v2184 = vpack.c.b16 %v2148, %v2144
    %v2185 = vpack.c.b16 %v2149, %v2145
    %v2186 = vpack.c.b16 %v2150, %v2146
    %v2187 = vpack.c.b16 %v2151, %v2147
    %v2188 = vpack.c.b16 %v2156, %v2152
    %v2189 = vpack.c.b16 %v2157, %v2153
    %v2190 = vpack.c.b16 %v2158, %v2154
    %v2191 = vpack.c.b16 %v2159, %v2155
    %2224 = vmatprep.subr.bf16.mxu0 %v2161
    %2225 = vmatpush1.bf16.msra.mxu0 %v2160
    %2226 = vmatprep.subr.bf16.mxu0 %v2165
    %2227 = vmatpush1.bf16.msra.mxu0 %v2164
    %2228 = vmatprep.subr.bf16.mxu0 %v2169
    %2229 = vmatpush1.bf16.msra.mxu0 %v2168
    %2230 = vmatprep.subr.bf16.mxu0 %v2173
    %2231 = vmatpush1.bf16.msra.mxu0 %v2172
    %2232 = vmatprep.subr.bf16.mxu0 %v2177
    %2233 = vmatpush1.bf16.msra.mxu0 %v2176
    %2234 = vmatprep.subr.bf16.mxu0 %v2181
    %2235 = vmatpush1.bf16.msra.mxu0 %v2180
    %2236 = vmatprep.subr.bf16.mxu0 %v2185
    %2237 = vmatpush1.bf16.msra.mxu0 %v2184
    %2238 = vmatprep.subr.bf16.mxu0 %v2189
    %2239 = vmatpush1.bf16.msra.mxu0 %v2188
    %2240 = vmatprep.subr.bf16.mxu0 0
    %2241 = vmatpush1.bf16.msra.mxu0 0
    %2242 = vmatprep.subr.bf16.mxu0 0
    %2243 = vmatpush1.bf16.msra.mxu0 0
    %2244 = vmatprep.subr.bf16.mxu0 0
    %2245 = vmatpush1.bf16.msra.mxu0 0
    %2246 = vmatprep.subr.bf16.mxu0 0
    %2247 = vmatpush1.bf16.msra.mxu0 0
    %2248 = vmatprep.subr.bf16.mxu0 0
    %2249 = vmatpush1.bf16.msra.mxu0 0
    %2250 = vmatprep.subr.bf16.mxu0 0
    %2251 = vmatpush1.bf16.msra.mxu0 0
    %2252 = vmatprep.subr.bf16.mxu0 0
    %2253 = vmatpush1.bf16.msra.mxu0 0
    %2254 = vmatprep.subr.bf16.mxu0 0
    %2255 = vmatpush1.bf16.msra.mxu0 0
    %2256 = vmatprep.mubr.bf16.mxu0 0
    %2257 = vmatmul.mubr.bf16.gmra.mrb[0].mxu0 %v2063
    %v2258 = vpop.f32.mrb[0].mxu0
    %v2259 = vadd.f32 0.0, %v2258
    %v2260 = vpop.f32.mrb[0].mxu0
    %v2261 = vadd.f32 0.0, %v2260
    %v2262 = vpop.f32.mrb[0].mxu0
    %v2263 = vpop.f32.mrb[0].mxu0
    %2264 = vdwg.mxu0
    %2265 = vmatprep.subr.bf16.mxu0 %v2163
    %2266 = vmatpush1.bf16.msra.mxu0 %v2162
    %2267 = vmatprep.subr.bf16.mxu0 %v2167
    %2268 = vmatpush1.bf16.msra.mxu0 %v2166
    %2269 = vmatprep.subr.bf16.mxu0 %v2171
    %2270 = vmatpush1.bf16.msra.mxu0 %v2170
    %2271 = vmatprep.subr.bf16.mxu0 %v2175
    %2272 = vmatpush1.bf16.msra.mxu0 %v2174
    %2273 = vmatprep.subr.bf16.mxu0 %v2179
    %2274 = vmatpush1.bf16.msra.mxu0 %v2178
    %2275 = vmatprep.subr.bf16.mxu0 %v2183
    %2276 = vmatpush1.bf16.msra.mxu0 %v2182
    %2277 = vmatprep.subr.bf16.mxu0 %v2187
    %2278 = vmatpush1.bf16.msra.mxu0 %v2186
    %2279 = vmatprep.subr.bf16.mxu0 %v2191
    %2280 = vmatpush1.bf16.msra.mxu0 %v2190
    %2281 = vmatprep.subr.bf16.mxu0 0
    %2282 = vmatpush1.bf16.msra.mxu0 0
    %2283 = vmatprep.subr.bf16.mxu0 0
    %2284 = vmatpush1.bf16.msra.mxu0 0
    %2285 = vmatprep.subr.bf16.mxu0 0
    %2286 = vmatpush1.bf16.msra.mxu0 0
    %2287 = vmatprep.subr.bf16.mxu0 0
    %2288 = vmatpush1.bf16.msra.mxu0 0
    %2289 = vmatprep.subr.bf16.mxu0 0
    %2290 = vmatpush1.bf16.msra.mxu0 0
    %2291 = vmatprep.subr.bf16.mxu0 0
    %2292 = vmatpush1.bf16.msra.mxu0 0
    %2293 = vmatprep.subr.bf16.mxu0 0
    %2294 = vmatpush1.bf16.msra.mxu0 0
    %2295 = vmatprep.subr.bf16.mxu0 0
    %2296 = vmatpush1.bf16.msra.mxu0 0
    %2297 = vmatprep.mubr.bf16.mxu0 0
    %2298 = vmatmul.mubr.bf16.gmra.mrb[0].mxu0 %v2063
    %v2299 = vpop.f32.mrb[0].mxu0
    %v2300 = vadd.f32 0.0, %v2299
    %v2301 = vpop.f32.mrb[0].mxu0
    %v2302 = vadd.f32 0.0, %v2301
    %v2303 = vpop.f32.mrb[0].mxu0
    %v2304 = vpop.f32.mrb[0].mxu0
    %2305 = vdwg.mxu0
    %v2306 = vadd.f32 %v2059, %v2259
    %v2307 = vadd.f32 %v2060, %v2261
    %v2308 = vadd.f32 %v2061, %v2300
    %v2309 = vadd.f32 %v2062, %v2302
    %v2310 = vxor.u32 %v2306, 2147483648
    %v2311 = vmul.f32 %v2310, 1.442695
    %v2312 = vpow.pop %v2311
    %v2313 = vadd.f32 %v2312, 1.0
    %v2314 = vrcp.pop %v2313
    %v2315 = vmul.f32 1.0, %v2314
    %v2316 = vxor.u32 %v2307, 2147483648
    %v2317 = vmul.f32 %v2316, 1.442695
    %v2318 = vpow.pop %v2317
    %v2319 = vadd.f32 %v2318, 1.0
    %v2320 = vrcp.pop %v2319
    %v2321 = vmul.f32 1.0, %v2320
    %v2322 = vtanh.pop %v2308
    %v2323 = vxor.u32 %v2309, 2147483648
    %v2324 = vmul.f32 %v2323, 1.442695
    %v2325 = vpow.pop %v2324
    %v2326 = vadd.f32 %v2325, 1.0
    %v2327 = vrcp.pop %v2326
    %v2328 = vmul.f32 1.0, %v2327
    %v2329 = vmul.f32 %v2321, %v2058
    %v2330 = vmul.f32 %v2315, %v2322
    %v2331 = vadd.f32 %v2329, %v2330
    %v2332 = vtanh.pop %v2331
    %v2333 = vmul.f32 %v2328, %v2332
    %2334 = vst [vmem:[#allocation3] sm:$0xff] %v2333
    %2335 = vst [vmem:[#allocation4] sm:$0xff] %v2331
    %2336 = vst [vmem:[#allocation5] sm:$0xff] %v2333
    %v2337 = vld [vmem:[#allocation3] sm:$0xff]
    %v2338 = vld [vmem:[#allocation4] sm:$0xff]
    %v2339 = vld [vmem:[%s759] sm:$0xff]
    %v2340 = vld [vmem:[%s759 + $0x8] sm:$0xff]
    %v2341 = vld [vmem:[%s759 + $0x10] sm:$0xff]
    %v2342 = vld [vmem:[%s759 + $0x18] sm:$0xff]
    %v2343 = vpack.c.bf16 %v2337, %v2337
    %2344 = vmatprep.subr.bf16.mxu0 %v2161
    %2345 = vmatpush1.bf16.msra.mxu0 %v2160
    %2346 = vmatprep.subr.bf16.mxu0 %v2165
    %2347 = vmatpush1.bf16.msra.mxu0 %v2164
    %2348 = vmatprep.subr.bf16.mxu0 %v2169
    %2349 = vmatpush1.bf16.msra.mxu0 %v2168
    %2350 = vmatprep.subr.bf16.mxu0 %v2173
    %2351 = vmatpush1.bf16.msra.mxu0 %v2172
    %2352 = vmatprep.subr.bf16.mxu0 %v2177
    %2353 = vmatpush1.bf16.msra.mxu0 %v2176
    %2354 = vmatprep.subr.bf16.mxu0 %v2181
    %2355 = vmatpush1.bf16.msra.mxu0 %v2180
    %2356 = vmatprep.subr.bf16.mxu0 %v2185
    %2357 = vmatpush1.bf16.msra.mxu0 %v2184
    %2358 = vmatprep.subr.bf16.mxu0 %v2189
    %2359 = vmatpush1.bf16.msra.mxu0 %v2188
    %2360 = vmatprep.subr.bf16.mxu0 0
    %2361 = vmatpush1.bf16.msra.mxu0 0
    %2362 = vmatprep.subr.bf16.mxu0 0
    %2363 = vmatpush1.bf16.msra.mxu0 0
    %2364 = vmatprep.subr.bf16.mxu0 0
    %2365 = vmatpush1.bf16.msra.mxu0 0
    %2366 = vmatprep.subr.bf16.mxu0 0
    %2367 = vmatpush1.bf16.msra.mxu0 0
    %2368 = vmatprep.subr.bf16.mxu0 0
    %2369 = vmatpush1.bf16.msra.mxu0 0
    %2370 = vmatprep.subr.bf16.mxu0 0
    %2371 = vmatpush1.bf16.msra.mxu0 0
    %2372 = vmatprep.subr.bf16.mxu0 0
    %2373 = vmatpush1.bf16.msra.mxu0 0
    %2374 = vmatprep.subr.bf16.mxu0 0
    %2375 = vmatpush1.bf16.msra.mxu0 0
    %2376 = vmatprep.mubr.bf16.mxu0 0
    %2377 = vmatmul.mubr.bf16.gmra.mrb[0].mxu0 %v2343
    %v2378 = vpop.f32.mrb[0].mxu0
    %v2379 = vadd.f32 0.0, %v2378
    %v2380 = vpop.f32.mrb[0].mxu0
    %v2381 = vadd.f32 0.0, %v2380
    %v2382 = vpop.f32.mrb[0].mxu0
    %v2383 = vpop.f32.mrb[0].mxu0
    %2384 = vdwg.mxu0
    %2385 = vmatprep.subr.bf16.mxu0 %v2163
    %2386 = vmatpush1.bf16.msra.mxu0 %v2162
    %2387 = vmatprep.subr.bf16.mxu0 %v2167
    %2388 = vmatpush1.bf16.msra.mxu0 %v2166
    %2389 = vmatprep.subr.bf16.mxu0 %v2171
    %2390 = vmatpush1.bf16.msra.mxu0 %v2170
    %2391 = vmatprep.subr.bf16.mxu0 %v2175
    %2392 = vmatpush1.bf16.msra.mxu0 %v2174
    %2393 = vmatprep.subr.bf16.mxu0 %v2179
    %2394 = vmatpush1.bf16.msra.mxu0 %v2178
    %2395 = vmatprep.subr.bf16.mxu0 %v2183
    %2396 = vmatpush1.bf16.msra.mxu0 %v2182
    %2397 = vmatprep.subr.bf16.mxu0 %v2187
    %2398 = vmatpush1.bf16.msra.mxu0 %v2186
    %2399 = vmatprep.subr.bf16.mxu0 %v2191
    %2400 = vmatpush1.bf16.msra.mxu0 %v2190
    %2401 = vmatprep.subr.bf16.mxu0 0
    %2402 = vmatpush1.bf16.msra.mxu0 0
    %2403 = vmatprep.subr.bf16.mxu0 0
    %2404 = vmatpush1.bf16.msra.mxu0 0
    %2405 = vmatprep.subr.bf16.mxu0 0
    %2406 = vmatpush1.bf16.msra.mxu0 0
    %2407 = vmatprep.subr.bf16.mxu0 0
    %2408 = vmatpush1.bf16.msra.mxu0 0
    %2409 = vmatprep.subr.bf16.mxu0 0
    %2410 = vmatpush1.bf16.msra.mxu0 0
    %2411 = vmatprep.subr.bf16.mxu0 0
    %2412 = vmatpush1.bf16.msra.mxu0 0
    %2413 = vmatprep.subr.bf16.mxu0 0
    %2414 = vmatpush1.bf16.msra.mxu0 0
    %2415 = vmatprep.subr.bf16.mxu0 0
    %2416 = vmatpush1.bf16.msra.mxu0 0
    %2417 = vmatprep.mubr.bf16.mxu0 0
    %2418 = vmatmul.mubr.bf16.gmra.mrb[0].mxu0 %v2343
    %v2419 = vpop.f32.mrb[0].mxu0
    %v2420 = vadd.f32 0.0, %v2419
    %v2421 = vpop.f32.mrb[0].mxu0
    %v2422 = vadd.f32 0.0, %v2421
    %v2423 = vpop.f32.mrb[0].mxu0
    %v2424 = vpop.f32.mrb[0].mxu0
    %2425 = vdwg.mxu0
    %v2426 = vadd.f32 %v2339, %v2379
    %v2427 = vadd.f32 %v2340, %v2381
    %v2428 = vadd.f32 %v2341, %v2420
    %v2429 = vadd.f32 %v2342, %v2422
    %v2430 = vxor.u32 %v2426, 2147483648
    %v2431 = vmul.f32 %v2430, 1.442695
    %v2432 = vpow.pop %v2431
    %v2433 = vadd.f32 %v2432, 1.0
    %v2434 = vrcp.pop %v2433
    %v2435 = vmul.f32 1.0, %v2434
    %v2436 = vxor.u32 %v2427, 2147483648
    %v2437 = vmul.f32 %v2436, 1.442695
    %v2438 = vpow.pop %v2437
    %v2439 = vadd.f32 %v2438, 1.0
    %v2440 = vrcp.pop %v2439
    %v2441 = vmul.f32 1.0, %v2440
    %v2442 = vtanh.pop %v2428
    %v2443 = vxor.u32 %v2429, 2147483648
    %v2444 = vmul.f32 %v2443, 1.442695
    %v2445 = vpow.pop %v2444
    %v2446 = vadd.f32 %v2445, 1.0
    %v2447 = vrcp.pop %v2446
    %v2448 = vmul.f32 1.0, %v2447
    %v2449 = vmul.f32 %v2441, %v2338
    %v2450 = vmul.f32 %v2435, %v2442
    %v2451 = vadd.f32 %v2449, %v2450
    %v2452 = vtanh.pop %v2451
    %v2453 = vmul.f32 %v2448, %v2452
    %2454 = vst [vmem:[#allocation3] sm:$0xff] %v2453
    %2455 = vst [vmem:[#allocation4] sm:$0xff] %v2451
    %2456 = vst [vmem:[%s877] sm:$0xff] %v2453
    %v2457 = vld [vmem:[#allocation3] sm:$0xff]
    %v2458 = vld [vmem:[#allocation4] sm:$0xff]
    %v2459 = vld [vmem:[%s881] sm:$0xff]
    %v2460 = vld [vmem:[%s881 + $0x8] sm:$0xff]
    %v2461 = vld [vmem:[%s881 + $0x10] sm:$0xff]
    %v2462 = vld [vmem:[%s881 + $0x18] sm:$0xff]
    %v2463 = vpack.c.bf16 %v2457, %v2457
    %2464 = vmatprep.subr.bf16.mxu0 %v2161
    %2465 = vmatpush1.bf16.msra.mxu0 %v2160
    %2466 = vmatprep.subr.bf16.mxu0 %v2165
    %2467 = vmatpush1.bf16.msra.mxu0 %v2164
    %2468 = vmatprep.subr.bf16.mxu0 %v2169
    %2469 = vmatpush1.bf16.msra.mxu0 %v2168
    %2470 = vmatprep.subr.bf16.mxu0 %v2173
    %2471 = vmatpush1.bf16.msra.mxu0 %v2172
    %2472 = vmatprep.subr.bf16.mxu0 %v2177
    %2473 = vmatpush1.bf16.msra.mxu0 %v2176
    %2474 = vmatprep.subr.bf16.mxu0 %v2181
    %2475 = vmatpush1.bf16.msra.mxu0 %v2180
    %2476 = vmatprep.subr.bf16.mxu0 %v2185
    %2477 = vmatpush1.bf16.msra.mxu0 %v2184
    %2478 = vmatprep.subr.bf16.mxu0 %v2189
    %2479 = vmatpush1.bf16.msra.mxu0 %v2188
    %2480 = vmatprep.subr.bf16.mxu0 0
    %2481 = vmatpush1.bf16.msra.mxu0 0
    %2482 = vmatprep.subr.bf16.mxu0 0
    %2483 = vmatpush1.bf16.msra.mxu0 0
    %2484 = vmatprep.subr.bf16.mxu0 0
    %2485 = vmatpush1.bf16.msra.mxu0 0
    %2486 = vmatprep.subr.bf16.mxu0 0
    %2487 = vmatpush1.bf16.msra.mxu0 0
    %2488 = vmatprep.subr.bf16.mxu0 0
    %2489 = vmatpush1.bf16.msra.mxu0 0
    %2490 = vmatprep.subr.bf16.mxu0 0
    %2491 = vmatpush1.bf16.msra.mxu0 0
    %2492 = vmatprep.subr.bf16.mxu0 0
    %2493 = vmatpush1.bf16.msra.mxu0 0
    %2494 = vmatprep.subr.bf16.mxu0 0
    %2495 = vmatpush1.bf16.msra.mxu0 0
    %2496 = vmatprep.mubr.bf16.mxu0 0
    %2497 = vmatmul.mubr.bf16.gmra.mrb[0].mxu0 %v2463
    %v2498 = vpop.f32.mrb[0].mxu0
    %v2499 = vadd.f32 0.0, %v2498
    %v2500 = vpop.f32.mrb[0].mxu0
    %v2501 = vadd.f32 0.0, %v2500
    %v2502 = vpop.f32.mrb[0].mxu0
    %v2503 = vpop.f32.mrb[0].mxu0
    %2504 = vdwg.mxu0
    %2505 = vmatprep.subr.bf16.mxu0 %v2163
    %2506 = vmatpush1.bf16.msra.mxu0 %v2162
    %2507 = vmatprep.subr.bf16.mxu0 %v2167
    %2508 = vmatpush1.bf16.msra.mxu0 %v2166
    %2509 = vmatprep.subr.bf16.mxu0 %v2171
    %2510 = vmatpush1.bf16.msra.mxu0 %v2170
    %2511 = vmatprep.subr.bf16.mxu0 %v2175
    %2512 = vmatpush1.bf16.msra.mxu0 %v2174
    %2513 = vmatprep.subr.bf16.mxu0 %v2179
    %2514 = vmatpush1.bf16.msra.mxu0 %v2178
    %2515 = vmatprep.subr.bf16.mxu0 %v2183
    %2516 = vmatpush1.bf16.msra.mxu0 %v2182
    %2517 = vmatprep.subr.bf16.mxu0 %v2187
    %2518 = vmatpush1.bf16.msra.mxu0 %v2186
    %2519 = vmatprep.subr.bf16.mxu0 %v2191
    %2520 = vmatpush1.bf16.msra.mxu0 %v2190
    %2521 = vmatprep.subr.bf16.mxu0 0
    %2522 = vmatpush1.bf16.msra.mxu0 0
    %2523 = vmatprep.subr.bf16.mxu0 0
    %2524 = vmatpush1.bf16.msra.mxu0 0
    %2525 = vmatprep.subr.bf16.mxu0 0
    %2526 = vmatpush1.bf16.msra.mxu0 0
    %2527 = vmatprep.subr.bf16.mxu0 0
    %2528 = vmatpush1.bf16.msra.mxu0 0
    %2529 = vmatprep.subr.bf16.mxu0 0
    %2530 = vmatpush1.bf16.msra.mxu0 0
    %2531 = vmatprep.subr.bf16.mxu0 0
    %2532 = vmatpush1.bf16.msra.mxu0 0
    %2533 = vmatprep.subr.bf16.mxu0 0
    %2534 = vmatpush1.bf16.msra.mxu0 0
    %2535 = vmatprep.subr.bf16.mxu0 0
    %2536 = vmatpush1.bf16.msra.mxu0 0
    %2537 = vmatprep.mubr.bf16.mxu0 0
    %2538 = vmatmul.mubr.bf16.gmra.mrb[0].mxu0 %v2463
    %v2539 = vpop.f32.mrb[0].mxu0
    %v2540 = vadd.f32 0.0, %v2539
    %v2541 = vpop.f32.mrb[0].mxu0
    %v2542 = vadd.f32 0.0, %v2541
    %v2543 = vpop.f32.mrb[0].mxu0
    %v2544 = vpop.f32.mrb[0].mxu0
    %2545 = vdwg.mxu0
    %v2546 = vadd.f32 %v2459, %v2499
    %v2547 = vadd.f32 %v2460, %v2501
    %v2548 = vadd.f32 %v2461, %v2540
    %v2549 = vadd.f32 %v2462, %v2542
    %v2550 = vxor.u32 %v2546, 2147483648
    %v2551 = vmul.f32 %v2550, 1.442695
    %v2552 = vpow.pop %v2551
    %v2553 = vadd.f32 %v2552, 1.0
    %v2554 = vrcp.pop %v2553
    %v2555 = vmul.f32 1.0, %v2554
    %v2556 = vxor.u32 %v2547, 2147483648
    %v2557 = vmul.f32 %v2556, 1.442695
    %v2558 = vpow.pop %v2557
    %v2559 = vadd.f32 %v2558, 1.0
    %v2560 = vrcp.pop %v2559
    %v2561 = vmul.f32 1.0, %v2560
    %v2562 = vtanh.pop %v2548
    %v2563 = vxor.u32 %v2549, 2147483648
    %v2564 = vmul.f32 %v2563, 1.442695
    %v2565 = vpow.pop %v2564
    %v2566 = vadd.f32 %v2565, 1.0
    %v2567 = vrcp.pop %v2566
    %v2568 = vmul.f32 1.0, %v2567
    %v2569 = vmul.f32 %v2561, %v2458
    %v2570 = vmul.f32 %v2555, %v2562
    %v2571 = vadd.f32 %v2569, %v2570
    %v2572 = vtanh.pop %v2571
    %v2573 = vmul.f32 %v2568, %v2572
    %2574 = vst [vmem:[#allocation3] sm:$0xff] %v2573
    %2575 = vst [vmem:[#allocation4] sm:$0xff] %v2571
    %2576 = vst [vmem:[%s999] sm:$0xff] %v2573
    %v2577 = vld [vmem:[#allocation3] sm:$0xff]
    %v2578 = vld [vmem:[#allocation4] sm:$0xff]
    %v2579 = vld [vmem:[%s1003] sm:$0xff]
    %v2580 = vld [vmem:[%s1003 + $0x8] sm:$0xff]
    %v2581 = vld [vmem:[%s1003 + $0x10] sm:$0xff]
    %v2582 = vld [vmem:[%s1003 + $0x18] sm:$0xff]
    %v2583 = vpack.c.bf16 %v2577, %v2577
    %2584 = vmatprep.subr.bf16.mxu0 %v2161
    %2585 = vmatpush1.bf16.msra.mxu0 %v2160
    %2586 = vmatprep.subr.bf16.mxu0 %v2165
    %2587 = vmatpush1.bf16.msra.mxu0 %v2164
    %2588 = vmatprep.subr.bf16.mxu0 %v2169
    %2589 = vmatpush1.bf16.msra.mxu0 %v2168
    %2590 = vmatprep.subr.bf16.mxu0 %v2173
    %2591 = vmatpush1.bf16.msra.mxu0 %v2172
    %2592 = vmatprep.subr.bf16.mxu0 %v2177
    %2593 = vmatpush1.bf16.msra.mxu0 %v2176
    %2594 = vmatprep.subr.bf16.mxu0 %v2181
    %2595 = vmatpush1.bf16.msra.mxu0 %v2180
    %2596 = vmatprep.subr.bf16.mxu0 %v2185
    %2597 = vmatpush1.bf16.msra.mxu0 %v2184
    %2598 = vmatprep.subr.bf16.mxu0 %v2189
    %2599 = vmatpush1.bf16.msra.mxu0 %v2188
    %2600 = vmatprep.subr.bf16.mxu0 0
    %2601 = vmatpush1.bf16.msra.mxu0 0
    %2602 = vmatprep.subr.bf16.mxu0 0
    %2603 = vmatpush1.bf16.msra.mxu0 0
    %2604 = vmatprep.subr.bf16.mxu0 0
    %2605 = vmatpush1.bf16.msra.mxu0 0
    %2606 = vmatprep.subr.bf16.mxu0 0
    %2607 = vmatpush1.bf16.msra.mxu0 0
    %2608 = vmatprep.subr.bf16.mxu0 0
    %2609 = vmatpush1.bf16.msra.mxu0 0
    %2610 = vmatprep.subr.bf16.mxu0 0
    %2611 = vmatpush1.bf16.msra.mxu0 0
    %2612 = vmatprep.subr.bf16.mxu0 0
    %2613 = vmatpush1.bf16.msra.mxu0 0
    %2614 = vmatprep.subr.bf16.mxu0 0
    %2615 = vmatpush1.bf16.msra.mxu0 0
    %2616 = vmatprep.mubr.bf16.mxu0 0
    %2617 = vmatmul.mubr.bf16.gmra.mrb[0].mxu0 %v2583
    %v2618 = vpop.f32.mrb[0].mxu0
    %v2619 = vadd.f32 0.0, %v2618
    %v2620 = vpop.f32.mrb[0].mxu0
    %v2621 = vadd.f32 0.0, %v2620
    %v2622 = vpop.f32.mrb[0].mxu0
    %v2623 = vpop.f32.mrb[0].mxu0
    %2624 = vdwg.mxu0
    %2625 = vmatprep.subr.bf16.mxu0 %v2163
    %2626 = vmatpush1.bf16.msra.mxu0 %v2162
    %2627 = vmatprep.subr.bf16.mxu0 %v2167
    %2628 = vmatpush1.bf16.msra.mxu0 %v2166
    %2629 = vmatprep.subr.bf16.mxu0 %v2171
    %2630 = vmatpush1.bf16.msra.mxu0 %v2170
    %2631 = vmatprep.subr.bf16.mxu0 %v2175
    %2632 = vmatpush1.bf16.msra.mxu0 %v2174
    %2633 = vmatprep.subr.bf16.mxu0 %v2179
    %2634 = vmatpush1.bf16.msra.mxu0 %v2178
    %2635 = vmatprep.subr.bf16.mxu0 %v2183
    %2636 = vmatpush1.bf16.msra.mxu0 %v2182
    %2637 = vmatprep.subr.bf16.mxu0 %v2187
    %2638 = vmatpush1.bf16.msra.mxu0 %v2186
    %2639 = vmatprep.subr.bf16.mxu0 %v2191
    %2640 = vmatpush1.bf16.msra.mxu0 %v2190
    %2641 = vmatprep.subr.bf16.mxu0 0
    %2642 = vmatpush1.bf16.msra.mxu0 0
    %2643 = vmatprep.subr.bf16.mxu0 0
    %2644 = vmatpush1.bf16.msra.mxu0 0
    %2645 = vmatprep.subr.bf16.mxu0 0
    %2646 = vmatpush1.bf16.msra.mxu0 0
    %2647 = vmatprep.subr.bf16.mxu0 0
    %2648 = vmatpush1.bf16.msra.mxu0 0
    %2649 = vmatprep.subr.bf16.mxu0 0
    %2650 = vmatpush1.bf16.msra.mxu0 0
    %2651 = vmatprep.subr.bf16.mxu0 0
    %2652 = vmatpush1.bf16.msra.mxu0 0
    %2653 = vmatprep.subr.bf16.mxu0 0
    %2654 = vmatpush1.bf16.msra.mxu0 0
    %2655 = vmatprep.subr.bf16.mxu0 0
    %2656 = vmatpush1.bf16.msra.mxu0 0
    %2657 = vmatprep.mubr.bf16.mxu0 0
    %2658 = vmatmul.mubr.bf16.gmra.mrb[0].mxu0 %v2583
    %v2659 = vpop.f32.mrb[0].mxu0
    %v2660 = vadd.f32 0.0, %v2659
    %v2661 = vpop.f32.mrb[0].mxu0
    %v2662 = vadd.f32 0.0, %v2661
    %v2663 = vpop.f32.mrb[0].mxu0
    %v2664 = vpop.f32.mrb[0].mxu0
    %2665 = vdwg.mxu0
    %v2666 = vadd.f32 %v2579, %v2619
    %v2667 = vadd.f32 %v2580, %v2621
    %v2668 = vadd.f32 %v2581, %v2660
    %v2669 = vadd.f32 %v2582, %v2662
    %v2670 = vxor.u32 %v2666, 2147483648
    %v2671 = vmul.f32 %v2670, 1.442695
    %v2672 = vpow.pop %v2671
    %v2673 = vadd.f32 %v2672, 1.0
    %v2674 = vrcp.pop %v2673
    %v2675 = vmul.f32 1.0, %v2674
    %v2676 = vxor.u32 %v2667, 2147483648
    %v2677 = vmul.f32 %v2676, 1.442695
    %v2678 = vpow.pop %v2677
    %v2679 = vadd.f32 %v2678, 1.0
    %v2680 = vrcp.pop %v2679
    %v2681 = vmul.f32 1.0, %v2680
    %v2682 = vtanh.pop %v2668
    %v2683 = vxor.u32 %v2669, 2147483648
    %v2684 = vmul.f32 %v2683, 1.442695
    %v2685 = vpow.pop %v2684
    %v2686 = vadd.f32 %v2685, 1.0
    %v2687 = vrcp.pop %v2686
    %v2688 = vmul.f32 1.0, %v2687
    %v2689 = vmul.f32 %v2681, %v2578
    %v2690 = vmul.f32 %v2675, %v2682
    %v2691 = vadd.f32 %v2689, %v2690
    %v2692 = vtanh.pop %v2691
    %v2693 = vmul.f32 %v2688, %v2692
    %2694 = vst [vmem:[#allocation3] sm:$0xff] %v2693
    %2695 = vst [vmem:[#allocation4] sm:$0xff] %v2691
    %2696 = vst [vmem:[%s1121] sm:$0xff] %v2693
    %v2697 = vld [vmem:[#allocation3] sm:$0xff]
    %v2698 = vld [vmem:[#allocation4] sm:$0xff]
    %v2699 = vld [vmem:[%s1125] sm:$0xff]
    %v2700 = vld [vmem:[%s1125 + $0x8] sm:$0xff]
    %v2701 = vld [vmem:[%s1125 + $0x10] sm:$0xff]
    %v2702 = vld [vmem:[%s1125 + $0x18] sm:$0xff]
    %v2703 = vpack.c.bf16 %v2697, %v2697
    %2704 = vmatprep.subr.bf16.mxu0 %v2161
    %2705 = vmatpush1.bf16.msra.mxu0 %v2160
    %2706 = vmatprep.subr.bf16.mxu0 %v2165
    %2707 = vmatpush1.bf16.msra.mxu0 %v2164
    %2708 = vmatprep.subr.bf16.mxu0 %v2169
    %2709 = vmatpush1.bf16.msra.mxu0 %v2168
    %2710 = vmatprep.subr.bf16.mxu0 %v2173
    %2711 = vmatpush1.bf16.msra.mxu0 %v2172
    %2712 = vmatprep.subr.bf16.mxu0 %v2177
    %2713 = vmatpush1.bf16.msra.mxu0 %v2176
    %2714 = vmatprep.subr.bf16.mxu0 %v2181
    %2715 = vmatpush1.bf16.msra.mxu0 %v2180
    %2716 = vmatprep.subr.bf16.mxu0 %v2185
    %2717 = vmatpush1.bf16.msra.mxu0 %v2184
    %2718 = vmatprep.subr.bf16.mxu0 %v2189
    %2719 = vmatpush1.bf16.msra.mxu0 %v2188
    %2720 = vmatprep.subr.bf16.mxu0 0
    %2721 = vmatpush1.bf16.msra.mxu0 0
    %2722 = vmatprep.subr.bf16.mxu0 0
    %2723 = vmatpush1.bf16.msra.mxu0 0
    %2724 = vmatprep.subr.bf16.mxu0 0
    %2725 = vmatpush1.bf16.msra.mxu0 0
    %2726 = vmatprep.subr.bf16.mxu0 0
    %2727 = vmatpush1.bf16.msra.mxu0 0
    %2728 = vmatprep.subr.bf16.mxu0 0
    %2729 = vmatpush1.bf16.msra.mxu0 0
    %2730 = vmatprep.subr.bf16.mxu0 0
    %2731 = vmatpush1.bf16.msra.mxu0 0
    %2732 = vmatprep.subr.bf16.mxu0 0
    %2733 = vmatpush1.bf16.msra.mxu0 0
    %2734 = vmatprep.subr.bf16.mxu0 0
    %2735 = vmatpush1.bf16.msra.mxu0 0
    %2736 = vmatprep.mubr.bf16.mxu0 0
    %2737 = vmatmul.mubr.bf16.gmra.mrb[0].mxu0 %v2703
    %v2738 = vpop.f32.mrb[0].mxu0
    %v2739 = vadd.f32 0.0, %v2738
    %v2740 = vpop.f32.mrb[0].mxu0
    %v2741 = vadd.f32 0.0, %v2740
    %v2742 = vpop.f32.mrb[0].mxu0
    %v2743 = vpop.f32.mrb[0].mxu0
    %2744 = vdwg.mxu0
    %2745 = vmatprep.subr.bf16.mxu0 %v2163
    %2746 = vmatpush1.bf16.msra.mxu0 %v2162
    %2747 = vmatprep.subr.bf16.mxu0 %v2167
    %2748 = vmatpush1.bf16.msra.mxu0 %v2166
    %2749 = vmatprep.subr.bf16.mxu0 %v2171
    %2750 = vmatpush1.bf16.msra.mxu0 %v2170
    %2751 = vmatprep.subr.bf16.mxu0 %v2175
    %2752 = vmatpush1.bf16.msra.mxu0 %v2174
    %2753 = vmatprep.subr.bf16.mxu0 %v2179
    %2754 = vmatpush1.bf16.msra.mxu0 %v2178
    %2755 = vmatprep.subr.bf16.mxu0 %v2183
    %2756 = vmatpush1.bf16.msra.mxu0 %v2182
    %2757 = vmatprep.subr.bf16.mxu0 %v2187
    %2758 = vmatpush1.bf16.msra.mxu0 %v2186
    %2759 = vmatprep.subr.bf16.mxu0 %v2191
    %2760 = vmatpush1.bf16.msra.mxu0 %v2190
    %2761 = vmatprep.subr.bf16.mxu0 0
    %2762 = vmatpush1.bf16.msra.mxu0 0
    %2763 = vmatprep.subr.bf16.mxu0 0
    %2764 = vmatpush1.bf16.msra.mxu0 0
    %2765 = vmatprep.subr.bf16.mxu0 0
    %2766 = vmatpush1.bf16.msra.mxu0 0
    %2767 = vmatprep.subr.bf16.mxu0 0
    %2768 = vmatpush1.bf16.msra.mxu0 0
    %2769 = vmatprep.subr.bf16.mxu0 0
    %2770 = vmatpush1.bf16.msra.mxu0 0
    %2771 = vmatprep.subr.bf16.mxu0 0
    %2772 = vmatpush1.bf16.msra.mxu0 0
    %2773 = vmatprep.subr.bf16.mxu0 0
    %2774 = vmatpush1.bf16.msra.mxu0 0
    %2775 = vmatprep.subr.bf16.mxu0 0
    %2776 = vmatpush1.bf16.msra.mxu0 0
    %2777 = vmatprep.mubr.bf16.mxu0 0
    %2778 = vmatmul.mubr.bf16.gmra.mrb[0].mxu0 %v2703
    %v2779 = vpop.f32.mrb[0].mxu0
    %v2780 = vadd.f32 0.0, %v2779
    %v2781 = vpop.f32.mrb[0].mxu0
    %v2782 = vadd.f32 0.0, %v2781
    %v2783 = vpop.f32.mrb[0].mxu0
    %v2784 = vpop.f32.mrb[0].mxu0
    %2785 = vdwg.mxu0
    %v2786 = vadd.f32 %v2699, %v2739
    %v2787 = vadd.f32 %v2700, %v2741
    %v2788 = vadd.f32 %v2701, %v2780
    %v2789 = vadd.f32 %v2702, %v2782
    %v2790 = vxor.u32 %v2786, 2147483648
    %v2791 = vmul.f32 %v2790, 1.442695
    %v2792 = vpow.pop %v2791
    %v2793 = vadd.f32 %v2792, 1.0
    %v2794 = vrcp.pop %v2793
    %v2795 = vmul.f32 1.0, %v2794
    %v2796 = vxor.u32 %v2787, 2147483648
    %v2797 = vmul.f32 %v2796, 1.442695
    %v2798 = vpow.pop %v2797
    %v2799 = vadd.f32 %v2798, 1.0
    %v2800 = vrcp.pop %v2799
    %v2801 = vmul.f32 1.0, %v2800
    %v2802 = vtanh.pop %v2788
    %v2803 = vxor.u32 %v2789, 2147483648
    %v2804 = vmul.f32 %v2803, 1.442695
    %v2805 = vpow.pop %v2804
    %v2806 = vadd.f32 %v2805, 1.0
    %v2807 = vrcp.pop %v2806
    %v2808 = vmul.f32 1.0, %v2807
    %v2809 = vmul.f32 %v2801, %v2698
    %v2810 = vmul.f32 %v2795, %v2802
    %v2811 = vadd.f32 %v2809, %v2810
    %v2812 = vtanh.pop %v2811
    %v2813 = vmul.f32 %v2808, %v2812
    %2814 = vst [vmem:[#allocation3] sm:$0xff] %v2813
    %2815 = vst [vmem:[#allocation4] sm:$0xff] %v2811
    %2816 = vst [vmem:[%s1243] sm:$0xff] %v2813
    %v2817 = vld [vmem:[#allocation3] sm:$0xff]
    %v2818 = vld [vmem:[#allocation4] sm:$0xff]
    %v2819 = vld [vmem:[%s1247] sm:$0xff]
    %v2820 = vld [vmem:[%s1247 + $0x8] sm:$0xff]
    %v2821 = vld [vmem:[%s1247 + $0x10] sm:$0xff]
    %v2822 = vld [vmem:[%s1247 + $0x18] sm:$0xff]
    %v2823 = vpack.c.bf16 %v2817, %v2817
    %2824 = vmatprep.subr.bf16.mxu0 %v2161
    %2825 = vmatpush1.bf16.msra.mxu0 %v2160
    %2826 = vmatprep.subr.bf16.mxu0 %v2165
    %2827 = vmatpush1.bf16.msra.mxu0 %v2164
    %2828 = vmatprep.subr.bf16.mxu0 %v2169
    %2829 = vmatpush1.bf16.msra.mxu0 %v2168
    %2830 = vmatprep.subr.bf16.mxu0 %v2173
    %2831 = vmatpush1.bf16.msra.mxu0 %v2172
    %2832 = vmatprep.subr.bf16.mxu0 %v2177
    %2833 = vmatpush1.bf16.msra.mxu0 %v2176
    %2834 = vmatprep.subr.bf16.mxu0 %v2181
    %2835 = vmatpush1.bf16.msra.mxu0 %v2180
    %2836 = vmatprep.subr.bf16.mxu0 %v2185
    %2837 = vmatpush1.bf16.msra.mxu0 %v2184
    %2838 = vmatprep.subr.bf16.mxu0 %v2189
    %2839 = vmatpush1.bf16.msra.mxu0 %v2188
    %2840 = vmatprep.subr.bf16.mxu0 0
    %2841 = vmatpush1.bf16.msra.mxu0 0
    %2842 = vmatprep.subr.bf16.mxu0 0
    %2843 = vmatpush1.bf16.msra.mxu0 0
    %2844 = vmatprep.subr.bf16.mxu0 0
    %2845 = vmatpush1.bf16.msra.mxu0 0
    %2846 = vmatprep.subr.bf16.mxu0 0
    %2847 = vmatpush1.bf16.msra.mxu0 0
    %2848 = vmatprep.subr.bf16.mxu0 0
    %2849 = vmatpush1.bf16.msra.mxu0 0
    %2850 = vmatprep.subr.bf16.mxu0 0
    %2851 = vmatpush1.bf16.msra.mxu0 0
    %2852 = vmatprep.subr.bf16.mxu0 0
    %2853 = vmatpush1.bf16.msra.mxu0 0
    %2854 = vmatprep.subr.bf16.mxu0 0
    %2855 = vmatpush1.bf16.msra.mxu0 0
    %2856 = vmatprep.mubr.bf16.mxu0 0
    %2857 = vmatmul.mubr.bf16.gmra.mrb[0].mxu0 %v2823
    %v2858 = vpop.f32.mrb[0].mxu0
    %v2859 = vadd.f32 0.0, %v2858
    %v2860 = vpop.f32.mrb[0].mxu0
    %v2861 = vadd.f32 0.0, %v2860
    %v2862 = vpop.f32.mrb[0].mxu0
    %v2863 = vpop.f32.mrb[0].mxu0
    %2864 = vdwg.mxu0
    %2865 = vmatprep.subr.bf16.mxu0 %v2163
    %2866 = vmatpush1.bf16.msra.mxu0 %v2162
    %2867 = vmatprep.subr.bf16.mxu0 %v2167
    %2868 = vmatpush1.bf16.msra.mxu0 %v2166
    %2869 = vmatprep.subr.bf16.mxu0 %v2171
    %2870 = vmatpush1.bf16.msra.mxu0 %v2170
    %2871 = vmatprep.subr.bf16.mxu0 %v2175
    %2872 = vmatpush1.bf16.msra.mxu0 %v2174
    %2873 = vmatprep.subr.bf16.mxu0 %v2179
    %2874 = vmatpush1.bf16.msra.mxu0 %v2178
    %2875 = vmatprep.subr.bf16.mxu0 %v2183
    %2876 = vmatpush1.bf16.msra.mxu0 %v2182
    %2877 = vmatprep.subr.bf16.mxu0 %v2187
    %2878 = vmatpush1.bf16.msra.mxu0 %v2186
    %2879 = vmatprep.subr.bf16.mxu0 %v2191
    %2880 = vmatpush1.bf16.msra.mxu0 %v2190
    %2881 = vmatprep.subr.bf16.mxu0 0
    %2882 = vmatpush1.bf16.msra.mxu0 0
    %2883 = vmatprep.subr.bf16.mxu0 0
    %2884 = vmatpush1.bf16.msra.mxu0 0
    %2885 = vmatprep.subr.bf16.mxu0 0
    %2886 = vmatpush1.bf16.msra.mxu0 0
    %2887 = vmatprep.subr.bf16.mxu0 0
    %2888 = vmatpush1.bf16.msra.mxu0 0
    %2889 = vmatprep.subr.bf16.mxu0 0
    %2890 = vmatpush1.bf16.msra.mxu0 0
    %2891 = vmatprep.subr.bf16.mxu0 0
    %2892 = vmatpush1.bf16.msra.mxu0 0
    %2893 = vmatprep.subr.bf16.mxu0 0
    %2894 = vmatpush1.bf16.msra.mxu0 0
    %2895 = vmatprep.subr.bf16.mxu0 0
    %2896 = vmatpush1.bf16.msra.mxu0 0
    %2897 = vmatprep.mubr.bf16.mxu0 0
    %2898 = vmatmul.mubr.bf16.gmra.mrb[0].mxu0 %v2823
    %v2899 = vpop.f32.mrb[0].mxu0
    %v2900 = vadd.f32 0.0, %v2899
    %v2901 = vpop.f32.mrb[0].mxu0
    %v2902 = vadd.f32 0.0, %v2901
    %v2903 = vpop.f32.mrb[0].mxu0
    %v2904 = vpop.f32.mrb[0].mxu0
    %2905 = vdwg.mxu0
    %v2906 = vadd.f32 %v2819, %v2859
    %v2907 = vadd.f32 %v2820, %v2861
    %v2908 = vadd.f32 %v2821, %v2900
    %v2909 = vadd.f32 %v2822, %v2902
    %v2910 = vxor.u32 %v2906, 2147483648
    %v2911 = vmul.f32 %v2910, 1.442695
    %v2912 = vpow.pop %v2911
    %v2913 = vadd.f32 %v2912, 1.0
    %v2914 = vrcp.pop %v2913
    %v2915 = vmul.f32 1.0, %v2914
    %v2916 = vxor.u32 %v2907, 2147483648
    %v2917 = vmul.f32 %v2916, 1.442695
    %v2918 = vpow.pop %v2917
    %v2919 = vadd.f32 %v2918, 1.0
    %v2920 = vrcp.pop %v2919
    %v2921 = vmul.f32 1.0, %v2920
    %v2922 = vtanh.pop %v2908
    %v2923 = vxor.u32 %v2909, 2147483648
    %v2924 = vmul.f32 %v2923, 1.442695
    %v2925 = vpow.pop %v2924
    %v2926 = vadd.f32 %v2925, 1.0
    %v2927 = vrcp.pop %v2926
    %v2928 = vmul.f32 1.0, %v2927
    %v2929 = vmul.f32 %v2921, %v2818
    %v2930 = vmul.f32 %v2915, %v2922
    %v2931 = vadd.f32 %v2929, %v2930
    %v2932 = vtanh.pop %v2931
    %v2933 = vmul.f32 %v2928, %v2932
    %2934 = vst [vmem:[#allocation3] sm:$0xff] %v2933
    %2935 = vst [vmem:[#allocation4] sm:$0xff] %v2931
    %2936 = vst [vmem:[%s1365] sm:$0xff] %v2933
    %v2937 = vld [vmem:[#allocation3] sm:$0xff]
    %v2938 = vld [vmem:[#allocation4] sm:$0xff]
    %v2939 = vld [vmem:[%s1369] sm:$0xff]
    %v2940 = vld [vmem:[%s1369 + $0x8] sm:$0xff]
    %v2941 = vld [vmem:[%s1369 + $0x10] sm:$0xff]
    %v2942 = vld [vmem:[%s1369 + $0x18] sm:$0xff]
    %v2943 = vpack.c.bf16 %v2937, %v2937
    %2944 = vmatprep.subr.bf16.mxu0 %v2161
    %2945 = vmatpush1.bf16.msra.mxu0 %v2160
    %2946 = vmatprep.subr.bf16.mxu0 %v2165
    %2947 = vmatpush1.bf16.msra.mxu0 %v2164
    %2948 = vmatprep.subr.bf16.mxu0 %v2169
    %2949 = vmatpush1.bf16.msra.mxu0 %v2168
    %2950 = vmatprep.subr.bf16.mxu0 %v2173
    %2951 = vmatpush1.bf16.msra.mxu0 %v2172
    %2952 = vmatprep.subr.bf16.mxu0 %v2177
    %2953 = vmatpush1.bf16.msra.mxu0 %v2176
    %2954 = vmatprep.subr.bf16.mxu0 %v2181
    %2955 = vmatpush1.bf16.msra.mxu0 %v2180
    %2956 = vmatprep.subr.bf16.mxu0 %v2185
    %2957 = vmatpush1.bf16.msra.mxu0 %v2184
    %2958 = vmatprep.subr.bf16.mxu0 %v2189
    %2959 = vmatpush1.bf16.msra.mxu0 %v2188
    %2960 = vmatprep.subr.bf16.mxu0 0
    %2961 = vmatpush1.bf16.msra.mxu0 0
    %2962 = vmatprep.subr.bf16.mxu0 0
    %2963 = vmatpush1.bf16.msra.mxu0 0
    %2964 = vmatprep.subr.bf16.mxu0 0
    %2965 = vmatpush1.bf16.msra.mxu0 0
    %2966 = vmatprep.subr.bf16.mxu0 0
    %2967 = vmatpush1.bf16.msra.mxu0 0
    %2968 = vmatprep.subr.bf16.mxu0 0
    %2969 = vmatpush1.bf16.msra.mxu0 0
    %2970 = vmatprep.subr.bf16.mxu0 0
    %2971 = vmatpush1.bf16.msra.mxu0 0
    %2972 = vmatprep.subr.bf16.mxu0 0
    %2973 = vmatpush1.bf16.msra.mxu0 0
    %2974 = vmatprep.subr.bf16.mxu0 0
    %2975 = vmatpush1.bf16.msra.mxu0 0
    %2976 = vmatprep.mubr.bf16.mxu0 0
    %2977 = vmatmul.mubr.bf16.gmra.mrb[0].mxu0 %v2943
    %v2978 = vpop.f32.mrb[0].mxu0
    %v2979 = vadd.f32 0.0, %v2978
    %v2980 = vpop.f32.mrb[0].mxu0
    %v2981 = vadd.f32 0.0, %v2980
    %v2982 = vpop.f32.mrb[0].mxu0
    %v2983 = vpop.f32.mrb[0].mxu0
    %2984 = vdwg.mxu0
    %2985 = vmatprep.subr.bf16.mxu0 %v2163
    %2986 = vmatpush1.bf16.msra.mxu0 %v2162
    %2987 = vmatprep.subr.bf16.mxu0 %v2167
    %2988 = vmatpush1.bf16.msra.mxu0 %v2166
    %2989 = vmatprep.subr.bf16.mxu0 %v2171
    %2990 = vmatpush1.bf16.msra.mxu0 %v2170
    %2991 = vmatprep.subr.bf16.mxu0 %v2175
    %2992 = vmatpush1.bf16.msra.mxu0 %v2174
    %2993 = vmatprep.subr.bf16.mxu0 %v2179
    %2994 = vmatpush1.bf16.msra.mxu0 %v2178
    %2995 = vmatprep.subr.bf16.mxu0 %v2183
    %2996 = vmatpush1.bf16.msra.mxu0 %v2182
    %2997 = vmatprep.subr.bf16.mxu0 %v2187
    %2998 = vmatpush1.bf16.msra.mxu0 %v2186
    %2999 = vmatprep.subr.bf16.mxu0 %v2191
    %3000 = vmatpush1.bf16.msra.mxu0 %v2190
    %3001 = vmatprep.subr.bf16.mxu0 0
    %3002 = vmatpush1.bf16.msra.mxu0 0
    %3003 = vmatprep.subr.bf16.mxu0 0
    %3004 = vmatpush1.bf16.msra.mxu0 0
    %3005 = vmatprep.subr.bf16.mxu0 0
    %3006 = vmatpush1.bf16.msra.mxu0 0
    %3007 = vmatprep.subr.bf16.mxu0 0
    %3008 = vmatpush1.bf16.msra.mxu0 0
    %3009 = vmatprep.subr.bf16.mxu0 0
    %3010 = vmatpush1.bf16.msra.mxu0 0
    %3011 = vmatprep.subr.bf16.mxu0 0
    %3012 = vmatpush1.bf16.msra.mxu0 0
    %3013 = vmatprep.subr.bf16.mxu0 0
    %3014 = vmatpush1.bf16.msra.mxu0 0
    %3015 = vmatprep.subr.bf16.mxu0 0
    %3016 = vmatpush1.bf16.msra.mxu0 0
    %3017 = vmatprep.mubr.bf16.mxu0 0
    %3018 = vmatmul.mubr.bf16.gmra.mrb[0].mxu0 %v2943
    %v3019 = vpop.f32.mrb[0].mxu0
    %v3020 = vadd.f32 0.0, %v3019
    %v3021 = vpop.f32.mrb[0].mxu0
    %v3022 = vadd.f32 0.0, %v3021
    %v3023 = vpop.f32.mrb[0].mxu0
    %v3024 = vpop.f32.mrb[0].mxu0
    %3025 = vdwg.mxu0
    %v3026 = vadd.f32 %v2939, %v2979
    %v3027 = vadd.f32 %v2940, %v2981
    %v3028 = vadd.f32 %v2941, %v3020
    %v3029 = vadd.f32 %v2942, %v3022
    %v3030 = vxor.u32 %v3026, 2147483648
    %v3031 = vmul.f32 %v3030, 1.442695
    %v3032 = vpow.pop %v3031
    %v3033 = vadd.f32 %v3032, 1.0
    %v3034 = vrcp.pop %v3033
    %v3035 = vmul.f32 1.0, %v3034
    %v3036 = vxor.u32 %v3027, 2147483648
    %v3037 = vmul.f32 %v3036, 1.442695
    %v3038 = vpow.pop %v3037
    %v3039 = vadd.f32 %v3038, 1.0
    %v3040 = vrcp.pop %v3039
    %v3041 = vmul.f32 1.0, %v3040
    %v3042 = vtanh.pop %v3028
    %v3043 = vxor.u32 %v3029, 2147483648
    %v3044 = vmul.f32 %v3043, 1.442695
    %v3045 = vpow.pop %v3044
    %v3046 = vadd.f32 %v3045, 1.0
    %v3047 = vrcp.pop %v3046
    %v3048 = vmul.f32 1.0, %v3047
    %v3049 = vmul.f32 %v3041, %v2938
    %v3050 = vmul.f32 %v3035, %v3042
    %v3051 = vadd.f32 %v3049, %v3050
    %v3052 = vtanh.pop %v3051
    %v3053 = vmul.f32 %v3048, %v3052
    %3054 = vst [vmem:[#allocation3] sm:$0xff] %v3053
    %3055 = vst [vmem:[#allocation4] sm:$0xff] %v3051
    %3056 = vst [vmem:[%s1487] sm:$0xff] %v3053
    %v3057 = vld [vmem:[#allocation3] sm:$0xff]
    %v3058 = vld [vmem:[#allocation4] sm:$0xff]
    %v3059 = vld [vmem:[%s1491] sm:$0xff]
    %v3060 = vld [vmem:[%s1491 + $0x8] sm:$0xff]
    %v3061 = vld [vmem:[%s1491 + $0x10] sm:$0xff]
    %v3062 = vld [vmem:[%s1491 + $0x18] sm:$0xff]
    %v3063 = vpack.c.bf16 %v3057, %v3057
    %3064 = vmatprep.subr.bf16.mxu0 %v2161
    %3065 = vmatpush1.bf16.msra.mxu0 %v2160
    %3066 = vmatprep.subr.bf16.mxu0 %v2165
    %3067 = vmatpush1.bf16.msra.mxu0 %v2164
    %3068 = vmatprep.subr.bf16.mxu0 %v2169
    %3069 = vmatpush1.bf16.msra.mxu0 %v2168
    %3070 = vmatprep.subr.bf16.mxu0 %v2173
    %3071 = vmatpush1.bf16.msra.mxu0 %v2172
    %3072 = vmatprep.subr.bf16.mxu0 %v2177
    %3073 = vmatpush1.bf16.msra.mxu0 %v2176
    %3074 = vmatprep.subr.bf16.mxu0 %v2181
    %3075 = vmatpush1.bf16.msra.mxu0 %v2180
    %3076 = vmatprep.subr.bf16.mxu0 %v2185
    %3077 = vmatpush1.bf16.msra.mxu0 %v2184
    %3078 = vmatprep.subr.bf16.mxu0 %v2189
    %3079 = vmatpush1.bf16.msra.mxu0 %v2188
    %3080 = vmatprep.subr.bf16.mxu0 0
    %3081 = vmatpush1.bf16.msra.mxu0 0
    %3082 = vmatprep.subr.bf16.mxu0 0
    %3083 = vmatpush1.bf16.msra.mxu0 0
    %3084 = vmatprep.subr.bf16.mxu0 0
    %3085 = vmatpush1.bf16.msra.mxu0 0
    %3086 = vmatprep.subr.bf16.mxu0 0
    %3087 = vmatpush1.bf16.msra.mxu0 0
    %3088 = vmatprep.subr.bf16.mxu0 0
    %3089 = vmatpush1.bf16.msra.mxu0 0
    %3090 = vmatprep.subr.bf16.mxu0 0
    %3091 = vmatpush1.bf16.msra.mxu0 0
    %3092 = vmatprep.subr.bf16.mxu0 0
    %3093 = vmatpush1.bf16.msra.mxu0 0
    %3094 = vmatprep.subr.bf16.mxu0 0
    %3095 = vmatpush1.bf16.msra.mxu0 0
    %3096 = vmatprep.mubr.bf16.mxu0 0
    %3097 = vmatmul.mubr.bf16.gmra.mrb[0].mxu0 %v3063
    %v3098 = vpop.f32.mrb[0].mxu0
    %v3099 = vadd.f32 0.0, %v3098
    %v3100 = vpop.f32.mrb[0].mxu0
    %v3101 = vadd.f32 0.0, %v3100
    %v3102 = vpop.f32.mrb[0].mxu0
    %v3103 = vpop.f32.mrb[0].mxu0
    %3104 = vdwg.mxu0
    %3105 = vmatprep.subr.bf16.mxu0 %v2163
    %3106 = vmatpush1.bf16.msra.mxu0 %v2162
    %3107 = vmatprep.subr.bf16.mxu0 %v2167
    %3108 = vmatpush1.bf16.msra.mxu0 %v2166
    %3109 = vmatprep.subr.bf16.mxu0 %v2171
    %3110 = vmatpush1.bf16.msra.mxu0 %v2170
    %3111 = vmatprep.subr.bf16.mxu0 %v2175
    %3112 = vmatpush1.bf16.msra.mxu0 %v2174
    %3113 = vmatprep.subr.bf16.mxu0 %v2179
    %3114 = vmatpush1.bf16.msra.mxu0 %v2178
    %3115 = vmatprep.subr.bf16.mxu0 %v2183
    %3116 = vmatpush1.bf16.msra.mxu0 %v2182
    %3117 = vmatprep.subr.bf16.mxu0 %v2187
    %3118 = vmatpush1.bf16.msra.mxu0 %v2186
    %3119 = vmatprep.subr.bf16.mxu0 %v2191
    %3120 = vmatpush1.bf16.msra.mxu0 %v2190
    %3121 = vmatprep.subr.bf16.mxu0 0
    %3122 = vmatpush1.bf16.msra.mxu0 0
    %3123 = vmatprep.subr.bf16.mxu0 0
    %3124 = vmatpush1.bf16.msra.mxu0 0
    %3125 = vmatprep.subr.bf16.mxu0 0
    %3126 = vmatpush1.bf16.msra.mxu0 0
    %3127 = vmatprep.subr.bf16.mxu0 0
    %3128 = vmatpush1.bf16.msra.mxu0 0
    %3129 = vmatprep.subr.bf16.mxu0 0
    %3130 = vmatpush1.bf16.msra.mxu0 0
    %3131 = vmatprep.subr.bf16.mxu0 0
    %3132 = vmatpush1.bf16.msra.mxu0 0
    %3133 = vmatprep.subr.bf16.mxu0 0
    %3134 = vmatpush1.bf16.msra.mxu0 0
    %3135 = vmatprep.subr.bf16.mxu0 0
    %3136 = vmatpush1.bf16.msra.mxu0 0
    %3137 = vmatprep.mubr.bf16.mxu0 0
    %3138 = vmatmul.mubr.bf16.gmra.mrb[0].mxu0 %v3063
    %v3139 = vpop.f32.mrb[0].mxu0
    %v3140 = vadd.f32 0.0, %v3139
    %v3141 = vpop.f32.mrb[0].mxu0
    %v3142 = vadd.f32 0.0, %v3141
    %v3143 = vpop.f32.mrb[0].mxu0
    %v3144 = vpop.f32.mrb[0].mxu0
    %3145 = vdwg.mxu0
    %v3146 = vadd.f32 %v3059, %v3099
    %v3147 = vadd.f32 %v3060, %v3101
    %v3148 = vadd.f32 %v3061, %v3140
    %v3149 = vadd.f32 %v3062, %v3142
    %v3150 = vxor.u32 %v3146, 2147483648
    %v3151 = vmul.f32 %v3150, 1.442695
    %v3152 = vpow.pop %v3151
    %v3153 = vadd.f32 %v3152, 1.0
    %v3154 = vrcp.pop %v3153
    %v3155 = vmul.f32 1.0, %v3154
    %v3156 = vxor.u32 %v3147, 2147483648
    %v3157 = vmul.f32 %v3156, 1.442695
    %v3158 = vpow.pop %v3157
    %v3159 = vadd.f32 %v3158, 1.0
    %v3160 = vrcp.pop %v3159
    %v3161 = vmul.f32 1.0, %v3160
    %v3162 = vtanh.pop %v3148
    %v3163 = vxor.u32 %v3149, 2147483648
    %v3164 = vmul.f32 %v3163, 1.442695
    %v3165 = vpow.pop %v3164
    %v3166 = vadd.f32 %v3165, 1.0
    %v3167 = vrcp.pop %v3166
    %v3168 = vmul.f32 1.0, %v3167
    %v3169 = vmul.f32 %v3161, %v3058
    %v3170 = vmul.f32 %v3155, %v3162
    %v3171 = vadd.f32 %v3169, %v3170
    %v3172 = vtanh.pop %v3171
    %v3173 = vmul.f32 %v3168, %v3172
    %3174 = vst [vmem:[#allocation3] sm:$0xff] %v3173
    %3175 = vst [vmem:[#allocation4] sm:$0xff] %v3171
    %3176 = vst [vmem:[%s1609] sm:$0xff] %v3173
    %v3177 = vld [vmem:[#allocation3] sm:$0xff]
    %s3178 = scalar_lea.vmem %s10, 8
    %3179 = vst [vmem:[%s3178] sm:$0xff] %v3177
    %v3180 = vld [vmem:[#allocation4] sm:$0xff]
    %s3181 = scalar_lea.vmem %s11, 8
    %3182 = vst [vmem:[%s3181] sm:$0xff] %v3180
    // Predicated region
    $region38: #{s2s_forward.3} parent=1 // pred_check
      _
    $region39: #{s2s_forward.3} parent=1 // pred_check_branch
      %3184 = sbr.rel (0) target = $region41
    $region40: #{s2s_forward.3} parent=1 // pred_region
      %s3186 = ssub.s32 1024, 1024
      %3187 = vsyncadd [#allocation6], %s3186
      %s3188 = sshll.u32 [#allocation5], 4
      %s3189 = int_to_ptr.vmem [resolvable:$true] %s3188
      %3194 = dma.vmem_to_hbm [thread:$0]  %s3189, 1024, %s9, [#allocation6], 128, 128, 8
    $region41: #{s2s_forward.3} parent=1 // pred_fallthru
      _
    // Predicated region
    $region42: #{s2s_forward.3} parent=1 // pred_check
      _
    $region43: #{s2s_forward.3} parent=1 // pred_check_branch
      %3196 = sbr.rel (0) target = $region45
    $region44: #{s2s_forward.3} parent=1 // pred_region
      _
    $region45: #{s2s_forward.3} parent=1 // pred_fallthru
      _
    // Predicated region
    $region46: #{s2s_forward.3} parent=1 // pred_check
      _
    $region47: #{s2s_forward.3} parent=1 // pred_check_branch
      %3198 = sbr.rel (0) target = $region49
    $region48: #{s2s_forward.3} parent=1 // pred_region
      _
    $region49: #{s2s_forward.3} parent=1 // pred_fallthru
      _
    // Predicated region
    $region50: #{s2s_forward.3} parent=1 // pred_check
      _
    $region51: #{s2s_forward.3} parent=1 // pred_check_branch
      %3200 = sbr.rel (0) target = $region53
    $region52: #{s2s_forward.3} parent=1 // pred_region
      %3201 = dma.done [#allocation6], 1024
    $region53: #{s2s_forward.3} parent=1 // pred_fallthru
      _
    // Predicated region
    $region54: #{s2s_forward.3} parent=1 // pred_check
      _
    $region55: #{s2s_forward.3} parent=1 // pred_check_branch
      %3203 = sbr.rel (0) target = $region57
    $region56: #{s2s_forward.3} parent=1 // pred_region
      _
    $region57: #{s2s_forward.3} parent=1 // pred_fallthru
      _
    // Predicated region
    $region58: #{s2s_forward.3} parent=1 // pred_check
      _
    $region59: #{s2s_forward.3} parent=1 // pred_check_branch
      %3205 = sbr.rel (0) target = $region61
    $region60: #{s2s_forward.3} parent=1 // pred_region
      _
    $region61: #{s2s_forward.3} parent=1 // pred_fallthru
      _
    %3206 = vsyncpa [#allocation6], 1

</llo_original>
